<compile_context>
chip_gen: v7x
topology: tpu7x:2x2x1
jax: 0.10.0
libtpu: 0.0.40
codegen_flags: <defaults>
</compile_context>

<pallas_src>
import functools
import math

import jax
import jax.numpy as jnp
import numpy as np
from jax import lax
from jax.experimental import pallas as pl
from jax.experimental.pallas import tpu as pltpu

F32 = jnp.float32
BF16 = jnp.bfloat16


# ----------------------------- config ---------------------------------------
class Config:
    num_features = 16
    hidden_dim = 32
    num_layers = 2
    num_relations = 3
    edge_dim = 3
    pool_ratio = 0.5
    graph_num_head = 4
    num_seed_points = 2
    graph_dropout = 0.1  # eval mode -> dropout is a no-op


def _full(shape):
    # whole-array block (everything here is a few KiB; block == array is legal)
    return pl.BlockSpec(shape, lambda *_: (0,) * len(shape))


def _bdot(a, b):
    """Weight matmul: bf16 operands on the MXU, f32 accumulate."""
    return jnp.dot(a.astype(BF16), b.astype(BF16), preferred_element_type=F32)


def _fdot(a, b):
    """Exact f32 matmul (scatter-sum / GraphNorm statistics)."""
    return jnp.dot(a, b, preferred_element_type=F32)


# ===========================  kernel 1: graph stack  ==========================
# feat_transform + GraphNorm + num_layers x RGAT (+GraphNorm+residual) + SAG score
def _graph_stack_kernel(x0_ref, ea_ref, wf_ref, bf_ref, gn_in_ref,
                        wrel_ref, we_ref, qke_ref, bias_ref, gnl_ref,
                        sag_wrel_ref, sag_wroot_ref, sag_brel_ref,
                        dstc_ref, dstr_ref, srcc_ref, typc_ref,
                        brow_ref, bcol_ref,
                        x_out_ref, score_ref,
                        *, num_graphs, num_relations, num_layers):
    N = x0_ref.shape[0]
    C = wf_ref.shape[1]
    E = ea_ref.shape[0]
    R = num_relations
    G = num_graphs

    dst_c = dstc_ref[...]                                       # [E,1] i32
    dst_r = dstr_ref[...]                                       # [1,E] i32
    src_c = srcc_ref[...]                                       # [E,1] i32
    typ_c = typc_ref[...]                                       # [E,1] i32

    # --- graph one-hots for GraphNorm: built ONCE, reused by all 3 norms -----
    oh_gn = (lax.broadcasted_iota(jnp.int32, (G, N), 0) == brow_ref[...]).astype(F32)
    oh_ng = (lax.broadcasted_iota(jnp.int32, (N, G), 1) == bcol_ref[...]).astype(F32)
    inv_cnt = 1.0 / jnp.maximum(jnp.sum(oh_gn, axis=1, keepdims=True), 1.0)   # [G,1]

    def graph_norm(v, gn):
        # PyG GraphNorm; gn rows: 0=weight, 1=bias, 2=mean_scale. Exact f32 sums.
        mean_g = _fdot(oh_gn, v) * inv_cnt
        mean_n = _fdot(oh_ng, mean_g)
        cent = v - gn[2:3, :] * mean_n
        var_g = _fdot(oh_gn, cent * cent) * inv_cnt
        var_n = _fdot(oh_ng, var_g)
        return gn[0:1, :] * cent * lax.rsqrt(var_n + 1e-5) + gn[1:2, :]

    # --- edge<->node one-hots: built ONCE, reused by both layers + SAG score --
    iota_n_l = lax.broadcasted_iota(jnp.int32, (E, N), 1)
    is_dst_en = iota_n_l == dst_c                               # [E,N] bool
    is_src_en = iota_n_l == src_c                               # [E,N] bool
    oh_dst_f = is_dst_en.astype(F32)
    oh_dst_b = oh_dst_f.astype(BF16)                            # bf16 gather operand
    oh_src_b = is_src_en.astype(F32).astype(BF16)
    oh_dst_ne = (lax.broadcasted_iota(jnp.int32, (N, E), 0) == dst_r).astype(F32)

    # --- feat_transform + leaky_relu(0.1) + input GraphNorm -------------------
    y = _bdot(x0_ref[...], wf_ref[...]) + bf_ref[...]
    y = jnp.where(y >= 0, y, 0.1 * y)
    x = graph_norm(y, gn_in_ref[...])

    ea = ea_ref[...]

    # --- RGAT layers, statically unrolled -------------------------------------
    for l in range(num_layers):
        xb = x.astype(BF16)
        h_i = jnp.zeros((E, C), F32)
        h_j = jnp.zeros((E, C), F32)
        for r in range(R):                                      # static, R=3
            # relation-r transform + one-hot gather to edges (bf16 MXU, f32 acc);
            # no lane-offset slicing of an [E, R*C] activation.
            t_r = jnp.dot(xb, wrel_ref[l * R + r], preferred_element_type=F32)
            t_rb = t_r.astype(BF16)
            sel = (typ_c == r).astype(F32)                      # [E,1]
            h_i = h_i + sel * jnp.dot(oh_dst_b, t_rb, preferred_element_type=F32)
            h_j = h_j + sel * jnp.dot(oh_src_b, t_rb, preferred_element_type=F32)

        ee = _bdot(ea, we_ref[l])                               # lin_edge (no bias)

        # additive attention logit (VPU mul + lane reduce)
        qke = qke_ref[l]                                        # [3,C]: rows q, k, e
        logit = jnp.sum(h_i * qke[0:1, :] + h_j * qke[1:2, :] + ee * qke[2:3, :],
                        axis=-1, keepdims=True)                 # [E,1]
        logit = jnp.where(logit >= 0, logit, 0.2 * logit)       # LeakyReLU(0.2)

        # exact per-target segment softmax (per-segment max; masked lanes never exp)
        masked = jnp.where(is_dst_en, logit, -1e30)             # [E,N]
        m_node = jnp.max(masked, axis=0, keepdims=True)         # [1,N]
        m_e = jnp.sum(jnp.where(is_dst_en, m_node, 0.0), axis=1, keepdims=True)
        p_e = jnp.exp(logit - m_e)                              # [E,1], <= 1
        s_node = jnp.sum(oh_dst_f * p_e, axis=0, keepdims=True)
        s_e = jnp.sum(oh_dst_f * s_node, axis=1, keepdims=True)  # [E,1], >= 1
        alpha = p_e / s_e                                       # exact softmax weight

        conv = _fdot(oh_dst_ne, alpha * h_j) + bias_ref[l]      # f32 scatter-sum + bias
        out = graph_norm(conv, gnl_ref[l])
        yv = out + x                                            # residual
        x = jnp.where(yv >= 0, yv, 0.1 * yv)                    # leaky_relu(0.1)

    x_out_ref[...] = x

    # --- SAGPooling GraphConv(C,1) score, emitted lane-dense as [1,N] --------
    x_src = jnp.dot(oh_src_b, x.astype(BF16), preferred_element_type=F32)   # [E,C]
    agg = _fdot(oh_dst_ne, x_src)                                           # [N,C]
    s_row = (lax.dot_general(sag_wrel_ref[...], agg, (((1,), (1,)), ((), ())),
                             preferred_element_type=F32)
             + lax.dot_general(sag_wroot_ref[...], x, (((1,), (1,)), ((), ())),
                               preferred_element_type=F32)
             + sag_brel_ref[...])
    score_ref[...] = jnp.tanh(s_row)                                        # [1,N]


# =====================  kernel 2: SAB -> PMA -> SAB stack  ====================
def _mab_stack_kernel(x_ref, xm_ref, ym_ref, seed_ref, wp_ref, bp_ref,
                      wq_ref, bq_ref, wk_ref, bk_ref, wv_ref, bv_ref,
                      wo_ref, bo_ref, wlin_ref, blin_ref, o_ref, *, heads):
    C = x_ref.shape[-1]
    dh = C // heads
    scale = 1.0 / math.sqrt(dh)
    io = lax.broadcasted_iota(jnp.int32, (1, C), 1)
    hmasks = [((io >= h * dh) & (io < (h + 1) * dh)).astype(F32) for h in range(heads)]

    def mab(xg, yg, b, q_mask, k_mask):
        # MultiheadAttentionBlock (layer_norm=False, eval): QKV proj, masked MHA,
        # out proj, residual, FFN(ReLU), residual.  Block index b is static.
        q = _bdot(xg, wq_ref[b]) + bq_ref[b]
        k = _bdot(yg, wk_ref[b]) + bk_ref[b]
        v = _bdot(yg, wv_ref[b]) + bv_ref[b]
        kb = k.astype(BF16)
        att = jnp.zeros_like(q)
        for h in range(heads):                                  # static, heads=4
            hm = hmasks[h]
            # per-head scores via channel-masked full-width contraction (bf16 MXU)
            s_h = lax.dot_general((q * hm).astype(BF16), kb,
                                  (((1,), (1,)), ((), ())),
                                  preferred_element_type=F32) * scale      # [Lq,Lk]
            if k_mask is not None:
                s_h = jnp.where(k_mask > 0, s_h, -1e30)
            m = jnp.max(s_h, axis=-1, keepdims=True)
            p = jnp.exp(s_h - m)
            a = p / jnp.sum(p, axis=-1, keepdims=True)          # exact softmax
            att = att + jnp.dot(a.astype(BF16), (v * hm).astype(BF16),
                                preferred_element_type=F32)     # head-h block only
        o = _bdot(att, wo_ref[b]) + bo_ref[b]
        if q_mask is not None:                                  # static flag
            o = o * q_mask
        h1 = o + xg
        ffn = jnp.maximum(_bdot(h1, wlin_ref[b]) + blin_ref[b], 0.0)
        return h1 + ffn

    xg = x_ref[0]                                               # [Lq,C]
    xm = xm_ref[0]                                              # [Lq,1]
    ym = ym_ref[0]                                              # [1,Lk]

    h_enc = mab(xg, xg, 0, xm, ym)                              # SAB encoder
    y_pma = jnp.maximum(_bdot(h_enc, wp_ref[...]) + bp_ref[...], 0.0)   # PMA pre-lin
    h_pma = mab(seed_ref[...], y_pma, 1, None, ym)              # PMA
    h_dec = mab(h_pma, h_pma, 2, None, None)                    # SAB decoder
    o_ref[0] = h_dec


# ----------------------------- parameters ------------------------------------
def init_params(key, cfg):
    C = cfg.hidden_dim
    ks = iter(jax.random.split(key, 64))

    def nrm(shape, scale):
        return (scale * jax.random.normal(next(ks), shape)).astype(F32)

    def lin(fi, fo):
        s = 1.0 / math.sqrt(fi)
        return nrm((fi, fo), s), nrm((fo,), s)

    def gn_params():
        return dict(weight=jnp.ones((C,), F32), bias=jnp.zeros((C,), F32),
                    mean_scale=jnp.ones((C,), F32))

    def mab_params():
        wq, bq = lin(C, C); wk, bk = lin(C, C); wv, bv = lin(C, C)
        wo, bo = lin(C, C); wl, bl = lin(C, C)
        return dict(wq=wq, bq=bq, wk=wk, bk=bk, wv=wv, bv=bv,
                    wo=wo, bo=bo, wlin=wl, blin=bl)

    p = {}
    p["feat_w"], p["feat_b"] = lin(cfg.num_features, C)
    p["gn_in"] = gn_params()
    layers = []
    for _ in range(cfg.num_layers):
        lp = {}
        lp["W"] = nrm((cfg.num_relations, C, C), 1.0 / math.sqrt(C))
        lp["q"] = nrm((C,), 1.0 / math.sqrt(C))
        lp["k"] = nrm((C,), 1.0 / math.sqrt(C))
        lp["We"], _ = lin(cfg.edge_dim, C)          # lin_edge (no bias)
        lp["e"] = nrm((C,), 1.0 / math.sqrt(C))
        lp["bias"] = jnp.zeros((C,), F32)
        lp["gn"] = gn_params()
        layers.append(lp)
    p["layers"] = layers
    p["sag_w_rel"], p["sag_b_rel"] = lin(C, 1)      # SAGPooling GraphConv(C, 1)
    p["sag_w_root"], _ = lin(C, 1)
    p["enc"] = mab_params()                         # SetTransformer: SAB / PMA / SAB
    p["pma_lin_w"], p["pma_lin_b"] = lin(C, C)
    p["pma_seed"] = nrm((1, cfg.num_seed_points, C), 1.0)
    p["pma"] = mab_params()
    p["dec"] = mab_params()
    return p


def pack_params(p, cfg):
    """One-time weight packing: bf16 casts, stacks and reshapes happen here, not
    per forward call."""
    C = cfg.hidden_dim
    layers = p["layers"]

    def stack_mab(key):
        return jnp.stack([p[b][key] for b in ("enc", "pma", "dec")])

    return dict(
        feat_w=p["feat_w"].astype(BF16),
        feat_b=p["feat_b"].reshape(1, C),
        gn_in=jnp.stack([p["gn_in"]["weight"], p["gn_in"]["bias"],
                         p["gn_in"]["mean_scale"]]),
        wrel=jnp.concatenate([lp["W"] for lp in layers], axis=0).astype(BF16),  # [L*R,C,C]
        we=jnp.stack([lp["We"] for lp in layers]).astype(BF16),                 # [L,De,C]
        qke=jnp.stack([jnp.stack([lp["q"], lp["k"], lp["e"]]) for lp in layers]),
        bias=jnp.stack([lp["bias"].reshape(1, C) for lp in layers]),
        gnl=jnp.stack([jnp.stack([lp["gn"]["weight"], lp["gn"]["bias"],
                                  lp["gn"]["mean_scale"]]) for lp in layers]),
        sag_wrel=p["sag_w_rel"].reshape(1, C),
        sag_wroot=p["sag_w_root"].reshape(1, C),
        sag_brel=p["sag_b_rel"].reshape(1, 1),
        seed=p["pma_seed"].reshape(cfg.num_seed_points, C),
        pma_lin_w=p["pma_lin_w"].astype(BF16),
        pma_lin_b=p["pma_lin_b"].reshape(1, C),
        mab_wq=stack_mab("wq").astype(BF16), mab_bq=stack_mab("bq").reshape(3, 1, C),
        mab_wk=stack_mab("wk").astype(BF16), mab_bk=stack_mab("bk").reshape(3, 1, C),
        mab_wv=stack_mab("wv").astype(BF16), mab_bv=stack_mab("bv").reshape(3, 1, C),
        mab_wo=stack_mab("wo").astype(BF16), mab_bo=stack_mab("bo").reshape(3, 1, C),
        mab_wlin=stack_mab("wlin").astype(BF16),
        mab_blin=stack_mab("blin").reshape(3, 1, C),
    )


# ----------------------------- jitted forward --------------------------------
def make_forward(cfg, batch_np, edge_index_np):
    """Builds a jitted forward specialized to a fixed graph structure.
    NOTE: keep_counts / gather map / num_graphs are trace-time constants, so a
    different batch composition triggers a retrace (perf hazard, not a bug)."""
    batch_np = np.asarray(batch_np, np.int32)
    edge_index_np = np.asarray(edge_index_np)
    src_np, dst_np = edge_index_np[0], edge_index_np[1]
    N = int(batch_np.shape[0])
    E = int(src_np.shape[0])
    G = int(batch_np.max()) + 1
    C, R, L = cfg.hidden_dim, cfg.num_relations, cfg.num_layers
    S, H = cfg.num_seed_points, cfg.graph_num_head
    Fd, De = cfg.num_features, cfg.edge_dim

    # static graph-structure constants (tiny id vectors; kernels rebuild one-hots)
    dst_col = jnp.asarray(dst_np.reshape(E, 1), jnp.int32)
    dst_row = jnp.asarray(dst_np.reshape(1, E), jnp.int32)
    src_col = jnp.asarray(src_np.reshape(E, 1), jnp.int32)
    brow = jnp.asarray(batch_np.reshape(1, N), jnp.int32)
    bcol = jnp.asarray(batch_np.reshape(N, 1), jnp.int32)
    seg_masks = [jnp.asarray(batch_np == g) for g in range(G)]

    # static SAGPooling / to_dense_batch structure
    keep_counts = [int(math.ceil(cfg.pool_ratio * int((batch_np == g).sum())))
                   for g in range(G)]
    Lmax = max(keep_counts)
    gather_idx = np.zeros((G, Lmax), np.int32)
    mask_np = np.zeros((G, Lmax), np.float32)
    off = 0
    for g, kc in enumerate(keep_counts):
        gather_idx[g, :kc] = off + np.arange(kc)
        mask_np[g, :kc] = 1.0
        off += kc
    gidx = jnp.asarray(gather_idx.reshape(-1))
    xmask = jnp.asarray(mask_np.reshape(G, Lmax, 1))
    ymask = jnp.asarray(mask_np.reshape(G, 1, Lmax))
    batch_pool = np.concatenate([np.full(k, g, np.int32)
                                 for g, k in enumerate(keep_counts)])
    # TODO(synk): filter_adj of the pooled edge_index is skipped — unused downstream.

    graph_call = pl.pallas_call(
        functools.partial(_graph_stack_kernel, num_graphs=G, num_relations=R,
                          num_layers=L),
        out_shape=(jax.ShapeDtypeStruct((N, C), F32),
                   jax.ShapeDtypeStruct((1, N), F32)),
        in_specs=[_full((N, Fd)), _full((E, De)),
                  _full((Fd, C)), _full((1, C)), _full((3, C)),
                  _full((L * R, C, C)), _full((L, De, C)), _full((L, 3, C)),
                  _full((L, 1, C)), _full((L, 3, C)),
                  _full((1, C)), _full((1, C)), _full((1, 1)),
                  _full((E, 1)), _full((1, E)), _full((E, 1)), _full((E, 1)),
                  _full((1, N)), _full((N, 1))],
        out_specs=(_full((N, C)), _full((1, N))),
    )

    rep2 = lambda g: (0, 0)
    rep3 = lambda g: (0, 0, 0)
    mab_call = pl.pallas_call(
        functools.partial(_mab_stack_kernel, heads=H),
        out_shape=jax.ShapeDtypeStruct((G, S, C), F32),
        grid=(G,),
        in_specs=[pl.BlockSpec((1, Lmax, C), lambda g: (g, 0, 0)),
                  pl.BlockSpec((1, Lmax, 1), lambda g: (g, 0, 0)),
                  pl.BlockSpec((1, 1, Lmax), lambda g: (g, 0, 0)),
                  pl.BlockSpec((S, C), rep2),
                  pl.BlockSpec((C, C), rep2), pl.BlockSpec((1, C), rep2),
                  pl.BlockSpec((3, C, C), rep3), pl.BlockSpec((3, 1, C), rep3),
                  pl.BlockSpec((3, C, C), rep3), pl.BlockSpec((3, 1, C), rep3),
                  pl.BlockSpec((3, C, C), rep3), pl.BlockSpec((3, 1, C), rep3),
                  pl.BlockSpec((3, C, C), rep3), pl.BlockSpec((3, 1, C), rep3),
                  pl.BlockSpec((3, C, C), rep3), pl.BlockSpec((3, 1, C), rep3)],
        out_specs=pl.BlockSpec((1, S, C), lambda g: (g, 0, 0)),
        compiler_params=pltpu.CompilerParams(dimension_semantics=("parallel",)),
    )

    @jax.jit
    def fwd(packed, x0, edge_attr):
        x0 = x0.astype(F32)
        edge_attr = edge_attr.astype(F32)
        edge_type = (jnp.argmax(edge_attr, axis=1).astype(jnp.int32)
                     if edge_attr.ndim > 1 else edge_attr.astype(jnp.int32))
        typ_col = edge_type.reshape(E, 1)

        # kernel 1: feat_transform + GraphNorm + both RGAT layers + SAG score
        x_nodes, score_row = graph_call(
            x0, edge_attr, packed["feat_w"], packed["feat_b"], packed["gn_in"],
            packed["wrel"], packed["we"], packed["qke"], packed["bias"],
            packed["gnl"], packed["sag_wrel"], packed["sag_wroot"],
            packed["sag_brel"], dst_col, dst_row, src_col, typ_col, brow, bcol)

        # SAGPooling: per-graph top-k on device (static keep counts)
        score_flat = score_row[0]
        perm = jnp.concatenate([
            lax.top_k(jnp.where(seg_masks[g], score_flat, -jnp.inf),
                      keep_counts[g])[1] for g in range(G)])
        x_pool = x_nodes[perm] * score_flat[perm][:, None]      # x[perm]*tanh(score)

        # to_dense_batch via static gather map, then the fused SAB->PMA->SAB stack
        dense = x_pool[gidx].reshape(G, Lmax, C) * xmask
        h = mab_call(dense, xmask, ymask, packed["seed"],
                     packed["pma_lin_w"], packed["pma_lin_b"],
                     packed["mab_wq"], packed["mab_bq"],
                     packed["mab_wk"], packed["mab_bk"],
                     packed["mab_wv"], packed["mab_bv"],
                     packed["mab_wo"], packed["mab_bo"],
                     packed["mab_wlin"], packed["mab_blin"])
        return jnp.nan_to_num(h).reshape(G, S * C)

    return fwd, batch_pool


# ----------------------------- main -------------------------------------------
if __name__ == "__main__":
    cfg = Config()
    key = jax.random.PRNGKey(0)
    kx, ke, ka, kp = jax.random.split(key, 4)

    n_per_graph = 12
    num_graphs = 2
    N = n_per_graph * num_graphs
    E_per = 24

    x = jax.random.normal(kx, (N, cfg.num_features), dtype=jnp.float32)
    batch = np.repeat(np.arange(num_graphs), n_per_graph).astype(np.int32)

    srcs, dsts = [], []
    e_keys = jax.random.split(ke, num_graphs)
    for g in range(num_graphs):
        k1, k2 = jax.random.split(e_keys[g])
        s = np.asarray(jax.random.randint(k1, (E_per,), 0, n_per_graph)) + g * n_per_graph
        d = np.asarray(jax.random.randint(k2, (E_per,), 0, n_per_graph)) + g * n_per_graph
        srcs.append(s)
        dsts.append(d)
    edge_index = np.stack([np.concatenate(srcs), np.concatenate(dsts)]).astype(np.int32)
    edge_attr = jax.random.normal(ka, (edge_index.shape[1], cfg.edge_dim), dtype=jnp.float32)

    params = init_params(kp, cfg)
    packed = pack_params(params, cfg)                 # one-time weight packing
    fwd, batch_out = make_forward(cfg, batch, edge_index)

    out = fwd(packed, x, edge_attr)
    jax.block_until_ready(out)
    assert out.shape == (num_graphs, cfg.num_seed_points * cfg.hidden_dim)
    assert batch_out.shape[0] == sum(int(math.ceil(cfg.pool_ratio * n_per_graph))
                                     for _ in range(num_graphs))
    print("KERNEL_OK")
</pallas_src>

<mosaic_0001>
module attributes {stable_mosaic.version = 11 : i64} {
  func.func @_graph_stack_kernel(%arg0: memref<24x16xf32, #tpu.memory_space<vmem>>, %arg1: memref<48x3xf32, #tpu.memory_space<vmem>>, %arg2: memref<16x32xbf16, #tpu.memory_space<vmem>>, %arg3: memref<1x32xf32, #tpu.memory_space<vmem>>, %arg4: memref<3x32xf32, #tpu.memory_space<vmem>>, %arg5: memref<6x32x32xbf16, #tpu.memory_space<vmem>>, %arg6: memref<2x3x32xbf16, #tpu.memory_space<vmem>>, %arg7: memref<2x3x32xf32, #tpu.memory_space<vmem>>, %arg8: memref<2x1x32xf32, #tpu.memory_space<vmem>>, %arg9: memref<2x3x32xf32, #tpu.memory_space<vmem>>, %arg10: memref<1x32xf32, #tpu.memory_space<vmem>>, %arg11: memref<1x32xf32, #tpu.memory_space<vmem>>, %arg12: memref<1x1xf32, #tpu.memory_space<vmem>>, %arg13: memref<48x1xi32, #tpu.memory_space<vmem>>, %arg14: memref<1x48xi32, #tpu.memory_space<vmem>>, %arg15: memref<48x1xi32, #tpu.memory_space<vmem>>, %arg16: memref<48x1xi32, #tpu.memory_space<vmem>>, %arg17: memref<1x24xi32, #tpu.memory_space<vmem>>, %arg18: memref<24x1xi32, #tpu.memory_space<vmem>>, %arg19: memref<24x32xf32, #tpu.memory_space<vmem>>, %arg20: memref<1x24xf32, #tpu.memory_space<vmem>>) attributes {dimension_semantics = [], scalar_prefetch = 0 : i64, scratch_operands = 0 : i64, tpu.core_type = #tpu.core_type<tc>} {
    %c0 = arith.constant 0 : index
    %c0_0 = arith.constant 0 : index
    %0 = vector.load %arg13[%c0, %c0_0] : memref<48x1xi32, #tpu.memory_space<vmem>>, vector<48x1xi32>
    %c0_1 = arith.constant 0 : index
    %c0_2 = arith.constant 0 : index
    %1 = vector.load %arg14[%c0_1, %c0_2] : memref<1x48xi32, #tpu.memory_space<vmem>>, vector<1x48xi32>
    %c0_3 = arith.constant 0 : index
    %c0_4 = arith.constant 0 : index
    %2 = vector.load %arg15[%c0_3, %c0_4] : memref<48x1xi32, #tpu.memory_space<vmem>>, vector<48x1xi32>
    %c0_5 = arith.constant 0 : index
    %c0_6 = arith.constant 0 : index
    %3 = vector.load %arg16[%c0_5, %c0_6] : memref<48x1xi32, #tpu.memory_space<vmem>>, vector<48x1xi32>
    %4 = tpu.iota {dimensions = array<i32: 0>} : vector<2x24xi32>
    %c0_7 = arith.constant 0 : index
    %c0_8 = arith.constant 0 : index
    %5 = vector.load %arg17[%c0_7, %c0_8] : memref<1x24xi32, #tpu.memory_space<vmem>>, vector<1x24xi32>
    %6 = vector.broadcast %5 : vector<1x24xi32> to vector<2x24xi32>
    %7 = arith.cmpi eq, %4, %6 : vector<2x24xi32>
    %8 = arith.extui %7 : vector<2x24xi1> to vector<2x24xi32>
    %9 = arith.sitofp %8 : vector<2x24xi32> to vector<2x24xf32>
    %10 = tpu.iota {dimensions = array<i32: 1>} : vector<24x2xi32>
    %c0_9 = arith.constant 0 : index
    %c0_10 = arith.constant 0 : index
    %11 = vector.load %arg18[%c0_9, %c0_10] : memref<24x1xi32, #tpu.memory_space<vmem>>, vector<24x1xi32>
    %12 = vector.broadcast %11 : vector<24x1xi32> to vector<24x2xi32>
    %13 = arith.cmpi eq, %10, %12 : vector<24x2xi32>
    %14 = arith.extui %13 : vector<24x2xi1> to vector<24x2xi32>
    %15 = arith.sitofp %14 : vector<24x2xi32> to vector<24x2xf32>
    %cst = arith.constant dense<0.000000e+00> : vector<2xf32>
    %16 = vector.multi_reduction <add>, %9, %cst [1] : vector<2x24xf32> to vector<2xf32>
    %17 = vector.shape_cast %16 : vector<2xf32> to vector<2x1xf32>
    %cst_11 = arith.constant 1.000000e+00 : f32
    %18 = vector.broadcast %cst_11 : f32 to vector<2x1xf32>
    %19 = arith.maximumf %17, %18 : vector<2x1xf32>
    %cst_12 = arith.constant 1.000000e+00 : f32
    %20 = vector.broadcast %cst_12 : f32 to vector<2x1xf32>
    %21 = arith.divf %20, %19 : vector<2x1xf32>
    %22 = tpu.iota {dimensions = array<i32: 1>} : vector<48x24xi32>
    %23 = vector.broadcast %0 : vector<48x1xi32> to vector<48x24xi32>
    %24 = arith.cmpi eq, %22, %23 : vector<48x24xi32>
    %25 = vector.broadcast %2 : vector<48x1xi32> to vector<48x24xi32>
    %26 = arith.cmpi eq, %22, %25 : vector<48x24xi32>
    %27 = arith.extui %24 : vector<48x24xi1> to vector<48x24xi32>
    %28 = arith.sitofp %27 : vector<48x24xi32> to vector<48x24xf32>
    %29 = arith.truncf %28 : vector<48x24xf32> to vector<48x24xbf16>
    %30 = arith.extui %26 : vector<48x24xi1> to vector<48x24xi32>
    %31 = arith.sitofp %30 : vector<48x24xi32> to vector<48x24xf32>
    %32 = arith.truncf %31 : vector<48x24xf32> to vector<48x24xbf16>
    %33 = tpu.iota {dimensions = array<i32: 0>} : vector<24x48xi32>
    %34 = vector.broadcast %1 : vector<1x48xi32> to vector<24x48xi32>
    %35 = arith.cmpi eq, %33, %34 : vector<24x48xi32>
    %36 = arith.extui %35 : vector<24x48xi1> to vector<24x48xi32>
    %37 = arith.sitofp %36 : vector<24x48xi32> to vector<24x48xf32>
    %c0_13 = arith.constant 0 : index
    %c0_14 = arith.constant 0 : index
    %38 = vector.load %arg0[%c0_13, %c0_14] : memref<24x16xf32, #tpu.memory_space<vmem>>, vector<24x16xf32>
    %c0_15 = arith.constant 0 : index
    %c0_16 = arith.constant 0 : index
    %39 = vector.load %arg2[%c0_15, %c0_16] : memref<16x32xbf16, #tpu.memory_space<vmem>>, vector<16x32xbf16>
    %40 = arith.truncf %38 : vector<24x16xf32> to vector<24x16xbf16>
    %cst_17 = arith.constant dense<0.000000e+00> : vector<24x32xf32>
    %41 = tpu.matmul %40, %39, %cst_17 {dimension_numbers = #tpu.dot_dimension_numbers<[1], [0], [0], [1], [0, 0, 1, 1], [], []>} : vector<24x16xbf16>, vector<16x32xbf16>, vector<24x32xf32> -> vector<24x32xf32>
    %c0_18 = arith.constant 0 : index
    %c0_19 = arith.constant 0 : index
    %42 = vector.load %arg3[%c0_18, %c0_19] : memref<1x32xf32, #tpu.memory_space<vmem>>, vector<1x32xf32>
    %43 = vector.broadcast %42 : vector<1x32xf32> to vector<24x32xf32>
    %44 = arith.addf %41, %43 : vector<24x32xf32>
    %cst_20 = arith.constant 0.000000e+00 : f32
    %45 = vector.broadcast %cst_20 : f32 to vector<24x32xf32>
    %46 = arith.cmpf oge, %44, %45 : vector<24x32xf32>
    %cst_21 = arith.constant 1.000000e-01 : f32
    %47 = vector.broadcast %cst_21 : f32 to vector<24x32xf32>
    %48 = arith.mulf %47, %44 : vector<24x32xf32>
    %49 = arith.select %46, %44, %48 : vector<24x32xi1>, vector<24x32xf32>
    %c0_22 = arith.constant 0 : index
    %c0_23 = arith.constant 0 : index
    %50 = vector.load %arg4[%c0_22, %c0_23] : memref<3x32xf32, #tpu.memory_space<vmem>>, vector<3x32xf32>
    %cst_24 = arith.constant dense<0.000000e+00> : vector<2x32xf32>
    %51 = tpu.matmul %9, %49, %cst_24 {dimension_numbers = #tpu.dot_dimension_numbers<[1], [0], [0], [1], [0, 0, 1, 1], [], []>} : vector<2x24xf32>, vector<24x32xf32>, vector<2x32xf32> -> vector<2x32xf32>
    %52 = vector.broadcast %21 : vector<2x1xf32> to vector<2x32xf32>
    %53 = arith.mulf %51, %52 : vector<2x32xf32>
    %cst_25 = arith.constant dense<0.000000e+00> : vector<24x32xf32>
    %54 = tpu.matmul %15, %53, %cst_25 {dimension_numbers = #tpu.dot_dimension_numbers<[1], [0], [0], [1], [0, 0, 1, 1], [], []>} : vector<24x2xf32>, vector<2x32xf32>, vector<24x32xf32> -> vector<24x32xf32>
    %55 = vector.extract_strided_slice %50 {offsets = [2, 0], sizes = [1, 32], strides = [1, 1]} : vector<3x32xf32> to vector<1x32xf32>
    %56 = vector.broadcast %55 : vector<1x32xf32> to vector<24x32xf32>
    %57 = arith.mulf %56, %54 : vector<24x32xf32>
    %58 = arith.subf %49, %57 : vector<24x32xf32>
    %59 = arith.mulf %58, %58 : vector<24x32xf32>
    %cst_26 = arith.constant dense<0.000000e+00> : vector<2x32xf32>
    %60 = tpu.matmul %9, %59, %cst_26 {dimension_numbers = #tpu.dot_dimension_numbers<[1], [0], [0], [1], [0, 0, 1, 1], [], []>} : vector<2x24xf32>, vector<24x32xf32>, vector<2x32xf32> -> vector<2x32xf32>
    %61 = vector.broadcast %21 : vector<2x1xf32> to vector<2x32xf32>
    %62 = arith.mulf %60, %61 : vector<2x32xf32>
    %cst_27 = arith.constant dense<0.000000e+00> : vector<24x32xf32>
    %63 = tpu.matmul %15, %62, %cst_27 {dimension_numbers = #tpu.dot_dimension_numbers<[1], [0], [0], [1], [0, 0, 1, 1], [], []>} : vector<24x2xf32>, vector<2x32xf32>, vector<24x32xf32> -> vector<24x32xf32>
    %64 = vector.extract_strided_slice %50 {offsets = [0, 0], sizes = [1, 32], strides = [1, 1]} : vector<3x32xf32> to vector<1x32xf32>
    %65 = vector.broadcast %64 : vector<1x32xf32> to vector<24x32xf32>
    %66 = arith.mulf %65, %58 : vector<24x32xf32>
    %cst_28 = arith.constant 9.99999974E-6 : f32
    %67 = vector.broadcast %cst_28 : f32 to vector<24x32xf32>
    %68 = arith.addf %63, %67 : vector<24x32xf32>
    %69 = math.rsqrt %68 : vector<24x32xf32>
    %70 = arith.mulf %66, %69 : vector<24x32xf32>
    %71 = vector.extract_strided_slice %50 {offsets = [1, 0], sizes = [1, 32], strides = [1, 1]} : vector<3x32xf32> to vector<1x32xf32>
    %72 = vector.broadcast %71 : vector<1x32xf32> to vector<24x32xf32>
    %73 = arith.addf %70, %72 : vector<24x32xf32>
    %c0_29 = arith.constant 0 : index
    %c0_30 = arith.constant 0 : index
    %74 = vector.load %arg1[%c0_29, %c0_30] : memref<48x3xf32, #tpu.memory_space<vmem>>, vector<48x3xf32>
    %75 = arith.truncf %73 : vector<24x32xf32> to vector<24x32xbf16>
    %cst_31 = arith.constant 0.000000e+00 : f32
    %76 = vector.broadcast %cst_31 : f32 to vector<48x32xf32>
    %cst_32 = arith.constant 0.000000e+00 : f32
    %77 = vector.broadcast %cst_32 : f32 to vector<48x32xf32>
    %c0_33 = arith.constant 0 : index
    %c0_34 = arith.constant 0 : index
    %c0_35 = arith.constant 0 : index
    %78 = vector.load %arg5[%c0_33, %c0_34, %c0_35] : memref<6x32x32xbf16, #tpu.memory_space<vmem>>, vector<1x32x32xbf16>
    %79 = vector.shape_cast %78 : vector<1x32x32xbf16> to vector<32x32xbf16>
    %cst_36 = arith.constant dense<0.000000e+00> : vector<24x32xf32>
    %80 = tpu.matmul %75, %79, %cst_36 {dimension_numbers = #tpu.dot_dimension_numbers<[1], [0], [0], [1], [0, 0, 1, 1], [], []>} : vector<24x32xbf16>, vector<32x32xbf16>, vector<24x32xf32> -> vector<24x32xf32>
    %81 = arith.truncf %80 : vector<24x32xf32> to vector<24x32xbf16>
    %c0_i32 = arith.constant 0 : i32
    %82 = vector.broadcast %c0_i32 : i32 to vector<48x1xi32>
    %83 = arith.cmpi eq, %3, %82 : vector<48x1xi32>
    %84 = arith.extui %83 : vector<48x1xi1> to vector<48x1xi32>
    %85 = arith.sitofp %84 : vector<48x1xi32> to vector<48x1xf32>
    %cst_37 = arith.constant dense<0.000000e+00> : vector<48x32xf32>
    %86 = tpu.matmul %29, %81, %cst_37 {dimension_numbers = #tpu.dot_dimension_numbers<[1], [0], [0], [1], [0, 0, 1, 1], [], []>} : vector<48x24xbf16>, vector<24x32xbf16>, vector<48x32xf32> -> vector<48x32xf32>
    %87 = vector.broadcast %85 : vector<48x1xf32> to vector<48x32xf32>
    %88 = arith.mulf %87, %86 : vector<48x32xf32>
    %89 = arith.addf %76, %88 : vector<48x32xf32>
    %cst_38 = arith.constant dense<0.000000e+00> : vector<48x32xf32>
    %90 = tpu.matmul %32, %81, %cst_38 {dimension_numbers = #tpu.dot_dimension_numbers<[1], [0], [0], [1], [0, 0, 1, 1], [], []>} : vector<48x24xbf16>, vector<24x32xbf16>, vector<48x32xf32> -> vector<48x32xf32>
    %91 = vector.broadcast %85 : vector<48x1xf32> to vector<48x32xf32>
    %92 = arith.mulf %91, %90 : vector<48x32xf32>
    %93 = arith.addf %77, %92 : vector<48x32xf32>
    %c1 = arith.constant 1 : index
    %c0_39 = arith.constant 0 : index
    %c0_40 = arith.constant 0 : index
    %94 = vector.load %arg5[%c1, %c0_39, %c0_40] : memref<6x32x32xbf16, #tpu.memory_space<vmem>>, vector<1x32x32xbf16>
    %95 = vector.shape_cast %94 : vector<1x32x32xbf16> to vector<32x32xbf16>
    %cst_41 = arith.constant dense<0.000000e+00> : vector<24x32xf32>
    %96 = tpu.matmul %75, %95, %cst_41 {dimension_numbers = #tpu.dot_dimension_numbers<[1], [0], [0], [1], [0, 0, 1, 1], [], []>} : vector<24x32xbf16>, vector<32x32xbf16>, vector<24x32xf32> -> vector<24x32xf32>
    %97 = arith.truncf %96 : vector<24x32xf32> to vector<24x32xbf16>
    %c1_i32 = arith.constant 1 : i32
    %98 = vector.broadcast %c1_i32 : i32 to vector<48x1xi32>
    %99 = arith.cmpi eq, %3, %98 : vector<48x1xi32>
    %100 = arith.extui %99 : vector<48x1xi1> to vector<48x1xi32>
    %101 = arith.sitofp %100 : vector<48x1xi32> to vector<48x1xf32>
    %cst_42 = arith.constant dense<0.000000e+00> : vector<48x32xf32>
    %102 = tpu.matmul %29, %97, %cst_42 {dimension_numbers = #tpu.dot_dimension_numbers<[1], [0], [0], [1], [0, 0, 1, 1], [], []>} : vector<48x24xbf16>, vector<24x32xbf16>, vector<48x32xf32> -> vector<48x32xf32>
    %103 = vector.broadcast %101 : vector<48x1xf32> to vector<48x32xf32>
    %104 = arith.mulf %103, %102 : vector<48x32xf32>
    %105 = arith.addf %89, %104 : vector<48x32xf32>
    %cst_43 = arith.constant dense<0.000000e+00> : vector<48x32xf32>
    %106 = tpu.matmul %32, %97, %cst_43 {dimension_numbers = #tpu.dot_dimension_numbers<[1], [0], [0], [1], [0, 0, 1, 1], [], []>} : vector<48x24xbf16>, vector<24x32xbf16>, vector<48x32xf32> -> vector<48x32xf32>
    %107 = vector.broadcast %101 : vector<48x1xf32> to vector<48x32xf32>
    %108 = arith.mulf %107, %106 : vector<48x32xf32>
    %109 = arith.addf %93, %108 : vector<48x32xf32>
    %c2 = arith.constant 2 : index
    %c0_44 = arith.constant 0 : index
    %c0_45 = arith.constant 0 : index
    %110 = vector.load %arg5[%c2, %c0_44, %c0_45] : memref<6x32x32xbf16, #tpu.memory_space<vmem>>, vector<1x32x32xbf16>
    %111 = vector.shape_cast %110 : vector<1x32x32xbf16> to vector<32x32xbf16>
    %cst_46 = arith.constant dense<0.000000e+00> : vector<24x32xf32>
    %112 = tpu.matmul %75, %111, %cst_46 {dimension_numbers = #tpu.dot_dimension_numbers<[1], [0], [0], [1], [0, 0, 1, 1], [], []>} : vector<24x32xbf16>, vector<32x32xbf16>, vector<24x32xf32> -> vector<24x32xf32>
    %113 = arith.truncf %112 : vector<24x32xf32> to vector<24x32xbf16>
    %c2_i32 = arith.constant 2 : i32
    %114 = vector.broadcast %c2_i32 : i32 to vector<48x1xi32>
    %115 = arith.cmpi eq, %3, %114 : vector<48x1xi32>
    %116 = arith.extui %115 : vector<48x1xi1> to vector<48x1xi32>
    %117 = arith.sitofp %116 : vector<48x1xi32> to vector<48x1xf32>
    %cst_47 = arith.constant dense<0.000000e+00> : vector<48x32xf32>
    %118 = tpu.matmul %29, %113, %cst_47 {dimension_numbers = #tpu.dot_dimension_numbers<[1], [0], [0], [1], [0, 0, 1, 1], [], []>} : vector<48x24xbf16>, vector<24x32xbf16>, vector<48x32xf32> -> vector<48x32xf32>
    %119 = vector.broadcast %117 : vector<48x1xf32> to vector<48x32xf32>
    %120 = arith.mulf %119, %118 : vector<48x32xf32>
    %121 = arith.addf %105, %120 : vector<48x32xf32>
    %cst_48 = arith.constant dense<0.000000e+00> : vector<48x32xf32>
    %122 = tpu.matmul %32, %113, %cst_48 {dimension_numbers = #tpu.dot_dimension_numbers<[1], [0], [0], [1], [0, 0, 1, 1], [], []>} : vector<48x24xbf16>, vector<24x32xbf16>, vector<48x32xf32> -> vector<48x32xf32>
    %123 = vector.broadcast %117 : vector<48x1xf32> to vector<48x32xf32>
    %124 = arith.mulf %123, %122 : vector<48x32xf32>
    %125 = arith.addf %109, %124 : vector<48x32xf32>
    %c0_49 = arith.constant 0 : index
    %c0_50 = arith.constant 0 : index
    %c0_51 = arith.constant 0 : index
    %126 = vector.load %arg6[%c0_49, %c0_50, %c0_51] : memref<2x3x32xbf16, #tpu.memory_space<vmem>>, vector<1x3x32xbf16>
    %127 = vector.shape_cast %126 : vector<1x3x32xbf16> to vector<3x32xbf16>
    %128 = arith.truncf %74 : vector<48x3xf32> to vector<48x3xbf16>
    %cst_52 = arith.constant dense<0.000000e+00> : vector<48x32xf32>
    %129 = tpu.matmul %128, %127, %cst_52 {dimension_numbers = #tpu.dot_dimension_numbers<[1], [0], [0], [1], [0, 0, 1, 1], [], []>} : vector<48x3xbf16>, vector<3x32xbf16>, vector<48x32xf32> -> vector<48x32xf32>
    %c0_53 = arith.constant 0 : index
    %c0_54 = arith.constant 0 : index
    %c0_55 = arith.constant 0 : index
    %130 = vector.load %arg7[%c0_53, %c0_54, %c0_55] : memref<2x3x32xf32, #tpu.memory_space<vmem>>, vector<1x3x32xf32>
    %131 = vector.shape_cast %130 : vector<1x3x32xf32> to vector<3x32xf32>
    %132 = vector.extract_strided_slice %131 {offsets = [0, 0], sizes = [1, 32], strides = [1, 1]} : vector<3x32xf32> to vector<1x32xf32>
    %133 = vector.broadcast %132 : vector<1x32xf32> to vector<48x32xf32>
    %134 = arith.mulf %121, %133 : vector<48x32xf32>
    %135 = vector.extract_strided_slice %131 {offsets = [1, 0], sizes = [1, 32], strides = [1, 1]} : vector<3x32xf32> to vector<1x32xf32>
    %136 = vector.broadcast %135 : vector<1x32xf32> to vector<48x32xf32>
    %137 = arith.mulf %125, %136 : vector<48x32xf32>
    %138 = arith.addf %134, %137 : vector<48x32xf32>
    %139 = vector.extract_strided_slice %131 {offsets = [2, 0], sizes = [1, 32], strides = [1, 1]} : vector<3x32xf32> to vector<1x32xf32>
    %140 = vector.broadcast %139 : vector<1x32xf32> to vector<48x32xf32>
    %141 = arith.mulf %129, %140 : vector<48x32xf32>
    %142 = arith.addf %138, %141 : vector<48x32xf32>
    %cst_56 = arith.constant dense<0.000000e+00> : vector<48xf32>
    %143 = vector.multi_reduction <add>, %142, %cst_56 [1] : vector<48x32xf32> to vector<48xf32>
    %144 = vector.shape_cast %143 : vector<48xf32> to vector<48x1xf32>
    %cst_57 = arith.constant 0.000000e+00 : f32
    %145 = vector.broadcast %cst_57 : f32 to vector<48x1xf32>
    %146 = arith.cmpf oge, %144, %145 : vector<48x1xf32>
    %cst_58 = arith.constant 2.000000e-01 : f32
    %147 = vector.broadcast %cst_58 : f32 to vector<48x1xf32>
    %148 = arith.mulf %147, %144 : vector<48x1xf32>
    %149 = arith.select %146, %144, %148 : vector<48x1xi1>, vector<48x1xf32>
    %cst_59 = arith.constant -1.000000e+30 : f32
    %150 = vector.shape_cast %149 : vector<48x1xf32> to vector<48x1xf32>
    %151 = vector.broadcast %150 : vector<48x1xf32> to vector<48x24xf32>
    %152 = vector.broadcast %cst_59 : f32 to vector<48x24xf32>
    %153 = arith.select %24, %151, %152 : vector<48x24xi1>, vector<48x24xf32>
    %cst_60 = arith.constant dense<0xFF800000> : vector<24xf32>
    %154 = vector.multi_reduction <maximumf>, %153, %cst_60 [0] : vector<48x24xf32> to vector<24xf32>
    %155 = vector.shape_cast %154 : vector<24xf32> to vector<1x24xf32>
    %cst_61 = arith.constant 0.000000e+00 : f32
    %156 = vector.shape_cast %155 : vector<1x24xf32> to vector<1x24xf32>
    %157 = vector.broadcast %156 : vector<1x24xf32> to vector<48x24xf32>
    %158 = vector.broadcast %cst_61 : f32 to vector<48x24xf32>
    %159 = arith.select %24, %157, %158 : vector<48x24xi1>, vector<48x24xf32>
    %cst_62 = arith.constant dense<0.000000e+00> : vector<48xf32>
    %160 = vector.multi_reduction <add>, %159, %cst_62 [1] : vector<48x24xf32> to vector<48xf32>
    %161 = vector.shape_cast %160 : vector<48xf32> to vector<48x1xf32>
    %162 = arith.subf %149, %161 : vector<48x1xf32>
    %163 = math.exp %162 : vector<48x1xf32>
    %164 = vector.broadcast %163 : vector<48x1xf32> to vector<48x24xf32>
    %165 = arith.mulf %28, %164 : vector<48x24xf32>
    %cst_63 = arith.constant dense<0.000000e+00> : vector<24xf32>
    %166 = vector.multi_reduction <add>, %165, %cst_63 [0] : vector<48x24xf32> to vector<24xf32>
    %167 = vector.shape_cast %166 : vector<24xf32> to vector<1x24xf32>
    %168 = vector.broadcast %167 : vector<1x24xf32> to vector<48x24xf32>
    %169 = arith.mulf %28, %168 : vector<48x24xf32>
    %cst_64 = arith.constant dense<0.000000e+00> : vector<48xf32>
    %170 = vector.multi_reduction <add>, %169, %cst_64 [1] : vector<48x24xf32> to vector<48xf32>
    %171 = vector.shape_cast %170 : vector<48xf32> to vector<48x1xf32>
    %172 = arith.divf %163, %171 : vector<48x1xf32>
    %173 = vector.broadcast %172 : vector<48x1xf32> to vector<48x32xf32>
    %174 = arith.mulf %173, %125 : vector<48x32xf32>
    %cst_65 = arith.constant dense<0.000000e+00> : vector<24x32xf32>
    %175 = tpu.matmul %37, %174, %cst_65 {dimension_numbers = #tpu.dot_dimension_numbers<[1], [0], [0], [1], [0, 0, 1, 1], [], []>} : vector<24x48xf32>, vector<48x32xf32>, vector<24x32xf32> -> vector<24x32xf32>
    %c0_66 = arith.constant 0 : index
    %c0_67 = arith.constant 0 : index
    %c0_68 = arith.constant 0 : index
    %176 = vector.load %arg8[%c0_66, %c0_67, %c0_68] : memref<2x1x32xf32, #tpu.memory_space<vmem>>, vector<1x1x32xf32>
    %177 = vector.shape_cast %176 : vector<1x1x32xf32> to vector<1x32xf32>
    %178 = vector.broadcast %177 : vector<1x32xf32> to vector<24x32xf32>
    %179 = arith.addf %175, %178 : vector<24x32xf32>
    %c0_69 = arith.constant 0 : index
    %c0_70 = arith.constant 0 : index
    %c0_71 = arith.constant 0 : index
    %180 = vector.load %arg9[%c0_69, %c0_70, %c0_71] : memref<2x3x32xf32, #tpu.memory_space<vmem>>, vector<1x3x32xf32>
    %181 = vector.shape_cast %180 : vector<1x3x32xf32> to vector<3x32xf32>
    %cst_72 = arith.constant dense<0.000000e+00> : vector<2x32xf32>
    %182 = tpu.matmul %9, %179, %cst_72 {dimension_numbers = #tpu.dot_dimension_numbers<[1], [0], [0], [1], [0, 0, 1, 1], [], []>} : vector<2x24xf32>, vector<24x32xf32>, vector<2x32xf32> -> vector<2x32xf32>
    %183 = vector.broadcast %21 : vector<2x1xf32> to vector<2x32xf32>
    %184 = arith.mulf %182, %183 : vector<2x32xf32>
    %cst_73 = arith.constant dense<0.000000e+00> : vector<24x32xf32>
    %185 = tpu.matmul %15, %184, %cst_73 {dimension_numbers = #tpu.dot_dimension_numbers<[1], [0], [0], [1], [0, 0, 1, 1], [], []>} : vector<24x2xf32>, vector<2x32xf32>, vector<24x32xf32> -> vector<24x32xf32>
    %186 = vector.extract_strided_slice %181 {offsets = [2, 0], sizes = [1, 32], strides = [1, 1]} : vector<3x32xf32> to vector<1x32xf32>
    %187 = vector.broadcast %186 : vector<1x32xf32> to vector<24x32xf32>
    %188 = arith.mulf %187, %185 : vector<24x32xf32>
    %189 = arith.subf %179, %188 : vector<24x32xf32>
    %190 = arith.mulf %189, %189 : vector<24x32xf32>
    %cst_74 = arith.constant dense<0.000000e+00> : vector<2x32xf32>
    %191 = tpu.matmul %9, %190, %cst_74 {dimension_numbers = #tpu.dot_dimension_numbers<[1], [0], [0], [1], [0, 0, 1, 1], [], []>} : vector<2x24xf32>, vector<24x32xf32>, vector<2x32xf32> -> vector<2x32xf32>
    %192 = vector.broadcast %21 : vector<2x1xf32> to vector<2x32xf32>
    %193 = arith.mulf %191, %192 : vector<2x32xf32>
    %cst_75 = arith.constant dense<0.000000e+00> : vector<24x32xf32>
    %194 = tpu.matmul %15, %193, %cst_75 {dimension_numbers = #tpu.dot_dimension_numbers<[1], [0], [0], [1], [0, 0, 1, 1], [], []>} : vector<24x2xf32>, vector<2x32xf32>, vector<24x32xf32> -> vector<24x32xf32>
    %195 = vector.extract_strided_slice %181 {offsets = [0, 0], sizes = [1, 32], strides = [1, 1]} : vector<3x32xf32> to vector<1x32xf32>
    %196 = vector.broadcast %195 : vector<1x32xf32> to vector<24x32xf32>
    %197 = arith.mulf %196, %189 : vector<24x32xf32>
    %cst_76 = arith.constant 9.99999974E-6 : f32
    %198 = vector.broadcast %cst_76 : f32 to vector<24x32xf32>
    %199 = arith.addf %194, %198 : vector<24x32xf32>
    %200 = math.rsqrt %199 : vector<24x32xf32>
    %201 = arith.mulf %197, %200 : vector<24x32xf32>
    %202 = vector.extract_strided_slice %181 {offsets = [1, 0], sizes = [1, 32], strides = [1, 1]} : vector<3x32xf32> to vector<1x32xf32>
    %203 = vector.broadcast %202 : vector<1x32xf32> to vector<24x32xf32>
    %204 = arith.addf %201, %203 : vector<24x32xf32>
    %205 = arith.addf %204, %73 : vector<24x32xf32>
    %cst_77 = arith.constant 0.000000e+00 : f32
    %206 = vector.broadcast %cst_77 : f32 to vector<24x32xf32>
    %207 = arith.cmpf oge, %205, %206 : vector<24x32xf32>
    %cst_78 = arith.constant 1.000000e-01 : f32
    %208 = vector.broadcast %cst_78 : f32 to vector<24x32xf32>
    %209 = arith.mulf %208, %205 : vector<24x32xf32>
    %210 = arith.select %207, %205, %209 : vector<24x32xi1>, vector<24x32xf32>
    %211 = arith.truncf %210 : vector<24x32xf32> to vector<24x32xbf16>
    %cst_79 = arith.constant 0.000000e+00 : f32
    %212 = vector.broadcast %cst_79 : f32 to vector<48x32xf32>
    %cst_80 = arith.constant 0.000000e+00 : f32
    %213 = vector.broadcast %cst_80 : f32 to vector<48x32xf32>
    %c3 = arith.constant 3 : index
    %c0_81 = arith.constant 0 : index
    %c0_82 = arith.constant 0 : index
    %214 = vector.load %arg5[%c3, %c0_81, %c0_82] : memref<6x32x32xbf16, #tpu.memory_space<vmem>>, vector<1x32x32xbf16>
    %215 = vector.shape_cast %214 : vector<1x32x32xbf16> to vector<32x32xbf16>
    %cst_83 = arith.constant dense<0.000000e+00> : vector<24x32xf32>
    %216 = tpu.matmul %211, %215, %cst_83 {dimension_numbers = #tpu.dot_dimension_numbers<[1], [0], [0], [1], [0, 0, 1, 1], [], []>} : vector<24x32xbf16>, vector<32x32xbf16>, vector<24x32xf32> -> vector<24x32xf32>
    %217 = arith.truncf %216 : vector<24x32xf32> to vector<24x32xbf16>
    %c0_i32_84 = arith.constant 0 : i32
    %218 = vector.broadcast %c0_i32_84 : i32 to vector<48x1xi32>
    %219 = arith.cmpi eq, %3, %218 : vector<48x1xi32>
    %220 = arith.extui %219 : vector<48x1xi1> to vector<48x1xi32>
    %221 = arith.sitofp %220 : vector<48x1xi32> to vector<48x1xf32>
    %cst_85 = arith.constant dense<0.000000e+00> : vector<48x32xf32>
    %222 = tpu.matmul %29, %217, %cst_85 {dimension_numbers = #tpu.dot_dimension_numbers<[1], [0], [0], [1], [0, 0, 1, 1], [], []>} : vector<48x24xbf16>, vector<24x32xbf16>, vector<48x32xf32> -> vector<48x32xf32>
    %223 = vector.broadcast %221 : vector<48x1xf32> to vector<48x32xf32>
    %224 = arith.mulf %223, %222 : vector<48x32xf32>
    %225 = arith.addf %212, %224 : vector<48x32xf32>
    %cst_86 = arith.constant dense<0.000000e+00> : vector<48x32xf32>
    %226 = tpu.matmul %32, %217, %cst_86 {dimension_numbers = #tpu.dot_dimension_numbers<[1], [0], [0], [1], [0, 0, 1, 1], [], []>} : vector<48x24xbf16>, vector<24x32xbf16>, vector<48x32xf32> -> vector<48x32xf32>
    %227 = vector.broadcast %221 : vector<48x1xf32> to vector<48x32xf32>
    %228 = arith.mulf %227, %226 : vector<48x32xf32>
    %229 = arith.addf %213, %228 : vector<48x32xf32>
    %c4 = arith.constant 4 : index
    %c0_87 = arith.constant 0 : index
    %c0_88 = arith.constant 0 : index
    %230 = vector.load %arg5[%c4, %c0_87, %c0_88] : memref<6x32x32xbf16, #tpu.memory_space<vmem>>, vector<1x32x32xbf16>
    %231 = vector.shape_cast %230 : vector<1x32x32xbf16> to vector<32x32xbf16>
    %cst_89 = arith.constant dense<0.000000e+00> : vector<24x32xf32>
    %232 = tpu.matmul %211, %231, %cst_89 {dimension_numbers = #tpu.dot_dimension_numbers<[1], [0], [0], [1], [0, 0, 1, 1], [], []>} : vector<24x32xbf16>, vector<32x32xbf16>, vector<24x32xf32> -> vector<24x32xf32>
    %233 = arith.truncf %232 : vector<24x32xf32> to vector<24x32xbf16>
    %c1_i32_90 = arith.constant 1 : i32
    %234 = vector.broadcast %c1_i32_90 : i32 to vector<48x1xi32>
    %235 = arith.cmpi eq, %3, %234 : vector<48x1xi32>
    %236 = arith.extui %235 : vector<48x1xi1> to vector<48x1xi32>
    %237 = arith.sitofp %236 : vector<48x1xi32> to vector<48x1xf32>
    %cst_91 = arith.constant dense<0.000000e+00> : vector<48x32xf32>
    %238 = tpu.matmul %29, %233, %cst_91 {dimension_numbers = #tpu.dot_dimension_numbers<[1], [0], [0], [1], [0, 0, 1, 1], [], []>} : vector<48x24xbf16>, vector<24x32xbf16>, vector<48x32xf32> -> vector<48x32xf32>
    %239 = vector.broadcast %237 : vector<48x1xf32> to vector<48x32xf32>
    %240 = arith.mulf %239, %238 : vector<48x32xf32>
    %241 = arith.addf %225, %240 : vector<48x32xf32>
    %cst_92 = arith.constant dense<0.000000e+00> : vector<48x32xf32>
    %242 = tpu.matmul %32, %233, %cst_92 {dimension_numbers = #tpu.dot_dimension_numbers<[1], [0], [0], [1], [0, 0, 1, 1], [], []>} : vector<48x24xbf16>, vector<24x32xbf16>, vector<48x32xf32> -> vector<48x32xf32>
    %243 = vector.broadcast %237 : vector<48x1xf32> to vector<48x32xf32>
    %244 = arith.mulf %243, %242 : vector<48x32xf32>
    %245 = arith.addf %229, %244 : vector<48x32xf32>
    %c5 = arith.constant 5 : index
    %c0_93 = arith.constant 0 : index
    %c0_94 = arith.constant 0 : index
    %246 = vector.load %arg5[%c5, %c0_93, %c0_94] : memref<6x32x32xbf16, #tpu.memory_space<vmem>>, vector<1x32x32xbf16>
    %247 = vector.shape_cast %246 : vector<1x32x32xbf16> to vector<32x32xbf16>
    %cst_95 = arith.constant dense<0.000000e+00> : vector<24x32xf32>
    %248 = tpu.matmul %211, %247, %cst_95 {dimension_numbers = #tpu.dot_dimension_numbers<[1], [0], [0], [1], [0, 0, 1, 1], [], []>} : vector<24x32xbf16>, vector<32x32xbf16>, vector<24x32xf32> -> vector<24x32xf32>
    %249 = arith.truncf %248 : vector<24x32xf32> to vector<24x32xbf16>
    %c2_i32_96 = arith.constant 2 : i32
    %250 = vector.broadcast %c2_i32_96 : i32 to vector<48x1xi32>
    %251 = arith.cmpi eq, %3, %250 : vector<48x1xi32>
    %252 = arith.extui %251 : vector<48x1xi1> to vector<48x1xi32>
    %253 = arith.sitofp %252 : vector<48x1xi32> to vector<48x1xf32>
    %cst_97 = arith.constant dense<0.000000e+00> : vector<48x32xf32>
    %254 = tpu.matmul %29, %249, %cst_97 {dimension_numbers = #tpu.dot_dimension_numbers<[1], [0], [0], [1], [0, 0, 1, 1], [], []>} : vector<48x24xbf16>, vector<24x32xbf16>, vector<48x32xf32> -> vector<48x32xf32>
    %255 = vector.broadcast %253 : vector<48x1xf32> to vector<48x32xf32>
    %256 = arith.mulf %255, %254 : vector<48x32xf32>
    %257 = arith.addf %241, %256 : vector<48x32xf32>
    %cst_98 = arith.constant dense<0.000000e+00> : vector<48x32xf32>
    %258 = tpu.matmul %32, %249, %cst_98 {dimension_numbers = #tpu.dot_dimension_numbers<[1], [0], [0], [1], [0, 0, 1, 1], [], []>} : vector<48x24xbf16>, vector<24x32xbf16>, vector<48x32xf32> -> vector<48x32xf32>
    %259 = vector.broadcast %253 : vector<48x1xf32> to vector<48x32xf32>
    %260 = arith.mulf %259, %258 : vector<48x32xf32>
    %261 = arith.addf %245, %260 : vector<48x32xf32>
    %c1_99 = arith.constant 1 : index
    %c0_100 = arith.constant 0 : index
    %c0_101 = arith.constant 0 : index
    %262 = vector.load %arg6[%c1_99, %c0_100, %c0_101] : memref<2x3x32xbf16, #tpu.memory_space<vmem>>, vector<1x3x32xbf16>
    %263 = vector.shape_cast %262 : vector<1x3x32xbf16> to vector<3x32xbf16>
    %264 = arith.truncf %74 : vector<48x3xf32> to vector<48x3xbf16>
    %cst_102 = arith.constant dense<0.000000e+00> : vector<48x32xf32>
    %265 = tpu.matmul %264, %263, %cst_102 {dimension_numbers = #tpu.dot_dimension_numbers<[1], [0], [0], [1], [0, 0, 1, 1], [], []>} : vector<48x3xbf16>, vector<3x32xbf16>, vector<48x32xf32> -> vector<48x32xf32>
    %c1_103 = arith.constant 1 : index
    %c0_104 = arith.constant 0 : index
    %c0_105 = arith.constant 0 : index
    %266 = vector.load %arg7[%c1_103, %c0_104, %c0_105] : memref<2x3x32xf32, #tpu.memory_space<vmem>>, vector<1x3x32xf32>
    %267 = vector.shape_cast %266 : vector<1x3x32xf32> to vector<3x32xf32>
    %268 = vector.extract_strided_slice %267 {offsets = [0, 0], sizes = [1, 32], strides = [1, 1]} : vector<3x32xf32> to vector<1x32xf32>
    %269 = vector.broadcast %268 : vector<1x32xf32> to vector<48x32xf32>
    %270 = arith.mulf %257, %269 : vector<48x32xf32>
    %271 = vector.extract_strided_slice %267 {offsets = [1, 0], sizes = [1, 32], strides = [1, 1]} : vector<3x32xf32> to vector<1x32xf32>
    %272 = vector.broadcast %271 : vector<1x32xf32> to vector<48x32xf32>
    %273 = arith.mulf %261, %272 : vector<48x32xf32>
    %274 = arith.addf %270, %273 : vector<48x32xf32>
    %275 = vector.extract_strided_slice %267 {offsets = [2, 0], sizes = [1, 32], strides = [1, 1]} : vector<3x32xf32> to vector<1x32xf32>
    %276 = vector.broadcast %275 : vector<1x32xf32> to vector<48x32xf32>
    %277 = arith.mulf %265, %276 : vector<48x32xf32>
    %278 = arith.addf %274, %277 : vector<48x32xf32>
    %cst_106 = arith.constant dense<0.000000e+00> : vector<48xf32>
    %279 = vector.multi_reduction <add>, %278, %cst_106 [1] : vector<48x32xf32> to vector<48xf32>
    %280 = vector.shape_cast %279 : vector<48xf32> to vector<48x1xf32>
    %cst_107 = arith.constant 0.000000e+00 : f32
    %281 = vector.broadcast %cst_107 : f32 to vector<48x1xf32>
    %282 = arith.cmpf oge, %280, %281 : vector<48x1xf32>
    %cst_108 = arith.constant 2.000000e-01 : f32
    %283 = vector.broadcast %cst_108 : f32 to vector<48x1xf32>
    %284 = arith.mulf %283, %280 : vector<48x1xf32>
    %285 = arith.select %282, %280, %284 : vector<48x1xi1>, vector<48x1xf32>
    %cst_109 = arith.constant -1.000000e+30 : f32
    %286 = vector.shape_cast %285 : vector<48x1xf32> to vector<48x1xf32>
    %287 = vector.broadcast %286 : vector<48x1xf32> to vector<48x24xf32>
    %288 = vector.broadcast %cst_109 : f32 to vector<48x24xf32>
    %289 = arith.select %24, %287, %288 : vector<48x24xi1>, vector<48x24xf32>
    %cst_110 = arith.constant dense<0xFF800000> : vector<24xf32>
    %290 = vector.multi_reduction <maximumf>, %289, %cst_110 [0] : vector<48x24xf32> to vector<24xf32>
    %291 = vector.shape_cast %290 : vector<24xf32> to vector<1x24xf32>
    %cst_111 = arith.constant 0.000000e+00 : f32
    %292 = vector.shape_cast %291 : vector<1x24xf32> to vector<1x24xf32>
    %293 = vector.broadcast %292 : vector<1x24xf32> to vector<48x24xf32>
    %294 = vector.broadcast %cst_111 : f32 to vector<48x24xf32>
    %295 = arith.select %24, %293, %294 : vector<48x24xi1>, vector<48x24xf32>
    %cst_112 = arith.constant dense<0.000000e+00> : vector<48xf32>
    %296 = vector.multi_reduction <add>, %295, %cst_112 [1] : vector<48x24xf32> to vector<48xf32>
    %297 = vector.shape_cast %296 : vector<48xf32> to vector<48x1xf32>
    %298 = arith.subf %285, %297 : vector<48x1xf32>
    %299 = math.exp %298 : vector<48x1xf32>
    %300 = vector.broadcast %299 : vector<48x1xf32> to vector<48x24xf32>
    %301 = arith.mulf %28, %300 : vector<48x24xf32>
    %cst_113 = arith.constant dense<0.000000e+00> : vector<24xf32>
    %302 = vector.multi_reduction <add>, %301, %cst_113 [0] : vector<48x24xf32> to vector<24xf32>
    %303 = vector.shape_cast %302 : vector<24xf32> to vector<1x24xf32>
    %304 = vector.broadcast %303 : vector<1x24xf32> to vector<48x24xf32>
    %305 = arith.mulf %28, %304 : vector<48x24xf32>
    %cst_114 = arith.constant dense<0.000000e+00> : vector<48xf32>
    %306 = vector.multi_reduction <add>, %305, %cst_114 [1] : vector<48x24xf32> to vector<48xf32>
    %307 = vector.shape_cast %306 : vector<48xf32> to vector<48x1xf32>
    %308 = arith.divf %299, %307 : vector<48x1xf32>
    %309 = vector.broadcast %308 : vector<48x1xf32> to vector<48x32xf32>
    %310 = arith.mulf %309, %261 : vector<48x32xf32>
    %cst_115 = arith.constant dense<0.000000e+00> : vector<24x32xf32>
    %311 = tpu.matmul %37, %310, %cst_115 {dimension_numbers = #tpu.dot_dimension_numbers<[1], [0], [0], [1], [0, 0, 1, 1], [], []>} : vector<24x48xf32>, vector<48x32xf32>, vector<24x32xf32> -> vector<24x32xf32>
    %c1_116 = arith.constant 1 : index
    %c0_117 = arith.constant 0 : index
    %c0_118 = arith.constant 0 : index
    %312 = vector.load %arg8[%c1_116, %c0_117, %c0_118] : memref<2x1x32xf32, #tpu.memory_space<vmem>>, vector<1x1x32xf32>
    %313 = vector.shape_cast %312 : vector<1x1x32xf32> to vector<1x32xf32>
    %314 = vector.broadcast %313 : vector<1x32xf32> to vector<24x32xf32>
    %315 = arith.addf %311, %314 : vector<24x32xf32>
    %c1_119 = arith.constant 1 : index
    %c0_120 = arith.constant 0 : index
    %c0_121 = arith.constant 0 : index
    %316 = vector.load %arg9[%c1_119, %c0_120, %c0_121] : memref<2x3x32xf32, #tpu.memory_space<vmem>>, vector<1x3x32xf32>
    %317 = vector.shape_cast %316 : vector<1x3x32xf32> to vector<3x32xf32>
    %cst_122 = arith.constant dense<0.000000e+00> : vector<2x32xf32>
    %318 = tpu.matmul %9, %315, %cst_122 {dimension_numbers = #tpu.dot_dimension_numbers<[1], [0], [0], [1], [0, 0, 1, 1], [], []>} : vector<2x24xf32>, vector<24x32xf32>, vector<2x32xf32> -> vector<2x32xf32>
    %319 = vector.broadcast %21 : vector<2x1xf32> to vector<2x32xf32>
    %320 = arith.mulf %318, %319 : vector<2x32xf32>
    %cst_123 = arith.constant dense<0.000000e+00> : vector<24x32xf32>
    %321 = tpu.matmul %15, %320, %cst_123 {dimension_numbers = #tpu.dot_dimension_numbers<[1], [0], [0], [1], [0, 0, 1, 1], [], []>} : vector<24x2xf32>, vector<2x32xf32>, vector<24x32xf32> -> vector<24x32xf32>
    %322 = vector.extract_strided_slice %317 {offsets = [2, 0], sizes = [1, 32], strides = [1, 1]} : vector<3x32xf32> to vector<1x32xf32>
    %323 = vector.broadcast %322 : vector<1x32xf32> to vector<24x32xf32>
    %324 = arith.mulf %323, %321 : vector<24x32xf32>
    %325 = arith.subf %315, %324 : vector<24x32xf32>
    %326 = arith.mulf %325, %325 : vector<24x32xf32>
    %cst_124 = arith.constant dense<0.000000e+00> : vector<2x32xf32>
    %327 = tpu.matmul %9, %326, %cst_124 {dimension_numbers = #tpu.dot_dimension_numbers<[1], [0], [0], [1], [0, 0, 1, 1], [], []>} : vector<2x24xf32>, vector<24x32xf32>, vector<2x32xf32> -> vector<2x32xf32>
    %328 = vector.broadcast %21 : vector<2x1xf32> to vector<2x32xf32>
    %329 = arith.mulf %327, %328 : vector<2x32xf32>
    %cst_125 = arith.constant dense<0.000000e+00> : vector<24x32xf32>
    %330 = tpu.matmul %15, %329, %cst_125 {dimension_numbers = #tpu.dot_dimension_numbers<[1], [0], [0], [1], [0, 0, 1, 1], [], []>} : vector<24x2xf32>, vector<2x32xf32>, vector<24x32xf32> -> vector<24x32xf32>
    %331 = vector.extract_strided_slice %317 {offsets = [0, 0], sizes = [1, 32], strides = [1, 1]} : vector<3x32xf32> to vector<1x32xf32>
    %332 = vector.broadcast %331 : vector<1x32xf32> to vector<24x32xf32>
    %333 = arith.mulf %332, %325 : vector<24x32xf32>
    %cst_126 = arith.constant 9.99999974E-6 : f32
    %334 = vector.broadcast %cst_126 : f32 to vector<24x32xf32>
    %335 = arith.addf %330, %334 : vector<24x32xf32>
    %336 = math.rsqrt %335 : vector<24x32xf32>
    %337 = arith.mulf %333, %336 : vector<24x32xf32>
    %338 = vector.extract_strided_slice %317 {offsets = [1, 0], sizes = [1, 32], strides = [1, 1]} : vector<3x32xf32> to vector<1x32xf32>
    %339 = vector.broadcast %338 : vector<1x32xf32> to vector<24x32xf32>
    %340 = arith.addf %337, %339 : vector<24x32xf32>
    %341 = arith.addf %340, %210 : vector<24x32xf32>
    %cst_127 = arith.constant 0.000000e+00 : f32
    %342 = vector.broadcast %cst_127 : f32 to vector<24x32xf32>
    %343 = arith.cmpf oge, %341, %342 : vector<24x32xf32>
    %cst_128 = arith.constant 1.000000e-01 : f32
    %344 = vector.broadcast %cst_128 : f32 to vector<24x32xf32>
    %345 = arith.mulf %344, %341 : vector<24x32xf32>
    %346 = arith.select %343, %341, %345 : vector<24x32xi1>, vector<24x32xf32>
    %c0_129 = arith.constant 0 : index
    %c0_130 = arith.constant 0 : index
    %347 = vector.load %arg19[%c0_129, %c0_130] : memref<24x32xf32, #tpu.memory_space<vmem>>, vector<24x32xf32>
    tpu.vector_store %arg19[%c0_129, %c0_130], %346 {strides = array<i32>} : memref<24x32xf32, #tpu.memory_space<vmem>>, vector<24x32xf32>,
    %348 = arith.truncf %346 : vector<24x32xf32> to vector<24x32xbf16>
    %cst_131 = arith.constant dense<0.000000e+00> : vector<48x32xf32>
    %349 = tpu.matmul %32, %348, %cst_131 {dimension_numbers = #tpu.dot_dimension_numbers<[1], [0], [0], [1], [0, 0, 1, 1], [], []>} : vector<48x24xbf16>, vector<24x32xbf16>, vector<48x32xf32> -> vector<48x32xf32>
    %cst_132 = arith.constant dense<0.000000e+00> : vector<24x32xf32>
    %350 = tpu.matmul %37, %349, %cst_132 {dimension_numbers = #tpu.dot_dimension_numbers<[1], [0], [0], [1], [0, 0, 1, 1], [], []>} : vector<24x48xf32>, vector<48x32xf32>, vector<24x32xf32> -> vector<24x32xf32>
    %c0_133 = arith.constant 0 : index
    %c0_134 = arith.constant 0 : index
    %351 = vector.load %arg10[%c0_133, %c0_134] : memref<1x32xf32, #tpu.memory_space<vmem>>, vector<1x32xf32>
    %cst_135 = arith.constant dense<0.000000e+00> : vector<1x24xf32>
    %352 = tpu.matmul %351, %350, %cst_135 {dimension_numbers = #tpu.dot_dimension_numbers<[1], [1], [0], [0], [0, 0, 1, 0], [], []>} : vector<1x32xf32>, vector<24x32xf32>, vector<1x24xf32> -> vector<1x24xf32>
    %c0_136 = arith.constant 0 : index
    %c0_137 = arith.constant 0 : index
    %353 = vector.load %arg11[%c0_136, %c0_137] : memref<1x32xf32, #tpu.memory_space<vmem>>, vector<1x32xf32>
    %cst_138 = arith.constant dense<0.000000e+00> : vector<1x24xf32>
    %354 = tpu.matmul %353, %346, %cst_138 {dimension_numbers = #tpu.dot_dimension_numbers<[1], [1], [0], [0], [0, 0, 1, 0], [], []>} : vector<1x32xf32>, vector<24x32xf32>, vector<1x24xf32> -> vector<1x24xf32>
    %355 = arith.addf %352, %354 : vector<1x24xf32>
    %c0_139 = arith.constant 0 : index
    %c0_140 = arith.constant 0 : index
    %356 = vector.load %arg12[%c0_139, %c0_140] : memref<1x1xf32, #tpu.memory_space<vmem>>, vector<1x1xf32>
    %357 = vector.broadcast %356 : vector<1x1xf32> to vector<1x24xf32>
    %358 = arith.addf %355, %357 : vector<1x24xf32>
    %359 = math.tanh %358 : vector<1x24xf32>
    %c0_141 = arith.constant 0 : index
    %c0_142 = arith.constant 0 : index
    %360 = vector.load %arg20[%c0_141, %c0_142] : memref<1x24xf32, #tpu.memory_space<vmem>>, vector<1x24xf32>
    tpu.vector_store %arg20[%c0_141, %c0_142], %359 {strides = array<i32>} : memref<1x24xf32, #tpu.memory_space<vmem>>, vector<1x24xf32>,
    return
  }
}

module attributes {stable_mosaic.version = 11 : i64} {
  func.func @_mab_stack_kernel(%arg0: i32, %arg1: memref<1x6x32xf32, #tpu.memory_space<vmem>>, %arg2: memref<1x6x1xf32, #tpu.memory_space<vmem>>, %arg3: memref<1x1x6xf32, #tpu.memory_space<vmem>>, %arg4: memref<2x32xf32, #tpu.memory_space<vmem>>, %arg5: memref<32x32xbf16, #tpu.memory_space<vmem>>, %arg6: memref<1x32xf32, #tpu.memory_space<vmem>>, %arg7: memref<3x32x32xbf16, #tpu.memory_space<vmem>>, %arg8: memref<3x1x32xf32, #tpu.memory_space<vmem>>, %arg9: memref<3x32x32xbf16, #tpu.memory_space<vmem>>, %arg10: memref<3x1x32xf32, #tpu.memory_space<vmem>>, %arg11: memref<3x32x32xbf16, #tpu.memory_space<vmem>>, %arg12: memref<3x1x32xf32, #tpu.memory_space<vmem>>, %arg13: memref<3x32x32xbf16, #tpu.memory_space<vmem>>, %arg14: memref<3x1x32xf32, #tpu.memory_space<vmem>>, %arg15: memref<3x32x32xbf16, #tpu.memory_space<vmem>>, %arg16: memref<3x1x32xf32, #tpu.memory_space<vmem>>, %arg17: memref<1x2x32xf32, #tpu.memory_space<vmem>>) attributes {dimension_semantics = [#tpu.dimension_semantics<parallel>], iteration_bounds = array<i64: 2>, scalar_prefetch = 0 : i64, scratch_operands = 0 : i64, tpu.core_type = #tpu.core_type<tc>, window_params = [{transform_indices = @transform_0, window_bounds = array<i64: 1, 6, 32>}, {transform_indices = @transform_1, window_bounds = array<i64: 1, 6, 1>}, {transform_indices = @transform_2, window_bounds = array<i64: 1, 1, 6>}, {pipeline_mode = #tpu.pipeline_mode<synchronous>, transform_indices = @transform_3, window_bounds = array<i64: 2, 32>}, {pipeline_mode = #tpu.pipeline_mode<synchronous>, transform_indices = @transform_4, window_bounds = array<i64: 32, 32>}, {pipeline_mode = #tpu.pipeline_mode<synchronous>, transform_indices = @transform_5, window_bounds = array<i64: 1, 32>}, {pipeline_mode = #tpu.pipeline_mode<synchronous>, transform_indices = @transform_6, window_bounds = array<i64: 3, 32, 32>}, {pipeline_mode = #tpu.pipeline_mode<synchronous>, transform_indices = @transform_7, window_bounds = array<i64: 3, 1, 32>}, {pipeline_mode = #tpu.pipeline_mode<synchronous>, transform_indices = @transform_8, window_bounds = array<i64: 3, 32, 32>}, {pipeline_mode = #tpu.pipeline_mode<synchronous>, transform_indices = @transform_9, window_bounds = array<i64: 3, 1, 32>}, {pipeline_mode = #tpu.pipeline_mode<synchronous>, transform_indices = @transform_10, window_bounds = array<i64: 3, 32, 32>}, {pipeline_mode = #tpu.pipeline_mode<synchronous>, transform_indices = @transform_11, window_bounds = array<i64: 3, 1, 32>}, {pipeline_mode = #tpu.pipeline_mode<synchronous>, transform_indices = @transform_12, window_bounds = array<i64: 3, 32, 32>}, {pipeline_mode = #tpu.pipeline_mode<synchronous>, transform_indices = @transform_13, window_bounds = array<i64: 3, 1, 32>}, {pipeline_mode = #tpu.pipeline_mode<synchronous>, transform_indices = @transform_14, window_bounds = array<i64: 3, 32, 32>}, {pipeline_mode = #tpu.pipeline_mode<synchronous>, transform_indices = @transform_15, window_bounds = array<i64: 3, 1, 32>}, {transform_indices = @transform_16, window_bounds = array<i64: 1, 2, 32>}]} {
    %0 = tpu.iota {dimensions = array<i32: 1>} : vector<1x32xi32>
    %c0_i32 = arith.constant 0 : i32
    %1 = vector.broadcast %c0_i32 : i32 to vector<1x32xi32>
    %2 = arith.cmpi sge, %0, %1 : vector<1x32xi32>
    %c8_i32 = arith.constant 8 : i32
    %3 = vector.broadcast %c8_i32 : i32 to vector<1x32xi32>
    %4 = arith.cmpi slt, %0, %3 : vector<1x32xi32>
    %5 = arith.andi %2, %4 : vector<1x32xi1>
    %6 = arith.extui %5 : vector<1x32xi1> to vector<1x32xi32>
    %7 = arith.sitofp %6 : vector<1x32xi32> to vector<1x32xf32>
    %c8_i32_0 = arith.constant 8 : i32
    %8 = vector.broadcast %c8_i32_0 : i32 to vector<1x32xi32>
    %9 = arith.cmpi sge, %0, %8 : vector<1x32xi32>
    %c16_i32 = arith.constant 16 : i32
    %10 = vector.broadcast %c16_i32 : i32 to vector<1x32xi32>
    %11 = arith.cmpi slt, %0, %10 : vector<1x32xi32>
    %12 = arith.andi %9, %11 : vector<1x32xi1>
    %13 = arith.extui %12 : vector<1x32xi1> to vector<1x32xi32>
    %14 = arith.sitofp %13 : vector<1x32xi32> to vector<1x32xf32>
    %c16_i32_1 = arith.constant 16 : i32
    %15 = vector.broadcast %c16_i32_1 : i32 to vector<1x32xi32>
    %16 = arith.cmpi sge, %0, %15 : vector<1x32xi32>
    %c24_i32 = arith.constant 24 : i32
    %17 = vector.broadcast %c24_i32 : i32 to vector<1x32xi32>
    %18 = arith.cmpi slt, %0, %17 : vector<1x32xi32>
    %19 = arith.andi %16, %18 : vector<1x32xi1>
    %20 = arith.extui %19 : vector<1x32xi1> to vector<1x32xi32>
    %21 = arith.sitofp %20 : vector<1x32xi32> to vector<1x32xf32>
    %c24_i32_2 = arith.constant 24 : i32
    %22 = vector.broadcast %c24_i32_2 : i32 to vector<1x32xi32>
    %23 = arith.cmpi sge, %0, %22 : vector<1x32xi32>
    %c32_i32 = arith.constant 32 : i32
    %24 = vector.broadcast %c32_i32 : i32 to vector<1x32xi32>
    %25 = arith.cmpi slt, %0, %24 : vector<1x32xi32>
    %26 = arith.andi %23, %25 : vector<1x32xi1>
    %27 = arith.extui %26 : vector<1x32xi1> to vector<1x32xi32>
    %28 = arith.sitofp %27 : vector<1x32xi32> to vector<1x32xf32>
    %c0 = arith.constant 0 : index
    %c0_3 = arith.constant 0 : index
    %c0_4 = arith.constant 0 : index
    %29 = vector.load %arg1[%c0, %c0_3, %c0_4] : memref<1x6x32xf32, #tpu.memory_space<vmem>>, vector<1x6x32xf32>
    %30 = vector.shape_cast %29 : vector<1x6x32xf32> to vector<6x32xf32>
    %c0_5 = arith.constant 0 : index
    %c0_6 = arith.constant 0 : index
    %c0_7 = arith.constant 0 : index
    %31 = vector.load %arg2[%c0_5, %c0_6, %c0_7] : memref<1x6x1xf32, #tpu.memory_space<vmem>>, vector<1x6x1xf32>
    %32 = vector.shape_cast %31 : vector<1x6x1xf32> to vector<6x1xf32>
    %c0_8 = arith.constant 0 : index
    %c0_9 = arith.constant 0 : index
    %c0_10 = arith.constant 0 : index
    %33 = vector.load %arg3[%c0_8, %c0_9, %c0_10] : memref<1x1x6xf32, #tpu.memory_space<vmem>>, vector<1x1x6xf32>
    %34 = vector.shape_cast %33 : vector<1x1x6xf32> to vector<1x6xf32>
    %c0_11 = arith.constant 0 : index
    %c0_12 = arith.constant 0 : index
    %c0_13 = arith.constant 0 : index
    %35 = vector.load %arg7[%c0_11, %c0_12, %c0_13] : memref<3x32x32xbf16, #tpu.memory_space<vmem>>, vector<1x32x32xbf16>
    %36 = vector.shape_cast %35 : vector<1x32x32xbf16> to vector<32x32xbf16>
    %37 = arith.truncf %30 : vector<6x32xf32> to vector<6x32xbf16>
    %cst = arith.constant dense<0.000000e+00> : vector<6x32xf32>
    %38 = tpu.matmul %37, %36, %cst {dimension_numbers = #tpu.dot_dimension_numbers<[1], [0], [0], [1], [0, 0, 1, 1], [], []>} : vector<6x32xbf16>, vector<32x32xbf16>, vector<6x32xf32> -> vector<6x32xf32>
    %c0_14 = arith.constant 0 : index
    %c0_15 = arith.constant 0 : index
    %c0_16 = arith.constant 0 : index
    %39 = vector.load %arg8[%c0_14, %c0_15, %c0_16] : memref<3x1x32xf32, #tpu.memory_space<vmem>>, vector<1x1x32xf32>
    %40 = vector.shape_cast %39 : vector<1x1x32xf32> to vector<1x32xf32>
    %41 = vector.broadcast %40 : vector<1x32xf32> to vector<6x32xf32>
    %42 = arith.addf %38, %41 : vector<6x32xf32>
    %c0_17 = arith.constant 0 : index
    %c0_18 = arith.constant 0 : index
    %c0_19 = arith.constant 0 : index
    %43 = vector.load %arg9[%c0_17, %c0_18, %c0_19] : memref<3x32x32xbf16, #tpu.memory_space<vmem>>, vector<1x32x32xbf16>
    %44 = vector.shape_cast %43 : vector<1x32x32xbf16> to vector<32x32xbf16>
    %45 = arith.truncf %30 : vector<6x32xf32> to vector<6x32xbf16>
    %cst_20 = arith.constant dense<0.000000e+00> : vector<6x32xf32>
    %46 = tpu.matmul %45, %44, %cst_20 {dimension_numbers = #tpu.dot_dimension_numbers<[1], [0], [0], [1], [0, 0, 1, 1], [], []>} : vector<6x32xbf16>, vector<32x32xbf16>, vector<6x32xf32> -> vector<6x32xf32>
    %c0_21 = arith.constant 0 : index
    %c0_22 = arith.constant 0 : index
    %c0_23 = arith.constant 0 : index
    %47 = vector.load %arg10[%c0_21, %c0_22, %c0_23] : memref<3x1x32xf32, #tpu.memory_space<vmem>>, vector<1x1x32xf32>
    %48 = vector.shape_cast %47 : vector<1x1x32xf32> to vector<1x32xf32>
    %49 = vector.broadcast %48 : vector<1x32xf32> to vector<6x32xf32>
    %50 = arith.addf %46, %49 : vector<6x32xf32>
    %c0_24 = arith.constant 0 : index
    %c0_25 = arith.constant 0 : index
    %c0_26 = arith.constant 0 : index
    %51 = vector.load %arg11[%c0_24, %c0_25, %c0_26] : memref<3x32x32xbf16, #tpu.memory_space<vmem>>, vector<1x32x32xbf16>
    %52 = vector.shape_cast %51 : vector<1x32x32xbf16> to vector<32x32xbf16>
    %53 = arith.truncf %30 : vector<6x32xf32> to vector<6x32xbf16>
    %cst_27 = arith.constant dense<0.000000e+00> : vector<6x32xf32>
    %54 = tpu.matmul %53, %52, %cst_27 {dimension_numbers = #tpu.dot_dimension_numbers<[1], [0], [0], [1], [0, 0, 1, 1], [], []>} : vector<6x32xbf16>, vector<32x32xbf16>, vector<6x32xf32> -> vector<6x32xf32>
    %c0_28 = arith.constant 0 : index
    %c0_29 = arith.constant 0 : index
    %c0_30 = arith.constant 0 : index
    %55 = vector.load %arg12[%c0_28, %c0_29, %c0_30] : memref<3x1x32xf32, #tpu.memory_space<vmem>>, vector<1x1x32xf32>
    %56 = vector.shape_cast %55 : vector<1x1x32xf32> to vector<1x32xf32>
    %57 = vector.broadcast %56 : vector<1x32xf32> to vector<6x32xf32>
    %58 = arith.addf %54, %57 : vector<6x32xf32>
    %59 = arith.truncf %50 : vector<6x32xf32> to vector<6x32xbf16>
    %cst_31 = arith.constant 0.000000e+00 : f32
    %60 = vector.broadcast %cst_31 : f32 to vector<6x32xf32>
    %61 = vector.broadcast %7 : vector<1x32xf32> to vector<6x32xf32>
    %62 = arith.mulf %42, %61 : vector<6x32xf32>
    %63 = arith.truncf %62 : vector<6x32xf32> to vector<6x32xbf16>
    %cst_32 = arith.constant dense<0.000000e+00> : vector<6x6xf32>
    %64 = tpu.matmul %63, %59, %cst_32 {dimension_numbers = #tpu.dot_dimension_numbers<[1], [1], [0], [0], [0, 0, 1, 0], [], []>} : vector<6x32xbf16>, vector<6x32xbf16>, vector<6x6xf32> -> vector<6x6xf32>
    %cst_33 = arith.constant 0.353553385 : f32
    %65 = vector.broadcast %cst_33 : f32 to vector<6x6xf32>
    %66 = arith.mulf %64, %65 : vector<6x6xf32>
    %cst_34 = arith.constant 0.000000e+00 : f32
    %67 = vector.broadcast %cst_34 : f32 to vector<1x6xf32>
    %68 = arith.cmpf ogt, %34, %67 : vector<1x6xf32>
    %cst_35 = arith.constant -1.000000e+30 : f32
    %69 = vector.shape_cast %68 : vector<1x6xi1> to vector<1x6xi1>
    %70 = vector.broadcast %69 : vector<1x6xi1> to vector<6x6xi1>
    %71 = vector.broadcast %cst_35 : f32 to vector<6x6xf32>
    %72 = arith.select %70, %66, %71 : vector<6x6xi1>, vector<6x6xf32>
    %cst_36 = arith.constant dense<0xFF800000> : vector<6xf32>
    %73 = vector.multi_reduction <maximumf>, %72, %cst_36 [1] : vector<6x6xf32> to vector<6xf32>
    %74 = vector.shape_cast %73 : vector<6xf32> to vector<6x1xf32>
    %75 = vector.broadcast %74 : vector<6x1xf32> to vector<6x6xf32>
    %76 = arith.subf %72, %75 : vector<6x6xf32>
    %77 = math.exp %76 : vector<6x6xf32>
    %cst_37 = arith.constant dense<0.000000e+00> : vector<6xf32>
    %78 = vector.multi_reduction <add>, %77, %cst_37 [1] : vector<6x6xf32> to vector<6xf32>
    %79 = vector.shape_cast %78 : vector<6xf32> to vector<6x1xf32>
    %80 = vector.broadcast %79 : vector<6x1xf32> to vector<6x6xf32>
    %81 = arith.divf %77, %80 : vector<6x6xf32>
    %82 = arith.truncf %81 : vector<6x6xf32> to vector<6x6xbf16>
    %83 = vector.broadcast %7 : vector<1x32xf32> to vector<6x32xf32>
    %84 = arith.mulf %58, %83 : vector<6x32xf32>
    %85 = arith.truncf %84 : vector<6x32xf32> to vector<6x32xbf16>
    %cst_38 = arith.constant dense<0.000000e+00> : vector<6x32xf32>
    %86 = tpu.matmul %82, %85, %cst_38 {dimension_numbers = #tpu.dot_dimension_numbers<[1], [0], [0], [1], [0, 0, 1, 1], [], []>} : vector<6x6xbf16>, vector<6x32xbf16>, vector<6x32xf32> -> vector<6x32xf32>
    %87 = arith.addf %60, %86 : vector<6x32xf32>
    %88 = vector.broadcast %14 : vector<1x32xf32> to vector<6x32xf32>
    %89 = arith.mulf %42, %88 : vector<6x32xf32>
    %90 = arith.truncf %89 : vector<6x32xf32> to vector<6x32xbf16>
    %cst_39 = arith.constant dense<0.000000e+00> : vector<6x6xf32>
    %91 = tpu.matmul %90, %59, %cst_39 {dimension_numbers = #tpu.dot_dimension_numbers<[1], [1], [0], [0], [0, 0, 1, 0], [], []>} : vector<6x32xbf16>, vector<6x32xbf16>, vector<6x6xf32> -> vector<6x6xf32>
    %cst_40 = arith.constant 0.353553385 : f32
    %92 = vector.broadcast %cst_40 : f32 to vector<6x6xf32>
    %93 = arith.mulf %91, %92 : vector<6x6xf32>
    %cst_41 = arith.constant 0.000000e+00 : f32
    %94 = vector.broadcast %cst_41 : f32 to vector<1x6xf32>
    %95 = arith.cmpf ogt, %34, %94 : vector<1x6xf32>
    %cst_42 = arith.constant -1.000000e+30 : f32
    %96 = vector.shape_cast %95 : vector<1x6xi1> to vector<1x6xi1>
    %97 = vector.broadcast %96 : vector<1x6xi1> to vector<6x6xi1>
    %98 = vector.broadcast %cst_42 : f32 to vector<6x6xf32>
    %99 = arith.select %97, %93, %98 : vector<6x6xi1>, vector<6x6xf32>
    %cst_43 = arith.constant dense<0xFF800000> : vector<6xf32>
    %100 = vector.multi_reduction <maximumf>, %99, %cst_43 [1] : vector<6x6xf32> to vector<6xf32>
    %101 = vector.shape_cast %100 : vector<6xf32> to vector<6x1xf32>
    %102 = vector.broadcast %101 : vector<6x1xf32> to vector<6x6xf32>
    %103 = arith.subf %99, %102 : vector<6x6xf32>
    %104 = math.exp %103 : vector<6x6xf32>
    %cst_44 = arith.constant dense<0.000000e+00> : vector<6xf32>
    %105 = vector.multi_reduction <add>, %104, %cst_44 [1] : vector<6x6xf32> to vector<6xf32>
    %106 = vector.shape_cast %105 : vector<6xf32> to vector<6x1xf32>
    %107 = vector.broadcast %106 : vector<6x1xf32> to vector<6x6xf32>
    %108 = arith.divf %104, %107 : vector<6x6xf32>
    %109 = arith.truncf %108 : vector<6x6xf32> to vector<6x6xbf16>
    %110 = vector.broadcast %14 : vector<1x32xf32> to vector<6x32xf32>
    %111 = arith.mulf %58, %110 : vector<6x32xf32>
    %112 = arith.truncf %111 : vector<6x32xf32> to vector<6x32xbf16>
    %cst_45 = arith.constant dense<0.000000e+00> : vector<6x32xf32>
    %113 = tpu.matmul %109, %112, %cst_45 {dimension_numbers = #tpu.dot_dimension_numbers<[1], [0], [0], [1], [0, 0, 1, 1], [], []>} : vector<6x6xbf16>, vector<6x32xbf16>, vector<6x32xf32> -> vector<6x32xf32>
    %114 = arith.addf %87, %113 : vector<6x32xf32>
    %115 = vector.broadcast %21 : vector<1x32xf32> to vector<6x32xf32>
    %116 = arith.mulf %42, %115 : vector<6x32xf32>
    %117 = arith.truncf %116 : vector<6x32xf32> to vector<6x32xbf16>
    %cst_46 = arith.constant dense<0.000000e+00> : vector<6x6xf32>
    %118 = tpu.matmul %117, %59, %cst_46 {dimension_numbers = #tpu.dot_dimension_numbers<[1], [1], [0], [0], [0, 0, 1, 0], [], []>} : vector<6x32xbf16>, vector<6x32xbf16>, vector<6x6xf32> -> vector<6x6xf32>
    %cst_47 = arith.constant 0.353553385 : f32
    %119 = vector.broadcast %cst_47 : f32 to vector<6x6xf32>
    %120 = arith.mulf %118, %119 : vector<6x6xf32>
    %cst_48 = arith.constant 0.000000e+00 : f32
    %121 = vector.broadcast %cst_48 : f32 to vector<1x6xf32>
    %122 = arith.cmpf ogt, %34, %121 : vector<1x6xf32>
    %cst_49 = arith.constant -1.000000e+30 : f32
    %123 = vector.shape_cast %122 : vector<1x6xi1> to vector<1x6xi1>
    %124 = vector.broadcast %123 : vector<1x6xi1> to vector<6x6xi1>
    %125 = vector.broadcast %cst_49 : f32 to vector<6x6xf32>
    %126 = arith.select %124, %120, %125 : vector<6x6xi1>, vector<6x6xf32>
    %cst_50 = arith.constant dense<0xFF800000> : vector<6xf32>
    %127 = vector.multi_reduction <maximumf>, %126, %cst_50 [1] : vector<6x6xf32> to vector<6xf32>
    %128 = vector.shape_cast %127 : vector<6xf32> to vector<6x1xf32>
    %129 = vector.broadcast %128 : vector<6x1xf32> to vector<6x6xf32>
    %130 = arith.subf %126, %129 : vector<6x6xf32>
    %131 = math.exp %130 : vector<6x6xf32>
    %cst_51 = arith.constant dense<0.000000e+00> : vector<6xf32>
    %132 = vector.multi_reduction <add>, %131, %cst_51 [1] : vector<6x6xf32> to vector<6xf32>
    %133 = vector.shape_cast %132 : vector<6xf32> to vector<6x1xf32>
    %134 = vector.broadcast %133 : vector<6x1xf32> to vector<6x6xf32>
    %135 = arith.divf %131, %134 : vector<6x6xf32>
    %136 = arith.truncf %135 : vector<6x6xf32> to vector<6x6xbf16>
    %137 = vector.broadcast %21 : vector<1x32xf32> to vector<6x32xf32>
    %138 = arith.mulf %58, %137 : vector<6x32xf32>
    %139 = arith.truncf %138 : vector<6x32xf32> to vector<6x32xbf16>
    %cst_52 = arith.constant dense<0.000000e+00> : vector<6x32xf32>
    %140 = tpu.matmul %136, %139, %cst_52 {dimension_numbers = #tpu.dot_dimension_numbers<[1], [0], [0], [1], [0, 0, 1, 1], [], []>} : vector<6x6xbf16>, vector<6x32xbf16>, vector<6x32xf32> -> vector<6x32xf32>
    %141 = arith.addf %114, %140 : vector<6x32xf32>
    %142 = vector.broadcast %28 : vector<1x32xf32> to vector<6x32xf32>
    %143 = arith.mulf %42, %142 : vector<6x32xf32>
    %144 = arith.truncf %143 : vector<6x32xf32> to vector<6x32xbf16>
    %cst_53 = arith.constant dense<0.000000e+00> : vector<6x6xf32>
    %145 = tpu.matmul %144, %59, %cst_53 {dimension_numbers = #tpu.dot_dimension_numbers<[1], [1], [0], [0], [0, 0, 1, 0], [], []>} : vector<6x32xbf16>, vector<6x32xbf16>, vector<6x6xf32> -> vector<6x6xf32>
    %cst_54 = arith.constant 0.353553385 : f32
    %146 = vector.broadcast %cst_54 : f32 to vector<6x6xf32>
    %147 = arith.mulf %145, %146 : vector<6x6xf32>
    %cst_55 = arith.constant 0.000000e+00 : f32
    %148 = vector.broadcast %cst_55 : f32 to vector<1x6xf32>
    %149 = arith.cmpf ogt, %34, %148 : vector<1x6xf32>
    %cst_56 = arith.constant -1.000000e+30 : f32
    %150 = vector.shape_cast %149 : vector<1x6xi1> to vector<1x6xi1>
    %151 = vector.broadcast %150 : vector<1x6xi1> to vector<6x6xi1>
    %152 = vector.broadcast %cst_56 : f32 to vector<6x6xf32>
    %153 = arith.select %151, %147, %152 : vector<6x6xi1>, vector<6x6xf32>
    %cst_57 = arith.constant dense<0xFF800000> : vector<6xf32>
    %154 = vector.multi_reduction <maximumf>, %153, %cst_57 [1] : vector<6x6xf32> to vector<6xf32>
    %155 = vector.shape_cast %154 : vector<6xf32> to vector<6x1xf32>
    %156 = vector.broadcast %155 : vector<6x1xf32> to vector<6x6xf32>
    %157 = arith.subf %153, %156 : vector<6x6xf32>
    %158 = math.exp %157 : vector<6x6xf32>
    %cst_58 = arith.constant dense<0.000000e+00> : vector<6xf32>
    %159 = vector.multi_reduction <add>, %158, %cst_58 [1] : vector<6x6xf32> to vector<6xf32>
    %160 = vector.shape_cast %159 : vector<6xf32> to vector<6x1xf32>
    %161 = vector.broadcast %160 : vector<6x1xf32> to vector<6x6xf32>
    %162 = arith.divf %158, %161 : vector<6x6xf32>
    %163 = arith.truncf %162 : vector<6x6xf32> to vector<6x6xbf16>
    %164 = vector.broadcast %28 : vector<1x32xf32> to vector<6x32xf32>
    %165 = arith.mulf %58, %164 : vector<6x32xf32>
    %166 = arith.truncf %165 : vector<6x32xf32> to vector<6x32xbf16>
    %cst_59 = arith.constant dense<0.000000e+00> : vector<6x32xf32>
    %167 = tpu.matmul %163, %166, %cst_59 {dimension_numbers = #tpu.dot_dimension_numbers<[1], [0], [0], [1], [0, 0, 1, 1], [], []>} : vector<6x6xbf16>, vector<6x32xbf16>, vector<6x32xf32> -> vector<6x32xf32>
    %168 = arith.addf %141, %167 : vector<6x32xf32>
    %c0_60 = arith.constant 0 : index
    %c0_61 = arith.constant 0 : index
    %c0_62 = arith.constant 0 : index
    %169 = vector.load %arg13[%c0_60, %c0_61, %c0_62] : memref<3x32x32xbf16, #tpu.memory_space<vmem>>, vector<1x32x32xbf16>
    %170 = vector.shape_cast %169 : vector<1x32x32xbf16> to vector<32x32xbf16>
    %171 = arith.truncf %168 : vector<6x32xf32> to vector<6x32xbf16>
    %cst_63 = arith.constant dense<0.000000e+00> : vector<6x32xf32>
    %172 = tpu.matmul %171, %170, %cst_63 {dimension_numbers = #tpu.dot_dimension_numbers<[1], [0], [0], [1], [0, 0, 1, 1], [], []>} : vector<6x32xbf16>, vector<32x32xbf16>, vector<6x32xf32> -> vector<6x32xf32>
    %c0_64 = arith.constant 0 : index
    %c0_65 = arith.constant 0 : index
    %c0_66 = arith.constant 0 : index
    %173 = vector.load %arg14[%c0_64, %c0_65, %c0_66] : memref<3x1x32xf32, #tpu.memory_space<vmem>>, vector<1x1x32xf32>
    %174 = vector.shape_cast %173 : vector<1x1x32xf32> to vector<1x32xf32>
    %175 = vector.broadcast %174 : vector<1x32xf32> to vector<6x32xf32>
    %176 = arith.addf %172, %175 : vector<6x32xf32>
    %177 = vector.broadcast %32 : vector<6x1xf32> to vector<6x32xf32>
    %178 = arith.mulf %176, %177 : vector<6x32xf32>
    %179 = arith.addf %178, %30 : vector<6x32xf32>
    %c0_67 = arith.constant 0 : index
    %c0_68 = arith.constant 0 : index
    %c0_69 = arith.constant 0 : index
    %180 = vector.load %arg15[%c0_67, %c0_68, %c0_69] : memref<3x32x32xbf16, #tpu.memory_space<vmem>>, vector<1x32x32xbf16>
    %181 = vector.shape_cast %180 : vector<1x32x32xbf16> to vector<32x32xbf16>
    %182 = arith.truncf %179 : vector<6x32xf32> to vector<6x32xbf16>
    %cst_70 = arith.constant dense<0.000000e+00> : vector<6x32xf32>
    %183 = tpu.matmul %182, %181, %cst_70 {dimension_numbers = #tpu.dot_dimension_numbers<[1], [0], [0], [1], [0, 0, 1, 1], [], []>} : vector<6x32xbf16>, vector<32x32xbf16>, vector<6x32xf32> -> vector<6x32xf32>
    %c0_71 = arith.constant 0 : index
    %c0_72 = arith.constant 0 : index
    %c0_73 = arith.constant 0 : index
    %184 = vector.load %arg16[%c0_71, %c0_72, %c0_73] : memref<3x1x32xf32, #tpu.memory_space<vmem>>, vector<1x1x32xf32>
    %185 = vector.shape_cast %184 : vector<1x1x32xf32> to vector<1x32xf32>
    %186 = vector.broadcast %185 : vector<1x32xf32> to vector<6x32xf32>
    %187 = arith.addf %183, %186 : vector<6x32xf32>
    %cst_74 = arith.constant 0.000000e+00 : f32
    %188 = vector.broadcast %cst_74 : f32 to vector<6x32xf32>
    %189 = arith.maximumf %187, %188 : vector<6x32xf32>
    %190 = arith.addf %179, %189 : vector<6x32xf32>
    %c0_75 = arith.constant 0 : index
    %c0_76 = arith.constant 0 : index
    %191 = vector.load %arg5[%c0_75, %c0_76] : memref<32x32xbf16, #tpu.memory_space<vmem>>, vector<32x32xbf16>
    %192 = arith.truncf %190 : vector<6x32xf32> to vector<6x32xbf16>
    %cst_77 = arith.constant dense<0.000000e+00> : vector<6x32xf32>
    %193 = tpu.matmul %192, %191, %cst_77 {dimension_numbers = #tpu.dot_dimension_numbers<[1], [0], [0], [1], [0, 0, 1, 1], [], []>} : vector<6x32xbf16>, vector<32x32xbf16>, vector<6x32xf32> -> vector<6x32xf32>
    %c0_78 = arith.constant 0 : index
    %c0_79 = arith.constant 0 : index
    %194 = vector.load %arg6[%c0_78, %c0_79] : memref<1x32xf32, #tpu.memory_space<vmem>>, vector<1x32xf32>
    %195 = vector.broadcast %194 : vector<1x32xf32> to vector<6x32xf32>
    %196 = arith.addf %193, %195 : vector<6x32xf32>
    %cst_80 = arith.constant 0.000000e+00 : f32
    %197 = vector.broadcast %cst_80 : f32 to vector<6x32xf32>
    %198 = arith.maximumf %196, %197 : vector<6x32xf32>
    %c0_81 = arith.constant 0 : index
    %c0_82 = arith.constant 0 : index
    %199 = vector.load %arg4[%c0_81, %c0_82] : memref<2x32xf32, #tpu.memory_space<vmem>>, vector<2x32xf32>
    %c1 = arith.constant 1 : index
    %c0_83 = arith.constant 0 : index
    %c0_84 = arith.constant 0 : index
    %200 = vector.load %arg7[%c1, %c0_83, %c0_84] : memref<3x32x32xbf16, #tpu.memory_space<vmem>>, vector<1x32x32xbf16>
    %201 = vector.shape_cast %200 : vector<1x32x32xbf16> to vector<32x32xbf16>
    %202 = arith.truncf %199 : vector<2x32xf32> to vector<2x32xbf16>
    %cst_85 = arith.constant dense<0.000000e+00> : vector<2x32xf32>
    %203 = tpu.matmul %202, %201, %cst_85 {dimension_numbers = #tpu.dot_dimension_numbers<[1], [0], [0], [1], [0, 0, 1, 1], [], []>} : vector<2x32xbf16>, vector<32x32xbf16>, vector<2x32xf32> -> vector<2x32xf32>
    %c1_86 = arith.constant 1 : index
    %c0_87 = arith.constant 0 : index
    %c0_88 = arith.constant 0 : index
    %204 = vector.load %arg8[%c1_86, %c0_87, %c0_88] : memref<3x1x32xf32, #tpu.memory_space<vmem>>, vector<1x1x32xf32>
    %205 = vector.shape_cast %204 : vector<1x1x32xf32> to vector<1x32xf32>
    %206 = vector.broadcast %205 : vector<1x32xf32> to vector<2x32xf32>
    %207 = arith.addf %203, %206 : vector<2x32xf32>
    %c1_89 = arith.constant 1 : index
    %c0_90 = arith.constant 0 : index
    %c0_91 = arith.constant 0 : index
    %208 = vector.load %arg9[%c1_89, %c0_90, %c0_91] : memref<3x32x32xbf16, #tpu.memory_space<vmem>>, vector<1x32x32xbf16>
    %209 = vector.shape_cast %208 : vector<1x32x32xbf16> to vector<32x32xbf16>
    %210 = arith.truncf %198 : vector<6x32xf32> to vector<6x32xbf16>
    %cst_92 = arith.constant dense<0.000000e+00> : vector<6x32xf32>
    %211 = tpu.matmul %210, %209, %cst_92 {dimension_numbers = #tpu.dot_dimension_numbers<[1], [0], [0], [1], [0, 0, 1, 1], [], []>} : vector<6x32xbf16>, vector<32x32xbf16>, vector<6x32xf32> -> vector<6x32xf32>
    %c1_93 = arith.constant 1 : index
    %c0_94 = arith.constant 0 : index
    %c0_95 = arith.constant 0 : index
    %212 = vector.load %arg10[%c1_93, %c0_94, %c0_95] : memref<3x1x32xf32, #tpu.memory_space<vmem>>, vector<1x1x32xf32>
    %213 = vector.shape_cast %212 : vector<1x1x32xf32> to vector<1x32xf32>
    %214 = vector.broadcast %213 : vector<1x32xf32> to vector<6x32xf32>
    %215 = arith.addf %211, %214 : vector<6x32xf32>
    %c1_96 = arith.constant 1 : index
    %c0_97 = arith.constant 0 : index
    %c0_98 = arith.constant 0 : index
    %216 = vector.load %arg11[%c1_96, %c0_97, %c0_98] : memref<3x32x32xbf16, #tpu.memory_space<vmem>>, vector<1x32x32xbf16>
    %217 = vector.shape_cast %216 : vector<1x32x32xbf16> to vector<32x32xbf16>
    %218 = arith.truncf %198 : vector<6x32xf32> to vector<6x32xbf16>
    %cst_99 = arith.constant dense<0.000000e+00> : vector<6x32xf32>
    %219 = tpu.matmul %218, %217, %cst_99 {dimension_numbers = #tpu.dot_dimension_numbers<[1], [0], [0], [1], [0, 0, 1, 1], [], []>} : vector<6x32xbf16>, vector<32x32xbf16>, vector<6x32xf32> -> vector<6x32xf32>
    %c1_100 = arith.constant 1 : index
    %c0_101 = arith.constant 0 : index
    %c0_102 = arith.constant 0 : index
    %220 = vector.load %arg12[%c1_100, %c0_101, %c0_102] : memref<3x1x32xf32, #tpu.memory_space<vmem>>, vector<1x1x32xf32>
    %221 = vector.shape_cast %220 : vector<1x1x32xf32> to vector<1x32xf32>
    %222 = vector.broadcast %221 : vector<1x32xf32> to vector<6x32xf32>
    %223 = arith.addf %219, %222 : vector<6x32xf32>
    %224 = arith.truncf %215 : vector<6x32xf32> to vector<6x32xbf16>
    %cst_103 = arith.constant 0.000000e+00 : f32
    %225 = vector.broadcast %cst_103 : f32 to vector<2x32xf32>
    %226 = vector.broadcast %7 : vector<1x32xf32> to vector<2x32xf32>
    %227 = arith.mulf %207, %226 : vector<2x32xf32>
    %228 = arith.truncf %227 : vector<2x32xf32> to vector<2x32xbf16>
    %cst_104 = arith.constant dense<0.000000e+00> : vector<2x6xf32>
    %229 = tpu.matmul %228, %224, %cst_104 {dimension_numbers = #tpu.dot_dimension_numbers<[1], [1], [0], [0], [0, 0, 1, 0], [], []>} : vector<2x32xbf16>, vector<6x32xbf16>, vector<2x6xf32> -> vector<2x6xf32>
    %cst_105 = arith.constant 0.353553385 : f32
    %230 = vector.broadcast %cst_105 : f32 to vector<2x6xf32>
    %231 = arith.mulf %229, %230 : vector<2x6xf32>
    %cst_106 = arith.constant 0.000000e+00 : f32
    %232 = vector.broadcast %cst_106 : f32 to vector<1x6xf32>
    %233 = arith.cmpf ogt, %34, %232 : vector<1x6xf32>
    %cst_107 = arith.constant -1.000000e+30 : f32
    %234 = vector.shape_cast %233 : vector<1x6xi1> to vector<1x6xi1>
    %235 = vector.broadcast %234 : vector<1x6xi1> to vector<2x6xi1>
    %236 = vector.broadcast %cst_107 : f32 to vector<2x6xf32>
    %237 = arith.select %235, %231, %236 : vector<2x6xi1>, vector<2x6xf32>
    %cst_108 = arith.constant dense<0xFF800000> : vector<2xf32>
    %238 = vector.multi_reduction <maximumf>, %237, %cst_108 [1] : vector<2x6xf32> to vector<2xf32>
    %239 = vector.shape_cast %238 : vector<2xf32> to vector<2x1xf32>
    %240 = vector.broadcast %239 : vector<2x1xf32> to vector<2x6xf32>
    %241 = arith.subf %237, %240 : vector<2x6xf32>
    %242 = math.exp %241 : vector<2x6xf32>
    %cst_109 = arith.constant dense<0.000000e+00> : vector<2xf32>
    %243 = vector.multi_reduction <add>, %242, %cst_109 [1] : vector<2x6xf32> to vector<2xf32>
    %244 = vector.shape_cast %243 : vector<2xf32> to vector<2x1xf32>
    %245 = vector.broadcast %244 : vector<2x1xf32> to vector<2x6xf32>
    %246 = arith.divf %242, %245 : vector<2x6xf32>
    %247 = arith.truncf %246 : vector<2x6xf32> to vector<2x6xbf16>
    %248 = vector.broadcast %7 : vector<1x32xf32> to vector<6x32xf32>
    %249 = arith.mulf %223, %248 : vector<6x32xf32>
    %250 = arith.truncf %249 : vector<6x32xf32> to vector<6x32xbf16>
    %cst_110 = arith.constant dense<0.000000e+00> : vector<2x32xf32>
    %251 = tpu.matmul %247, %250, %cst_110 {dimension_numbers = #tpu.dot_dimension_numbers<[1], [0], [0], [1], [0, 0, 1, 1], [], []>} : vector<2x6xbf16>, vector<6x32xbf16>, vector<2x32xf32> -> vector<2x32xf32>
    %252 = arith.addf %225, %251 : vector<2x32xf32>
    %253 = vector.broadcast %14 : vector<1x32xf32> to vector<2x32xf32>
    %254 = arith.mulf %207, %253 : vector<2x32xf32>
    %255 = arith.truncf %254 : vector<2x32xf32> to vector<2x32xbf16>
    %cst_111 = arith.constant dense<0.000000e+00> : vector<2x6xf32>
    %256 = tpu.matmul %255, %224, %cst_111 {dimension_numbers = #tpu.dot_dimension_numbers<[1], [1], [0], [0], [0, 0, 1, 0], [], []>} : vector<2x32xbf16>, vector<6x32xbf16>, vector<2x6xf32> -> vector<2x6xf32>
    %cst_112 = arith.constant 0.353553385 : f32
    %257 = vector.broadcast %cst_112 : f32 to vector<2x6xf32>
    %258 = arith.mulf %256, %257 : vector<2x6xf32>
    %cst_113 = arith.constant 0.000000e+00 : f32
    %259 = vector.broadcast %cst_113 : f32 to vector<1x6xf32>
    %260 = arith.cmpf ogt, %34, %259 : vector<1x6xf32>
    %cst_114 = arith.constant -1.000000e+30 : f32
    %261 = vector.shape_cast %260 : vector<1x6xi1> to vector<1x6xi1>
    %262 = vector.broadcast %261 : vector<1x6xi1> to vector<2x6xi1>
    %263 = vector.broadcast %cst_114 : f32 to vector<2x6xf32>
    %264 = arith.select %262, %258, %263 : vector<2x6xi1>, vector<2x6xf32>
    %cst_115 = arith.constant dense<0xFF800000> : vector<2xf32>
    %265 = vector.multi_reduction <maximumf>, %264, %cst_115 [1] : vector<2x6xf32> to vector<2xf32>
    %266 = vector.shape_cast %265 : vector<2xf32> to vector<2x1xf32>
    %267 = vector.broadcast %266 : vector<2x1xf32> to vector<2x6xf32>
    %268 = arith.subf %264, %267 : vector<2x6xf32>
    %269 = math.exp %268 : vector<2x6xf32>
    %cst_116 = arith.constant dense<0.000000e+00> : vector<2xf32>
    %270 = vector.multi_reduction <add>, %269, %cst_116 [1] : vector<2x6xf32> to vector<2xf32>
    %271 = vector.shape_cast %270 : vector<2xf32> to vector<2x1xf32>
    %272 = vector.broadcast %271 : vector<2x1xf32> to vector<2x6xf32>
    %273 = arith.divf %269, %272 : vector<2x6xf32>
    %274 = arith.truncf %273 : vector<2x6xf32> to vector<2x6xbf16>
    %275 = vector.broadcast %14 : vector<1x32xf32> to vector<6x32xf32>
    %276 = arith.mulf %223, %275 : vector<6x32xf32>
    %277 = arith.truncf %276 : vector<6x32xf32> to vector<6x32xbf16>
    %cst_117 = arith.constant dense<0.000000e+00> : vector<2x32xf32>
    %278 = tpu.matmul %274, %277, %cst_117 {dimension_numbers = #tpu.dot_dimension_numbers<[1], [0], [0], [1], [0, 0, 1, 1], [], []>} : vector<2x6xbf16>, vector<6x32xbf16>, vector<2x32xf32> -> vector<2x32xf32>
    %279 = arith.addf %252, %278 : vector<2x32xf32>
    %280 = vector.broadcast %21 : vector<1x32xf32> to vector<2x32xf32>
    %281 = arith.mulf %207, %280 : vector<2x32xf32>
    %282 = arith.truncf %281 : vector<2x32xf32> to vector<2x32xbf16>
    %cst_118 = arith.constant dense<0.000000e+00> : vector<2x6xf32>
    %283 = tpu.matmul %282, %224, %cst_118 {dimension_numbers = #tpu.dot_dimension_numbers<[1], [1], [0], [0], [0, 0, 1, 0], [], []>} : vector<2x32xbf16>, vector<6x32xbf16>, vector<2x6xf32> -> vector<2x6xf32>
    %cst_119 = arith.constant 0.353553385 : f32
    %284 = vector.broadcast %cst_119 : f32 to vector<2x6xf32>
    %285 = arith.mulf %283, %284 : vector<2x6xf32>
    %cst_120 = arith.constant 0.000000e+00 : f32
    %286 = vector.broadcast %cst_120 : f32 to vector<1x6xf32>
    %287 = arith.cmpf ogt, %34, %286 : vector<1x6xf32>
    %cst_121 = arith.constant -1.000000e+30 : f32
    %288 = vector.shape_cast %287 : vector<1x6xi1> to vector<1x6xi1>
    %289 = vector.broadcast %288 : vector<1x6xi1> to vector<2x6xi1>
    %290 = vector.broadcast %cst_121 : f32 to vector<2x6xf32>
    %291 = arith.select %289, %285, %290 : vector<2x6xi1>, vector<2x6xf32>
    %cst_122 = arith.constant dense<0xFF800000> : vector<2xf32>
    %292 = vector.multi_reduction <maximumf>, %291, %cst_122 [1] : vector<2x6xf32> to vector<2xf32>
    %293 = vector.shape_cast %292 : vector<2xf32> to vector<2x1xf32>
    %294 = vector.broadcast %293 : vector<2x1xf32> to vector<2x6xf32>
    %295 = arith.subf %291, %294 : vector<2x6xf32>
    %296 = math.exp %295 : vector<2x6xf32>
    %cst_123 = arith.constant dense<0.000000e+00> : vector<2xf32>
    %297 = vector.multi_reduction <add>, %296, %cst_123 [1] : vector<2x6xf32> to vector<2xf32>
    %298 = vector.shape_cast %297 : vector<2xf32> to vector<2x1xf32>
    %299 = vector.broadcast %298 : vector<2x1xf32> to vector<2x6xf32>
    %300 = arith.divf %296, %299 : vector<2x6xf32>
    %301 = arith.truncf %300 : vector<2x6xf32> to vector<2x6xbf16>
    %302 = vector.broadcast %21 : vector<1x32xf32> to vector<6x32xf32>
    %303 = arith.mulf %223, %302 : vector<6x32xf32>
    %304 = arith.truncf %303 : vector<6x32xf32> to vector<6x32xbf16>
    %cst_124 = arith.constant dense<0.000000e+00> : vector<2x32xf32>
    %305 = tpu.matmul %301, %304, %cst_124 {dimension_numbers = #tpu.dot_dimension_numbers<[1], [0], [0], [1], [0, 0, 1, 1], [], []>} : vector<2x6xbf16>, vector<6x32xbf16>, vector<2x32xf32> -> vector<2x32xf32>
    %306 = arith.addf %279, %305 : vector<2x32xf32>
    %307 = vector.broadcast %28 : vector<1x32xf32> to vector<2x32xf32>
    %308 = arith.mulf %207, %307 : vector<2x32xf32>
    %309 = arith.truncf %308 : vector<2x32xf32> to vector<2x32xbf16>
    %cst_125 = arith.constant dense<0.000000e+00> : vector<2x6xf32>
    %310 = tpu.matmul %309, %224, %cst_125 {dimension_numbers = #tpu.dot_dimension_numbers<[1], [1], [0], [0], [0, 0, 1, 0], [], []>} : vector<2x32xbf16>, vector<6x32xbf16>, vector<2x6xf32> -> vector<2x6xf32>
    %cst_126 = arith.constant 0.353553385 : f32
    %311 = vector.broadcast %cst_126 : f32 to vector<2x6xf32>
    %312 = arith.mulf %310, %311 : vector<2x6xf32>
    %cst_127 = arith.constant 0.000000e+00 : f32
    %313 = vector.broadcast %cst_127 : f32 to vector<1x6xf32>
    %314 = arith.cmpf ogt, %34, %313 : vector<1x6xf32>
    %cst_128 = arith.constant -1.000000e+30 : f32
    %315 = vector.shape_cast %314 : vector<1x6xi1> to vector<1x6xi1>
    %316 = vector.broadcast %315 : vector<1x6xi1> to vector<2x6xi1>
    %317 = vector.broadcast %cst_128 : f32 to vector<2x6xf32>
    %318 = arith.select %316, %312, %317 : vector<2x6xi1>, vector<2x6xf32>
    %cst_129 = arith.constant dense<0xFF800000> : vector<2xf32>
    %319 = vector.multi_reduction <maximumf>, %318, %cst_129 [1] : vector<2x6xf32> to vector<2xf32>
    %320 = vector.shape_cast %319 : vector<2xf32> to vector<2x1xf32>
    %321 = vector.broadcast %320 : vector<2x1xf32> to vector<2x6xf32>
    %322 = arith.subf %318, %321 : vector<2x6xf32>
    %323 = math.exp %322 : vector<2x6xf32>
    %cst_130 = arith.constant dense<0.000000e+00> : vector<2xf32>
    %324 = vector.multi_reduction <add>, %323, %cst_130 [1] : vector<2x6xf32> to vector<2xf32>
    %325 = vector.shape_cast %324 : vector<2xf32> to vector<2x1xf32>
    %326 = vector.broadcast %325 : vector<2x1xf32> to vector<2x6xf32>
    %327 = arith.divf %323, %326 : vector<2x6xf32>
    %328 = arith.truncf %327 : vector<2x6xf32> to vector<2x6xbf16>
    %329 = vector.broadcast %28 : vector<1x32xf32> to vector<6x32xf32>
    %330 = arith.mulf %223, %329 : vector<6x32xf32>
    %331 = arith.truncf %330 : vector<6x32xf32> to vector<6x32xbf16>
    %cst_131 = arith.constant dense<0.000000e+00> : vector<2x32xf32>
    %332 = tpu.matmul %328, %331, %cst_131 {dimension_numbers = #tpu.dot_dimension_numbers<[1], [0], [0], [1], [0, 0, 1, 1], [], []>} : vector<2x6xbf16>, vector<6x32xbf16>, vector<2x32xf32> -> vector<2x32xf32>
    %333 = arith.addf %306, %332 : vector<2x32xf32>
    %c1_132 = arith.constant 1 : index
    %c0_133 = arith.constant 0 : index
    %c0_134 = arith.constant 0 : index
    %334 = vector.load %arg13[%c1_132, %c0_133, %c0_134] : memref<3x32x32xbf16, #tpu.memory_space<vmem>>, vector<1x32x32xbf16>
    %335 = vector.shape_cast %334 : vector<1x32x32xbf16> to vector<32x32xbf16>
    %336 = arith.truncf %333 : vector<2x32xf32> to vector<2x32xbf16>
    %cst_135 = arith.constant dense<0.000000e+00> : vector<2x32xf32>
    %337 = tpu.matmul %336, %335, %cst_135 {dimension_numbers = #tpu.dot_dimension_numbers<[1], [0], [0], [1], [0, 0, 1, 1], [], []>} : vector<2x32xbf16>, vector<32x32xbf16>, vector<2x32xf32> -> vector<2x32xf32>
    %c1_136 = arith.constant 1 : index
    %c0_137 = arith.constant 0 : index
    %c0_138 = arith.constant 0 : index
    %338 = vector.load %arg14[%c1_136, %c0_137, %c0_138] : memref<3x1x32xf32, #tpu.memory_space<vmem>>, vector<1x1x32xf32>
    %339 = vector.shape_cast %338 : vector<1x1x32xf32> to vector<1x32xf32>
    %340 = vector.broadcast %339 : vector<1x32xf32> to vector<2x32xf32>
    %341 = arith.addf %337, %340 : vector<2x32xf32>
    %342 = arith.addf %341, %199 : vector<2x32xf32>
    %c1_139 = arith.constant 1 : index
    %c0_140 = arith.constant 0 : index
    %c0_141 = arith.constant 0 : index
    %343 = vector.load %arg15[%c1_139, %c0_140, %c0_141] : memref<3x32x32xbf16, #tpu.memory_space<vmem>>, vector<1x32x32xbf16>
    %344 = vector.shape_cast %343 : vector<1x32x32xbf16> to vector<32x32xbf16>
    %345 = arith.truncf %342 : vector<2x32xf32> to vector<2x32xbf16>
    %cst_142 = arith.constant dense<0.000000e+00> : vector<2x32xf32>
    %346 = tpu.matmul %345, %344, %cst_142 {dimension_numbers = #tpu.dot_dimension_numbers<[1], [0], [0], [1], [0, 0, 1, 1], [], []>} : vector<2x32xbf16>, vector<32x32xbf16>, vector<2x32xf32> -> vector<2x32xf32>
    %c1_143 = arith.constant 1 : index
    %c0_144 = arith.constant 0 : index
    %c0_145 = arith.constant 0 : index
    %347 = vector.load %arg16[%c1_143, %c0_144, %c0_145] : memref<3x1x32xf32, #tpu.memory_space<vmem>>, vector<1x1x32xf32>
    %348 = vector.shape_cast %347 : vector<1x1x32xf32> to vector<1x32xf32>
    %349 = vector.broadcast %348 : vector<1x32xf32> to vector<2x32xf32>
    %350 = arith.addf %346, %349 : vector<2x32xf32>
    %cst_146 = arith.constant 0.000000e+00 : f32
    %351 = vector.broadcast %cst_146 : f32 to vector<2x32xf32>
    %352 = arith.maximumf %350, %351 : vector<2x32xf32>
    %353 = arith.addf %342, %352 : vector<2x32xf32>
    %c2 = arith.constant 2 : index
    %c0_147 = arith.constant 0 : index
    %c0_148 = arith.constant 0 : index
    %354 = vector.load %arg7[%c2, %c0_147, %c0_148] : memref<3x32x32xbf16, #tpu.memory_space<vmem>>, vector<1x32x32xbf16>
    %355 = vector.shape_cast %354 : vector<1x32x32xbf16> to vector<32x32xbf16>
    %356 = arith.truncf %353 : vector<2x32xf32> to vector<2x32xbf16>
    %cst_149 = arith.constant dense<0.000000e+00> : vector<2x32xf32>
    %357 = tpu.matmul %356, %355, %cst_149 {dimension_numbers = #tpu.dot_dimension_numbers<[1], [0], [0], [1], [0, 0, 1, 1], [], []>} : vector<2x32xbf16>, vector<32x32xbf16>, vector<2x32xf32> -> vector<2x32xf32>
    %c2_150 = arith.constant 2 : index
    %c0_151 = arith.constant 0 : index
    %c0_152 = arith.constant 0 : index
    %358 = vector.load %arg8[%c2_150, %c0_151, %c0_152] : memref<3x1x32xf32, #tpu.memory_space<vmem>>, vector<1x1x32xf32>
    %359 = vector.shape_cast %358 : vector<1x1x32xf32> to vector<1x32xf32>
    %360 = vector.broadcast %359 : vector<1x32xf32> to vector<2x32xf32>
    %361 = arith.addf %357, %360 : vector<2x32xf32>
    %c2_153 = arith.constant 2 : index
    %c0_154 = arith.constant 0 : index
    %c0_155 = arith.constant 0 : index
    %362 = vector.load %arg9[%c2_153, %c0_154, %c0_155] : memref<3x32x32xbf16, #tpu.memory_space<vmem>>, vector<1x32x32xbf16>
    %363 = vector.shape_cast %362 : vector<1x32x32xbf16> to vector<32x32xbf16>
    %364 = arith.truncf %353 : vector<2x32xf32> to vector<2x32xbf16>
    %cst_156 = arith.constant dense<0.000000e+00> : vector<2x32xf32>
    %365 = tpu.matmul %364, %363, %cst_156 {dimension_numbers = #tpu.dot_dimension_numbers<[1], [0], [0], [1], [0, 0, 1, 1], [], []>} : vector<2x32xbf16>, vector<32x32xbf16>, vector<2x32xf32> -> vector<2x32xf32>
    %c2_157 = arith.constant 2 : index
    %c0_158 = arith.constant 0 : index
    %c0_159 = arith.constant 0 : index
    %366 = vector.load %arg10[%c2_157, %c0_158, %c0_159] : memref<3x1x32xf32, #tpu.memory_space<vmem>>, vector<1x1x32xf32>
    %367 = vector.shape_cast %366 : vector<1x1x32xf32> to vector<1x32xf32>
    %368 = vector.broadcast %367 : vector<1x32xf32> to vector<2x32xf32>
    %369 = arith.addf %365, %368 : vector<2x32xf32>
    %c2_160 = arith.constant 2 : index
    %c0_161 = arith.constant 0 : index
    %c0_162 = arith.constant 0 : index
    %370 = vector.load %arg11[%c2_160, %c0_161, %c0_162] : memref<3x32x32xbf16, #tpu.memory_space<vmem>>, vector<1x32x32xbf16>
    %371 = vector.shape_cast %370 : vector<1x32x32xbf16> to vector<32x32xbf16>
    %372 = arith.truncf %353 : vector<2x32xf32> to vector<2x32xbf16>
    %cst_163 = arith.constant dense<0.000000e+00> : vector<2x32xf32>
    %373 = tpu.matmul %372, %371, %cst_163 {dimension_numbers = #tpu.dot_dimension_numbers<[1], [0], [0], [1], [0, 0, 1, 1], [], []>} : vector<2x32xbf16>, vector<32x32xbf16>, vector<2x32xf32> -> vector<2x32xf32>
    %c2_164 = arith.constant 2 : index
    %c0_165 = arith.constant 0 : index
    %c0_166 = arith.constant 0 : index
    %374 = vector.load %arg12[%c2_164, %c0_165, %c0_166] : memref<3x1x32xf32, #tpu.memory_space<vmem>>, vector<1x1x32xf32>
    %375 = vector.shape_cast %374 : vector<1x1x32xf32> to vector<1x32xf32>
    %376 = vector.broadcast %375 : vector<1x32xf32> to vector<2x32xf32>
    %377 = arith.addf %373, %376 : vector<2x32xf32>
    %378 = arith.truncf %369 : vector<2x32xf32> to vector<2x32xbf16>
    %cst_167 = arith.constant 0.000000e+00 : f32
    %379 = vector.broadcast %cst_167 : f32 to vector<2x32xf32>
    %380 = vector.broadcast %7 : vector<1x32xf32> to vector<2x32xf32>
    %381 = arith.mulf %361, %380 : vector<2x32xf32>
    %382 = arith.truncf %381 : vector<2x32xf32> to vector<2x32xbf16>
    %cst_168 = arith.constant dense<0.000000e+00> : vector<2x2xf32>
    %383 = tpu.matmul %382, %378, %cst_168 {dimension_numbers = #tpu.dot_dimension_numbers<[1], [1], [0], [0], [0, 0, 1, 0], [], []>} : vector<2x32xbf16>, vector<2x32xbf16>, vector<2x2xf32> -> vector<2x2xf32>
    %cst_169 = arith.constant 0.353553385 : f32
    %384 = vector.broadcast %cst_169 : f32 to vector<2x2xf32>
    %385 = arith.mulf %383, %384 : vector<2x2xf32>
    %cst_170 = arith.constant dense<0xFF800000> : vector<2xf32>
    %386 = vector.multi_reduction <maximumf>, %385, %cst_170 [1] : vector<2x2xf32> to vector<2xf32>
    %387 = vector.shape_cast %386 : vector<2xf32> to vector<2x1xf32>
    %388 = vector.broadcast %387 : vector<2x1xf32> to vector<2x2xf32>
    %389 = arith.subf %385, %388 : vector<2x2xf32>
    %390 = math.exp %389 : vector<2x2xf32>
    %cst_171 = arith.constant dense<0.000000e+00> : vector<2xf32>
    %391 = vector.multi_reduction <add>, %390, %cst_171 [1] : vector<2x2xf32> to vector<2xf32>
    %392 = vector.shape_cast %391 : vector<2xf32> to vector<2x1xf32>
    %393 = vector.broadcast %392 : vector<2x1xf32> to vector<2x2xf32>
    %394 = arith.divf %390, %393 : vector<2x2xf32>
    %395 = arith.truncf %394 : vector<2x2xf32> to vector<2x2xbf16>
    %396 = vector.broadcast %7 : vector<1x32xf32> to vector<2x32xf32>
    %397 = arith.mulf %377, %396 : vector<2x32xf32>
    %398 = arith.truncf %397 : vector<2x32xf32> to vector<2x32xbf16>
    %cst_172 = arith.constant dense<0.000000e+00> : vector<2x32xf32>
    %399 = tpu.matmul %395, %398, %cst_172 {dimension_numbers = #tpu.dot_dimension_numbers<[1], [0], [0], [1], [0, 0, 1, 1], [], []>} : vector<2x2xbf16>, vector<2x32xbf16>, vector<2x32xf32> -> vector<2x32xf32>
    %400 = arith.addf %379, %399 : vector<2x32xf32>
    %401 = vector.broadcast %14 : vector<1x32xf32> to vector<2x32xf32>
    %402 = arith.mulf %361, %401 : vector<2x32xf32>
    %403 = arith.truncf %402 : vector<2x32xf32> to vector<2x32xbf16>
    %cst_173 = arith.constant dense<0.000000e+00> : vector<2x2xf32>
    %404 = tpu.matmul %403, %378, %cst_173 {dimension_numbers = #tpu.dot_dimension_numbers<[1], [1], [0], [0], [0, 0, 1, 0], [], []>} : vector<2x32xbf16>, vector<2x32xbf16>, vector<2x2xf32> -> vector<2x2xf32>
    %cst_174 = arith.constant 0.353553385 : f32
    %405 = vector.broadcast %cst_174 : f32 to vector<2x2xf32>
    %406 = arith.mulf %404, %405 : vector<2x2xf32>
    %cst_175 = arith.constant dense<0xFF800000> : vector<2xf32>
    %407 = vector.multi_reduction <maximumf>, %406, %cst_175 [1] : vector<2x2xf32> to vector<2xf32>
    %408 = vector.shape_cast %407 : vector<2xf32> to vector<2x1xf32>
    %409 = vector.broadcast %408 : vector<2x1xf32> to vector<2x2xf32>
    %410 = arith.subf %406, %409 : vector<2x2xf32>
    %411 = math.exp %410 : vector<2x2xf32>
    %cst_176 = arith.constant dense<0.000000e+00> : vector<2xf32>
    %412 = vector.multi_reduction <add>, %411, %cst_176 [1] : vector<2x2xf32> to vector<2xf32>
    %413 = vector.shape_cast %412 : vector<2xf32> to vector<2x1xf32>
    %414 = vector.broadcast %413 : vector<2x1xf32> to vector<2x2xf32>
    %415 = arith.divf %411, %414 : vector<2x2xf32>
    %416 = arith.truncf %415 : vector<2x2xf32> to vector<2x2xbf16>
    %417 = vector.broadcast %14 : vector<1x32xf32> to vector<2x32xf32>
    %418 = arith.mulf %377, %417 : vector<2x32xf32>
    %419 = arith.truncf %418 : vector<2x32xf32> to vector<2x32xbf16>
    %cst_177 = arith.constant dense<0.000000e+00> : vector<2x32xf32>
    %420 = tpu.matmul %416, %419, %cst_177 {dimension_numbers = #tpu.dot_dimension_numbers<[1], [0], [0], [1], [0, 0, 1, 1], [], []>} : vector<2x2xbf16>, vector<2x32xbf16>, vector<2x32xf32> -> vector<2x32xf32>
    %421 = arith.addf %400, %420 : vector<2x32xf32>
    %422 = vector.broadcast %21 : vector<1x32xf32> to vector<2x32xf32>
    %423 = arith.mulf %361, %422 : vector<2x32xf32>
    %424 = arith.truncf %423 : vector<2x32xf32> to vector<2x32xbf16>
    %cst_178 = arith.constant dense<0.000000e+00> : vector<2x2xf32>
    %425 = tpu.matmul %424, %378, %cst_178 {dimension_numbers = #tpu.dot_dimension_numbers<[1], [1], [0], [0], [0, 0, 1, 0], [], []>} : vector<2x32xbf16>, vector<2x32xbf16>, vector<2x2xf32> -> vector<2x2xf32>
    %cst_179 = arith.constant 0.353553385 : f32
    %426 = vector.broadcast %cst_179 : f32 to vector<2x2xf32>
    %427 = arith.mulf %425, %426 : vector<2x2xf32>
    %cst_180 = arith.constant dense<0xFF800000> : vector<2xf32>
    %428 = vector.multi_reduction <maximumf>, %427, %cst_180 [1] : vector<2x2xf32> to vector<2xf32>
    %429 = vector.shape_cast %428 : vector<2xf32> to vector<2x1xf32>
    %430 = vector.broadcast %429 : vector<2x1xf32> to vector<2x2xf32>
    %431 = arith.subf %427, %430 : vector<2x2xf32>
    %432 = math.exp %431 : vector<2x2xf32>
    %cst_181 = arith.constant dense<0.000000e+00> : vector<2xf32>
    %433 = vector.multi_reduction <add>, %432, %cst_181 [1] : vector<2x2xf32> to vector<2xf32>
    %434 = vector.shape_cast %433 : vector<2xf32> to vector<2x1xf32>
    %435 = vector.broadcast %434 : vector<2x1xf32> to vector<2x2xf32>
    %436 = arith.divf %432, %435 : vector<2x2xf32>
    %437 = arith.truncf %436 : vector<2x2xf32> to vector<2x2xbf16>
    %438 = vector.broadcast %21 : vector<1x32xf32> to vector<2x32xf32>
    %439 = arith.mulf %377, %438 : vector<2x32xf32>
    %440 = arith.truncf %439 : vector<2x32xf32> to vector<2x32xbf16>
    %cst_182 = arith.constant dense<0.000000e+00> : vector<2x32xf32>
    %441 = tpu.matmul %437, %440, %cst_182 {dimension_numbers = #tpu.dot_dimension_numbers<[1], [0], [0], [1], [0, 0, 1, 1], [], []>} : vector<2x2xbf16>, vector<2x32xbf16>, vector<2x32xf32> -> vector<2x32xf32>
    %442 = arith.addf %421, %441 : vector<2x32xf32>
    %443 = vector.broadcast %28 : vector<1x32xf32> to vector<2x32xf32>
    %444 = arith.mulf %361, %443 : vector<2x32xf32>
    %445 = arith.truncf %444 : vector<2x32xf32> to vector<2x32xbf16>
    %cst_183 = arith.constant dense<0.000000e+00> : vector<2x2xf32>
    %446 = tpu.matmul %445, %378, %cst_183 {dimension_numbers = #tpu.dot_dimension_numbers<[1], [1], [0], [0], [0, 0, 1, 0], [], []>} : vector<2x32xbf16>, vector<2x32xbf16>, vector<2x2xf32> -> vector<2x2xf32>
    %cst_184 = arith.constant 0.353553385 : f32
    %447 = vector.broadcast %cst_184 : f32 to vector<2x2xf32>
    %448 = arith.mulf %446, %447 : vector<2x2xf32>
    %cst_185 = arith.constant dense<0xFF800000> : vector<2xf32>
    %449 = vector.multi_reduction <maximumf>, %448, %cst_185 [1] : vector<2x2xf32> to vector<2xf32>
    %450 = vector.shape_cast %449 : vector<2xf32> to vector<2x1xf32>
    %451 = vector.broadcast %450 : vector<2x1xf32> to vector<2x2xf32>
    %452 = arith.subf %448, %451 : vector<2x2xf32>
    %453 = math.exp %452 : vector<2x2xf32>
    %cst_186 = arith.constant dense<0.000000e+00> : vector<2xf32>
    %454 = vector.multi_reduction <add>, %453, %cst_186 [1] : vector<2x2xf32> to vector<2xf32>
    %455 = vector.shape_cast %454 : vector<2xf32> to vector<2x1xf32>
    %456 = vector.broadcast %455 : vector<2x1xf32> to vector<2x2xf32>
    %457 = arith.divf %453, %456 : vector<2x2xf32>
    %458 = arith.truncf %457 : vector<2x2xf32> to vector<2x2xbf16>
    %459 = vector.broadcast %28 : vector<1x32xf32> to vector<2x32xf32>
    %460 = arith.mulf %377, %459 : vector<2x32xf32>
    %461 = arith.truncf %460 : vector<2x32xf32> to vector<2x32xbf16>
    %cst_187 = arith.constant dense<0.000000e+00> : vector<2x32xf32>
    %462 = tpu.matmul %458, %461, %cst_187 {dimension_numbers = #tpu.dot_dimension_numbers<[1], [0], [0], [1], [0, 0, 1, 1], [], []>} : vector<2x2xbf16>, vector<2x32xbf16>, vector<2x32xf32> -> vector<2x32xf32>
    %463 = arith.addf %442, %462 : vector<2x32xf32>
    %c2_188 = arith.constant 2 : index
    %c0_189 = arith.constant 0 : index
    %c0_190 = arith.constant 0 : index
    %464 = vector.load %arg13[%c2_188, %c0_189, %c0_190] : memref<3x32x32xbf16, #tpu.memory_space<vmem>>, vector<1x32x32xbf16>
    %465 = vector.shape_cast %464 : vector<1x32x32xbf16> to vector<32x32xbf16>
    %466 = arith.truncf %463 : vector<2x32xf32> to vector<2x32xbf16>
    %cst_191 = arith.constant dense<0.000000e+00> : vector<2x32xf32>
    %467 = tpu.matmul %466, %465, %cst_191 {dimension_numbers = #tpu.dot_dimension_numbers<[1], [0], [0], [1], [0, 0, 1, 1], [], []>} : vector<2x32xbf16>, vector<32x32xbf16>, vector<2x32xf32> -> vector<2x32xf32>
    %c2_192 = arith.constant 2 : index
    %c0_193 = arith.constant 0 : index
    %c0_194 = arith.constant 0 : index
    %468 = vector.load %arg14[%c2_192, %c0_193, %c0_194] : memref<3x1x32xf32, #tpu.memory_space<vmem>>, vector<1x1x32xf32>
    %469 = vector.shape_cast %468 : vector<1x1x32xf32> to vector<1x32xf32>
    %470 = vector.broadcast %469 : vector<1x32xf32> to vector<2x32xf32>
    %471 = arith.addf %467, %470 : vector<2x32xf32>
    %472 = arith.addf %471, %353 : vector<2x32xf32>
    %c2_195 = arith.constant 2 : index
    %c0_196 = arith.constant 0 : index
    %c0_197 = arith.constant 0 : index
    %473 = vector.load %arg15[%c2_195, %c0_196, %c0_197] : memref<3x32x32xbf16, #tpu.memory_space<vmem>>, vector<1x32x32xbf16>
    %474 = vector.shape_cast %473 : vector<1x32x32xbf16> to vector<32x32xbf16>
    %475 = arith.truncf %472 : vector<2x32xf32> to vector<2x32xbf16>
    %cst_198 = arith.constant dense<0.000000e+00> : vector<2x32xf32>
    %476 = tpu.matmul %475, %474, %cst_198 {dimension_numbers = #tpu.dot_dimension_numbers<[1], [0], [0], [1], [0, 0, 1, 1], [], []>} : vector<2x32xbf16>, vector<32x32xbf16>, vector<2x32xf32> -> vector<2x32xf32>
    %c2_199 = arith.constant 2 : index
    %c0_200 = arith.constant 0 : index
    %c0_201 = arith.constant 0 : index
    %477 = vector.load %arg16[%c2_199, %c0_200, %c0_201] : memref<3x1x32xf32, #tpu.memory_space<vmem>>, vector<1x1x32xf32>
    %478 = vector.shape_cast %477 : vector<1x1x32xf32> to vector<1x32xf32>
    %479 = vector.broadcast %478 : vector<1x32xf32> to vector<2x32xf32>
    %480 = arith.addf %476, %479 : vector<2x32xf32>
    %cst_202 = arith.constant 0.000000e+00 : f32
    %481 = vector.broadcast %cst_202 : f32 to vector<2x32xf32>
    %482 = arith.maximumf %480, %481 : vector<2x32xf32>
    %483 = arith.addf %472, %482 : vector<2x32xf32>
    %c0_203 = arith.constant 0 : index
    %c0_204 = arith.constant 0 : index
    %c0_205 = arith.constant 0 : index
    %484 = vector.load %arg17[%c0_203, %c0_204, %c0_205] : memref<1x2x32xf32, #tpu.memory_space<vmem>>, vector<1x2x32xf32>
    %485 = vector.shape_cast %484 : vector<1x2x32xf32> to vector<2x32xf32>
    %486 = vector.shape_cast %483 : vector<2x32xf32> to vector<1x2x32xf32>
    tpu.vector_store %arg17[%c0_203, %c0_204, %c0_205], %486 {strides = array<i32>} : memref<1x2x32xf32, #tpu.memory_space<vmem>>, vector<1x2x32xf32>,
    return
  }
  func.func @transform_0(%arg0: i32) -> (i32, i32, i32) {
    %c0_i32 = arith.constant 0 : i32
    %c0_i32_0 = arith.constant 0 : i32
    %c0_i32_1 = arith.constant 0 : i32
    return %arg0, %c0_i32, %c0_i32_0 : i32, i32, i32
  }
  func.func @transform_1(%arg0: i32) -> (i32, i32, i32) {
    %c0_i32 = arith.constant 0 : i32
    %c0_i32_0 = arith.constant 0 : i32
    %c0_i32_1 = arith.constant 0 : i32
    return %arg0, %c0_i32, %c0_i32_0 : i32, i32, i32
  }
  func.func @transform_2(%arg0: i32) -> (i32, i32, i32) {
    %c0_i32 = arith.constant 0 : i32
    %c0_i32_0 = arith.constant 0 : i32
    %c0_i32_1 = arith.constant 0 : i32
    return %arg0, %c0_i32, %c0_i32_0 : i32, i32, i32
  }
  func.func @transform_3(%arg0: i32) -> (i32, i32) {
    %c0_i32 = arith.constant 0 : i32
    %c0_i32_0 = arith.constant 0 : i32
    %c0_i32_1 = arith.constant 0 : i32
    return %c0_i32, %c0_i32_0 : i32, i32
  }
  func.func @transform_4(%arg0: i32) -> (i32, i32) {
    %c0_i32 = arith.constant 0 : i32
    %c0_i32_0 = arith.constant 0 : i32
    %c0_i32_1 = arith.constant 0 : i32
    return %c0_i32, %c0_i32_0 : i32, i32
  }
  func.func @transform_5(%arg0: i32) -> (i32, i32) {
    %c0_i32 = arith.constant 0 : i32
    %c0_i32_0 = arith.constant 0 : i32
    %c0_i32_1 = arith.constant 0 : i32
    return %c0_i32, %c0_i32_0 : i32, i32
  }
  func.func @transform_6(%arg0: i32) -> (i32, i32, i32) {
    %c0_i32 = arith.constant 0 : i32
    %c0_i32_0 = arith.constant 0 : i32
    %c0_i32_1 = arith.constant 0 : i32
    %c0_i32_2 = arith.constant 0 : i32
    return %c0_i32, %c0_i32_0, %c0_i32_1 : i32, i32, i32
  }
  func.func @transform_7(%arg0: i32) -> (i32, i32, i32) {
    %c0_i32 = arith.constant 0 : i32
    %c0_i32_0 = arith.constant 0 : i32
    %c0_i32_1 = arith.constant 0 : i32
    %c0_i32_2 = arith.constant 0 : i32
    return %c0_i32, %c0_i32_0, %c0_i32_1 : i32, i32, i32
  }
  func.func @transform_8(%arg0: i32) -> (i32, i32, i32) {
    %c0_i32 = arith.constant 0 : i32
    %c0_i32_0 = arith.constant 0 : i32
    %c0_i32_1 = arith.constant 0 : i32
    %c0_i32_2 = arith.constant 0 : i32
    return %c0_i32, %c0_i32_0, %c0_i32_1 : i32, i32, i32
  }
  func.func @transform_9(%arg0: i32) -> (i32, i32, i32) {
    %c0_i32 = arith.constant 0 : i32
    %c0_i32_0 = arith.constant 0 : i32
    %c0_i32_1 = arith.constant 0 : i32
    %c0_i32_2 = arith.constant 0 : i32
    return %c0_i32, %c0_i32_0, %c0_i32_1 : i32, i32, i32
  }
  func.func @transform_10(%arg0: i32) -> (i32, i32, i32) {
    %c0_i32 = arith.constant 0 : i32
    %c0_i32_0 = arith.constant 0 : i32
    %c0_i32_1 = arith.constant 0 : i32
    %c0_i32_2 = arith.constant 0 : i32
    return %c0_i32, %c0_i32_0, %c0_i32_1 : i32, i32, i32
  }
  func.func @transform_11(%arg0: i32) -> (i32, i32, i32) {
    %c0_i32 = arith.constant 0 : i32
    %c0_i32_0 = arith.constant 0 : i32
    %c0_i32_1 = arith.constant 0 : i32
    %c0_i32_2 = arith.constant 0 : i32
    return %c0_i32, %c0_i32_0, %c0_i32_1 : i32, i32, i32
  }
  func.func @transform_12(%arg0: i32) -> (i32, i32, i32) {
    %c0_i32 = arith.constant 0 : i32
    %c0_i32_0 = arith.constant 0 : i32
    %c0_i32_1 = arith.constant 0 : i32
    %c0_i32_2 = arith.constant 0 : i32
    return %c0_i32, %c0_i32_0, %c0_i32_1 : i32, i32, i32
  }
  func.func @transform_13(%arg0: i32) -> (i32, i32, i32) {
    %c0_i32 = arith.constant 0 : i32
    %c0_i32_0 = arith.constant 0 : i32
    %c0_i32_1 = arith.constant 0 : i32
    %c0_i32_2 = arith.constant 0 : i32
    return %c0_i32, %c0_i32_0, %c0_i32_1 : i32, i32, i32
  }
  func.func @transform_14(%arg0: i32) -> (i32, i32, i32) {
    %c0_i32 = arith.constant 0 : i32
    %c0_i32_0 = arith.constant 0 : i32
    %c0_i32_1 = arith.constant 0 : i32
    %c0_i32_2 = arith.constant 0 : i32
    return %c0_i32, %c0_i32_0, %c0_i32_1 : i32, i32, i32
  }
  func.func @transform_15(%arg0: i32) -> (i32, i32, i32) {
    %c0_i32 = arith.constant 0 : i32
    %c0_i32_0 = arith.constant 0 : i32
    %c0_i32_1 = arith.constant 0 : i32
    %c0_i32_2 = arith.constant 0 : i32
    return %c0_i32, %c0_i32_0, %c0_i32_1 : i32, i32, i32
  }
  func.func @transform_16(%arg0: i32) -> (i32, i32, i32) {
    %c0_i32 = arith.constant 0 : i32
    %c0_i32_0 = arith.constant 0 : i32
    %c0_i32_1 = arith.constant 0 : i32
    return %arg0, %c0_i32, %c0_i32_0 : i32, i32, i32
  }
}

</mosaic_0001>

<llo_original>
// kernel: fwd.2
$region0: #{fwd.2}
  #allocation0 [shape = 'u32[]', space=smem, size = 0x4, offset = 0x4, fixed_abs, tag = 'smem constant byte address 0x4 - core index']
  #allocation1 [shape = 'u32[144,128]{1,0:T(1,128)}', space=vmem, size = 0x12000, scoped, tag = 'internal scratch']
  #allocation2 [shape = 'f32[1,1]{1,0:T(1,128)S(1)}', space=vmem, size = 0x200, scoped, tag = 'scoped memory for fwd.2']
  %s0 = inlined_call_operand.vmem [shape: f32[24,16], index: 0, kind: input, shape index: {}]
  %s1 = inlined_call_operand.vmem [shape: f32[48,3], index: 1, kind: input, shape index: {}]
  %s2 = inlined_call_operand.vmem [shape: bf16[16,32], index: 2, kind: input, shape index: {}]
  %s3 = inlined_call_operand.hbm [shape: f32[1,32], index: 3, kind: input, shape index: {}]
  %s4 = inlined_call_operand.hbm [shape: f32[3,32], index: 4, kind: input, shape index: {}]
  %s5 = inlined_call_operand.vmem [shape: bf16[6,32,32], index: 5, kind: input, shape index: {}]
  %s6 = inlined_call_operand.vmem [shape: bf16[2,3,32], index: 6, kind: input, shape index: {}]
  %s7 = inlined_call_operand.vmem [shape: f32[2,3,32], index: 7, kind: input, shape index: {}]
  %s8 = inlined_call_operand.vmem [shape: f32[2,1,32], index: 8, kind: input, shape index: {}]
  %s9 = inlined_call_operand.vmem [shape: f32[2,3,32], index: 9, kind: input, shape index: {}]
  %s10 = inlined_call_operand.hbm [shape: f32[1,32], index: 10, kind: input, shape index: {}]
  %s11 = inlined_call_operand.hbm [shape: f32[1,32], index: 11, kind: input, shape index: {}]
  %s12 = inlined_call_operand.<no memory space> [shape: f32[1,1], index: 12, kind: input, shape index: {}]
  %s13 = inlined_call_operand.vmem [shape: s32[48,1], index: 13, kind: input, shape index: {}]
  %s14 = inlined_call_operand.vmem [shape: s32[1,48], index: 14, kind: input, shape index: {}]
  %s15 = inlined_call_operand.vmem [shape: s32[48,1], index: 15, kind: input, shape index: {}]
  %s16 = inlined_call_operand.vmem [shape: s32[48,1], index: 16, kind: input, shape index: {}]
  %s17 = inlined_call_operand.vmem [shape: s32[1,24], index: 17, kind: input, shape index: {}]
  %s18 = inlined_call_operand.vmem [shape: s32[24,1], index: 18, kind: input, shape index: {}]
  %s19 = inlined_call_operand.vmem [shape: f32[24,32], index: 19, kind: output, shape index: {0}]
  %s20 = inlined_call_operand.vmem [shape: f32[1,24], index: 20, kind: output, shape index: {1}]
  %21 = xla_tuple %s19, %s20
  %s22 = sld [smem:[#allocation0]]
  $region110: #{fwd.2} parent=0
    _
  %s24 = ssub.s32 1, %s22
  %s25 = scalar_select 0, %s24, %s22
  %v26 = vstv %s12
  %27 = vst [vmem:[#allocation2] sm:$0x1] %v26
  $region1: #{fwd.2} parent=0
    #allocation3 [shape = 'u8[512]{0}', space=vmem, size = 0x400, scoped, tag = 'input window, operand 3, single buffered']
    #allocation4 [shape = 's32[1]{0}', space=sflag, size = 0x4, scoped, tag = 'scoped memory for fwd.2']
    #allocation5 [shape = 'u8[2048]{0}', space=vmem, size = 0x800, scoped, tag = 'input window, operand 4, single buffered']
    #allocation6 [shape = 's32[1]{0}', space=sflag, size = 0x4, scoped, tag = 'scoped memory for fwd.2']
    #allocation7 [shape = 'u8[512]{0}', space=vmem, size = 0x400, scoped, tag = 'input window, operand 10, single buffered']
    #allocation8 [shape = 'u8[512]{0}', space=vmem, size = 0x400, scoped, tag = 'input window, operand 11, single buffered']
    #allocation9 [shape = 's32[1]{0}', space=sflag, size = 0x4, scoped, tag = 'scoped memory for fwd.2']
    %28 = vsyncpa [#allocation4], 0
    %29 = vsyncpa [#allocation6], 0
    %30 = vsyncpa [#allocation9], 0
    // Predicated region
    $region2: #{fwd.2} parent=1 // pred_check
      _
    $region3: #{fwd.2} parent=1 // pred_check_branch
      %32 = sbr.rel (0) target = $region5
    $region4: #{fwd.2} parent=1 // pred_region
      _
    $region5: #{fwd.2} parent=1 // pred_fallthru
      _
    // Predicated region
    $region6: #{fwd.2} parent=1 // pred_check
      _
    $region7: #{fwd.2} parent=1 // pred_check_branch
      %34 = sbr.rel (0) target = $region9
    $region8: #{fwd.2} parent=1 // pred_region
      _
    $region9: #{fwd.2} parent=1 // pred_fallthru
      _
    // Predicated region
    $region10: #{fwd.2} parent=1 // pred_check
      _
    $region11: #{fwd.2} parent=1 // pred_check_branch
      %36 = sbr.rel (0) target = $region13
    $region12: #{fwd.2} parent=1 // pred_region
      _
    $region13: #{fwd.2} parent=1 // pred_fallthru
      _
    // Predicated region
    $region14: #{fwd.2} parent=1 // pred_check
      _
    $region15: #{fwd.2} parent=1 // pred_check_branch
      %38 = sbr.rel (0) target = $region17
    $region16: #{fwd.2} parent=1 // pred_region
      %s40 = ssub.s32 16, 16
      %41 = vsyncadd [#allocation4], %s40
      %s43 = sshll.u32 [#allocation3], 4
      %s44 = int_to_ptr.vmem [resolvable:$true] %s43
      %46 = dma.hbm_to_vmem [thread:$0]  %s3, 16, %s44, [#allocation4]
    $region17: #{fwd.2} parent=1 // pred_fallthru
      _
    // Predicated region
    $region18: #{fwd.2} parent=1 // pred_check
      _
    $region19: #{fwd.2} parent=1 // pred_check_branch
      %48 = sbr.rel (0) target = $region21
    $region20: #{fwd.2} parent=1 // pred_region
      %s50 = ssub.s32 64, 64
      %51 = vsyncadd [#allocation6], %s50
      %s53 = sshll.u32 [#allocation5], 4
      %s54 = int_to_ptr.vmem [resolvable:$true] %s53
      %56 = dma.hbm_to_vmem [thread:$0]  %s4, 64, %s54, [#allocation6]
    $region21: #{fwd.2} parent=1 // pred_fallthru
      _
    // Predicated region
    $region22: #{fwd.2} parent=1 // pred_check
      _
    $region23: #{fwd.2} parent=1 // pred_check_branch
      %58 = sbr.rel (0) target = $region25
    $region24: #{fwd.2} parent=1 // pred_region
      _
    $region25: #{fwd.2} parent=1 // pred_fallthru
      _
    // Predicated region
    $region26: #{fwd.2} parent=1 // pred_check
      _
    $region27: #{fwd.2} parent=1 // pred_check_branch
      %60 = sbr.rel (0) target = $region29
    $region28: #{fwd.2} parent=1 // pred_region
      _
    $region29: #{fwd.2} parent=1 // pred_fallthru
      _
    // Predicated region
    $region30: #{fwd.2} parent=1 // pred_check
      _
    $region31: #{fwd.2} parent=1 // pred_check_branch
      %62 = sbr.rel (0) target = $region33
    $region32: #{fwd.2} parent=1 // pred_region
      _
    $region33: #{fwd.2} parent=1 // pred_fallthru
      _
    // Predicated region
    $region34: #{fwd.2} parent=1 // pred_check
      _
    $region35: #{fwd.2} parent=1 // pred_check_branch
      %64 = sbr.rel (0) target = $region37
    $region36: #{fwd.2} parent=1 // pred_region
      _
    $region37: #{fwd.2} parent=1 // pred_fallthru
      _
    // Predicated region
    $region38: #{fwd.2} parent=1 // pred_check
      _
    $region39: #{fwd.2} parent=1 // pred_check_branch
      %66 = sbr.rel (0) target = $region41
    $region40: #{fwd.2} parent=1 // pred_region
      _
    $region41: #{fwd.2} parent=1 // pred_fallthru
      _
    // Predicated region
    $region42: #{fwd.2} parent=1 // pred_check
      _
    $region43: #{fwd.2} parent=1 // pred_check_branch
      %68 = sbr.rel (0) target = $region45
    $region44: #{fwd.2} parent=1 // pred_region
      %s70 = ssub.s32 16, 16
      %71 = vsyncadd [#allocation6], %s70
      %s73 = sshll.u32 [#allocation7], 4
      %s74 = int_to_ptr.vmem [resolvable:$true] %s73
      %76 = dma.hbm_to_vmem [thread:$0]  %s10, 16, %s74, [#allocation6]
    $region45: #{fwd.2} parent=1 // pred_fallthru
      _
    // Predicated region
    $region46: #{fwd.2} parent=1 // pred_check
      _
    $region47: #{fwd.2} parent=1 // pred_check_branch
      %78 = sbr.rel (0) target = $region49
    $region48: #{fwd.2} parent=1 // pred_region
      %s80 = ssub.s32 16, 16
      %81 = vsyncadd [#allocation9], %s80
      %s83 = sshll.u32 [#allocation8], 4
      %s84 = int_to_ptr.vmem [resolvable:$true] %s83
      %86 = dma.hbm_to_vmem [thread:$0]  %s11, 16, %s84, [#allocation9]
    $region49: #{fwd.2} parent=1 // pred_fallthru
      _
    // Predicated region
    $region50: #{fwd.2} parent=1 // pred_check
      _
    $region51: #{fwd.2} parent=1 // pred_check_branch
      %88 = sbr.rel (0) target = $region53
    $region52: #{fwd.2} parent=1 // pred_region
      _
    $region53: #{fwd.2} parent=1 // pred_fallthru
      _
    // Predicated region
    $region54: #{fwd.2} parent=1 // pred_check
      _
    $region55: #{fwd.2} parent=1 // pred_check_branch
      %90 = sbr.rel (0) target = $region57
    $region56: #{fwd.2} parent=1 // pred_region
      _
    $region57: #{fwd.2} parent=1 // pred_fallthru
      _
    // Predicated region
    $region58: #{fwd.2} parent=1 // pred_check
      _
    $region59: #{fwd.2} parent=1 // pred_check_branch
      %92 = sbr.rel (0) target = $region61
    $region60: #{fwd.2} parent=1 // pred_region
      _
    $region61: #{fwd.2} parent=1 // pred_fallthru
      _
    // Predicated region
    $region62: #{fwd.2} parent=1 // pred_check
      _
    $region63: #{fwd.2} parent=1 // pred_check_branch
      %94 = sbr.rel (0) target = $region65
    $region64: #{fwd.2} parent=1 // pred_region
      _
    $region65: #{fwd.2} parent=1 // pred_fallthru
      _
    // Predicated region
    $region66: #{fwd.2} parent=1 // pred_check
      _
    $region67: #{fwd.2} parent=1 // pred_check_branch
      %96 = sbr.rel (0) target = $region69
    $region68: #{fwd.2} parent=1 // pred_region
      _
    $region69: #{fwd.2} parent=1 // pred_fallthru
      _
    // Predicated region
    $region70: #{fwd.2} parent=1 // pred_check
      _
    $region71: #{fwd.2} parent=1 // pred_check_branch
      %98 = sbr.rel (0) target = $region73
    $region72: #{fwd.2} parent=1 // pred_region
      _
    $region73: #{fwd.2} parent=1 // pred_fallthru
      _
    // Predicated region
    $region74: #{fwd.2} parent=1 // pred_check
      _
    $region75: #{fwd.2} parent=1 // pred_check_branch
      %100 = sbr.rel (0) target = $region77
    $region76: #{fwd.2} parent=1 // pred_region
      _
    $region77: #{fwd.2} parent=1 // pred_fallthru
      _
    // Predicated region
    $region78: #{fwd.2} parent=1 // pred_check
      _
    $region79: #{fwd.2} parent=1 // pred_check_branch
      %102 = sbr.rel (0) target = $region81
    $region80: #{fwd.2} parent=1 // pred_region
      %103 = dma.done [#allocation4], 16
    $region81: #{fwd.2} parent=1 // pred_fallthru
      _
    // Predicated region
    $region82: #{fwd.2} parent=1 // pred_check
      _
    $region83: #{fwd.2} parent=1 // pred_check_branch
      %105 = sbr.rel (0) target = $region85
    $region84: #{fwd.2} parent=1 // pred_region
      %106 = dma.done [#allocation6], 64
    $region85: #{fwd.2} parent=1 // pred_fallthru
      _
    // Predicated region
    $region86: #{fwd.2} parent=1 // pred_check
      _
    $region87: #{fwd.2} parent=1 // pred_check_branch
      %108 = sbr.rel (0) target = $region89
    $region88: #{fwd.2} parent=1 // pred_region
      %109 = dma.done [#allocation6], 16
    $region89: #{fwd.2} parent=1 // pred_fallthru
      _
    // Predicated region
    $region90: #{fwd.2} parent=1 // pred_check
      _
    $region91: #{fwd.2} parent=1 // pred_check_branch
      %111 = sbr.rel (0) target = $region93
    $region92: #{fwd.2} parent=1 // pred_region
      %112 = dma.done [#allocation9], 16
    $region93: #{fwd.2} parent=1 // pred_fallthru
      _
    %v114 = vld [vmem:[%s13] sm:$0xff]
    %v115 = vld [vmem:[%s13 + $0x8] sm:$0xff]
    %v116 = vld [vmem:[%s13 + $0x10] sm:$0xff]
    %v117 = vld [vmem:[%s13 + $0x18] sm:$0xff]
    %v118 = vld [vmem:[%s13 + $0x20] sm:$0xff]
    %v119 = vld [vmem:[%s13 + $0x28] sm:$0xff]
    %v120 = vld [vmem:[%s14] sm:$0x1]
    %v121 = vld [vmem:[%s15] sm:$0xff]
    %v122 = vld [vmem:[%s15 + $0x8] sm:$0xff]
    %v123 = vld [vmem:[%s15 + $0x10] sm:$0xff]
    %v124 = vld [vmem:[%s15 + $0x18] sm:$0xff]
    %v125 = vld [vmem:[%s15 + $0x20] sm:$0xff]
    %v126 = vld [vmem:[%s15 + $0x28] sm:$0xff]
    %v127 = vld [vmem:[%s16] sm:$0xff]
    %v128 = vld [vmem:[%s16 + $0x8] sm:$0xff]
    %v129 = vld [vmem:[%s16 + $0x10] sm:$0xff]
    %v130 = vld [vmem:[%s16 + $0x18] sm:$0xff]
    %v131 = vld [vmem:[%s16 + $0x20] sm:$0xff]
    %v132 = vld [vmem:[%s16 + $0x28] sm:$0xff]
    %v133 = vlaneseq
    %v134 = vshrl.u32 %v133, 7
    %v135 = vld [vmem:[%s17] sm:$0x1]
    %v136 = vlaneseq
    %v137 = vshrl.u32 %v136, 7
    %v138 = vsub.s32 0, %v137
    %v139 = vrot.slane %v135, %v138
    %vm140 = vcmp.eq.s32.totalorder %v134, %v139
    %v141 = vsel %vm140, 1, 0
    %v142 = vcvt.s32.f32 %v141
    %v143 = vlaneseq
    %v144 = vand.u32 %v143, 127
    %v145 = vld [vmem:[%s18] sm:$0xff]
    %v146 = vld [vmem:[%s18 + $0x8] sm:$0xff]
    %v147 = vld [vmem:[%s18 + $0x10] sm:$0xff]
    %148 = vset.pattern.permute.xlu0 0
    %149 = vperm.xlu0 %148, %v145
    %v150 = vpop.permute.xlu0 %149
    %151 = vset.pattern.permute.xlu0 0
    %152 = vperm.xlu0 %151, %v146
    %v153 = vpop.permute.xlu0 %152
    %154 = vset.pattern.permute.xlu0 0
    %155 = vperm.xlu0 %154, %v147
    %v156 = vpop.permute.xlu0 %155
    %vm157 = vcmp.eq.s32.totalorder %v144, %v150
    %vm158 = vcmp.eq.s32.totalorder %v144, %v153
    %vm159 = vcmp.eq.s32.totalorder %v144, %v156
    %v160 = vsel %vm157, 1, 0
    %v161 = vsel %vm158, 1, 0
    %v162 = vsel %vm159, 1, 0
    %v163 = vcvt.s32.f32 %v160
    %v164 = vcvt.s32.f32 %v161
    %v165 = vcvt.s32.f32 %v162
    %vm166 = vcmask 189440
    %v167 = vsel %vm166, %v142, 0.0
    %168 = vadd.xlane.f32.xlu0 %v167
    %v169 = vpop.xlane.xlu0 %168
    %v170 = vmax.f32 %v169, 1.0
    %v171 = vrcp.pop %v170
    %v172 = vmul.f32 1.0, %v171
    %173 = vset.pattern.permute.xlu0 0
    %174 = vperm.xlu0 %173, %v114
    %v175 = vpop.permute.xlu0 %174
    %176 = vset.pattern.permute.xlu0 0
    %177 = vperm.xlu0 %176, %v115
    %v178 = vpop.permute.xlu0 %177
    %179 = vset.pattern.permute.xlu0 0
    %180 = vperm.xlu0 %179, %v116
    %v181 = vpop.permute.xlu0 %180
    %182 = vset.pattern.permute.xlu0 0
    %183 = vperm.xlu0 %182, %v117
    %v184 = vpop.permute.xlu0 %183
    %185 = vset.pattern.permute.xlu0 0
    %186 = vperm.xlu0 %185, %v118
    %v187 = vpop.permute.xlu0 %186
    %188 = vset.pattern.permute.xlu0 0
    %189 = vperm.xlu0 %188, %v119
    %v190 = vpop.permute.xlu0 %189
    %vm191 = vcmp.eq.s32.totalorder %v144, %v175
    %vm192 = vcmp.eq.s32.totalorder %v144, %v178
    %vm193 = vcmp.eq.s32.totalorder %v144, %v181
    %vm194 = vcmp.eq.s32.totalorder %v144, %v184
    %vm195 = vcmp.eq.s32.totalorder %v144, %v187
    %vm196 = vcmp.eq.s32.totalorder %v144, %v190
    %197 = vset.pattern.permute.xlu0 0
    %198 = vperm.xlu0 %197, %v121
    %v199 = vpop.permute.xlu0 %198
    %200 = vset.pattern.permute.xlu0 0
    %201 = vperm.xlu0 %200, %v122
    %v202 = vpop.permute.xlu0 %201
    %203 = vset.pattern.permute.xlu0 0
    %204 = vperm.xlu0 %203, %v123
    %v205 = vpop.permute.xlu0 %204
    %206 = vset.pattern.permute.xlu0 0
    %207 = vperm.xlu0 %206, %v124
    %v208 = vpop.permute.xlu0 %207
    %209 = vset.pattern.permute.xlu0 0
    %210 = vperm.xlu0 %209, %v125
    %v211 = vpop.permute.xlu0 %210
    %212 = vset.pattern.permute.xlu0 0
    %213 = vperm.xlu0 %212, %v126
    %v214 = vpop.permute.xlu0 %213
    %vm215 = vcmp.eq.s32.totalorder %v144, %v199
    %vm216 = vcmp.eq.s32.totalorder %v144, %v202
    %vm217 = vcmp.eq.s32.totalorder %v144, %v205
    %vm218 = vcmp.eq.s32.totalorder %v144, %v208
    %vm219 = vcmp.eq.s32.totalorder %v144, %v211
    %vm220 = vcmp.eq.s32.totalorder %v144, %v214
    %v221 = vsel %vm191, 1, 0
    %v222 = vsel %vm192, 1, 0
    %v223 = vsel %vm193, 1, 0
    %v224 = vsel %vm194, 1, 0
    %v225 = vsel %vm195, 1, 0
    %v226 = vsel %vm196, 1, 0
    %v227 = vcvt.s32.f32 %v221
    %v228 = vcvt.s32.f32 %v222
    %v229 = vcvt.s32.f32 %v223
    %v230 = vcvt.s32.f32 %v224
    %v231 = vcvt.s32.f32 %v225
    %v232 = vcvt.s32.f32 %v226
    %v233 = vpack.c.bf16 %v228, %v227
    %v234 = vpack.c.bf16 %v230, %v229
    %v235 = vpack.c.bf16 %v232, %v231
    %v236 = vsel %vm215, 1, 0
    %v237 = vsel %vm216, 1, 0
    %v238 = vsel %vm217, 1, 0
    %v239 = vsel %vm218, 1, 0
    %v240 = vsel %vm219, 1, 0
    %v241 = vsel %vm220, 1, 0
    %v242 = vcvt.s32.f32 %v236
    %v243 = vcvt.s32.f32 %v237
    %v244 = vcvt.s32.f32 %v238
    %v245 = vcvt.s32.f32 %v239
    %v246 = vcvt.s32.f32 %v240
    %v247 = vcvt.s32.f32 %v241
    %v248 = vpack.c.bf16 %v243, %v242
    %v249 = vpack.c.bf16 %v245, %v244
    %v250 = vpack.c.bf16 %v247, %v246
    %v251 = vadd.s32 %v134, 8
    %v252 = vadd.s32 %v134, 16
    %v253 = vlaneseq
    %v254 = vshrl.u32 %v253, 7
    %v255 = vsub.s32 0, %v254
    %v256 = vrot.slane %v120, %v255
    %vm257 = vcmp.eq.s32.totalorder %v134, %v256
    %vm258 = vcmp.eq.s32.totalorder %v251, %v256
    %vm259 = vcmp.eq.s32.totalorder %v252, %v256
    %v260 = vsel %vm257, 1, 0
    %v261 = vsel %vm258, 1, 0
    %v262 = vsel %vm259, 1, 0
    %v263 = vcvt.s32.f32 %v260
    %v264 = vcvt.s32.f32 %v261
    %v265 = vcvt.s32.f32 %v262
    %v266 = vld [vmem:[%s0] sm:$0xff]
    %v267 = vld [vmem:[%s0 + $0x8] sm:$0xff]
    %v268 = vld [vmem:[%s0 + $0x10] sm:$0xff]
    %v269 = vld [vmem:[%s2] sm:$0xf]
    %v270 = vld [vmem:[%s2 + $0x4] sm:$0xf]
    %v271 = vpack.c.bf16 %v267, %v266
    %v272 = vpack.c.bf16 %v268, %v268
    %v273 = vld [vmem:[#allocation3] sm:$0x1]
    %v275 = vlaneseq
    %v276 = vshrl.u32 %v275, 7
    %v277 = vsub.s32 0, %v276
    %v278 = vrot.slane %v273, %v277
    %v282 = vunpack.c.l.b16 %v269
    %v283 = vunpack.c.l.b16 %v270
    %v284 = vpack.c.b16 %v283, %v282
    %vm286 = vcmask 130048
    %v288 = vsel %vm286, %v271, 0
    %v291 = vsel %vm286, %v272, 0
    %293 = vmatprep.subr.bf16.mxu0 0
    %294 = vmatpush1.bf16.msra.mxu0 %v284
    %295 = vmatprep.subr.bf16.mxu0 0
    %296 = vmatpush1.bf16.msra.mxu0 0
    %297 = vmatprep.subr.bf16.mxu0 0
    %298 = vmatpush1.bf16.msra.mxu0 0
    %299 = vmatprep.subr.bf16.mxu0 0
    %300 = vmatpush1.bf16.msra.mxu0 0
    %301 = vmatprep.subr.bf16.mxu0 0
    %302 = vmatpush1.bf16.msra.mxu0 0
    %303 = vmatprep.subr.bf16.mxu0 0
    %304 = vmatpush1.bf16.msra.mxu0 0
    %305 = vmatprep.subr.bf16.mxu0 0
    %306 = vmatpush1.bf16.msra.mxu0 0
    %307 = vmatprep.subr.bf16.mxu0 0
    %308 = vmatpush1.bf16.msra.mxu0 0
    %309 = vmatprep.subr.bf16.mxu0 0
    %310 = vmatpush1.bf16.msra.mxu0 0
    %311 = vmatprep.subr.bf16.mxu0 0
    %312 = vmatpush1.bf16.msra.mxu0 0
    %313 = vmatprep.subr.bf16.mxu0 0
    %314 = vmatpush1.bf16.msra.mxu0 0
    %315 = vmatprep.subr.bf16.mxu0 0
    %316 = vmatpush1.bf16.msra.mxu0 0
    %317 = vmatprep.subr.bf16.mxu0 0
    %318 = vmatpush1.bf16.msra.mxu0 0
    %319 = vmatprep.subr.bf16.mxu0 0
    %320 = vmatpush1.bf16.msra.mxu0 0
    %321 = vmatprep.subr.bf16.mxu0 0
    %322 = vmatpush1.bf16.msra.mxu0 0
    %323 = vmatprep.subr.bf16.mxu0 0
    %324 = vmatpush1.bf16.msra.mxu0 0
    %325 = vmatprep.mubr.bf16.mxu0 0
    %326 = vmatmul.mubr.bf16.gmra.mrb[0].mxu0 %v288
    %v327 = vpop.f32.mrb[0].mxu0
    %v328 = vadd.f32 %v278, %v327
    %v329 = vpop.f32.mrb[0].mxu0
    %v330 = vpop.f32.mrb[0].mxu0
    %v331 = vadd.f32 %v278, %v330
    %v332 = vpop.f32.mrb[0].mxu0
    %333 = vmatprep.mubr.bf16.mxu0 0
    %334 = vmatmul.mubr.bf16.gmra.mrb[0].mxu0 %v291
    %v335 = vpop.f32.mrb[0].mxu0
    %v336 = vadd.f32 %v278, %v335
    %v337 = vpop.f32.mrb[0].mxu0
    %v338 = vpop.f32.mrb[0].mxu0
    %v339 = vpop.f32.mrb[0].mxu0
    %340 = vdwg.mxu0
    %vm341 = vcmp.ge.f32.partialorder %v328, 0.0
    %vm342 = vcmp.ge.f32.partialorder %v331, 0.0
    %vm343 = vcmp.ge.f32.partialorder %v336, 0.0
    %v344 = vmul.f32 %v328, 0.1
    %v345 = vmul.f32 %v331, 0.1
    %v346 = vmul.f32 %v336, 0.1
    %v347 = vsel %vm341, %v328, %v344
    %v348 = vsel %vm342, %v331, %v345
    %v349 = vsel %vm343, %v336, %v346
    %v350 = vld [vmem:[#allocation5] sm:$0x7]
    %vm351 = vcmask 195584
    %v353 = vsel %vm351, %v142, 0
    %355 = vmatprep.subr.mxu0 0.0
    %356 = vmatpush1.msra.mxu0 %v347
    %357 = vmatprep.subr.mxu0 0.0
    %358 = vmatpush1.msra.mxu0 %v348
    %359 = vmatprep.subr.mxu0 0.0
    %360 = vmatpush1.msra.mxu0 %v349
    %361 = vmatprep.subr.mxu0 0.0
    %362 = vmatpush1.msra.mxu0 0.0
    %363 = vmatprep.subr.mxu0 0.0
    %364 = vmatpush1.msra.mxu0 0.0
    %365 = vmatprep.subr.mxu0 0.0
    %366 = vmatpush1.msra.mxu0 0.0
    %367 = vmatprep.subr.mxu0 0.0
    %368 = vmatpush1.msra.mxu0 0.0
    %369 = vmatprep.subr.mxu0 0.0
    %370 = vmatpush1.msra.mxu0 0.0
    %371 = vmatprep.subr.mxu0 0.0
    %372 = vmatpush1.msra.mxu0 0.0
    %373 = vmatprep.subr.mxu0 0.0
    %374 = vmatpush1.msra.mxu0 0.0
    %375 = vmatprep.subr.mxu0 0.0
    %376 = vmatpush1.msra.mxu0 0.0
    %377 = vmatprep.subr.mxu0 0.0
    %378 = vmatpush1.msra.mxu0 0.0
    %379 = vmatprep.subr.mxu0 0.0
    %380 = vmatpush1.msra.mxu0 0.0
    %381 = vmatprep.subr.mxu0 0.0
    %382 = vmatpush1.msra.mxu0 0.0
    %383 = vmatprep.subr.mxu0 0.0
    %384 = vmatpush1.msra.mxu0 0.0
    %385 = vmatprep.subr.mxu0 0.0
    %386 = vmatpush1.msra.mxu0 0.0
    %387 = vmatprep.subr.mxu0 0.0
    %388 = vmatpush1.msra.mxu0 0.0
    %389 = vmatprep.subr.mxu0 0.0
    %390 = vmatpush1.msra.mxu0 0.0
    %391 = vmatprep.subr.mxu0 0.0
    %392 = vmatpush1.msra.mxu0 0.0
    %393 = vmatprep.subr.mxu0 0.0
    %394 = vmatpush1.msra.mxu0 0.0
    %395 = vmatprep.subr.mxu0 0.0
    %396 = vmatpush1.msra.mxu0 0.0
    %397 = vmatprep.subr.mxu0 0.0
    %398 = vmatpush1.msra.mxu0 0.0
    %399 = vmatprep.subr.mxu0 0.0
    %400 = vmatpush1.msra.mxu0 0.0
    %401 = vmatprep.subr.mxu0 0.0
    %402 = vmatpush1.msra.mxu0 0.0
    %403 = vmatprep.subr.mxu0 0.0
    %404 = vmatpush1.msra.mxu0 0.0
    %405 = vmatprep.subr.mxu0 0.0
    %406 = vmatpush1.msra.mxu0 0.0
    %407 = vmatprep.subr.mxu0 0.0
    %408 = vmatpush1.msra.mxu0 0.0
    %409 = vmatprep.subr.mxu0 0.0
    %410 = vmatpush1.msra.mxu0 0.0
    %411 = vmatprep.subr.mxu0 0.0
    %412 = vmatpush1.msra.mxu0 0.0
    %413 = vmatprep.subr.mxu0 0.0
    %414 = vmatpush1.msra.mxu0 0.0
    %415 = vmatprep.subr.mxu0 0.0
    %416 = vmatpush1.msra.mxu0 0.0
    %417 = vmatprep.subr.mxu0 0.0
    %418 = vmatpush1.msra.mxu0 0.0
    %419 = vmatprep.mubr.f32.mxu0 0.0
    %420 = vmatmul.mubr.f32.gmra.mrb[0].mxu0 %v353
    %v421 = vpop.f32.mrb[0].mxu0
    %v422 = vadd.f32 0.0, %v421
    %v423 = vpop.f32.mrb[0].mxu0
    %424 = vdwg.mxu0
    %v425 = vmul.f32 %v422, %v172
    %vm426 = vcmask 15360
    %v428 = vsel %vm426, %v163, 0
    %v431 = vsel %vm426, %v164, 0
    %v434 = vsel %vm426, %v165, 0
    %vm436 = vcmask 1041408
    %v438 = vsel %vm436, %v425, 0
    %440 = vmatprep.subr.mxu0 0.0
    %441 = vmatpush1.msra.mxu0 %v438
    %442 = vmatprep.subr.mxu0 0.0
    %443 = vmatpush1.msra.mxu0 0.0
    %444 = vmatprep.subr.mxu0 0.0
    %445 = vmatpush1.msra.mxu0 0.0
    %446 = vmatprep.subr.mxu0 0.0
    %447 = vmatpush1.msra.mxu0 0.0
    %448 = vmatprep.subr.mxu0 0.0
    %449 = vmatpush1.msra.mxu0 0.0
    %450 = vmatprep.subr.mxu0 0.0
    %451 = vmatpush1.msra.mxu0 0.0
    %452 = vmatprep.subr.mxu0 0.0
    %453 = vmatpush1.msra.mxu0 0.0
    %454 = vmatprep.subr.mxu0 0.0
    %455 = vmatpush1.msra.mxu0 0.0
    %456 = vmatprep.subr.mxu0 0.0
    %457 = vmatpush1.msra.mxu0 0.0
    %458 = vmatprep.subr.mxu0 0.0
    %459 = vmatpush1.msra.mxu0 0.0
    %460 = vmatprep.subr.mxu0 0.0
    %461 = vmatpush1.msra.mxu0 0.0
    %462 = vmatprep.subr.mxu0 0.0
    %463 = vmatpush1.msra.mxu0 0.0
    %464 = vmatprep.subr.mxu0 0.0
    %465 = vmatpush1.msra.mxu0 0.0
    %466 = vmatprep.subr.mxu0 0.0
    %467 = vmatpush1.msra.mxu0 0.0
    %468 = vmatprep.subr.mxu0 0.0
    %469 = vmatpush1.msra.mxu0 0.0
    %470 = vmatprep.subr.mxu0 0.0
    %471 = vmatpush1.msra.mxu0 0.0
    %472 = vmatprep.subr.mxu0 0.0
    %473 = vmatpush1.msra.mxu0 0.0
    %474 = vmatprep.subr.mxu0 0.0
    %475 = vmatpush1.msra.mxu0 0.0
    %476 = vmatprep.subr.mxu0 0.0
    %477 = vmatpush1.msra.mxu0 0.0
    %478 = vmatprep.subr.mxu0 0.0
    %479 = vmatpush1.msra.mxu0 0.0
    %480 = vmatprep.subr.mxu0 0.0
    %481 = vmatpush1.msra.mxu0 0.0
    %482 = vmatprep.subr.mxu0 0.0
    %483 = vmatpush1.msra.mxu0 0.0
    %484 = vmatprep.subr.mxu0 0.0
    %485 = vmatpush1.msra.mxu0 0.0
    %486 = vmatprep.subr.mxu0 0.0
    %487 = vmatpush1.msra.mxu0 0.0
    %488 = vmatprep.subr.mxu0 0.0
    %489 = vmatpush1.msra.mxu0 0.0
    %490 = vmatprep.subr.mxu0 0.0
    %491 = vmatpush1.msra.mxu0 0.0
    %492 = vmatprep.subr.mxu0 0.0
    %493 = vmatpush1.msra.mxu0 0.0
    %494 = vmatprep.subr.mxu0 0.0
    %495 = vmatpush1.msra.mxu0 0.0
    %496 = vmatprep.subr.mxu0 0.0
    %497 = vmatpush1.msra.mxu0 0.0
    %498 = vmatprep.subr.mxu0 0.0
    %499 = vmatpush1.msra.mxu0 0.0
    %500 = vmatprep.subr.mxu0 0.0
    %501 = vmatpush1.msra.mxu0 0.0
    %502 = vmatprep.subr.mxu0 0.0
    %503 = vmatpush1.msra.mxu0 0.0
    %504 = vmatprep.mubr.f32.mxu0 0.0
    %505 = vmatmul.mubr.f32.gmra.mrb[0].mxu0 %v428
    %v506 = vpop.f32.mrb[0].mxu0
    %v507 = vadd.f32 0.0, %v506
    %v508 = vpop.f32.mrb[0].mxu0
    %509 = vmatprep.mubr.f32.mxu0 0.0
    %510 = vmatmul.mubr.f32.gmra.mrb[0].mxu0 %v431
    %v511 = vpop.f32.mrb[0].mxu0
    %v512 = vadd.f32 0.0, %v511
    %v513 = vpop.f32.mrb[0].mxu0
    %514 = vmatprep.mubr.f32.mxu0 0.0
    %515 = vmatmul.mubr.f32.gmra.mrb[0].mxu0 %v434
    %v516 = vpop.f32.mrb[0].mxu0
    %v517 = vadd.f32 0.0, %v516
    %v518 = vpop.f32.mrb[0].mxu0
    %519 = vdwg.mxu0
    %v520 = vlaneseq
    %v521 = vshrl.u32 %v520, 7
    %v522 = vsub.s32 2, %v521
    %v523 = vrot.slane %v350, %v522
    %v524 = vmul.f32 %v523, %v507
    %v525 = vmul.f32 %v523, %v512
    %v526 = vmul.f32 %v523, %v517
    %v527 = vsub.f32 %v347, %v524
    %v528 = vsub.f32 %v348, %v525
    %v529 = vsub.f32 %v349, %v526
    %v530 = vmul.f32 %v527, %v527
    %v531 = vmul.f32 %v528, %v528
    %v532 = vmul.f32 %v529, %v529
    %533 = vmatprep.subr.mxu0 0.0
    %534 = vmatpush1.msra.mxu0 %v530
    %535 = vmatprep.subr.mxu0 0.0
    %536 = vmatpush1.msra.mxu0 %v531
    %537 = vmatprep.subr.mxu0 0.0
    %538 = vmatpush1.msra.mxu0 %v532
    %539 = vmatprep.subr.mxu0 0.0
    %540 = vmatpush1.msra.mxu0 0.0
    %541 = vmatprep.subr.mxu0 0.0
    %542 = vmatpush1.msra.mxu0 0.0
    %543 = vmatprep.subr.mxu0 0.0
    %544 = vmatpush1.msra.mxu0 0.0
    %545 = vmatprep.subr.mxu0 0.0
    %546 = vmatpush1.msra.mxu0 0.0
    %547 = vmatprep.subr.mxu0 0.0
    %548 = vmatpush1.msra.mxu0 0.0
    %549 = vmatprep.subr.mxu0 0.0
    %550 = vmatpush1.msra.mxu0 0.0
    %551 = vmatprep.subr.mxu0 0.0
    %552 = vmatpush1.msra.mxu0 0.0
    %553 = vmatprep.subr.mxu0 0.0
    %554 = vmatpush1.msra.mxu0 0.0
    %555 = vmatprep.subr.mxu0 0.0
    %556 = vmatpush1.msra.mxu0 0.0
    %557 = vmatprep.subr.mxu0 0.0
    %558 = vmatpush1.msra.mxu0 0.0
    %559 = vmatprep.subr.mxu0 0.0
    %560 = vmatpush1.msra.mxu0 0.0
    %561 = vmatprep.subr.mxu0 0.0
    %562 = vmatpush1.msra.mxu0 0.0
    %563 = vmatprep.subr.mxu0 0.0
    %564 = vmatpush1.msra.mxu0 0.0
    %565 = vmatprep.subr.mxu0 0.0
    %566 = vmatpush1.msra.mxu0 0.0
    %567 = vmatprep.subr.mxu0 0.0
    %568 = vmatpush1.msra.mxu0 0.0
    %569 = vmatprep.subr.mxu0 0.0
    %570 = vmatpush1.msra.mxu0 0.0
    %571 = vmatprep.subr.mxu0 0.0
    %572 = vmatpush1.msra.mxu0 0.0
    %573 = vmatprep.subr.mxu0 0.0
    %574 = vmatpush1.msra.mxu0 0.0
    %575 = vmatprep.subr.mxu0 0.0
    %576 = vmatpush1.msra.mxu0 0.0
    %577 = vmatprep.subr.mxu0 0.0
    %578 = vmatpush1.msra.mxu0 0.0
    %579 = vmatprep.subr.mxu0 0.0
    %580 = vmatpush1.msra.mxu0 0.0
    %581 = vmatprep.subr.mxu0 0.0
    %582 = vmatpush1.msra.mxu0 0.0
    %583 = vmatprep.subr.mxu0 0.0
    %584 = vmatpush1.msra.mxu0 0.0
    %585 = vmatprep.subr.mxu0 0.0
    %586 = vmatpush1.msra.mxu0 0.0
    %587 = vmatprep.subr.mxu0 0.0
    %588 = vmatpush1.msra.mxu0 0.0
    %589 = vmatprep.subr.mxu0 0.0
    %590 = vmatpush1.msra.mxu0 0.0
    %591 = vmatprep.subr.mxu0 0.0
    %592 = vmatpush1.msra.mxu0 0.0
    %593 = vmatprep.subr.mxu0 0.0
    %594 = vmatpush1.msra.mxu0 0.0
    %595 = vmatprep.subr.mxu0 0.0
    %596 = vmatpush1.msra.mxu0 0.0
    %597 = vmatprep.mubr.f32.mxu0 0.0
    %598 = vmatmul.mubr.f32.gmra.mrb[0].mxu0 %v353
    %v599 = vpop.f32.mrb[0].mxu0
    %v600 = vadd.f32 0.0, %v599
    %v601 = vpop.f32.mrb[0].mxu0
    %602 = vdwg.mxu0
    %v603 = vmul.f32 %v600, %v172
    %v604 = vlaneseq
    %v605 = vshrl.u32 %v604, 7
    %v606 = vsub.s32 0, %v605
    %v607 = vrot.slane %v350, %v606
    %v608 = vmul.f32 %v607, %v527
    %v609 = vmul.f32 %v607, %v528
    %v610 = vmul.f32 %v607, %v529
    %v612 = vsel %vm436, %v603, 0
    %614 = vmatprep.subr.mxu0 0.0
    %615 = vmatpush1.msra.mxu0 %v612
    %616 = vmatprep.subr.mxu0 0.0
    %617 = vmatpush1.msra.mxu0 0.0
    %618 = vmatprep.subr.mxu0 0.0
    %619 = vmatpush1.msra.mxu0 0.0
    %620 = vmatprep.subr.mxu0 0.0
    %621 = vmatpush1.msra.mxu0 0.0
    %622 = vmatprep.subr.mxu0 0.0
    %623 = vmatpush1.msra.mxu0 0.0
    %624 = vmatprep.subr.mxu0 0.0
    %625 = vmatpush1.msra.mxu0 0.0
    %626 = vmatprep.subr.mxu0 0.0
    %627 = vmatpush1.msra.mxu0 0.0
    %628 = vmatprep.subr.mxu0 0.0
    %629 = vmatpush1.msra.mxu0 0.0
    %630 = vmatprep.subr.mxu0 0.0
    %631 = vmatpush1.msra.mxu0 0.0
    %632 = vmatprep.subr.mxu0 0.0
    %633 = vmatpush1.msra.mxu0 0.0
    %634 = vmatprep.subr.mxu0 0.0
    %635 = vmatpush1.msra.mxu0 0.0
    %636 = vmatprep.subr.mxu0 0.0
    %637 = vmatpush1.msra.mxu0 0.0
    %638 = vmatprep.subr.mxu0 0.0
    %639 = vmatpush1.msra.mxu0 0.0
    %640 = vmatprep.subr.mxu0 0.0
    %641 = vmatpush1.msra.mxu0 0.0
    %642 = vmatprep.subr.mxu0 0.0
    %643 = vmatpush1.msra.mxu0 0.0
    %644 = vmatprep.subr.mxu0 0.0
    %645 = vmatpush1.msra.mxu0 0.0
    %646 = vmatprep.subr.mxu0 0.0
    %647 = vmatpush1.msra.mxu0 0.0
    %648 = vmatprep.subr.mxu0 0.0
    %649 = vmatpush1.msra.mxu0 0.0
    %650 = vmatprep.subr.mxu0 0.0
    %651 = vmatpush1.msra.mxu0 0.0
    %652 = vmatprep.subr.mxu0 0.0
    %653 = vmatpush1.msra.mxu0 0.0
    %654 = vmatprep.subr.mxu0 0.0
    %655 = vmatpush1.msra.mxu0 0.0
    %656 = vmatprep.subr.mxu0 0.0
    %657 = vmatpush1.msra.mxu0 0.0
    %658 = vmatprep.subr.mxu0 0.0
    %659 = vmatpush1.msra.mxu0 0.0
    %660 = vmatprep.subr.mxu0 0.0
    %661 = vmatpush1.msra.mxu0 0.0
    %662 = vmatprep.subr.mxu0 0.0
    %663 = vmatpush1.msra.mxu0 0.0
    %664 = vmatprep.subr.mxu0 0.0
    %665 = vmatpush1.msra.mxu0 0.0
    %666 = vmatprep.subr.mxu0 0.0
    %667 = vmatpush1.msra.mxu0 0.0
    %668 = vmatprep.subr.mxu0 0.0
    %669 = vmatpush1.msra.mxu0 0.0
    %670 = vmatprep.subr.mxu0 0.0
    %671 = vmatpush1.msra.mxu0 0.0
    %672 = vmatprep.subr.mxu0 0.0
    %673 = vmatpush1.msra.mxu0 0.0
    %674 = vmatprep.subr.mxu0 0.0
    %675 = vmatpush1.msra.mxu0 0.0
    %676 = vmatprep.subr.mxu0 0.0
    %677 = vmatpush1.msra.mxu0 0.0
    %678 = vmatprep.mubr.f32.mxu0 0.0
    %679 = vmatmul.mubr.f32.gmra.mrb[0].mxu0 %v428
    %v680 = vpop.f32.mrb[0].mxu0
    %v681 = vadd.f32 1e-05, %v680
    %v682 = vpop.f32.mrb[0].mxu0
    %683 = vmatprep.mubr.f32.mxu0 0.0
    %684 = vmatmul.mubr.f32.gmra.mrb[0].mxu0 %v431
    %v685 = vpop.f32.mrb[0].mxu0
    %v686 = vadd.f32 1e-05, %v685
    %v687 = vpop.f32.mrb[0].mxu0
    %688 = vmatprep.mubr.f32.mxu0 0.0
    %689 = vmatmul.mubr.f32.gmra.mrb[0].mxu0 %v434
    %v690 = vpop.f32.mrb[0].mxu0
    %v691 = vadd.f32 1e-05, %v690
    %v692 = vpop.f32.mrb[0].mxu0
    %693 = vdwg.mxu0
    %v694 = vrsqrt.pop %v681
    %v695 = vrsqrt.pop %v686
    %v696 = vrsqrt.pop %v691
    %v697 = vmul.f32 %v608, %v694
    %v698 = vmul.f32 %v609, %v695
    %v699 = vmul.f32 %v610, %v696
    %v700 = vlaneseq
    %v701 = vshrl.u32 %v700, 7
    %v702 = vsub.s32 1, %v701
    %v703 = vrot.slane %v350, %v702
    %v704 = vadd.f32 %v697, %v703
    %v705 = vadd.f32 %v698, %v703
    %v706 = vadd.f32 %v699, %v703
    %v707 = vld [vmem:[%s1] sm:$0xff]
    %v708 = vld [vmem:[%s1 + $0x8] sm:$0xff]
    %v709 = vld [vmem:[%s1 + $0x10] sm:$0xff]
    %v710 = vld [vmem:[%s1 + $0x18] sm:$0xff]
    %v711 = vld [vmem:[%s1 + $0x20] sm:$0xff]
    %v712 = vld [vmem:[%s1 + $0x28] sm:$0xff]
    %v713 = vpack.c.bf16 %v705, %v704
    %v714 = vpack.c.bf16 %v706, %v706
    %v715 = vld [vmem:[%s5] sm:$0xf]
    %v716 = vld [vmem:[%s5 + $0x4] sm:$0xf]
    %v717 = vld [vmem:[%s5 + $0x8] sm:$0xf]
    %v718 = vld [vmem:[%s5 + $0xc] sm:$0xf]
    %v723 = vunpack.c.l.b16 %v715
    %v724 = vunpack.c.l.b16 %v716
    %v725 = vunpack.c.l.b16 %v717
    %v726 = vunpack.c.l.b16 %v718
    %v727 = vpack.c.b16 %v724, %v723
    %v728 = vpack.c.b16 %v726, %v725
    %vm731 = vcmask 261120
    %v733 = vsel %vm731, %v713, 0
    %v736 = vsel %vm731, %v714, 0
    %738 = vmatprep.subr.bf16.mxu0 0
    %739 = vmatpush1.bf16.msra.mxu0 %v727
    %740 = vmatprep.subr.bf16.mxu0 0
    %741 = vmatpush1.bf16.msra.mxu0 %v728
    %742 = vmatprep.subr.bf16.mxu0 0
    %743 = vmatpush1.bf16.msra.mxu0 0
    %744 = vmatprep.subr.bf16.mxu0 0
    %745 = vmatpush1.bf16.msra.mxu0 0
    %746 = vmatprep.subr.bf16.mxu0 0
    %747 = vmatpush1.bf16.msra.mxu0 0
    %748 = vmatprep.subr.bf16.mxu0 0
    %749 = vmatpush1.bf16.msra.mxu0 0
    %750 = vmatprep.subr.bf16.mxu0 0
    %751 = vmatpush1.bf16.msra.mxu0 0
    %752 = vmatprep.subr.bf16.mxu0 0
    %753 = vmatpush1.bf16.msra.mxu0 0
    %754 = vmatprep.subr.bf16.mxu0 0
    %755 = vmatpush1.bf16.msra.mxu0 0
    %756 = vmatprep.subr.bf16.mxu0 0
    %757 = vmatpush1.bf16.msra.mxu0 0
    %758 = vmatprep.subr.bf16.mxu0 0
    %759 = vmatpush1.bf16.msra.mxu0 0
    %760 = vmatprep.subr.bf16.mxu0 0
    %761 = vmatpush1.bf16.msra.mxu0 0
    %762 = vmatprep.subr.bf16.mxu0 0
    %763 = vmatpush1.bf16.msra.mxu0 0
    %764 = vmatprep.subr.bf16.mxu0 0
    %765 = vmatpush1.bf16.msra.mxu0 0
    %766 = vmatprep.subr.bf16.mxu0 0
    %767 = vmatpush1.bf16.msra.mxu0 0
    %768 = vmatprep.subr.bf16.mxu0 0
    %769 = vmatpush1.bf16.msra.mxu0 0
    %770 = vmatprep.mubr.bf16.mxu0 0
    %771 = vmatmul.mubr.bf16.gmra.mrb[0].mxu0 %v733
    %v772 = vpop.f32.mrb[0].mxu0
    %v773 = vadd.f32 0.0, %v772
    %v774 = vpop.f32.mrb[0].mxu0
    %v775 = vpop.f32.mrb[0].mxu0
    %v776 = vadd.f32 0.0, %v775
    %v777 = vpop.f32.mrb[0].mxu0
    %778 = vmatprep.mubr.bf16.mxu0 0
    %779 = vmatmul.mubr.bf16.gmra.mrb[0].mxu0 %v736
    %v780 = vpop.f32.mrb[0].mxu0
    %v781 = vadd.f32 0.0, %v780
    %v782 = vpop.f32.mrb[0].mxu0
    %v783 = vpop.f32.mrb[0].mxu0
    %v784 = vpop.f32.mrb[0].mxu0
    %785 = vdwg.mxu0
    %v786 = vpack.c.bf16 %v776, %v773
    %v787 = vpack.c.bf16 %v781, %v781
    %vm788 = vcmp.eq.s32.totalorder %v127, 0
    %vm789 = vcmp.eq.s32.totalorder %v128, 0
    %vm790 = vcmp.eq.s32.totalorder %v129, 0
    %vm791 = vcmp.eq.s32.totalorder %v130, 0
    %vm792 = vcmp.eq.s32.totalorder %v131, 0
    %vm793 = vcmp.eq.s32.totalorder %v132, 0
    %v794 = vsel %vm788, 1, 0
    %v795 = vsel %vm789, 1, 0
    %v796 = vsel %vm790, 1, 0
    %v797 = vsel %vm791, 1, 0
    %v798 = vsel %vm792, 1, 0
    %v799 = vsel %vm793, 1, 0
    %v800 = vcvt.s32.f32 %v794
    %v801 = vcvt.s32.f32 %v795
    %v802 = vcvt.s32.f32 %v796
    %v803 = vcvt.s32.f32 %v797
    %v804 = vcvt.s32.f32 %v798
    %v805 = vcvt.s32.f32 %v799
    %v807 = vsel %vm351, %v233, 0
    %v810 = vsel %vm351, %v234, 0
    %v813 = vsel %vm351, %v235, 0
    %vm815 = vcmask 1043456
    %v817 = vsel %vm815, %v787, 0
    %819 = vmatprep.subr.bf16.mxu0 0
    %820 = vmatpush1.bf16.msra.mxu0 %v786
    %821 = vmatprep.subr.bf16.mxu0 0
    %822 = vmatpush1.bf16.msra.mxu0 %v817
    %823 = vmatprep.subr.bf16.mxu0 0
    %824 = vmatpush1.bf16.msra.mxu0 0
    %825 = vmatprep.subr.bf16.mxu0 0
    %826 = vmatpush1.bf16.msra.mxu0 0
    %827 = vmatprep.subr.bf16.mxu0 0
    %828 = vmatpush1.bf16.msra.mxu0 0
    %829 = vmatprep.subr.bf16.mxu0 0
    %830 = vmatpush1.bf16.msra.mxu0 0
    %831 = vmatprep.subr.bf16.mxu0 0
    %832 = vmatpush1.bf16.msra.mxu0 0
    %833 = vmatprep.subr.bf16.mxu0 0
    %834 = vmatpush1.bf16.msra.mxu0 0
    %835 = vmatprep.subr.bf16.mxu0 0
    %836 = vmatpush1.bf16.msra.mxu0 0
    %837 = vmatprep.subr.bf16.mxu0 0
    %838 = vmatpush1.bf16.msra.mxu0 0
    %839 = vmatprep.subr.bf16.mxu0 0
    %840 = vmatpush1.bf16.msra.mxu0 0
    %841 = vmatprep.subr.bf16.mxu0 0
    %842 = vmatpush1.bf16.msra.mxu0 0
    %843 = vmatprep.subr.bf16.mxu0 0
    %844 = vmatpush1.bf16.msra.mxu0 0
    %845 = vmatprep.subr.bf16.mxu0 0
    %846 = vmatpush1.bf16.msra.mxu0 0
    %847 = vmatprep.subr.bf16.mxu0 0
    %848 = vmatpush1.bf16.msra.mxu0 0
    %849 = vmatprep.subr.bf16.mxu0 0
    %850 = vmatpush1.bf16.msra.mxu0 0
    %851 = vmatprep.mubr.bf16.mxu0 0
    %852 = vmatmul.mubr.bf16.gmra.mrb[0].mxu0 %v807
    %v853 = vpop.f32.mrb[0].mxu0
    %v854 = vadd.f32 0.0, %v853
    %v855 = vpop.f32.mrb[0].mxu0
    %v856 = vpop.f32.mrb[0].mxu0
    %v857 = vadd.f32 0.0, %v856
    %v858 = vpop.f32.mrb[0].mxu0
    %859 = vmatprep.mubr.bf16.mxu0 0
    %860 = vmatmul.mubr.bf16.gmra.mrb[0].mxu0 %v810
    %v861 = vpop.f32.mrb[0].mxu0
    %v862 = vadd.f32 0.0, %v861
    %v863 = vpop.f32.mrb[0].mxu0
    %v864 = vpop.f32.mrb[0].mxu0
    %v865 = vadd.f32 0.0, %v864
    %v866 = vpop.f32.mrb[0].mxu0
    %867 = vmatprep.mubr.bf16.mxu0 0
    %868 = vmatmul.mubr.bf16.gmra.mrb[0].mxu0 %v813
    %v869 = vpop.f32.mrb[0].mxu0
    %v870 = vadd.f32 0.0, %v869
    %v871 = vpop.f32.mrb[0].mxu0
    %v872 = vpop.f32.mrb[0].mxu0
    %v873 = vadd.f32 0.0, %v872
    %v874 = vpop.f32.mrb[0].mxu0
    %875 = vdwg.mxu0
    %877 = vset.pattern.permute.xlu0 0
    %878 = vperm.xlu0 %877, %v800
    %v879 = vpop.permute.xlu0 %878
    %882 = vset.pattern.permute.xlu0 0
    %883 = vperm.xlu0 %882, %v801
    %v884 = vpop.permute.xlu0 %883
    %887 = vset.pattern.permute.xlu0 0
    %888 = vperm.xlu0 %887, %v802
    %v889 = vpop.permute.xlu0 %888
    %892 = vset.pattern.permute.xlu0 0
    %893 = vperm.xlu0 %892, %v803
    %v894 = vpop.permute.xlu0 %893
    %897 = vset.pattern.permute.xlu0 0
    %898 = vperm.xlu0 %897, %v804
    %v899 = vpop.permute.xlu0 %898
    %902 = vset.pattern.permute.xlu0 0
    %903 = vperm.xlu0 %902, %v805
    %v904 = vpop.permute.xlu0 %903
    %v906 = vmul.f32 %v879, %v854
    %v907 = vmul.f32 %v884, %v857
    %v908 = vmul.f32 %v889, %v862
    %v909 = vmul.f32 %v894, %v865
    %v910 = vmul.f32 %v899, %v870
    %v911 = vmul.f32 %v904, %v873
    %v912 = vadd.f32 %v906, 0.0
    %v913 = vadd.f32 %v907, 0.0
    %v914 = vadd.f32 %v908, 0.0
    %v915 = vadd.f32 %v909, 0.0
    %v916 = vadd.f32 %v910, 0.0
    %v917 = vadd.f32 %v911, 0.0
    %v919 = vsel %vm351, %v248, 0
    %v922 = vsel %vm351, %v249, 0
    %v925 = vsel %vm351, %v250, 0
    %927 = vmatprep.subr.bf16.mxu0 0
    %928 = vmatpush1.bf16.msra.mxu0 %v786
    %929 = vmatprep.subr.bf16.mxu0 0
    %930 = vmatpush1.bf16.msra.mxu0 %v817
    %931 = vmatprep.subr.bf16.mxu0 0
    %932 = vmatpush1.bf16.msra.mxu0 0
    %933 = vmatprep.subr.bf16.mxu0 0
    %934 = vmatpush1.bf16.msra.mxu0 0
    %935 = vmatprep.subr.bf16.mxu0 0
    %936 = vmatpush1.bf16.msra.mxu0 0
    %937 = vmatprep.subr.bf16.mxu0 0
    %938 = vmatpush1.bf16.msra.mxu0 0
    %939 = vmatprep.subr.bf16.mxu0 0
    %940 = vmatpush1.bf16.msra.mxu0 0
    %941 = vmatprep.subr.bf16.mxu0 0
    %942 = vmatpush1.bf16.msra.mxu0 0
    %943 = vmatprep.subr.bf16.mxu0 0
    %944 = vmatpush1.bf16.msra.mxu0 0
    %945 = vmatprep.subr.bf16.mxu0 0
    %946 = vmatpush1.bf16.msra.mxu0 0
    %947 = vmatprep.subr.bf16.mxu0 0
    %948 = vmatpush1.bf16.msra.mxu0 0
    %949 = vmatprep.subr.bf16.mxu0 0
    %950 = vmatpush1.bf16.msra.mxu0 0
    %951 = vmatprep.subr.bf16.mxu0 0
    %952 = vmatpush1.bf16.msra.mxu0 0
    %953 = vmatprep.subr.bf16.mxu0 0
    %954 = vmatpush1.bf16.msra.mxu0 0
    %955 = vmatprep.subr.bf16.mxu0 0
    %956 = vmatpush1.bf16.msra.mxu0 0
    %957 = vmatprep.subr.bf16.mxu0 0
    %958 = vmatpush1.bf16.msra.mxu0 0
    %959 = vmatprep.mubr.bf16.mxu0 0
    %960 = vmatmul.mubr.bf16.gmra.mrb[0].mxu0 %v919
    %v961 = vpop.f32.mrb[0].mxu0
    %v962 = vadd.f32 0.0, %v961
    %v963 = vpop.f32.mrb[0].mxu0
    %v964 = vpop.f32.mrb[0].mxu0
    %v965 = vadd.f32 0.0, %v964
    %v966 = vpop.f32.mrb[0].mxu0
    %967 = vmatprep.mubr.bf16.mxu0 0
    %968 = vmatmul.mubr.bf16.gmra.mrb[0].mxu0 %v922
    %v969 = vpop.f32.mrb[0].mxu0
    %v970 = vadd.f32 0.0, %v969
    %v971 = vpop.f32.mrb[0].mxu0
    %v972 = vpop.f32.mrb[0].mxu0
    %v973 = vadd.f32 0.0, %v972
    %v974 = vpop.f32.mrb[0].mxu0
    %975 = vmatprep.mubr.bf16.mxu0 0
    %976 = vmatmul.mubr.bf16.gmra.mrb[0].mxu0 %v925
    %v977 = vpop.f32.mrb[0].mxu0
    %v978 = vadd.f32 0.0, %v977
    %v979 = vpop.f32.mrb[0].mxu0
    %v980 = vpop.f32.mrb[0].mxu0
    %v981 = vadd.f32 0.0, %v980
    %v982 = vpop.f32.mrb[0].mxu0
    %983 = vdwg.mxu0
    %v984 = vmul.f32 %v879, %v962
    %v985 = vmul.f32 %v884, %v965
    %v986 = vmul.f32 %v889, %v970
    %v987 = vmul.f32 %v894, %v973
    %v988 = vmul.f32 %v899, %v978
    %v989 = vmul.f32 %v904, %v981
    %v990 = vadd.f32 %v984, 0.0
    %v991 = vadd.f32 %v985, 0.0
    %v992 = vadd.f32 %v986, 0.0
    %v993 = vadd.f32 %v987, 0.0
    %v994 = vadd.f32 %v988, 0.0
    %v995 = vadd.f32 %v989, 0.0
    %s996 = scalar_lea.vmem %s5, 16
    %v997 = vld [vmem:[%s996] sm:$0xf]
    %v998 = vld [vmem:[%s996 + $0x4] sm:$0xf]
    %v999 = vld [vmem:[%s996 + $0x8] sm:$0xf]
    %v1000 = vld [vmem:[%s996 + $0xc] sm:$0xf]
    %v1005 = vunpack.c.l.b16 %v997
    %v1006 = vunpack.c.l.b16 %v998
    %v1007 = vunpack.c.l.b16 %v999
    %v1008 = vunpack.c.l.b16 %v1000
    %v1009 = vpack.c.b16 %v1006, %v1005
    %v1010 = vpack.c.b16 %v1008, %v1007
    %1013 = vmatprep.subr.bf16.mxu0 0
    %1014 = vmatpush1.bf16.msra.mxu0 %v1009
    %1015 = vmatprep.subr.bf16.mxu0 0
    %1016 = vmatpush1.bf16.msra.mxu0 %v1010
    %1017 = vmatprep.subr.bf16.mxu0 0
    %1018 = vmatpush1.bf16.msra.mxu0 0
    %1019 = vmatprep.subr.bf16.mxu0 0
    %1020 = vmatpush1.bf16.msra.mxu0 0
    %1021 = vmatprep.subr.bf16.mxu0 0
    %1022 = vmatpush1.bf16.msra.mxu0 0
    %1023 = vmatprep.subr.bf16.mxu0 0
    %1024 = vmatpush1.bf16.msra.mxu0 0
    %1025 = vmatprep.subr.bf16.mxu0 0
    %1026 = vmatpush1.bf16.msra.mxu0 0
    %1027 = vmatprep.subr.bf16.mxu0 0
    %1028 = vmatpush1.bf16.msra.mxu0 0
    %1029 = vmatprep.subr.bf16.mxu0 0
    %1030 = vmatpush1.bf16.msra.mxu0 0
    %1031 = vmatprep.subr.bf16.mxu0 0
    %1032 = vmatpush1.bf16.msra.mxu0 0
    %1033 = vmatprep.subr.bf16.mxu0 0
    %1034 = vmatpush1.bf16.msra.mxu0 0
    %1035 = vmatprep.subr.bf16.mxu0 0
    %1036 = vmatpush1.bf16.msra.mxu0 0
    %1037 = vmatprep.subr.bf16.mxu0 0
    %1038 = vmatpush1.bf16.msra.mxu0 0
    %1039 = vmatprep.subr.bf16.mxu0 0
    %1040 = vmatpush1.bf16.msra.mxu0 0
    %1041 = vmatprep.subr.bf16.mxu0 0
    %1042 = vmatpush1.bf16.msra.mxu0 0
    %1043 = vmatprep.subr.bf16.mxu0 0
    %1044 = vmatpush1.bf16.msra.mxu0 0
    %1045 = vmatprep.mubr.bf16.mxu0 0
    %1046 = vmatmul.mubr.bf16.gmra.mrb[0].mxu0 %v733
    %v1047 = vpop.f32.mrb[0].mxu0
    %v1048 = vadd.f32 0.0, %v1047
    %v1049 = vpop.f32.mrb[0].mxu0
    %v1050 = vpop.f32.mrb[0].mxu0
    %v1051 = vadd.f32 0.0, %v1050
    %v1052 = vpop.f32.mrb[0].mxu0
    %1053 = vmatprep.mubr.bf16.mxu0 0
    %1054 = vmatmul.mubr.bf16.gmra.mrb[0].mxu0 %v736
    %v1055 = vpop.f32.mrb[0].mxu0
    %v1056 = vadd.f32 0.0, %v1055
    %v1057 = vpop.f32.mrb[0].mxu0
    %v1058 = vpop.f32.mrb[0].mxu0
    %v1059 = vpop.f32.mrb[0].mxu0
    %1060 = vdwg.mxu0
    %v1061 = vpack.c.bf16 %v1051, %v1048
    %v1062 = vpack.c.bf16 %v1056, %v1056
    %vm1063 = vcmp.eq.s32.totalorder %v127, 1
    %vm1064 = vcmp.eq.s32.totalorder %v128, 1
    %vm1065 = vcmp.eq.s32.totalorder %v129, 1
    %vm1066 = vcmp.eq.s32.totalorder %v130, 1
    %vm1067 = vcmp.eq.s32.totalorder %v131, 1
    %vm1068 = vcmp.eq.s32.totalorder %v132, 1
    %v1069 = vsel %vm1063, 1, 0
    %v1070 = vsel %vm1064, 1, 0
    %v1071 = vsel %vm1065, 1, 0
    %v1072 = vsel %vm1066, 1, 0
    %v1073 = vsel %vm1067, 1, 0
    %v1074 = vsel %vm1068, 1, 0
    %v1075 = vcvt.s32.f32 %v1069
    %v1076 = vcvt.s32.f32 %v1070
    %v1077 = vcvt.s32.f32 %v1071
    %v1078 = vcvt.s32.f32 %v1072
    %v1079 = vcvt.s32.f32 %v1073
    %v1080 = vcvt.s32.f32 %v1074
    %v1082 = vsel %vm815, %v1062, 0
    %1084 = vmatprep.subr.bf16.mxu0 0
    %1085 = vmatpush1.bf16.msra.mxu0 %v1061
    %1086 = vmatprep.subr.bf16.mxu0 0
    %1087 = vmatpush1.bf16.msra.mxu0 %v1082
    %1088 = vmatprep.subr.bf16.mxu0 0
    %1089 = vmatpush1.bf16.msra.mxu0 0
    %1090 = vmatprep.subr.bf16.mxu0 0
    %1091 = vmatpush1.bf16.msra.mxu0 0
    %1092 = vmatprep.subr.bf16.mxu0 0
    %1093 = vmatpush1.bf16.msra.mxu0 0
    %1094 = vmatprep.subr.bf16.mxu0 0
    %1095 = vmatpush1.bf16.msra.mxu0 0
    %1096 = vmatprep.subr.bf16.mxu0 0
    %1097 = vmatpush1.bf16.msra.mxu0 0
    %1098 = vmatprep.subr.bf16.mxu0 0
    %1099 = vmatpush1.bf16.msra.mxu0 0
    %1100 = vmatprep.subr.bf16.mxu0 0
    %1101 = vmatpush1.bf16.msra.mxu0 0
    %1102 = vmatprep.subr.bf16.mxu0 0
    %1103 = vmatpush1.bf16.msra.mxu0 0
    %1104 = vmatprep.subr.bf16.mxu0 0
    %1105 = vmatpush1.bf16.msra.mxu0 0
    %1106 = vmatprep.subr.bf16.mxu0 0
    %1107 = vmatpush1.bf16.msra.mxu0 0
    %1108 = vmatprep.subr.bf16.mxu0 0
    %1109 = vmatpush1.bf16.msra.mxu0 0
    %1110 = vmatprep.subr.bf16.mxu0 0
    %1111 = vmatpush1.bf16.msra.mxu0 0
    %1112 = vmatprep.subr.bf16.mxu0 0
    %1113 = vmatpush1.bf16.msra.mxu0 0
    %1114 = vmatprep.subr.bf16.mxu0 0
    %1115 = vmatpush1.bf16.msra.mxu0 0
    %1116 = vmatprep.mubr.bf16.mxu0 0
    %1117 = vmatmul.mubr.bf16.gmra.mrb[0].mxu0 %v807
    %v1118 = vpop.f32.mrb[0].mxu0
    %v1119 = vadd.f32 0.0, %v1118
    %v1120 = vpop.f32.mrb[0].mxu0
    %v1121 = vpop.f32.mrb[0].mxu0
    %v1122 = vadd.f32 0.0, %v1121
    %v1123 = vpop.f32.mrb[0].mxu0
    %1124 = vmatprep.mubr.bf16.mxu0 0
    %1125 = vmatmul.mubr.bf16.gmra.mrb[0].mxu0 %v810
    %v1126 = vpop.f32.mrb[0].mxu0
    %v1127 = vadd.f32 0.0, %v1126
    %v1128 = vpop.f32.mrb[0].mxu0
    %v1129 = vpop.f32.mrb[0].mxu0
    %v1130 = vadd.f32 0.0, %v1129
    %v1131 = vpop.f32.mrb[0].mxu0
    %1132 = vmatprep.mubr.bf16.mxu0 0
    %1133 = vmatmul.mubr.bf16.gmra.mrb[0].mxu0 %v813
    %v1134 = vpop.f32.mrb[0].mxu0
    %v1135 = vadd.f32 0.0, %v1134
    %v1136 = vpop.f32.mrb[0].mxu0
    %v1137 = vpop.f32.mrb[0].mxu0
    %v1138 = vadd.f32 0.0, %v1137
    %v1139 = vpop.f32.mrb[0].mxu0
    %1140 = vdwg.mxu0
    %1142 = vset.pattern.permute.xlu0 0
    %1143 = vperm.xlu0 %1142, %v1075
    %v1144 = vpop.permute.xlu0 %1143
    %1147 = vset.pattern.permute.xlu0 0
    %1148 = vperm.xlu0 %1147, %v1076
    %v1149 = vpop.permute.xlu0 %1148
    %1152 = vset.pattern.permute.xlu0 0
    %1153 = vperm.xlu0 %1152, %v1077
    %v1154 = vpop.permute.xlu0 %1153
    %1157 = vset.pattern.permute.xlu0 0
    %1158 = vperm.xlu0 %1157, %v1078
    %v1159 = vpop.permute.xlu0 %1158
    %1162 = vset.pattern.permute.xlu0 0
    %1163 = vperm.xlu0 %1162, %v1079
    %v1164 = vpop.permute.xlu0 %1163
    %1167 = vset.pattern.permute.xlu0 0
    %1168 = vperm.xlu0 %1167, %v1080
    %v1169 = vpop.permute.xlu0 %1168
    %v1171 = vmul.f32 %v1144, %v1119
    %v1172 = vmul.f32 %v1149, %v1122
    %v1173 = vmul.f32 %v1154, %v1127
    %v1174 = vmul.f32 %v1159, %v1130
    %v1175 = vmul.f32 %v1164, %v1135
    %v1176 = vmul.f32 %v1169, %v1138
    %v1177 = vadd.f32 %v912, %v1171
    %v1178 = vadd.f32 %v913, %v1172
    %v1179 = vadd.f32 %v914, %v1173
    %v1180 = vadd.f32 %v915, %v1174
    %v1181 = vadd.f32 %v916, %v1175
    %v1182 = vadd.f32 %v917, %v1176
    %1183 = vmatprep.subr.bf16.mxu0 0
    %1184 = vmatpush1.bf16.msra.mxu0 %v1061
    %1185 = vmatprep.subr.bf16.mxu0 0
    %1186 = vmatpush1.bf16.msra.mxu0 %v1082
    %1187 = vmatprep.subr.bf16.mxu0 0
    %1188 = vmatpush1.bf16.msra.mxu0 0
    %1189 = vmatprep.subr.bf16.mxu0 0
    %1190 = vmatpush1.bf16.msra.mxu0 0
    %1191 = vmatprep.subr.bf16.mxu0 0
    %1192 = vmatpush1.bf16.msra.mxu0 0
    %1193 = vmatprep.subr.bf16.mxu0 0
    %1194 = vmatpush1.bf16.msra.mxu0 0
    %1195 = vmatprep.subr.bf16.mxu0 0
    %1196 = vmatpush1.bf16.msra.mxu0 0
    %1197 = vmatprep.subr.bf16.mxu0 0
    %1198 = vmatpush1.bf16.msra.mxu0 0
    %1199 = vmatprep.subr.bf16.mxu0 0
    %1200 = vmatpush1.bf16.msra.mxu0 0
    %1201 = vmatprep.subr.bf16.mxu0 0
    %1202 = vmatpush1.bf16.msra.mxu0 0
    %1203 = vmatprep.subr.bf16.mxu0 0
    %1204 = vmatpush1.bf16.msra.mxu0 0
    %1205 = vmatprep.subr.bf16.mxu0 0
    %1206 = vmatpush1.bf16.msra.mxu0 0
    %1207 = vmatprep.subr.bf16.mxu0 0
    %1208 = vmatpush1.bf16.msra.mxu0 0
    %1209 = vmatprep.subr.bf16.mxu0 0
    %1210 = vmatpush1.bf16.msra.mxu0 0
    %1211 = vmatprep.subr.bf16.mxu0 0
    %1212 = vmatpush1.bf16.msra.mxu0 0
    %1213 = vmatprep.subr.bf16.mxu0 0
    %1214 = vmatpush1.bf16.msra.mxu0 0
    %1215 = vmatprep.mubr.bf16.mxu0 0
    %1216 = vmatmul.mubr.bf16.gmra.mrb[0].mxu0 %v919
    %v1217 = vpop.f32.mrb[0].mxu0
    %v1218 = vadd.f32 0.0, %v1217
    %v1219 = vpop.f32.mrb[0].mxu0
    %v1220 = vpop.f32.mrb[0].mxu0
    %v1221 = vadd.f32 0.0, %v1220
    %v1222 = vpop.f32.mrb[0].mxu0
    %1223 = vmatprep.mubr.bf16.mxu0 0
    %1224 = vmatmul.mubr.bf16.gmra.mrb[0].mxu0 %v922
    %v1225 = vpop.f32.mrb[0].mxu0
    %v1226 = vadd.f32 0.0, %v1225
    %v1227 = vpop.f32.mrb[0].mxu0
    %v1228 = vpop.f32.mrb[0].mxu0
    %v1229 = vadd.f32 0.0, %v1228
    %v1230 = vpop.f32.mrb[0].mxu0
    %1231 = vmatprep.mubr.bf16.mxu0 0
    %1232 = vmatmul.mubr.bf16.gmra.mrb[0].mxu0 %v925
    %v1233 = vpop.f32.mrb[0].mxu0
    %v1234 = vadd.f32 0.0, %v1233
    %v1235 = vpop.f32.mrb[0].mxu0
    %v1236 = vpop.f32.mrb[0].mxu0
    %v1237 = vadd.f32 0.0, %v1236
    %v1238 = vpop.f32.mrb[0].mxu0
    %1239 = vdwg.mxu0
    %v1240 = vmul.f32 %v1144, %v1218
    %v1241 = vmul.f32 %v1149, %v1221
    %v1242 = vmul.f32 %v1154, %v1226
    %v1243 = vmul.f32 %v1159, %v1229
    %v1244 = vmul.f32 %v1164, %v1234
    %v1245 = vmul.f32 %v1169, %v1237
    %v1246 = vadd.f32 %v990, %v1240
    %v1247 = vadd.f32 %v991, %v1241
    %v1248 = vadd.f32 %v992, %v1242
    %v1249 = vadd.f32 %v993, %v1243
    %v1250 = vadd.f32 %v994, %v1244
    %v1251 = vadd.f32 %v995, %v1245
    %s1252 = scalar_lea.vmem %s5, 32
    %v1253 = vld [vmem:[%s1252] sm:$0xf]
    %v1254 = vld [vmem:[%s1252 + $0x4] sm:$0xf]
    %v1255 = vld [vmem:[%s1252 + $0x8] sm:$0xf]
    %v1256 = vld [vmem:[%s1252 + $0xc] sm:$0xf]
    %v1261 = vunpack.c.l.b16 %v1253
    %v1262 = vunpack.c.l.b16 %v1254
    %v1263 = vunpack.c.l.b16 %v1255
    %v1264 = vunpack.c.l.b16 %v1256
    %v1265 = vpack.c.b16 %v1262, %v1261
    %v1266 = vpack.c.b16 %v1264, %v1263
    %1269 = vmatprep.subr.bf16.mxu0 0
    %1270 = vmatpush1.bf16.msra.mxu0 %v1265
    %1271 = vmatprep.subr.bf16.mxu0 0
    %1272 = vmatpush1.bf16.msra.mxu0 %v1266
    %1273 = vmatprep.subr.bf16.mxu0 0
    %1274 = vmatpush1.bf16.msra.mxu0 0
    %1275 = vmatprep.subr.bf16.mxu0 0
    %1276 = vmatpush1.bf16.msra.mxu0 0
    %1277 = vmatprep.subr.bf16.mxu0 0
    %1278 = vmatpush1.bf16.msra.mxu0 0
    %1279 = vmatprep.subr.bf16.mxu0 0
    %1280 = vmatpush1.bf16.msra.mxu0 0
    %1281 = vmatprep.subr.bf16.mxu0 0
    %1282 = vmatpush1.bf16.msra.mxu0 0
    %1283 = vmatprep.subr.bf16.mxu0 0
    %1284 = vmatpush1.bf16.msra.mxu0 0
    %1285 = vmatprep.subr.bf16.mxu0 0
    %1286 = vmatpush1.bf16.msra.mxu0 0
    %1287 = vmatprep.subr.bf16.mxu0 0
    %1288 = vmatpush1.bf16.msra.mxu0 0
    %1289 = vmatprep.subr.bf16.mxu0 0
    %1290 = vmatpush1.bf16.msra.mxu0 0
    %1291 = vmatprep.subr.bf16.mxu0 0
    %1292 = vmatpush1.bf16.msra.mxu0 0
    %1293 = vmatprep.subr.bf16.mxu0 0
    %1294 = vmatpush1.bf16.msra.mxu0 0
    %1295 = vmatprep.subr.bf16.mxu0 0
    %1296 = vmatpush1.bf16.msra.mxu0 0
    %1297 = vmatprep.subr.bf16.mxu0 0
    %1298 = vmatpush1.bf16.msra.mxu0 0
    %1299 = vmatprep.subr.bf16.mxu0 0
    %1300 = vmatpush1.bf16.msra.mxu0 0
    %1301 = vmatprep.mubr.bf16.mxu0 0
    %1302 = vmatmul.mubr.bf16.gmra.mrb[0].mxu0 %v733
    %v1303 = vpop.f32.mrb[0].mxu0
    %v1304 = vadd.f32 0.0, %v1303
    %v1305 = vpop.f32.mrb[0].mxu0
    %v1306 = vpop.f32.mrb[0].mxu0
    %v1307 = vadd.f32 0.0, %v1306
    %v1308 = vpop.f32.mrb[0].mxu0
    %1309 = vmatprep.mubr.bf16.mxu0 0
    %1310 = vmatmul.mubr.bf16.gmra.mrb[0].mxu0 %v736
    %v1311 = vpop.f32.mrb[0].mxu0
    %v1312 = vadd.f32 0.0, %v1311
    %v1313 = vpop.f32.mrb[0].mxu0
    %v1314 = vpop.f32.mrb[0].mxu0
    %v1315 = vpop.f32.mrb[0].mxu0
    %1316 = vdwg.mxu0
    %v1317 = vpack.c.bf16 %v1307, %v1304
    %v1318 = vpack.c.bf16 %v1312, %v1312
    %vm1319 = vcmp.eq.s32.totalorder %v127, 2
    %vm1320 = vcmp.eq.s32.totalorder %v128, 2
    %vm1321 = vcmp.eq.s32.totalorder %v129, 2
    %vm1322 = vcmp.eq.s32.totalorder %v130, 2
    %vm1323 = vcmp.eq.s32.totalorder %v131, 2
    %vm1324 = vcmp.eq.s32.totalorder %v132, 2
    %v1325 = vsel %vm1319, 1, 0
    %v1326 = vsel %vm1320, 1, 0
    %v1327 = vsel %vm1321, 1, 0
    %v1328 = vsel %vm1322, 1, 0
    %v1329 = vsel %vm1323, 1, 0
    %v1330 = vsel %vm1324, 1, 0
    %v1331 = vcvt.s32.f32 %v1325
    %v1332 = vcvt.s32.f32 %v1326
    %v1333 = vcvt.s32.f32 %v1327
    %v1334 = vcvt.s32.f32 %v1328
    %v1335 = vcvt.s32.f32 %v1329
    %v1336 = vcvt.s32.f32 %v1330
    %v1338 = vsel %vm815, %v1318, 0
    %1340 = vmatprep.subr.bf16.mxu0 0
    %1341 = vmatpush1.bf16.msra.mxu0 %v1317
    %1342 = vmatprep.subr.bf16.mxu0 0
    %1343 = vmatpush1.bf16.msra.mxu0 %v1338
    %1344 = vmatprep.subr.bf16.mxu0 0
    %1345 = vmatpush1.bf16.msra.mxu0 0
    %1346 = vmatprep.subr.bf16.mxu0 0
    %1347 = vmatpush1.bf16.msra.mxu0 0
    %1348 = vmatprep.subr.bf16.mxu0 0
    %1349 = vmatpush1.bf16.msra.mxu0 0
    %1350 = vmatprep.subr.bf16.mxu0 0
    %1351 = vmatpush1.bf16.msra.mxu0 0
    %1352 = vmatprep.subr.bf16.mxu0 0
    %1353 = vmatpush1.bf16.msra.mxu0 0
    %1354 = vmatprep.subr.bf16.mxu0 0
    %1355 = vmatpush1.bf16.msra.mxu0 0
    %1356 = vmatprep.subr.bf16.mxu0 0
    %1357 = vmatpush1.bf16.msra.mxu0 0
    %1358 = vmatprep.subr.bf16.mxu0 0
    %1359 = vmatpush1.bf16.msra.mxu0 0
    %1360 = vmatprep.subr.bf16.mxu0 0
    %1361 = vmatpush1.bf16.msra.mxu0 0
    %1362 = vmatprep.subr.bf16.mxu0 0
    %1363 = vmatpush1.bf16.msra.mxu0 0
    %1364 = vmatprep.subr.bf16.mxu0 0
    %1365 = vmatpush1.bf16.msra.mxu0 0
    %1366 = vmatprep.subr.bf16.mxu0 0
    %1367 = vmatpush1.bf16.msra.mxu0 0
    %1368 = vmatprep.subr.bf16.mxu0 0
    %1369 = vmatpush1.bf16.msra.mxu0 0
    %1370 = vmatprep.subr.bf16.mxu0 0
    %1371 = vmatpush1.bf16.msra.mxu0 0
    %1372 = vmatprep.mubr.bf16.mxu0 0
    %1373 = vmatmul.mubr.bf16.gmra.mrb[0].mxu0 %v807
    %v1374 = vpop.f32.mrb[0].mxu0
    %v1375 = vadd.f32 0.0, %v1374
    %v1376 = vpop.f32.mrb[0].mxu0
    %v1377 = vpop.f32.mrb[0].mxu0
    %v1378 = vadd.f32 0.0, %v1377
    %v1379 = vpop.f32.mrb[0].mxu0
    %1380 = vmatprep.mubr.bf16.mxu0 0
    %1381 = vmatmul.mubr.bf16.gmra.mrb[0].mxu0 %v810
    %v1382 = vpop.f32.mrb[0].mxu0
    %v1383 = vadd.f32 0.0, %v1382
    %v1384 = vpop.f32.mrb[0].mxu0
    %v1385 = vpop.f32.mrb[0].mxu0
    %v1386 = vadd.f32 0.0, %v1385
    %v1387 = vpop.f32.mrb[0].mxu0
    %1388 = vmatprep.mubr.bf16.mxu0 0
    %1389 = vmatmul.mubr.bf16.gmra.mrb[0].mxu0 %v813
    %v1390 = vpop.f32.mrb[0].mxu0
    %v1391 = vadd.f32 0.0, %v1390
    %v1392 = vpop.f32.mrb[0].mxu0
    %v1393 = vpop.f32.mrb[0].mxu0
    %v1394 = vadd.f32 0.0, %v1393
    %v1395 = vpop.f32.mrb[0].mxu0
    %1396 = vdwg.mxu0
    %1398 = vset.pattern.permute.xlu0 0
    %1399 = vperm.xlu0 %1398, %v1331
    %v1400 = vpop.permute.xlu0 %1399
    %1403 = vset.pattern.permute.xlu0 0
    %1404 = vperm.xlu0 %1403, %v1332
    %v1405 = vpop.permute.xlu0 %1404
    %1408 = vset.pattern.permute.xlu0 0
    %1409 = vperm.xlu0 %1408, %v1333
    %v1410 = vpop.permute.xlu0 %1409
    %1413 = vset.pattern.permute.xlu0 0
    %1414 = vperm.xlu0 %1413, %v1334
    %v1415 = vpop.permute.xlu0 %1414
    %1418 = vset.pattern.permute.xlu0 0
    %1419 = vperm.xlu0 %1418, %v1335
    %v1420 = vpop.permute.xlu0 %1419
    %1423 = vset.pattern.permute.xlu0 0
    %1424 = vperm.xlu0 %1423, %v1336
    %v1425 = vpop.permute.xlu0 %1424
    %v1427 = vmul.f32 %v1400, %v1375
    %v1428 = vmul.f32 %v1405, %v1378
    %v1429 = vmul.f32 %v1410, %v1383
    %v1430 = vmul.f32 %v1415, %v1386
    %v1431 = vmul.f32 %v1420, %v1391
    %v1432 = vmul.f32 %v1425, %v1394
    %v1433 = vadd.f32 %v1177, %v1427
    %v1434 = vadd.f32 %v1178, %v1428
    %v1435 = vadd.f32 %v1179, %v1429
    %v1436 = vadd.f32 %v1180, %v1430
    %v1437 = vadd.f32 %v1181, %v1431
    %v1438 = vadd.f32 %v1182, %v1432
    %1439 = vmatprep.subr.bf16.mxu0 0
    %1440 = vmatpush1.bf16.msra.mxu0 %v1317
    %1441 = vmatprep.subr.bf16.mxu0 0
    %1442 = vmatpush1.bf16.msra.mxu0 %v1338
    %1443 = vmatprep.subr.bf16.mxu0 0
    %1444 = vmatpush1.bf16.msra.mxu0 0
    %1445 = vmatprep.subr.bf16.mxu0 0
    %1446 = vmatpush1.bf16.msra.mxu0 0
    %1447 = vmatprep.subr.bf16.mxu0 0
    %1448 = vmatpush1.bf16.msra.mxu0 0
    %1449 = vmatprep.subr.bf16.mxu0 0
    %1450 = vmatpush1.bf16.msra.mxu0 0
    %1451 = vmatprep.subr.bf16.mxu0 0
    %1452 = vmatpush1.bf16.msra.mxu0 0
    %1453 = vmatprep.subr.bf16.mxu0 0
    %1454 = vmatpush1.bf16.msra.mxu0 0
    %1455 = vmatprep.subr.bf16.mxu0 0
    %1456 = vmatpush1.bf16.msra.mxu0 0
    %1457 = vmatprep.subr.bf16.mxu0 0
    %1458 = vmatpush1.bf16.msra.mxu0 0
    %1459 = vmatprep.subr.bf16.mxu0 0
    %1460 = vmatpush1.bf16.msra.mxu0 0
    %1461 = vmatprep.subr.bf16.mxu0 0
    %1462 = vmatpush1.bf16.msra.mxu0 0
    %1463 = vmatprep.subr.bf16.mxu0 0
    %1464 = vmatpush1.bf16.msra.mxu0 0
    %1465 = vmatprep.subr.bf16.mxu0 0
    %1466 = vmatpush1.bf16.msra.mxu0 0
    %1467 = vmatprep.subr.bf16.mxu0 0
    %1468 = vmatpush1.bf16.msra.mxu0 0
    %1469 = vmatprep.subr.bf16.mxu0 0
    %1470 = vmatpush1.bf16.msra.mxu0 0
    %1471 = vmatprep.mubr.bf16.mxu0 0
    %1472 = vmatmul.mubr.bf16.gmra.mrb[0].mxu0 %v919
    %v1473 = vpop.f32.mrb[0].mxu0
    %v1474 = vadd.f32 0.0, %v1473
    %v1475 = vpop.f32.mrb[0].mxu0
    %v1476 = vpop.f32.mrb[0].mxu0
    %v1477 = vadd.f32 0.0, %v1476
    %v1478 = vpop.f32.mrb[0].mxu0
    %1479 = vmatprep.mubr.bf16.mxu0 0
    %1480 = vmatmul.mubr.bf16.gmra.mrb[0].mxu0 %v922
    %v1481 = vpop.f32.mrb[0].mxu0
    %v1482 = vadd.f32 0.0, %v1481
    %v1483 = vpop.f32.mrb[0].mxu0
    %v1484 = vpop.f32.mrb[0].mxu0
    %v1485 = vadd.f32 0.0, %v1484
    %v1486 = vpop.f32.mrb[0].mxu0
    %1487 = vmatprep.mubr.bf16.mxu0 0
    %1488 = vmatmul.mubr.bf16.gmra.mrb[0].mxu0 %v925
    %v1489 = vpop.f32.mrb[0].mxu0
    %v1490 = vadd.f32 0.0, %v1489
    %v1491 = vpop.f32.mrb[0].mxu0
    %v1492 = vpop.f32.mrb[0].mxu0
    %v1493 = vadd.f32 0.0, %v1492
    %v1494 = vpop.f32.mrb[0].mxu0
    %1495 = vdwg.mxu0
    %v1496 = vmul.f32 %v1400, %v1474
    %v1497 = vmul.f32 %v1405, %v1477
    %v1498 = vmul.f32 %v1410, %v1482
    %v1499 = vmul.f32 %v1415, %v1485
    %v1500 = vmul.f32 %v1420, %v1490
    %v1501 = vmul.f32 %v1425, %v1493
    %v1502 = vadd.f32 %v1246, %v1496
    %v1503 = vadd.f32 %v1247, %v1497
    %v1504 = vadd.f32 %v1248, %v1498
    %v1505 = vadd.f32 %v1249, %v1499
    %v1506 = vadd.f32 %v1250, %v1500
    %v1507 = vadd.f32 %v1251, %v1501
    %v1508 = vld [vmem:[%s6] sm:$0x3]
    %v1509 = vpack.c.bf16 %v708, %v707
    %v1510 = vpack.c.bf16 %v710, %v709
    %v1511 = vpack.c.bf16 %v712, %v711
    %vm1512 = vcmask 23552
    %v1514 = vsel %vm1512, %v1509, 0
    %v1517 = vsel %vm1512, %v1510, 0
    %v1520 = vsel %vm1512, %v1511, 0
    %vm1522 = vcmask 1040384
    %v1523 = vsel %vm1522, 4294967295, 65535
    %v1524 = vsel %vm436, %v1523, 0
    %v1526 = vand.u32 %v1508, %v1524
    %1528 = vmatprep.subr.bf16.mxu0 0
    %1529 = vmatpush1.bf16.msra.mxu0 %v1526
    %1530 = vmatprep.subr.bf16.mxu0 0
    %1531 = vmatpush1.bf16.msra.mxu0 0
    %1532 = vmatprep.subr.bf16.mxu0 0
    %1533 = vmatpush1.bf16.msra.mxu0 0
    %1534 = vmatprep.subr.bf16.mxu0 0
    %1535 = vmatpush1.bf16.msra.mxu0 0
    %1536 = vmatprep.subr.bf16.mxu0 0
    %1537 = vmatpush1.bf16.msra.mxu0 0
    %1538 = vmatprep.subr.bf16.mxu0 0
    %1539 = vmatpush1.bf16.msra.mxu0 0
    %1540 = vmatprep.subr.bf16.mxu0 0
    %1541 = vmatpush1.bf16.msra.mxu0 0
    %1542 = vmatprep.subr.bf16.mxu0 0
    %1543 = vmatpush1.bf16.msra.mxu0 0
    %1544 = vmatprep.subr.bf16.mxu0 0
    %1545 = vmatpush1.bf16.msra.mxu0 0
    %1546 = vmatprep.subr.bf16.mxu0 0
    %1547 = vmatpush1.bf16.msra.mxu0 0
    %1548 = vmatprep.subr.bf16.mxu0 0
    %1549 = vmatpush1.bf16.msra.mxu0 0
    %1550 = vmatprep.subr.bf16.mxu0 0
    %1551 = vmatpush1.bf16.msra.mxu0 0
    %1552 = vmatprep.subr.bf16.mxu0 0
    %1553 = vmatpush1.bf16.msra.mxu0 0
    %1554 = vmatprep.subr.bf16.mxu0 0
    %1555 = vmatpush1.bf16.msra.mxu0 0
    %1556 = vmatprep.subr.bf16.mxu0 0
    %1557 = vmatpush1.bf16.msra.mxu0 0
    %1558 = vmatprep.subr.bf16.mxu0 0
    %1559 = vmatpush1.bf16.msra.mxu0 0
    %1560 = vmatprep.mubr.bf16.mxu0 0
    %1561 = vmatmul.mubr.bf16.gmra.mrb[0].mxu0 %v1514
    %v1562 = vpop.f32.mrb[0].mxu0
    %v1563 = vadd.f32 0.0, %v1562
    %v1564 = vpop.f32.mrb[0].mxu0
    %v1565 = vpop.f32.mrb[0].mxu0
    %v1566 = vadd.f32 0.0, %v1565
    %v1567 = vpop.f32.mrb[0].mxu0
    %1568 = vmatprep.mubr.bf16.mxu0 0
    %1569 = vmatmul.mubr.bf16.gmra.mrb[0].mxu0 %v1517
    %v1570 = vpop.f32.mrb[0].mxu0
    %v1571 = vadd.f32 0.0, %v1570
    %v1572 = vpop.f32.mrb[0].mxu0
    %v1573 = vpop.f32.mrb[0].mxu0
    %v1574 = vadd.f32 0.0, %v1573
    %v1575 = vpop.f32.mrb[0].mxu0
    %1576 = vmatprep.mubr.bf16.mxu0 0
    %1577 = vmatmul.mubr.bf16.gmra.mrb[0].mxu0 %v1520
    %v1578 = vpop.f32.mrb[0].mxu0
    %v1579 = vadd.f32 0.0, %v1578
    %v1580 = vpop.f32.mrb[0].mxu0
    %v1581 = vpop.f32.mrb[0].mxu0
    %v1582 = vadd.f32 0.0, %v1581
    %v1583 = vpop.f32.mrb[0].mxu0
    %1584 = vdwg.mxu0
    %v1585 = vld [vmem:[%s7] sm:$0x7]
    %v1586 = vlaneseq
    %v1587 = vshrl.u32 %v1586, 7
    %v1588 = vsub.s32 0, %v1587
    %v1589 = vrot.slane %v1585, %v1588
    %v1590 = vmul.f32 %v1433, %v1589
    %v1591 = vmul.f32 %v1434, %v1589
    %v1592 = vmul.f32 %v1435, %v1589
    %v1593 = vmul.f32 %v1436, %v1589
    %v1594 = vmul.f32 %v1437, %v1589
    %v1595 = vmul.f32 %v1438, %v1589
    %v1596 = vlaneseq
    %v1597 = vshrl.u32 %v1596, 7
    %v1598 = vsub.s32 1, %v1597
    %v1599 = vrot.slane %v1585, %v1598
    %v1600 = vmul.f32 %v1502, %v1599
    %v1601 = vmul.f32 %v1503, %v1599
    %v1602 = vmul.f32 %v1504, %v1599
    %v1603 = vmul.f32 %v1505, %v1599
    %v1604 = vmul.f32 %v1506, %v1599
    %v1605 = vmul.f32 %v1507, %v1599
    %v1606 = vadd.f32 %v1590, %v1600
    %v1607 = vadd.f32 %v1591, %v1601
    %v1608 = vadd.f32 %v1592, %v1602
    %v1609 = vadd.f32 %v1593, %v1603
    %v1610 = vadd.f32 %v1594, %v1604
    %v1611 = vadd.f32 %v1595, %v1605
    %v1612 = vlaneseq
    %v1613 = vshrl.u32 %v1612, 7
    %v1614 = vsub.s32 2, %v1613
    %v1615 = vrot.slane %v1585, %v1614
    %v1616 = vmul.f32 %v1563, %v1615
    %v1617 = vmul.f32 %v1566, %v1615
    %v1618 = vmul.f32 %v1571, %v1615
    %v1619 = vmul.f32 %v1574, %v1615
    %v1620 = vmul.f32 %v1579, %v1615
    %v1621 = vmul.f32 %v1582, %v1615
    %v1622 = vadd.f32 %v1606, %v1616
    %v1623 = vadd.f32 %v1607, %v1617
    %v1624 = vadd.f32 %v1608, %v1618
    %v1625 = vadd.f32 %v1609, %v1619
    %v1626 = vadd.f32 %v1610, %v1620
    %v1627 = vadd.f32 %v1611, %v1621
    %v1628 = vsel %vm731, %v1622, 0.0
    %1629 = vadd.xlane.f32.xlu0 %v1628
    %v1630 = vpop.xlane.xlu0 %1629
    %v1631 = vsel %vm731, %v1623, 0.0
    %1632 = vadd.xlane.f32.xlu0 %v1631
    %v1633 = vpop.xlane.xlu0 %1632
    %v1634 = vsel %vm731, %v1624, 0.0
    %1635 = vadd.xlane.f32.xlu0 %v1634
    %v1636 = vpop.xlane.xlu0 %1635
    %v1637 = vsel %vm731, %v1625, 0.0
    %1638 = vadd.xlane.f32.xlu0 %v1637
    %v1639 = vpop.xlane.xlu0 %1638
    %v1640 = vsel %vm731, %v1626, 0.0
    %1641 = vadd.xlane.f32.xlu0 %v1640
    %v1642 = vpop.xlane.xlu0 %1641
    %v1643 = vsel %vm731, %v1627, 0.0
    %1644 = vadd.xlane.f32.xlu0 %v1643
    %v1645 = vpop.xlane.xlu0 %1644
    %vm1646 = vcmp.ge.f32.partialorder %v1630, 0.0
    %vm1647 = vcmp.ge.f32.partialorder %v1633, 0.0
    %vm1648 = vcmp.ge.f32.partialorder %v1636, 0.0
    %vm1649 = vcmp.ge.f32.partialorder %v1639, 0.0
    %vm1650 = vcmp.ge.f32.partialorder %v1642, 0.0
    %vm1651 = vcmp.ge.f32.partialorder %v1645, 0.0
    %v1652 = vmul.f32 %v1630, 0.2
    %v1653 = vmul.f32 %v1633, 0.2
    %v1654 = vmul.f32 %v1636, 0.2
    %v1655 = vmul.f32 %v1639, 0.2
    %v1656 = vmul.f32 %v1642, 0.2
    %v1657 = vmul.f32 %v1645, 0.2
    %v1658 = vsel %vm1646, %v1630, %v1652
    %v1659 = vsel %vm1647, %v1633, %v1653
    %v1660 = vsel %vm1648, %v1636, %v1654
    %v1661 = vsel %vm1649, %v1639, %v1655
    %v1662 = vsel %vm1650, %v1642, %v1656
    %v1663 = vsel %vm1651, %v1645, %v1657
    %v1664 = vsel %vm191, %v1658, -1e+30
    %v1665 = vsel %vm192, %v1659, -1e+30
    %v1666 = vsel %vm193, %v1660, -1e+30
    %v1667 = vsel %vm194, %v1661, -1e+30
    %v1668 = vsel %vm195, %v1662, -1e+30
    %v1669 = vsel %vm196, %v1663, -1e+30
    %v1670 = vsel %vm351, %v1664, -inf
    %v1671 = vsel %vm351, %v1665, -inf
    %v1672 = vsel %vm351, %v1666, -inf
    %v1673 = vsel %vm351, %v1667, -inf
    %v1674 = vsel %vm351, %v1668, -inf
    %v1675 = vmax.f32 %v1670, %v1674
    %v1676 = vsel %vm351, %v1669, -inf
    %v1677 = vmax.f32 %v1671, %v1676
    %v1678 = vmax.f32 %v1675, %v1677
    %v1679 = vmax.f32 %v1672, %v1673
    %v1680 = vmax.f32 %v1678, %v1679
    %v1681 = vrot.slane %v1680, 4
    %v1682 = vmax.f32 %v1680, %v1681
    %v1683 = vrot.slane %v1682, 2
    %v1684 = vmax.f32 %v1682, %v1683
    %v1685 = vrot.slane %v1684, 1
    %v1686 = vmax.f32 %v1684, %v1685
    %v1687 = vsel %vm191, %v1686, 0.0
    %v1688 = vsel %vm192, %v1686, 0.0
    %v1689 = vsel %vm193, %v1686, 0.0
    %v1690 = vsel %vm194, %v1686, 0.0
    %v1691 = vsel %vm195, %v1686, 0.0
    %v1692 = vsel %vm196, %v1686, 0.0
    %v1693 = vsel %vm351, %v1687, 0.0
    %1694 = vadd.xlane.f32.xlu0 %v1693
    %v1695 = vpop.xlane.xlu0 %1694
    %v1696 = vsel %vm351, %v1688, 0.0
    %1697 = vadd.xlane.f32.xlu0 %v1696
    %v1698 = vpop.xlane.xlu0 %1697
    %v1699 = vsel %vm351, %v1689, 0.0
    %1700 = vadd.xlane.f32.xlu0 %v1699
    %v1701 = vpop.xlane.xlu0 %1700
    %v1702 = vsel %vm351, %v1690, 0.0
    %1703 = vadd.xlane.f32.xlu0 %v1702
    %v1704 = vpop.xlane.xlu0 %1703
    %v1705 = vsel %vm351, %v1691, 0.0
    %1706 = vadd.xlane.f32.xlu0 %v1705
    %v1707 = vpop.xlane.xlu0 %1706
    %v1708 = vsel %vm351, %v1692, 0.0
    %1709 = vadd.xlane.f32.xlu0 %v1708
    %v1710 = vpop.xlane.xlu0 %1709
    %v1711 = vsub.f32 %v1658, %v1695
    %v1712 = vsub.f32 %v1659, %v1698
    %v1713 = vsub.f32 %v1660, %v1701
    %v1714 = vsub.f32 %v1661, %v1704
    %v1715 = vsub.f32 %v1662, %v1707
    %v1716 = vsub.f32 %v1663, %v1710
    %v1717 = vmul.f32 %v1711, 1.442695
    %v1718 = vpow.pop %v1717
    %v1719 = vmul.f32 %v1712, 1.442695
    %v1720 = vpow.pop %v1719
    %v1721 = vmul.f32 %v1713, 1.442695
    %v1722 = vpow.pop %v1721
    %v1723 = vmul.f32 %v1714, 1.442695
    %v1724 = vpow.pop %v1723
    %v1725 = vmul.f32 %v1715, 1.442695
    %v1726 = vpow.pop %v1725
    %v1727 = vmul.f32 %v1716, 1.442695
    %v1728 = vpow.pop %v1727
    %v1729 = vmul.f32 %v227, %v1718
    %v1730 = vmul.f32 %v228, %v1720
    %v1731 = vmul.f32 %v229, %v1722
    %v1732 = vmul.f32 %v230, %v1724
    %v1733 = vmul.f32 %v231, %v1726
    %v1734 = vmul.f32 %v232, %v1728
    %v1735 = vsel %vm351, %v1729, 0.0
    %v1736 = vsel %vm351, %v1730, 0.0
    %v1737 = vadd.f32 %v1735, %v1736
    %v1738 = vsel %vm351, %v1731, 0.0
    %v1739 = vadd.f32 %v1737, %v1738
    %v1740 = vsel %vm351, %v1732, 0.0
    %v1741 = vadd.f32 %v1739, %v1740
    %v1742 = vsel %vm351, %v1733, 0.0
    %v1743 = vadd.f32 %v1741, %v1742
    %v1744 = vsel %vm351, %v1734, 0.0
    %v1745 = vadd.f32 %v1743, %v1744
    %v1746 = vrot.slane %v1745, 4
    %v1747 = vadd.f32 %v1745, %v1746
    %v1748 = vrot.slane %v1747, 2
    %v1749 = vadd.f32 %v1747, %v1748
    %v1750 = vrot.slane %v1749, 1
    %v1751 = vadd.f32 %v1749, %v1750
    %v1752 = vmul.f32 %v227, %v1751
    %v1753 = vmul.f32 %v228, %v1751
    %v1754 = vmul.f32 %v229, %v1751
    %v1755 = vmul.f32 %v230, %v1751
    %v1756 = vmul.f32 %v231, %v1751
    %v1757 = vmul.f32 %v232, %v1751
    %v1758 = vsel %vm351, %v1752, 0.0
    %1759 = vadd.xlane.f32.xlu0 %v1758
    %v1760 = vpop.xlane.xlu0 %1759
    %v1761 = vsel %vm351, %v1753, 0.0
    %1762 = vadd.xlane.f32.xlu0 %v1761
    %v1763 = vpop.xlane.xlu0 %1762
    %v1764 = vsel %vm351, %v1754, 0.0
    %1765 = vadd.xlane.f32.xlu0 %v1764
    %v1766 = vpop.xlane.xlu0 %1765
    %v1767 = vsel %vm351, %v1755, 0.0
    %1768 = vadd.xlane.f32.xlu0 %v1767
    %v1769 = vpop.xlane.xlu0 %1768
    %v1770 = vsel %vm351, %v1756, 0.0
    %1771 = vadd.xlane.f32.xlu0 %v1770
    %v1772 = vpop.xlane.xlu0 %1771
    %v1773 = vsel %vm351, %v1757, 0.0
    %1774 = vadd.xlane.f32.xlu0 %v1773
    %v1775 = vpop.xlane.xlu0 %1774
    %v1776 = vrcp.pop %v1760
    %v1777 = vmul.f32 %v1718, %v1776
    %v1778 = vrcp.pop %v1763
    %v1779 = vmul.f32 %v1720, %v1778
    %v1780 = vrcp.pop %v1766
    %v1781 = vmul.f32 %v1722, %v1780
    %v1782 = vrcp.pop %v1769
    %v1783 = vmul.f32 %v1724, %v1782
    %v1784 = vrcp.pop %v1772
    %v1785 = vmul.f32 %v1726, %v1784
    %v1786 = vrcp.pop %v1775
    %v1787 = vmul.f32 %v1728, %v1786
    %v1788 = vmul.f32 %v1777, %v1502
    %v1789 = vmul.f32 %v1779, %v1503
    %v1790 = vmul.f32 %v1781, %v1504
    %v1791 = vmul.f32 %v1783, %v1505
    %v1792 = vmul.f32 %v1785, %v1506
    %v1793 = vmul.f32 %v1787, %v1507
    %v1794 = vld [vmem:[%s8] sm:$0x1]
    %v1796 = vlaneseq
    %v1797 = vshrl.u32 %v1796, 7
    %v1798 = vsub.s32 0, %v1797
    %v1799 = vrot.slane %v1794, %v1798
    %vm1801 = vcmask 392192
    %v1803 = vsel %vm1801, %v263, 0
    %v1806 = vsel %vm1801, %v264, 0
    %v1809 = vsel %vm1801, %v265, 0
    %1811 = vmatprep.subr.mxu0 0.0
    %1812 = vmatpush1.msra.mxu0 %v1788
    %1813 = vmatprep.subr.mxu0 0.0
    %1814 = vmatpush1.msra.mxu0 %v1789
    %1815 = vmatprep.subr.mxu0 0.0
    %1816 = vmatpush1.msra.mxu0 %v1790
    %1817 = vmatprep.subr.mxu0 0.0
    %1818 = vmatpush1.msra.mxu0 %v1791
    %1819 = vmatprep.subr.mxu0 0.0
    %1820 = vmatpush1.msra.mxu0 %v1792
    %1821 = vmatprep.subr.mxu0 0.0
    %1822 = vmatpush1.msra.mxu0 %v1793
    %1823 = vmatprep.subr.mxu0 0.0
    %1824 = vmatpush1.msra.mxu0 0.0
    %1825 = vmatprep.subr.mxu0 0.0
    %1826 = vmatpush1.msra.mxu0 0.0
    %1827 = vmatprep.subr.mxu0 0.0
    %1828 = vmatpush1.msra.mxu0 0.0
    %1829 = vmatprep.subr.mxu0 0.0
    %1830 = vmatpush1.msra.mxu0 0.0
    %1831 = vmatprep.subr.mxu0 0.0
    %1832 = vmatpush1.msra.mxu0 0.0
    %1833 = vmatprep.subr.mxu0 0.0
    %1834 = vmatpush1.msra.mxu0 0.0
    %1835 = vmatprep.subr.mxu0 0.0
    %1836 = vmatpush1.msra.mxu0 0.0
    %1837 = vmatprep.subr.mxu0 0.0
    %1838 = vmatpush1.msra.mxu0 0.0
    %1839 = vmatprep.subr.mxu0 0.0
    %1840 = vmatpush1.msra.mxu0 0.0
    %1841 = vmatprep.subr.mxu0 0.0
    %1842 = vmatpush1.msra.mxu0 0.0
    %1843 = vmatprep.subr.mxu0 0.0
    %1844 = vmatpush1.msra.mxu0 0.0
    %1845 = vmatprep.subr.mxu0 0.0
    %1846 = vmatpush1.msra.mxu0 0.0
    %1847 = vmatprep.subr.mxu0 0.0
    %1848 = vmatpush1.msra.mxu0 0.0
    %1849 = vmatprep.subr.mxu0 0.0
    %1850 = vmatpush1.msra.mxu0 0.0
    %1851 = vmatprep.subr.mxu0 0.0
    %1852 = vmatpush1.msra.mxu0 0.0
    %1853 = vmatprep.subr.mxu0 0.0
    %1854 = vmatpush1.msra.mxu0 0.0
    %1855 = vmatprep.subr.mxu0 0.0
    %1856 = vmatpush1.msra.mxu0 0.0
    %1857 = vmatprep.subr.mxu0 0.0
    %1858 = vmatpush1.msra.mxu0 0.0
    %1859 = vmatprep.subr.mxu0 0.0
    %1860 = vmatpush1.msra.mxu0 0.0
    %1861 = vmatprep.subr.mxu0 0.0
    %1862 = vmatpush1.msra.mxu0 0.0
    %1863 = vmatprep.subr.mxu0 0.0
    %1864 = vmatpush1.msra.mxu0 0.0
    %1865 = vmatprep.subr.mxu0 0.0
    %1866 = vmatpush1.msra.mxu0 0.0
    %1867 = vmatprep.subr.mxu0 0.0
    %1868 = vmatpush1.msra.mxu0 0.0
    %1869 = vmatprep.subr.mxu0 0.0
    %1870 = vmatpush1.msra.mxu0 0.0
    %1871 = vmatprep.subr.mxu0 0.0
    %1872 = vmatpush1.msra.mxu0 0.0
    %1873 = vmatprep.subr.mxu0 0.0
    %1874 = vmatpush1.msra.mxu0 0.0
    %1875 = vmatprep.mubr.f32.mxu0 0.0
    %1876 = vmatmul.mubr.f32.gmra.mrb[0].mxu0 %v1803
    %v1877 = vpop.f32.mrb[0].mxu0
    %v1878 = vadd.f32 %v1799, %v1877
    %v1879 = vpop.f32.mrb[0].mxu0
    %1880 = vmatprep.mubr.f32.mxu0 0.0
    %1881 = vmatmul.mubr.f32.gmra.mrb[0].mxu0 %v1806
    %v1882 = vpop.f32.mrb[0].mxu0
    %v1883 = vadd.f32 %v1799, %v1882
    %v1884 = vpop.f32.mrb[0].mxu0
    %1885 = vmatprep.mubr.f32.mxu0 0.0
    %1886 = vmatmul.mubr.f32.gmra.mrb[0].mxu0 %v1809
    %v1887 = vpop.f32.mrb[0].mxu0
    %v1888 = vadd.f32 %v1799, %v1887
    %v1889 = vpop.f32.mrb[0].mxu0
    %1890 = vdwg.mxu0
    %v1891 = vld [vmem:[%s9] sm:$0x7]
    %1892 = vmatprep.subr.mxu0 0.0
    %1893 = vmatpush1.msra.mxu0 %v1878
    %1894 = vmatprep.subr.mxu0 0.0
    %1895 = vmatpush1.msra.mxu0 %v1883
    %1896 = vmatprep.subr.mxu0 0.0
    %1897 = vmatpush1.msra.mxu0 %v1888
    %1898 = vmatprep.subr.mxu0 0.0
    %1899 = vmatpush1.msra.mxu0 0.0
    %1900 = vmatprep.subr.mxu0 0.0
    %1901 = vmatpush1.msra.mxu0 0.0
    %1902 = vmatprep.subr.mxu0 0.0
    %1903 = vmatpush1.msra.mxu0 0.0
    %1904 = vmatprep.subr.mxu0 0.0
    %1905 = vmatpush1.msra.mxu0 0.0
    %1906 = vmatprep.subr.mxu0 0.0
    %1907 = vmatpush1.msra.mxu0 0.0
    %1908 = vmatprep.subr.mxu0 0.0
    %1909 = vmatpush1.msra.mxu0 0.0
    %1910 = vmatprep.subr.mxu0 0.0
    %1911 = vmatpush1.msra.mxu0 0.0
    %1912 = vmatprep.subr.mxu0 0.0
    %1913 = vmatpush1.msra.mxu0 0.0
    %1914 = vmatprep.subr.mxu0 0.0
    %1915 = vmatpush1.msra.mxu0 0.0
    %1916 = vmatprep.subr.mxu0 0.0
    %1917 = vmatpush1.msra.mxu0 0.0
    %1918 = vmatprep.subr.mxu0 0.0
    %1919 = vmatpush1.msra.mxu0 0.0
    %1920 = vmatprep.subr.mxu0 0.0
    %1921 = vmatpush1.msra.mxu0 0.0
    %1922 = vmatprep.subr.mxu0 0.0
    %1923 = vmatpush1.msra.mxu0 0.0
    %1924 = vmatprep.subr.mxu0 0.0
    %1925 = vmatpush1.msra.mxu0 0.0
    %1926 = vmatprep.subr.mxu0 0.0
    %1927 = vmatpush1.msra.mxu0 0.0
    %1928 = vmatprep.subr.mxu0 0.0
    %1929 = vmatpush1.msra.mxu0 0.0
    %1930 = vmatprep.subr.mxu0 0.0
    %1931 = vmatpush1.msra.mxu0 0.0
    %1932 = vmatprep.subr.mxu0 0.0
    %1933 = vmatpush1.msra.mxu0 0.0
    %1934 = vmatprep.subr.mxu0 0.0
    %1935 = vmatpush1.msra.mxu0 0.0
    %1936 = vmatprep.subr.mxu0 0.0
    %1937 = vmatpush1.msra.mxu0 0.0
    %1938 = vmatprep.subr.mxu0 0.0
    %1939 = vmatpush1.msra.mxu0 0.0
    %1940 = vmatprep.subr.mxu0 0.0
    %1941 = vmatpush1.msra.mxu0 0.0
    %1942 = vmatprep.subr.mxu0 0.0
    %1943 = vmatpush1.msra.mxu0 0.0
    %1944 = vmatprep.subr.mxu0 0.0
    %1945 = vmatpush1.msra.mxu0 0.0
    %1946 = vmatprep.subr.mxu0 0.0
    %1947 = vmatpush1.msra.mxu0 0.0
    %1948 = vmatprep.subr.mxu0 0.0
    %1949 = vmatpush1.msra.mxu0 0.0
    %1950 = vmatprep.subr.mxu0 0.0
    %1951 = vmatpush1.msra.mxu0 0.0
    %1952 = vmatprep.subr.mxu0 0.0
    %1953 = vmatpush1.msra.mxu0 0.0
    %1954 = vmatprep.subr.mxu0 0.0
    %1955 = vmatpush1.msra.mxu0 0.0
    %1956 = vmatprep.mubr.f32.mxu0 0.0
    %1957 = vmatmul.mubr.f32.gmra.mrb[0].mxu0 %v353
    %v1958 = vpop.f32.mrb[0].mxu0
    %v1959 = vadd.f32 0.0, %v1958
    %v1960 = vpop.f32.mrb[0].mxu0
    %1961 = vdwg.mxu0
    %v1962 = vmul.f32 %v1959, %v172
    %v1964 = vsel %vm436, %v1962, 0
    %1966 = vmatprep.subr.mxu0 0.0
    %1967 = vmatpush1.msra.mxu0 %v1964
    %1968 = vmatprep.subr.mxu0 0.0
    %1969 = vmatpush1.msra.mxu0 0.0
    %1970 = vmatprep.subr.mxu0 0.0
    %1971 = vmatpush1.msra.mxu0 0.0
    %1972 = vmatprep.subr.mxu0 0.0
    %1973 = vmatpush1.msra.mxu0 0.0
    %1974 = vmatprep.subr.mxu0 0.0
    %1975 = vmatpush1.msra.mxu0 0.0
    %1976 = vmatprep.subr.mxu0 0.0
    %1977 = vmatpush1.msra.mxu0 0.0
    %1978 = vmatprep.subr.mxu0 0.0
    %1979 = vmatpush1.msra.mxu0 0.0
    %1980 = vmatprep.subr.mxu0 0.0
    %1981 = vmatpush1.msra.mxu0 0.0
    %1982 = vmatprep.subr.mxu0 0.0
    %1983 = vmatpush1.msra.mxu0 0.0
    %1984 = vmatprep.subr.mxu0 0.0
    %1985 = vmatpush1.msra.mxu0 0.0
    %1986 = vmatprep.subr.mxu0 0.0
    %1987 = vmatpush1.msra.mxu0 0.0
    %1988 = vmatprep.subr.mxu0 0.0
    %1989 = vmatpush1.msra.mxu0 0.0
    %1990 = vmatprep.subr.mxu0 0.0
    %1991 = vmatpush1.msra.mxu0 0.0
    %1992 = vmatprep.subr.mxu0 0.0
    %1993 = vmatpush1.msra.mxu0 0.0
    %1994 = vmatprep.subr.mxu0 0.0
    %1995 = vmatpush1.msra.mxu0 0.0
    %1996 = vmatprep.subr.mxu0 0.0
    %1997 = vmatpush1.msra.mxu0 0.0
    %1998 = vmatprep.subr.mxu0 0.0
    %1999 = vmatpush1.msra.mxu0 0.0
    %2000 = vmatprep.subr.mxu0 0.0
    %2001 = vmatpush1.msra.mxu0 0.0
    %2002 = vmatprep.subr.mxu0 0.0
    %2003 = vmatpush1.msra.mxu0 0.0
    %2004 = vmatprep.subr.mxu0 0.0
    %2005 = vmatpush1.msra.mxu0 0.0
    %2006 = vmatprep.subr.mxu0 0.0
    %2007 = vmatpush1.msra.mxu0 0.0
    %2008 = vmatprep.subr.mxu0 0.0
    %2009 = vmatpush1.msra.mxu0 0.0
    %2010 = vmatprep.subr.mxu0 0.0
    %2011 = vmatpush1.msra.mxu0 0.0
    %2012 = vmatprep.subr.mxu0 0.0
    %2013 = vmatpush1.msra.mxu0 0.0
    %2014 = vmatprep.subr.mxu0 0.0
    %2015 = vmatpush1.msra.mxu0 0.0
    %2016 = vmatprep.subr.mxu0 0.0
    %2017 = vmatpush1.msra.mxu0 0.0
    %2018 = vmatprep.subr.mxu0 0.0
    %2019 = vmatpush1.msra.mxu0 0.0
    %2020 = vmatprep.subr.mxu0 0.0
    %2021 = vmatpush1.msra.mxu0 0.0
    %2022 = vmatprep.subr.mxu0 0.0
    %2023 = vmatpush1.msra.mxu0 0.0
    %2024 = vmatprep.subr.mxu0 0.0
    %2025 = vmatpush1.msra.mxu0 0.0
    %2026 = vmatprep.subr.mxu0 0.0
    %2027 = vmatpush1.msra.mxu0 0.0
    %2028 = vmatprep.subr.mxu0 0.0
    %2029 = vmatpush1.msra.mxu0 0.0
    %2030 = vmatprep.mubr.f32.mxu0 0.0
    %2031 = vmatmul.mubr.f32.gmra.mrb[0].mxu0 %v428
    %v2032 = vpop.f32.mrb[0].mxu0
    %v2033 = vadd.f32 0.0, %v2032
    %v2034 = vpop.f32.mrb[0].mxu0
    %2035 = vmatprep.mubr.f32.mxu0 0.0
    %2036 = vmatmul.mubr.f32.gmra.mrb[0].mxu0 %v431
    %v2037 = vpop.f32.mrb[0].mxu0
    %v2038 = vadd.f32 0.0, %v2037
    %v2039 = vpop.f32.mrb[0].mxu0
    %2040 = vmatprep.mubr.f32.mxu0 0.0
    %2041 = vmatmul.mubr.f32.gmra.mrb[0].mxu0 %v434
    %v2042 = vpop.f32.mrb[0].mxu0
    %v2043 = vadd.f32 0.0, %v2042
    %v2044 = vpop.f32.mrb[0].mxu0
    %2045 = vdwg.mxu0
    %v2046 = vlaneseq
    %v2047 = vshrl.u32 %v2046, 7
    %v2048 = vsub.s32 2, %v2047
    %v2049 = vrot.slane %v1891, %v2048
    %v2050 = vmul.f32 %v2049, %v2033
    %v2051 = vmul.f32 %v2049, %v2038
    %v2052 = vmul.f32 %v2049, %v2043
    %v2053 = vsub.f32 %v1878, %v2050
    %v2054 = vsub.f32 %v1883, %v2051
    %v2055 = vsub.f32 %v1888, %v2052
    %v2056 = vmul.f32 %v2053, %v2053
    %v2057 = vmul.f32 %v2054, %v2054
    %v2058 = vmul.f32 %v2055, %v2055
    %2059 = vmatprep.subr.mxu0 0.0
    %2060 = vmatpush1.msra.mxu0 %v2056
    %2061 = vmatprep.subr.mxu0 0.0
    %2062 = vmatpush1.msra.mxu0 %v2057
    %2063 = vmatprep.subr.mxu0 0.0
    %2064 = vmatpush1.msra.mxu0 %v2058
    %2065 = vmatprep.subr.mxu0 0.0
    %2066 = vmatpush1.msra.mxu0 0.0
    %2067 = vmatprep.subr.mxu0 0.0
    %2068 = vmatpush1.msra.mxu0 0.0
    %2069 = vmatprep.subr.mxu0 0.0
    %2070 = vmatpush1.msra.mxu0 0.0
    %2071 = vmatprep.subr.mxu0 0.0
    %2072 = vmatpush1.msra.mxu0 0.0
    %2073 = vmatprep.subr.mxu0 0.0
    %2074 = vmatpush1.msra.mxu0 0.0
    %2075 = vmatprep.subr.mxu0 0.0
    %2076 = vmatpush1.msra.mxu0 0.0
    %2077 = vmatprep.subr.mxu0 0.0
    %2078 = vmatpush1.msra.mxu0 0.0
    %2079 = vmatprep.subr.mxu0 0.0
    %2080 = vmatpush1.msra.mxu0 0.0
    %2081 = vmatprep.subr.mxu0 0.0
    %2082 = vmatpush1.msra.mxu0 0.0
    %2083 = vmatprep.subr.mxu0 0.0
    %2084 = vmatpush1.msra.mxu0 0.0
    %2085 = vmatprep.subr.mxu0 0.0
    %2086 = vmatpush1.msra.mxu0 0.0
    %2087 = vmatprep.subr.mxu0 0.0
    %2088 = vmatpush1.msra.mxu0 0.0
    %2089 = vmatprep.subr.mxu0 0.0
    %2090 = vmatpush1.msra.mxu0 0.0
    %2091 = vmatprep.subr.mxu0 0.0
    %2092 = vmatpush1.msra.mxu0 0.0
    %2093 = vmatprep.subr.mxu0 0.0
    %2094 = vmatpush1.msra.mxu0 0.0
    %2095 = vmatprep.subr.mxu0 0.0
    %2096 = vmatpush1.msra.mxu0 0.0
    %2097 = vmatprep.subr.mxu0 0.0
    %2098 = vmatpush1.msra.mxu0 0.0
    %2099 = vmatprep.subr.mxu0 0.0
    %2100 = vmatpush1.msra.mxu0 0.0
    %2101 = vmatprep.subr.mxu0 0.0
    %2102 = vmatpush1.msra.mxu0 0.0
    %2103 = vmatprep.subr.mxu0 0.0
    %2104 = vmatpush1.msra.mxu0 0.0
    %2105 = vmatprep.subr.mxu0 0.0
    %2106 = vmatpush1.msra.mxu0 0.0
    %2107 = vmatprep.subr.mxu0 0.0
    %2108 = vmatpush1.msra.mxu0 0.0
    %2109 = vmatprep.subr.mxu0 0.0
    %2110 = vmatpush1.msra.mxu0 0.0
    %2111 = vmatprep.subr.mxu0 0.0
    %2112 = vmatpush1.msra.mxu0 0.0
    %2113 = vmatprep.subr.mxu0 0.0
    %2114 = vmatpush1.msra.mxu0 0.0
    %2115 = vmatprep.subr.mxu0 0.0
    %2116 = vmatpush1.msra.mxu0 0.0
    %2117 = vmatprep.subr.mxu0 0.0
    %2118 = vmatpush1.msra.mxu0 0.0
    %2119 = vmatprep.subr.mxu0 0.0
    %2120 = vmatpush1.msra.mxu0 0.0
    %2121 = vmatprep.subr.mxu0 0.0
    %2122 = vmatpush1.msra.mxu0 0.0
    %2123 = vmatprep.mubr.f32.mxu0 0.0
    %2124 = vmatmul.mubr.f32.gmra.mrb[0].mxu0 %v353
    %v2125 = vpop.f32.mrb[0].mxu0
    %v2126 = vadd.f32 0.0, %v2125
    %v2127 = vpop.f32.mrb[0].mxu0
    %2128 = vdwg.mxu0
    %v2129 = vmul.f32 %v2126, %v172
    %v2130 = vlaneseq
    %v2131 = vshrl.u32 %v2130, 7
    %v2132 = vsub.s32 0, %v2131
    %v2133 = vrot.slane %v1891, %v2132
    %v2134 = vmul.f32 %v2133, %v2053
    %v2135 = vmul.f32 %v2133, %v2054
    %v2136 = vmul.f32 %v2133, %v2055
    %v2138 = vsel %vm436, %v2129, 0
    %2140 = vmatprep.subr.mxu0 0.0
    %2141 = vmatpush1.msra.mxu0 %v2138
    %2142 = vmatprep.subr.mxu0 0.0
    %2143 = vmatpush1.msra.mxu0 0.0
    %2144 = vmatprep.subr.mxu0 0.0
    %2145 = vmatpush1.msra.mxu0 0.0
    %2146 = vmatprep.subr.mxu0 0.0
    %2147 = vmatpush1.msra.mxu0 0.0
    %2148 = vmatprep.subr.mxu0 0.0
    %2149 = vmatpush1.msra.mxu0 0.0
    %2150 = vmatprep.subr.mxu0 0.0
    %2151 = vmatpush1.msra.mxu0 0.0
    %2152 = vmatprep.subr.mxu0 0.0
    %2153 = vmatpush1.msra.mxu0 0.0
    %2154 = vmatprep.subr.mxu0 0.0
    %2155 = vmatpush1.msra.mxu0 0.0
    %2156 = vmatprep.subr.mxu0 0.0
    %2157 = vmatpush1.msra.mxu0 0.0
    %2158 = vmatprep.subr.mxu0 0.0
    %2159 = vmatpush1.msra.mxu0 0.0
    %2160 = vmatprep.subr.mxu0 0.0
    %2161 = vmatpush1.msra.mxu0 0.0
    %2162 = vmatprep.subr.mxu0 0.0
    %2163 = vmatpush1.msra.mxu0 0.0
    %2164 = vmatprep.subr.mxu0 0.0
    %2165 = vmatpush1.msra.mxu0 0.0
    %2166 = vmatprep.subr.mxu0 0.0
    %2167 = vmatpush1.msra.mxu0 0.0
    %2168 = vmatprep.subr.mxu0 0.0
    %2169 = vmatpush1.msra.mxu0 0.0
    %2170 = vmatprep.subr.mxu0 0.0
    %2171 = vmatpush1.msra.mxu0 0.0
    %2172 = vmatprep.subr.mxu0 0.0
    %2173 = vmatpush1.msra.mxu0 0.0
    %2174 = vmatprep.subr.mxu0 0.0
    %2175 = vmatpush1.msra.mxu0 0.0
    %2176 = vmatprep.subr.mxu0 0.0
    %2177 = vmatpush1.msra.mxu0 0.0
    %2178 = vmatprep.subr.mxu0 0.0
    %2179 = vmatpush1.msra.mxu0 0.0
    %2180 = vmatprep.subr.mxu0 0.0
    %2181 = vmatpush1.msra.mxu0 0.0
    %2182 = vmatprep.subr.mxu0 0.0
    %2183 = vmatpush1.msra.mxu0 0.0
    %2184 = vmatprep.subr.mxu0 0.0
    %2185 = vmatpush1.msra.mxu0 0.0
    %2186 = vmatprep.subr.mxu0 0.0
    %2187 = vmatpush1.msra.mxu0 0.0
    %2188 = vmatprep.subr.mxu0 0.0
    %2189 = vmatpush1.msra.mxu0 0.0
    %2190 = vmatprep.subr.mxu0 0.0
    %2191 = vmatpush1.msra.mxu0 0.0
    %2192 = vmatprep.subr.mxu0 0.0
    %2193 = vmatpush1.msra.mxu0 0.0
    %2194 = vmatprep.subr.mxu0 0.0
    %2195 = vmatpush1.msra.mxu0 0.0
    %2196 = vmatprep.subr.mxu0 0.0
    %2197 = vmatpush1.msra.mxu0 0.0
    %2198 = vmatprep.subr.mxu0 0.0
    %2199 = vmatpush1.msra.mxu0 0.0
    %2200 = vmatprep.subr.mxu0 0.0
    %2201 = vmatpush1.msra.mxu0 0.0
    %2202 = vmatprep.subr.mxu0 0.0
    %2203 = vmatpush1.msra.mxu0 0.0
    %2204 = vmatprep.mubr.f32.mxu0 0.0
    %2205 = vmatmul.mubr.f32.gmra.mrb[0].mxu0 %v428
    %v2206 = vpop.f32.mrb[0].mxu0
    %v2207 = vadd.f32 1e-05, %v2206
    %v2208 = vpop.f32.mrb[0].mxu0
    %2209 = vmatprep.mubr.f32.mxu0 0.0
    %2210 = vmatmul.mubr.f32.gmra.mrb[0].mxu0 %v431
    %v2211 = vpop.f32.mrb[0].mxu0
    %v2212 = vadd.f32 1e-05, %v2211
    %v2213 = vpop.f32.mrb[0].mxu0
    %2214 = vmatprep.mubr.f32.mxu0 0.0
    %2215 = vmatmul.mubr.f32.gmra.mrb[0].mxu0 %v434
    %v2216 = vpop.f32.mrb[0].mxu0
    %v2217 = vadd.f32 1e-05, %v2216
    %v2218 = vpop.f32.mrb[0].mxu0
    %2219 = vdwg.mxu0
    %v2220 = vrsqrt.pop %v2207
    %v2221 = vrsqrt.pop %v2212
    %v2222 = vrsqrt.pop %v2217
    %v2223 = vmul.f32 %v2134, %v2220
    %v2224 = vmul.f32 %v2135, %v2221
    %v2225 = vmul.f32 %v2136, %v2222
    %v2226 = vlaneseq
    %v2227 = vshrl.u32 %v2226, 7
    %v2228 = vsub.s32 1, %v2227
    %v2229 = vrot.slane %v1891, %v2228
    %v2230 = vadd.f32 %v2223, %v2229
    %v2231 = vadd.f32 %v2224, %v2229
    %v2232 = vadd.f32 %v2225, %v2229
    %v2233 = vadd.f32 %v2230, %v704
    %v2234 = vadd.f32 %v2231, %v705
    %v2235 = vadd.f32 %v2232, %v706
    %vm2236 = vcmp.ge.f32.partialorder %v2233, 0.0
    %vm2237 = vcmp.ge.f32.partialorder %v2234, 0.0
    %vm2238 = vcmp.ge.f32.partialorder %v2235, 0.0
    %v2239 = vmul.f32 %v2233, 0.1
    %v2240 = vmul.f32 %v2234, 0.1
    %v2241 = vmul.f32 %v2235, 0.1
    %v2242 = vsel %vm2236, %v2233, %v2239
    %v2243 = vsel %vm2237, %v2234, %v2240
    %v2244 = vsel %vm2238, %v2235, %v2241
    %v2245 = vpack.c.bf16 %v2243, %v2242
    %v2246 = vpack.c.bf16 %v2244, %v2244
    %s2247 = scalar_lea.vmem %s5, 48
    %v2248 = vld [vmem:[%s2247] sm:$0xf]
    %v2249 = vld [vmem:[%s2247 + $0x4] sm:$0xf]
    %v2250 = vld [vmem:[%s2247 + $0x8] sm:$0xf]
    %v2251 = vld [vmem:[%s2247 + $0xc] sm:$0xf]
    %v2256 = vunpack.c.l.b16 %v2248
    %v2257 = vunpack.c.l.b16 %v2249
    %v2258 = vunpack.c.l.b16 %v2250
    %v2259 = vunpack.c.l.b16 %v2251
    %v2260 = vpack.c.b16 %v2257, %v2256
    %v2261 = vpack.c.b16 %v2259, %v2258
    %v2265 = vsel %vm731, %v2245, 0
    %v2268 = vsel %vm731, %v2246, 0
    %2270 = vmatprep.subr.bf16.mxu0 0
    %2271 = vmatpush1.bf16.msra.mxu0 %v2260
    %2272 = vmatprep.subr.bf16.mxu0 0
    %2273 = vmatpush1.bf16.msra.mxu0 %v2261
    %2274 = vmatprep.subr.bf16.mxu0 0
    %2275 = vmatpush1.bf16.msra.mxu0 0
    %2276 = vmatprep.subr.bf16.mxu0 0
    %2277 = vmatpush1.bf16.msra.mxu0 0
    %2278 = vmatprep.subr.bf16.mxu0 0
    %2279 = vmatpush1.bf16.msra.mxu0 0
    %2280 = vmatprep.subr.bf16.mxu0 0
    %2281 = vmatpush1.bf16.msra.mxu0 0
    %2282 = vmatprep.subr.bf16.mxu0 0
    %2283 = vmatpush1.bf16.msra.mxu0 0
    %2284 = vmatprep.subr.bf16.mxu0 0
    %2285 = vmatpush1.bf16.msra.mxu0 0
    %2286 = vmatprep.subr.bf16.mxu0 0
    %2287 = vmatpush1.bf16.msra.mxu0 0
    %2288 = vmatprep.subr.bf16.mxu0 0
    %2289 = vmatpush1.bf16.msra.mxu0 0
    %2290 = vmatprep.subr.bf16.mxu0 0
    %2291 = vmatpush1.bf16.msra.mxu0 0
    %2292 = vmatprep.subr.bf16.mxu0 0
    %2293 = vmatpush1.bf16.msra.mxu0 0
    %2294 = vmatprep.subr.bf16.mxu0 0
    %2295 = vmatpush1.bf16.msra.mxu0 0
    %2296 = vmatprep.subr.bf16.mxu0 0
    %2297 = vmatpush1.bf16.msra.mxu0 0
    %2298 = vmatprep.subr.bf16.mxu0 0
    %2299 = vmatpush1.bf16.msra.mxu0 0
    %2300 = vmatprep.subr.bf16.mxu0 0
    %2301 = vmatpush1.bf16.msra.mxu0 0
    %2302 = vmatprep.mubr.bf16.mxu0 0
    %2303 = vmatmul.mubr.bf16.gmra.mrb[0].mxu0 %v2265
    %v2304 = vpop.f32.mrb[0].mxu0
    %v2305 = vadd.f32 0.0, %v2304
    %v2306 = vpop.f32.mrb[0].mxu0
    %v2307 = vpop.f32.mrb[0].mxu0
    %v2308 = vadd.f32 0.0, %v2307
    %v2309 = vpop.f32.mrb[0].mxu0
    %2310 = vmatprep.mubr.bf16.mxu0 0
    %2311 = vmatmul.mubr.bf16.gmra.mrb[0].mxu0 %v2268
    %v2312 = vpop.f32.mrb[0].mxu0
    %v2313 = vadd.f32 0.0, %v2312
    %v2314 = vpop.f32.mrb[0].mxu0
    %v2315 = vpop.f32.mrb[0].mxu0
    %v2316 = vpop.f32.mrb[0].mxu0
    %2317 = vdwg.mxu0
    %v2318 = vpack.c.bf16 %v2308, %v2305
    %v2319 = vpack.c.bf16 %v2313, %v2313
    %v2321 = vsel %vm815, %v2319, 0
    %2323 = vmatprep.subr.bf16.mxu0 0
    %2324 = vmatpush1.bf16.msra.mxu0 %v2318
    %2325 = vmatprep.subr.bf16.mxu0 0
    %2326 = vmatpush1.bf16.msra.mxu0 %v2321
    %2327 = vmatprep.subr.bf16.mxu0 0
    %2328 = vmatpush1.bf16.msra.mxu0 0
    %2329 = vmatprep.subr.bf16.mxu0 0
    %2330 = vmatpush1.bf16.msra.mxu0 0
    %2331 = vmatprep.subr.bf16.mxu0 0
    %2332 = vmatpush1.bf16.msra.mxu0 0
    %2333 = vmatprep.subr.bf16.mxu0 0
    %2334 = vmatpush1.bf16.msra.mxu0 0
    %2335 = vmatprep.subr.bf16.mxu0 0
    %2336 = vmatpush1.bf16.msra.mxu0 0
    %2337 = vmatprep.subr.bf16.mxu0 0
    %2338 = vmatpush1.bf16.msra.mxu0 0
    %2339 = vmatprep.subr.bf16.mxu0 0
    %2340 = vmatpush1.bf16.msra.mxu0 0
    %2341 = vmatprep.subr.bf16.mxu0 0
    %2342 = vmatpush1.bf16.msra.mxu0 0
    %2343 = vmatprep.subr.bf16.mxu0 0
    %2344 = vmatpush1.bf16.msra.mxu0 0
    %2345 = vmatprep.subr.bf16.mxu0 0
    %2346 = vmatpush1.bf16.msra.mxu0 0
    %2347 = vmatprep.subr.bf16.mxu0 0
    %2348 = vmatpush1.bf16.msra.mxu0 0
    %2349 = vmatprep.subr.bf16.mxu0 0
    %2350 = vmatpush1.bf16.msra.mxu0 0
    %2351 = vmatprep.subr.bf16.mxu0 0
    %2352 = vmatpush1.bf16.msra.mxu0 0
    %2353 = vmatprep.subr.bf16.mxu0 0
    %2354 = vmatpush1.bf16.msra.mxu0 0
    %2355 = vmatprep.mubr.bf16.mxu0 0
    %2356 = vmatmul.mubr.bf16.gmra.mrb[0].mxu0 %v807
    %v2357 = vpop.f32.mrb[0].mxu0
    %v2358 = vadd.f32 0.0, %v2357
    %v2359 = vpop.f32.mrb[0].mxu0
    %v2360 = vpop.f32.mrb[0].mxu0
    %v2361 = vadd.f32 0.0, %v2360
    %v2362 = vpop.f32.mrb[0].mxu0
    %2363 = vmatprep.mubr.bf16.mxu0 0
    %2364 = vmatmul.mubr.bf16.gmra.mrb[0].mxu0 %v810
    %v2365 = vpop.f32.mrb[0].mxu0
    %v2366 = vadd.f32 0.0, %v2365
    %v2367 = vpop.f32.mrb[0].mxu0
    %v2368 = vpop.f32.mrb[0].mxu0
    %v2369 = vadd.f32 0.0, %v2368
    %v2370 = vpop.f32.mrb[0].mxu0
    %2371 = vmatprep.mubr.bf16.mxu0 0
    %2372 = vmatmul.mubr.bf16.gmra.mrb[0].mxu0 %v813
    %v2373 = vpop.f32.mrb[0].mxu0
    %v2374 = vadd.f32 0.0, %v2373
    %v2375 = vpop.f32.mrb[0].mxu0
    %v2376 = vpop.f32.mrb[0].mxu0
    %v2377 = vadd.f32 0.0, %v2376
    %v2378 = vpop.f32.mrb[0].mxu0
    %2379 = vdwg.mxu0
    %v2380 = vmul.f32 %v879, %v2358
    %v2381 = vmul.f32 %v884, %v2361
    %v2382 = vmul.f32 %v889, %v2366
    %v2383 = vmul.f32 %v894, %v2369
    %v2384 = vmul.f32 %v899, %v2374
    %v2385 = vmul.f32 %v904, %v2377
    %v2386 = vadd.f32 %v2380, 0.0
    %v2387 = vadd.f32 %v2381, 0.0
    %v2388 = vadd.f32 %v2382, 0.0
    %v2389 = vadd.f32 %v2383, 0.0
    %v2390 = vadd.f32 %v2384, 0.0
    %v2391 = vadd.f32 %v2385, 0.0
    %2392 = vmatprep.subr.bf16.mxu0 0
    %2393 = vmatpush1.bf16.msra.mxu0 %v2318
    %2394 = vmatprep.subr.bf16.mxu0 0
    %2395 = vmatpush1.bf16.msra.mxu0 %v2321
    %2396 = vmatprep.subr.bf16.mxu0 0
    %2397 = vmatpush1.bf16.msra.mxu0 0
    %2398 = vmatprep.subr.bf16.mxu0 0
    %2399 = vmatpush1.bf16.msra.mxu0 0
    %2400 = vmatprep.subr.bf16.mxu0 0
    %2401 = vmatpush1.bf16.msra.mxu0 0
    %2402 = vmatprep.subr.bf16.mxu0 0
    %2403 = vmatpush1.bf16.msra.mxu0 0
    %2404 = vmatprep.subr.bf16.mxu0 0
    %2405 = vmatpush1.bf16.msra.mxu0 0
    %2406 = vmatprep.subr.bf16.mxu0 0
    %2407 = vmatpush1.bf16.msra.mxu0 0
    %2408 = vmatprep.subr.bf16.mxu0 0
    %2409 = vmatpush1.bf16.msra.mxu0 0
    %2410 = vmatprep.subr.bf16.mxu0 0
    %2411 = vmatpush1.bf16.msra.mxu0 0
    %2412 = vmatprep.subr.bf16.mxu0 0
    %2413 = vmatpush1.bf16.msra.mxu0 0
    %2414 = vmatprep.subr.bf16.mxu0 0
    %2415 = vmatpush1.bf16.msra.mxu0 0
    %2416 = vmatprep.subr.bf16.mxu0 0
    %2417 = vmatpush1.bf16.msra.mxu0 0
    %2418 = vmatprep.subr.bf16.mxu0 0
    %2419 = vmatpush1.bf16.msra.mxu0 0
    %2420 = vmatprep.subr.bf16.mxu0 0
    %2421 = vmatpush1.bf16.msra.mxu0 0
    %2422 = vmatprep.subr.bf16.mxu0 0
    %2423 = vmatpush1.bf16.msra.mxu0 0
    %2424 = vmatprep.mubr.bf16.mxu0 0
    %2425 = vmatmul.mubr.bf16.gmra.mrb[0].mxu0 %v919
    %v2426 = vpop.f32.mrb[0].mxu0
    %v2427 = vadd.f32 0.0, %v2426
    %v2428 = vpop.f32.mrb[0].mxu0
    %v2429 = vpop.f32.mrb[0].mxu0
    %v2430 = vadd.f32 0.0, %v2429
    %v2431 = vpop.f32.mrb[0].mxu0
    %2432 = vmatprep.mubr.bf16.mxu0 0
    %2433 = vmatmul.mubr.bf16.gmra.mrb[0].mxu0 %v922
    %v2434 = vpop.f32.mrb[0].mxu0
    %v2435 = vadd.f32 0.0, %v2434
    %v2436 = vpop.f32.mrb[0].mxu0
    %v2437 = vpop.f32.mrb[0].mxu0
    %v2438 = vadd.f32 0.0, %v2437
    %v2439 = vpop.f32.mrb[0].mxu0
    %2440 = vmatprep.mubr.bf16.mxu0 0
    %2441 = vmatmul.mubr.bf16.gmra.mrb[0].mxu0 %v925
    %v2442 = vpop.f32.mrb[0].mxu0
    %v2443 = vadd.f32 0.0, %v2442
    %v2444 = vpop.f32.mrb[0].mxu0
    %v2445 = vpop.f32.mrb[0].mxu0
    %v2446 = vadd.f32 0.0, %v2445
    %v2447 = vpop.f32.mrb[0].mxu0
    %2448 = vdwg.mxu0
    %v2449 = vmul.f32 %v879, %v2427
    %v2450 = vmul.f32 %v884, %v2430
    %v2451 = vmul.f32 %v889, %v2435
    %v2452 = vmul.f32 %v894, %v2438
    %v2453 = vmul.f32 %v899, %v2443
    %v2454 = vmul.f32 %v904, %v2446
    %v2455 = vadd.f32 %v2449, 0.0
    %v2456 = vadd.f32 %v2450, 0.0
    %v2457 = vadd.f32 %v2451, 0.0
    %v2458 = vadd.f32 %v2452, 0.0
    %v2459 = vadd.f32 %v2453, 0.0
    %v2460 = vadd.f32 %v2454, 0.0
    %s2461 = scalar_lea.vmem %s5, 64
    %v2462 = vld [vmem:[%s2461] sm:$0xf]
    %v2463 = vld [vmem:[%s2461 + $0x4] sm:$0xf]
    %v2464 = vld [vmem:[%s2461 + $0x8] sm:$0xf]
    %v2465 = vld [vmem:[%s2461 + $0xc] sm:$0xf]
    %v2470 = vunpack.c.l.b16 %v2462
    %v2471 = vunpack.c.l.b16 %v2463
    %v2472 = vunpack.c.l.b16 %v2464
    %v2473 = vunpack.c.l.b16 %v2465
    %v2474 = vpack.c.b16 %v2471, %v2470
    %v2475 = vpack.c.b16 %v2473, %v2472
    %2478 = vmatprep.subr.bf16.mxu0 0
    %2479 = vmatpush1.bf16.msra.mxu0 %v2474
    %2480 = vmatprep.subr.bf16.mxu0 0
    %2481 = vmatpush1.bf16.msra.mxu0 %v2475
    %2482 = vmatprep.subr.bf16.mxu0 0
    %2483 = vmatpush1.bf16.msra.mxu0 0
    %2484 = vmatprep.subr.bf16.mxu0 0
    %2485 = vmatpush1.bf16.msra.mxu0 0
    %2486 = vmatprep.subr.bf16.mxu0 0
    %2487 = vmatpush1.bf16.msra.mxu0 0
    %2488 = vmatprep.subr.bf16.mxu0 0
    %2489 = vmatpush1.bf16.msra.mxu0 0
    %2490 = vmatprep.subr.bf16.mxu0 0
    %2491 = vmatpush1.bf16.msra.mxu0 0
    %2492 = vmatprep.subr.bf16.mxu0 0
    %2493 = vmatpush1.bf16.msra.mxu0 0
    %2494 = vmatprep.subr.bf16.mxu0 0
    %2495 = vmatpush1.bf16.msra.mxu0 0
    %2496 = vmatprep.subr.bf16.mxu0 0
    %2497 = vmatpush1.bf16.msra.mxu0 0
    %2498 = vmatprep.subr.bf16.mxu0 0
    %2499 = vmatpush1.bf16.msra.mxu0 0
    %2500 = vmatprep.subr.bf16.mxu0 0
    %2501 = vmatpush1.bf16.msra.mxu0 0
    %2502 = vmatprep.subr.bf16.mxu0 0
    %2503 = vmatpush1.bf16.msra.mxu0 0
    %2504 = vmatprep.subr.bf16.mxu0 0
    %2505 = vmatpush1.bf16.msra.mxu0 0
    %2506 = vmatprep.subr.bf16.mxu0 0
    %2507 = vmatpush1.bf16.msra.mxu0 0
    %2508 = vmatprep.subr.bf16.mxu0 0
    %2509 = vmatpush1.bf16.msra.mxu0 0
    %2510 = vmatprep.mubr.bf16.mxu0 0
    %2511 = vmatmul.mubr.bf16.gmra.mrb[0].mxu0 %v2265
    %v2512 = vpop.f32.mrb[0].mxu0
    %v2513 = vadd.f32 0.0, %v2512
    %v2514 = vpop.f32.mrb[0].mxu0
    %v2515 = vpop.f32.mrb[0].mxu0
    %v2516 = vadd.f32 0.0, %v2515
    %v2517 = vpop.f32.mrb[0].mxu0
    %2518 = vmatprep.mubr.bf16.mxu0 0
    %2519 = vmatmul.mubr.bf16.gmra.mrb[0].mxu0 %v2268
    %v2520 = vpop.f32.mrb[0].mxu0
    %v2521 = vadd.f32 0.0, %v2520
    %v2522 = vpop.f32.mrb[0].mxu0
    %v2523 = vpop.f32.mrb[0].mxu0
    %v2524 = vpop.f32.mrb[0].mxu0
    %2525 = vdwg.mxu0
    %v2526 = vpack.c.bf16 %v2516, %v2513
    %v2527 = vpack.c.bf16 %v2521, %v2521
    %v2529 = vsel %vm815, %v2527, 0
    %2531 = vmatprep.subr.bf16.mxu0 0
    %2532 = vmatpush1.bf16.msra.mxu0 %v2526
    %2533 = vmatprep.subr.bf16.mxu0 0
    %2534 = vmatpush1.bf16.msra.mxu0 %v2529
    %2535 = vmatprep.subr.bf16.mxu0 0
    %2536 = vmatpush1.bf16.msra.mxu0 0
    %2537 = vmatprep.subr.bf16.mxu0 0
    %2538 = vmatpush1.bf16.msra.mxu0 0
    %2539 = vmatprep.subr.bf16.mxu0 0
    %2540 = vmatpush1.bf16.msra.mxu0 0
    %2541 = vmatprep.subr.bf16.mxu0 0
    %2542 = vmatpush1.bf16.msra.mxu0 0
    %2543 = vmatprep.subr.bf16.mxu0 0
    %2544 = vmatpush1.bf16.msra.mxu0 0
    %2545 = vmatprep.subr.bf16.mxu0 0
    %2546 = vmatpush1.bf16.msra.mxu0 0
    %2547 = vmatprep.subr.bf16.mxu0 0
    %2548 = vmatpush1.bf16.msra.mxu0 0
    %2549 = vmatprep.subr.bf16.mxu0 0
    %2550 = vmatpush1.bf16.msra.mxu0 0
    %2551 = vmatprep.subr.bf16.mxu0 0
    %2552 = vmatpush1.bf16.msra.mxu0 0
    %2553 = vmatprep.subr.bf16.mxu0 0
    %2554 = vmatpush1.bf16.msra.mxu0 0
    %2555 = vmatprep.subr.bf16.mxu0 0
    %2556 = vmatpush1.bf16.msra.mxu0 0
    %2557 = vmatprep.subr.bf16.mxu0 0
    %2558 = vmatpush1.bf16.msra.mxu0 0
    %2559 = vmatprep.subr.bf16.mxu0 0
    %2560 = vmatpush1.bf16.msra.mxu0 0
    %2561 = vmatprep.subr.bf16.mxu0 0
    %2562 = vmatpush1.bf16.msra.mxu0 0
    %2563 = vmatprep.mubr.bf16.mxu0 0
    %2564 = vmatmul.mubr.bf16.gmra.mrb[0].mxu0 %v807
    %v2565 = vpop.f32.mrb[0].mxu0
    %v2566 = vadd.f32 0.0, %v2565
    %v2567 = vpop.f32.mrb[0].mxu0
    %v2568 = vpop.f32.mrb[0].mxu0
    %v2569 = vadd.f32 0.0, %v2568
    %v2570 = vpop.f32.mrb[0].mxu0
    %2571 = vmatprep.mubr.bf16.mxu0 0
    %2572 = vmatmul.mubr.bf16.gmra.mrb[0].mxu0 %v810
    %v2573 = vpop.f32.mrb[0].mxu0
    %v2574 = vadd.f32 0.0, %v2573
    %v2575 = vpop.f32.mrb[0].mxu0
    %v2576 = vpop.f32.mrb[0].mxu0
    %v2577 = vadd.f32 0.0, %v2576
    %v2578 = vpop.f32.mrb[0].mxu0
    %2579 = vmatprep.mubr.bf16.mxu0 0
    %2580 = vmatmul.mubr.bf16.gmra.mrb[0].mxu0 %v813
    %v2581 = vpop.f32.mrb[0].mxu0
    %v2582 = vadd.f32 0.0, %v2581
    %v2583 = vpop.f32.mrb[0].mxu0
    %v2584 = vpop.f32.mrb[0].mxu0
    %v2585 = vadd.f32 0.0, %v2584
    %v2586 = vpop.f32.mrb[0].mxu0
    %2587 = vdwg.mxu0
    %v2588 = vmul.f32 %v1144, %v2566
    %v2589 = vmul.f32 %v1149, %v2569
    %v2590 = vmul.f32 %v1154, %v2574
    %v2591 = vmul.f32 %v1159, %v2577
    %v2592 = vmul.f32 %v1164, %v2582
    %v2593 = vmul.f32 %v1169, %v2585
    %v2594 = vadd.f32 %v2386, %v2588
    %v2595 = vadd.f32 %v2387, %v2589
    %v2596 = vadd.f32 %v2388, %v2590
    %v2597 = vadd.f32 %v2389, %v2591
    %v2598 = vadd.f32 %v2390, %v2592
    %v2599 = vadd.f32 %v2391, %v2593
    %2600 = vmatprep.subr.bf16.mxu0 0
    %2601 = vmatpush1.bf16.msra.mxu0 %v2526
    %2602 = vmatprep.subr.bf16.mxu0 0
    %2603 = vmatpush1.bf16.msra.mxu0 %v2529
    %2604 = vmatprep.subr.bf16.mxu0 0
    %2605 = vmatpush1.bf16.msra.mxu0 0
    %2606 = vmatprep.subr.bf16.mxu0 0
    %2607 = vmatpush1.bf16.msra.mxu0 0
    %2608 = vmatprep.subr.bf16.mxu0 0
    %2609 = vmatpush1.bf16.msra.mxu0 0
    %2610 = vmatprep.subr.bf16.mxu0 0
    %2611 = vmatpush1.bf16.msra.mxu0 0
    %2612 = vmatprep.subr.bf16.mxu0 0
    %2613 = vmatpush1.bf16.msra.mxu0 0
    %2614 = vmatprep.subr.bf16.mxu0 0
    %2615 = vmatpush1.bf16.msra.mxu0 0
    %2616 = vmatprep.subr.bf16.mxu0 0
    %2617 = vmatpush1.bf16.msra.mxu0 0
    %2618 = vmatprep.subr.bf16.mxu0 0
    %2619 = vmatpush1.bf16.msra.mxu0 0
    %2620 = vmatprep.subr.bf16.mxu0 0
    %2621 = vmatpush1.bf16.msra.mxu0 0
    %2622 = vmatprep.subr.bf16.mxu0 0
    %2623 = vmatpush1.bf16.msra.mxu0 0
    %2624 = vmatprep.subr.bf16.mxu0 0
    %2625 = vmatpush1.bf16.msra.mxu0 0
    %2626 = vmatprep.subr.bf16.mxu0 0
    %2627 = vmatpush1.bf16.msra.mxu0 0
    %2628 = vmatprep.subr.bf16.mxu0 0
    %2629 = vmatpush1.bf16.msra.mxu0 0
    %2630 = vmatprep.subr.bf16.mxu0 0
    %2631 = vmatpush1.bf16.msra.mxu0 0
    %2632 = vmatprep.mubr.bf16.mxu0 0
    %2633 = vmatmul.mubr.bf16.gmra.mrb[0].mxu0 %v919
    %v2634 = vpop.f32.mrb[0].mxu0
    %v2635 = vadd.f32 0.0, %v2634
    %v2636 = vpop.f32.mrb[0].mxu0
    %v2637 = vpop.f32.mrb[0].mxu0
    %v2638 = vadd.f32 0.0, %v2637
    %v2639 = vpop.f32.mrb[0].mxu0
    %2640 = vmatprep.mubr.bf16.mxu0 0
    %2641 = vmatmul.mubr.bf16.gmra.mrb[0].mxu0 %v922
    %v2642 = vpop.f32.mrb[0].mxu0
    %v2643 = vadd.f32 0.0, %v2642
    %v2644 = vpop.f32.mrb[0].mxu0
    %v2645 = vpop.f32.mrb[0].mxu0
    %v2646 = vadd.f32 0.0, %v2645
    %v2647 = vpop.f32.mrb[0].mxu0
    %2648 = vmatprep.mubr.bf16.mxu0 0
    %2649 = vmatmul.mubr.bf16.gmra.mrb[0].mxu0 %v925
    %v2650 = vpop.f32.mrb[0].mxu0
    %v2651 = vadd.f32 0.0, %v2650
    %v2652 = vpop.f32.mrb[0].mxu0
    %v2653 = vpop.f32.mrb[0].mxu0
    %v2654 = vadd.f32 0.0, %v2653
    %v2655 = vpop.f32.mrb[0].mxu0
    %2656 = vdwg.mxu0
    %v2657 = vmul.f32 %v1144, %v2635
    %v2658 = vmul.f32 %v1149, %v2638
    %v2659 = vmul.f32 %v1154, %v2643
    %v2660 = vmul.f32 %v1159, %v2646
    %v2661 = vmul.f32 %v1164, %v2651
    %v2662 = vmul.f32 %v1169, %v2654
    %v2663 = vadd.f32 %v2455, %v2657
    %v2664 = vadd.f32 %v2456, %v2658
    %v2665 = vadd.f32 %v2457, %v2659
    %v2666 = vadd.f32 %v2458, %v2660
    %v2667 = vadd.f32 %v2459, %v2661
    %v2668 = vadd.f32 %v2460, %v2662
    %s2669 = scalar_lea.vmem %s5, 80
    %v2670 = vld [vmem:[%s2669] sm:$0xf]
    %v2671 = vld [vmem:[%s2669 + $0x4] sm:$0xf]
    %v2672 = vld [vmem:[%s2669 + $0x8] sm:$0xf]
    %v2673 = vld [vmem:[%s2669 + $0xc] sm:$0xf]
    %v2678 = vunpack.c.l.b16 %v2670
    %v2679 = vunpack.c.l.b16 %v2671
    %v2680 = vunpack.c.l.b16 %v2672
    %v2681 = vunpack.c.l.b16 %v2673
    %v2682 = vpack.c.b16 %v2679, %v2678
    %v2683 = vpack.c.b16 %v2681, %v2680
    %2686 = vmatprep.subr.bf16.mxu0 0
    %2687 = vmatpush1.bf16.msra.mxu0 %v2682
    %2688 = vmatprep.subr.bf16.mxu0 0
    %2689 = vmatpush1.bf16.msra.mxu0 %v2683
    %2690 = vmatprep.subr.bf16.mxu0 0
    %2691 = vmatpush1.bf16.msra.mxu0 0
    %2692 = vmatprep.subr.bf16.mxu0 0
    %2693 = vmatpush1.bf16.msra.mxu0 0
    %2694 = vmatprep.subr.bf16.mxu0 0
    %2695 = vmatpush1.bf16.msra.mxu0 0
    %2696 = vmatprep.subr.bf16.mxu0 0
    %2697 = vmatpush1.bf16.msra.mxu0 0
    %2698 = vmatprep.subr.bf16.mxu0 0
    %2699 = vmatpush1.bf16.msra.mxu0 0
    %2700 = vmatprep.subr.bf16.mxu0 0
    %2701 = vmatpush1.bf16.msra.mxu0 0
    %2702 = vmatprep.subr.bf16.mxu0 0
    %2703 = vmatpush1.bf16.msra.mxu0 0
    %2704 = vmatprep.subr.bf16.mxu0 0
    %2705 = vmatpush1.bf16.msra.mxu0 0
    %2706 = vmatprep.subr.bf16.mxu0 0
    %2707 = vmatpush1.bf16.msra.mxu0 0
    %2708 = vmatprep.subr.bf16.mxu0 0
    %2709 = vmatpush1.bf16.msra.mxu0 0
    %2710 = vmatprep.subr.bf16.mxu0 0
    %2711 = vmatpush1.bf16.msra.mxu0 0
    %2712 = vmatprep.subr.bf16.mxu0 0
    %2713 = vmatpush1.bf16.msra.mxu0 0
    %2714 = vmatprep.subr.bf16.mxu0 0
    %2715 = vmatpush1.bf16.msra.mxu0 0
    %2716 = vmatprep.subr.bf16.mxu0 0
    %2717 = vmatpush1.bf16.msra.mxu0 0
    %2718 = vmatprep.mubr.bf16.mxu0 0
    %2719 = vmatmul.mubr.bf16.gmra.mrb[0].mxu0 %v2265
    %v2720 = vpop.f32.mrb[0].mxu0
    %v2721 = vadd.f32 0.0, %v2720
    %v2722 = vpop.f32.mrb[0].mxu0
    %v2723 = vpop.f32.mrb[0].mxu0
    %v2724 = vadd.f32 0.0, %v2723
    %v2725 = vpop.f32.mrb[0].mxu0
    %2726 = vmatprep.mubr.bf16.mxu0 0
    %2727 = vmatmul.mubr.bf16.gmra.mrb[0].mxu0 %v2268
    %v2728 = vpop.f32.mrb[0].mxu0
    %v2729 = vadd.f32 0.0, %v2728
    %v2730 = vpop.f32.mrb[0].mxu0
    %v2731 = vpop.f32.mrb[0].mxu0
    %v2732 = vpop.f32.mrb[0].mxu0
    %2733 = vdwg.mxu0
    %v2734 = vpack.c.bf16 %v2724, %v2721
    %v2735 = vpack.c.bf16 %v2729, %v2729
    %v2737 = vsel %vm815, %v2735, 0
    %2739 = vmatprep.subr.bf16.mxu0 0
    %2740 = vmatpush1.bf16.msra.mxu0 %v2734
    %2741 = vmatprep.subr.bf16.mxu0 0
    %2742 = vmatpush1.bf16.msra.mxu0 %v2737
    %2743 = vmatprep.subr.bf16.mxu0 0
    %2744 = vmatpush1.bf16.msra.mxu0 0
    %2745 = vmatprep.subr.bf16.mxu0 0
    %2746 = vmatpush1.bf16.msra.mxu0 0
    %2747 = vmatprep.subr.bf16.mxu0 0
    %2748 = vmatpush1.bf16.msra.mxu0 0
    %2749 = vmatprep.subr.bf16.mxu0 0
    %2750 = vmatpush1.bf16.msra.mxu0 0
    %2751 = vmatprep.subr.bf16.mxu0 0
    %2752 = vmatpush1.bf16.msra.mxu0 0
    %2753 = vmatprep.subr.bf16.mxu0 0
    %2754 = vmatpush1.bf16.msra.mxu0 0
    %2755 = vmatprep.subr.bf16.mxu0 0
    %2756 = vmatpush1.bf16.msra.mxu0 0
    %2757 = vmatprep.subr.bf16.mxu0 0
    %2758 = vmatpush1.bf16.msra.mxu0 0
    %2759 = vmatprep.subr.bf16.mxu0 0
    %2760 = vmatpush1.bf16.msra.mxu0 0
    %2761 = vmatprep.subr.bf16.mxu0 0
    %2762 = vmatpush1.bf16.msra.mxu0 0
    %2763 = vmatprep.subr.bf16.mxu0 0
    %2764 = vmatpush1.bf16.msra.mxu0 0
    %2765 = vmatprep.subr.bf16.mxu0 0
    %2766 = vmatpush1.bf16.msra.mxu0 0
    %2767 = vmatprep.subr.bf16.mxu0 0
    %2768 = vmatpush1.bf16.msra.mxu0 0
    %2769 = vmatprep.subr.bf16.mxu0 0
    %2770 = vmatpush1.bf16.msra.mxu0 0
    %2771 = vmatprep.mubr.bf16.mxu0 0
    %2772 = vmatmul.mubr.bf16.gmra.mrb[0].mxu0 %v807
    %v2773 = vpop.f32.mrb[0].mxu0
    %v2774 = vadd.f32 0.0, %v2773
    %v2775 = vpop.f32.mrb[0].mxu0
    %v2776 = vpop.f32.mrb[0].mxu0
    %v2777 = vadd.f32 0.0, %v2776
    %v2778 = vpop.f32.mrb[0].mxu0
    %2779 = vmatprep.mubr.bf16.mxu0 0
    %2780 = vmatmul.mubr.bf16.gmra.mrb[0].mxu0 %v810
    %v2781 = vpop.f32.mrb[0].mxu0
    %v2782 = vadd.f32 0.0, %v2781
    %v2783 = vpop.f32.mrb[0].mxu0
    %v2784 = vpop.f32.mrb[0].mxu0
    %v2785 = vadd.f32 0.0, %v2784
    %v2786 = vpop.f32.mrb[0].mxu0
    %2787 = vmatprep.mubr.bf16.mxu0 0
    %2788 = vmatmul.mubr.bf16.gmra.mrb[0].mxu0 %v813
    %v2789 = vpop.f32.mrb[0].mxu0
    %v2790 = vadd.f32 0.0, %v2789
    %v2791 = vpop.f32.mrb[0].mxu0
    %v2792 = vpop.f32.mrb[0].mxu0
    %v2793 = vadd.f32 0.0, %v2792
    %v2794 = vpop.f32.mrb[0].mxu0
    %2795 = vdwg.mxu0
    %v2796 = vmul.f32 %v1400, %v2774
    %v2797 = vmul.f32 %v1405, %v2777
    %v2798 = vmul.f32 %v1410, %v2782
    %v2799 = vmul.f32 %v1415, %v2785
    %v2800 = vmul.f32 %v1420, %v2790
    %v2801 = vmul.f32 %v1425, %v2793
    %v2802 = vadd.f32 %v2594, %v2796
    %v2803 = vadd.f32 %v2595, %v2797
    %v2804 = vadd.f32 %v2596, %v2798
    %v2805 = vadd.f32 %v2597, %v2799
    %v2806 = vadd.f32 %v2598, %v2800
    %v2807 = vadd.f32 %v2599, %v2801
    %2808 = vmatprep.subr.bf16.mxu0 0
    %2809 = vmatpush1.bf16.msra.mxu0 %v2734
    %2810 = vmatprep.subr.bf16.mxu0 0
    %2811 = vmatpush1.bf16.msra.mxu0 %v2737
    %2812 = vmatprep.subr.bf16.mxu0 0
    %2813 = vmatpush1.bf16.msra.mxu0 0
    %2814 = vmatprep.subr.bf16.mxu0 0
    %2815 = vmatpush1.bf16.msra.mxu0 0
    %2816 = vmatprep.subr.bf16.mxu0 0
    %2817 = vmatpush1.bf16.msra.mxu0 0
    %2818 = vmatprep.subr.bf16.mxu0 0
    %2819 = vmatpush1.bf16.msra.mxu0 0
    %2820 = vmatprep.subr.bf16.mxu0 0
    %2821 = vmatpush1.bf16.msra.mxu0 0
    %2822 = vmatprep.subr.bf16.mxu0 0
    %2823 = vmatpush1.bf16.msra.mxu0 0
    %2824 = vmatprep.subr.bf16.mxu0 0
    %2825 = vmatpush1.bf16.msra.mxu0 0
    %2826 = vmatprep.subr.bf16.mxu0 0
    %2827 = vmatpush1.bf16.msra.mxu0 0
    %2828 = vmatprep.subr.bf16.mxu0 0
    %2829 = vmatpush1.bf16.msra.mxu0 0
    %2830 = vmatprep.subr.bf16.mxu0 0
    %2831 = vmatpush1.bf16.msra.mxu0 0
    %2832 = vmatprep.subr.bf16.mxu0 0
    %2833 = vmatpush1.bf16.msra.mxu0 0
    %2834 = vmatprep.subr.bf16.mxu0 0
    %2835 = vmatpush1.bf16.msra.mxu0 0
    %2836 = vmatprep.subr.bf16.mxu0 0
    %2837 = vmatpush1.bf16.msra.mxu0 0
    %2838 = vmatprep.subr.bf16.mxu0 0
    %2839 = vmatpush1.bf16.msra.mxu0 0
    %2840 = vmatprep.mubr.bf16.mxu0 0
    %2841 = vmatmul.mubr.bf16.gmra.mrb[0].mxu0 %v919
    %v2842 = vpop.f32.mrb[0].mxu0
    %v2843 = vadd.f32 0.0, %v2842
    %v2844 = vpop.f32.mrb[0].mxu0
    %v2845 = vpop.f32.mrb[0].mxu0
    %v2846 = vadd.f32 0.0, %v2845
    %v2847 = vpop.f32.mrb[0].mxu0
    %2848 = vmatprep.mubr.bf16.mxu0 0
    %2849 = vmatmul.mubr.bf16.gmra.mrb[0].mxu0 %v922
    %v2850 = vpop.f32.mrb[0].mxu0
    %v2851 = vadd.f32 0.0, %v2850
    %v2852 = vpop.f32.mrb[0].mxu0
    %v2853 = vpop.f32.mrb[0].mxu0
    %v2854 = vadd.f32 0.0, %v2853
    %v2855 = vpop.f32.mrb[0].mxu0
    %2856 = vmatprep.mubr.bf16.mxu0 0
    %2857 = vmatmul.mubr.bf16.gmra.mrb[0].mxu0 %v925
    %v2858 = vpop.f32.mrb[0].mxu0
    %v2859 = vadd.f32 0.0, %v2858
    %v2860 = vpop.f32.mrb[0].mxu0
    %v2861 = vpop.f32.mrb[0].mxu0
    %v2862 = vadd.f32 0.0, %v2861
    %v2863 = vpop.f32.mrb[0].mxu0
    %2864 = vdwg.mxu0
    %v2865 = vmul.f32 %v1400, %v2843
    %v2866 = vmul.f32 %v1405, %v2846
    %v2867 = vmul.f32 %v1410, %v2851
    %v2868 = vmul.f32 %v1415, %v2854
    %v2869 = vmul.f32 %v1420, %v2859
    %v2870 = vmul.f32 %v1425, %v2862
    %v2871 = vadd.f32 %v2663, %v2865
    %v2872 = vadd.f32 %v2664, %v2866
    %v2873 = vadd.f32 %v2665, %v2867
    %v2874 = vadd.f32 %v2666, %v2868
    %v2875 = vadd.f32 %v2667, %v2869
    %v2876 = vadd.f32 %v2668, %v2870
    %s2877 = scalar_lea.vmem %s6, 2
    %v2878 = vld [vmem:[%s2877] sm:$0x3]
    %v2880 = vand.u32 %v2878, %v1524
    %2882 = vmatprep.subr.bf16.mxu0 0
    %2883 = vmatpush1.bf16.msra.mxu0 %v2880
    %2884 = vmatprep.subr.bf16.mxu0 0
    %2885 = vmatpush1.bf16.msra.mxu0 0
    %2886 = vmatprep.subr.bf16.mxu0 0
    %2887 = vmatpush1.bf16.msra.mxu0 0
    %2888 = vmatprep.subr.bf16.mxu0 0
    %2889 = vmatpush1.bf16.msra.mxu0 0
    %2890 = vmatprep.subr.bf16.mxu0 0
    %2891 = vmatpush1.bf16.msra.mxu0 0
    %2892 = vmatprep.subr.bf16.mxu0 0
    %2893 = vmatpush1.bf16.msra.mxu0 0
    %2894 = vmatprep.subr.bf16.mxu0 0
    %2895 = vmatpush1.bf16.msra.mxu0 0
    %2896 = vmatprep.subr.bf16.mxu0 0
    %2897 = vmatpush1.bf16.msra.mxu0 0
    %2898 = vmatprep.subr.bf16.mxu0 0
    %2899 = vmatpush1.bf16.msra.mxu0 0
    %2900 = vmatprep.subr.bf16.mxu0 0
    %2901 = vmatpush1.bf16.msra.mxu0 0
    %2902 = vmatprep.subr.bf16.mxu0 0
    %2903 = vmatpush1.bf16.msra.mxu0 0
    %2904 = vmatprep.subr.bf16.mxu0 0
    %2905 = vmatpush1.bf16.msra.mxu0 0
    %2906 = vmatprep.subr.bf16.mxu0 0
    %2907 = vmatpush1.bf16.msra.mxu0 0
    %2908 = vmatprep.subr.bf16.mxu0 0
    %2909 = vmatpush1.bf16.msra.mxu0 0
    %2910 = vmatprep.subr.bf16.mxu0 0
    %2911 = vmatpush1.bf16.msra.mxu0 0
    %2912 = vmatprep.subr.bf16.mxu0 0
    %2913 = vmatpush1.bf16.msra.mxu0 0
    %2914 = vmatprep.mubr.bf16.mxu0 0
    %2915 = vmatmul.mubr.bf16.gmra.mrb[0].mxu0 %v1514
    %v2916 = vpop.f32.mrb[0].mxu0
    %v2917 = vadd.f32 0.0, %v2916
    %v2918 = vpop.f32.mrb[0].mxu0
    %v2919 = vpop.f32.mrb[0].mxu0
    %v2920 = vadd.f32 0.0, %v2919
    %v2921 = vpop.f32.mrb[0].mxu0
    %2922 = vmatprep.mubr.bf16.mxu0 0
    %2923 = vmatmul.mubr.bf16.gmra.mrb[0].mxu0 %v1517
    %v2924 = vpop.f32.mrb[0].mxu0
    %v2925 = vadd.f32 0.0, %v2924
    %v2926 = vpop.f32.mrb[0].mxu0
    %v2927 = vpop.f32.mrb[0].mxu0
    %v2928 = vadd.f32 0.0, %v2927
    %v2929 = vpop.f32.mrb[0].mxu0
    %2930 = vmatprep.mubr.bf16.mxu0 0
    %2931 = vmatmul.mubr.bf16.gmra.mrb[0].mxu0 %v1520
    %v2932 = vpop.f32.mrb[0].mxu0
    %v2933 = vadd.f32 0.0, %v2932
    %v2934 = vpop.f32.mrb[0].mxu0
    %v2935 = vpop.f32.mrb[0].mxu0
    %v2936 = vadd.f32 0.0, %v2935
    %v2937 = vpop.f32.mrb[0].mxu0
    %2938 = vdwg.mxu0
    %s2939 = scalar_lea.vmem %s7, 4
    %v2940 = vld [vmem:[%s2939] sm:$0x7]
    %v2941 = vlaneseq
    %v2942 = vshrl.u32 %v2941, 7
    %v2943 = vsub.s32 0, %v2942
    %v2944 = vrot.slane %v2940, %v2943
    %v2945 = vmul.f32 %v2802, %v2944
    %v2946 = vmul.f32 %v2803, %v2944
    %v2947 = vmul.f32 %v2804, %v2944
    %v2948 = vmul.f32 %v2805, %v2944
    %v2949 = vmul.f32 %v2806, %v2944
    %v2950 = vmul.f32 %v2807, %v2944
    %v2951 = vlaneseq
    %v2952 = vshrl.u32 %v2951, 7
    %v2953 = vsub.s32 1, %v2952
    %v2954 = vrot.slane %v2940, %v2953
    %v2955 = vmul.f32 %v2871, %v2954
    %v2956 = vmul.f32 %v2872, %v2954
    %v2957 = vmul.f32 %v2873, %v2954
    %v2958 = vmul.f32 %v2874, %v2954
    %v2959 = vmul.f32 %v2875, %v2954
    %v2960 = vmul.f32 %v2876, %v2954
    %v2961 = vadd.f32 %v2945, %v2955
    %v2962 = vadd.f32 %v2946, %v2956
    %v2963 = vadd.f32 %v2947, %v2957
    %v2964 = vadd.f32 %v2948, %v2958
    %v2965 = vadd.f32 %v2949, %v2959
    %v2966 = vadd.f32 %v2950, %v2960
    %v2967 = vlaneseq
    %v2968 = vshrl.u32 %v2967, 7
    %v2969 = vsub.s32 2, %v2968
    %v2970 = vrot.slane %v2940, %v2969
    %v2971 = vmul.f32 %v2917, %v2970
    %v2972 = vmul.f32 %v2920, %v2970
    %v2973 = vmul.f32 %v2925, %v2970
    %v2974 = vmul.f32 %v2928, %v2970
    %v2975 = vmul.f32 %v2933, %v2970
    %v2976 = vmul.f32 %v2936, %v2970
    %v2977 = vadd.f32 %v2961, %v2971
    %v2978 = vadd.f32 %v2962, %v2972
    %v2979 = vadd.f32 %v2963, %v2973
    %v2980 = vadd.f32 %v2964, %v2974
    %v2981 = vadd.f32 %v2965, %v2975
    %v2982 = vadd.f32 %v2966, %v2976
    %v2983 = vsel %vm731, %v2977, 0.0
    %2984 = vadd.xlane.f32.xlu0 %v2983
    %v2985 = vpop.xlane.xlu0 %2984
    %v2986 = vsel %vm731, %v2978, 0.0
    %2987 = vadd.xlane.f32.xlu0 %v2986
    %v2988 = vpop.xlane.xlu0 %2987
    %v2989 = vsel %vm731, %v2979, 0.0
    %2990 = vadd.xlane.f32.xlu0 %v2989
    %v2991 = vpop.xlane.xlu0 %2990
    %v2992 = vsel %vm731, %v2980, 0.0
    %2993 = vadd.xlane.f32.xlu0 %v2992
    %v2994 = vpop.xlane.xlu0 %2993
    %v2995 = vsel %vm731, %v2981, 0.0
    %2996 = vadd.xlane.f32.xlu0 %v2995
    %v2997 = vpop.xlane.xlu0 %2996
    %v2998 = vsel %vm731, %v2982, 0.0
    %2999 = vadd.xlane.f32.xlu0 %v2998
    %v3000 = vpop.xlane.xlu0 %2999
    %vm3001 = vcmp.ge.f32.partialorder %v2985, 0.0
    %vm3002 = vcmp.ge.f32.partialorder %v2988, 0.0
    %vm3003 = vcmp.ge.f32.partialorder %v2991, 0.0
    %vm3004 = vcmp.ge.f32.partialorder %v2994, 0.0
    %vm3005 = vcmp.ge.f32.partialorder %v2997, 0.0
    %vm3006 = vcmp.ge.f32.partialorder %v3000, 0.0
    %v3007 = vmul.f32 %v2985, 0.2
    %v3008 = vmul.f32 %v2988, 0.2
    %v3009 = vmul.f32 %v2991, 0.2
    %v3010 = vmul.f32 %v2994, 0.2
    %v3011 = vmul.f32 %v2997, 0.2
    %v3012 = vmul.f32 %v3000, 0.2
    %v3013 = vsel %vm3001, %v2985, %v3007
    %v3014 = vsel %vm3002, %v2988, %v3008
    %v3015 = vsel %vm3003, %v2991, %v3009
    %v3016 = vsel %vm3004, %v2994, %v3010
    %v3017 = vsel %vm3005, %v2997, %v3011
    %v3018 = vsel %vm3006, %v3000, %v3012
    %v3019 = vsel %vm191, %v3013, -1e+30
    %v3020 = vsel %vm192, %v3014, -1e+30
    %v3021 = vsel %vm193, %v3015, -1e+30
    %v3022 = vsel %vm194, %v3016, -1e+30
    %v3023 = vsel %vm195, %v3017, -1e+30
    %v3024 = vsel %vm196, %v3018, -1e+30
    %v3025 = vsel %vm351, %v3019, -inf
    %v3026 = vsel %vm351, %v3020, -inf
    %v3027 = vsel %vm351, %v3021, -inf
    %v3028 = vsel %vm351, %v3022, -inf
    %v3029 = vsel %vm351, %v3023, -inf
    %v3030 = vmax.f32 %v3025, %v3029
    %v3031 = vsel %vm351, %v3024, -inf
    %v3032 = vmax.f32 %v3026, %v3031
    %v3033 = vmax.f32 %v3030, %v3032
    %v3034 = vmax.f32 %v3027, %v3028
    %v3035 = vmax.f32 %v3033, %v3034
    %v3036 = vrot.slane %v3035, 4
    %v3037 = vmax.f32 %v3035, %v3036
    %v3038 = vrot.slane %v3037, 2
    %v3039 = vmax.f32 %v3037, %v3038
    %v3040 = vrot.slane %v3039, 1
    %v3041 = vmax.f32 %v3039, %v3040
    %v3042 = vsel %vm191, %v3041, 0.0
    %v3043 = vsel %vm192, %v3041, 0.0
    %v3044 = vsel %vm193, %v3041, 0.0
    %v3045 = vsel %vm194, %v3041, 0.0
    %v3046 = vsel %vm195, %v3041, 0.0
    %v3047 = vsel %vm196, %v3041, 0.0
    %v3048 = vsel %vm351, %v3042, 0.0
    %3049 = vadd.xlane.f32.xlu0 %v3048
    %v3050 = vpop.xlane.xlu0 %3049
    %v3051 = vsel %vm351, %v3043, 0.0
    %3052 = vadd.xlane.f32.xlu0 %v3051
    %v3053 = vpop.xlane.xlu0 %3052
    %v3054 = vsel %vm351, %v3044, 0.0
    %3055 = vadd.xlane.f32.xlu0 %v3054
    %v3056 = vpop.xlane.xlu0 %3055
    %v3057 = vsel %vm351, %v3045, 0.0
    %3058 = vadd.xlane.f32.xlu0 %v3057
    %v3059 = vpop.xlane.xlu0 %3058
    %v3060 = vsel %vm351, %v3046, 0.0
    %3061 = vadd.xlane.f32.xlu0 %v3060
    %v3062 = vpop.xlane.xlu0 %3061
    %v3063 = vsel %vm351, %v3047, 0.0
    %3064 = vadd.xlane.f32.xlu0 %v3063
    %v3065 = vpop.xlane.xlu0 %3064
    %v3066 = vsub.f32 %v3013, %v3050
    %v3067 = vsub.f32 %v3014, %v3053
    %v3068 = vsub.f32 %v3015, %v3056
    %v3069 = vsub.f32 %v3016, %v3059
    %v3070 = vsub.f32 %v3017, %v3062
    %v3071 = vsub.f32 %v3018, %v3065
    %v3072 = vmul.f32 %v3066, 1.442695
    %v3073 = vpow.pop %v3072
    %v3074 = vmul.f32 %v3067, 1.442695
    %v3075 = vpow.pop %v3074
    %v3076 = vmul.f32 %v3068, 1.442695
    %v3077 = vpow.pop %v3076
    %v3078 = vmul.f32 %v3069, 1.442695
    %v3079 = vpow.pop %v3078
    %v3080 = vmul.f32 %v3070, 1.442695
    %v3081 = vpow.pop %v3080
    %v3082 = vmul.f32 %v3071, 1.442695
    %v3083 = vpow.pop %v3082
    %v3084 = vmul.f32 %v227, %v3073
    %v3085 = vmul.f32 %v228, %v3075
    %v3086 = vmul.f32 %v229, %v3077
    %v3087 = vmul.f32 %v230, %v3079
    %v3088 = vmul.f32 %v231, %v3081
    %v3089 = vmul.f32 %v232, %v3083
    %v3090 = vsel %vm351, %v3084, 0.0
    %v3091 = vsel %vm351, %v3085, 0.0
    %v3092 = vadd.f32 %v3090, %v3091
    %v3093 = vsel %vm351, %v3086, 0.0
    %v3094 = vadd.f32 %v3092, %v3093
    %v3095 = vsel %vm351, %v3087, 0.0
    %v3096 = vadd.f32 %v3094, %v3095
    %v3097 = vsel %vm351, %v3088, 0.0
    %v3098 = vadd.f32 %v3096, %v3097
    %v3099 = vsel %vm351, %v3089, 0.0
    %v3100 = vadd.f32 %v3098, %v3099
    %v3101 = vrot.slane %v3100, 4
    %v3102 = vadd.f32 %v3100, %v3101
    %v3103 = vrot.slane %v3102, 2
    %v3104 = vadd.f32 %v3102, %v3103
    %v3105 = vrot.slane %v3104, 1
    %v3106 = vadd.f32 %v3104, %v3105
    %v3107 = vmul.f32 %v227, %v3106
    %v3108 = vmul.f32 %v228, %v3106
    %v3109 = vmul.f32 %v229, %v3106
    %v3110 = vmul.f32 %v230, %v3106
    %v3111 = vmul.f32 %v231, %v3106
    %v3112 = vmul.f32 %v232, %v3106
    %v3113 = vsel %vm351, %v3107, 0.0
    %3114 = vadd.xlane.f32.xlu0 %v3113
    %v3115 = vpop.xlane.xlu0 %3114
    %v3116 = vsel %vm351, %v3108, 0.0
    %3117 = vadd.xlane.f32.xlu0 %v3116
    %v3118 = vpop.xlane.xlu0 %3117
    %v3119 = vsel %vm351, %v3109, 0.0
    %3120 = vadd.xlane.f32.xlu0 %v3119
    %v3121 = vpop.xlane.xlu0 %3120
    %v3122 = vsel %vm351, %v3110, 0.0
    %3123 = vadd.xlane.f32.xlu0 %v3122
    %v3124 = vpop.xlane.xlu0 %3123
    %v3125 = vsel %vm351, %v3111, 0.0
    %3126 = vadd.xlane.f32.xlu0 %v3125
    %v3127 = vpop.xlane.xlu0 %3126
    %v3128 = vsel %vm351, %v3112, 0.0
    %3129 = vadd.xlane.f32.xlu0 %v3128
    %v3130 = vpop.xlane.xlu0 %3129
    %v3131 = vrcp.pop %v3115
    %v3132 = vmul.f32 %v3073, %v3131
    %v3133 = vrcp.pop %v3118
    %v3134 = vmul.f32 %v3075, %v3133
    %v3135 = vrcp.pop %v3121
    %v3136 = vmul.f32 %v3077, %v3135
    %v3137 = vrcp.pop %v3124
    %v3138 = vmul.f32 %v3079, %v3137
    %v3139 = vrcp.pop %v3127
    %v3140 = vmul.f32 %v3081, %v3139
    %v3141 = vrcp.pop %v3130
    %v3142 = vmul.f32 %v3083, %v3141
    %v3143 = vmul.f32 %v3132, %v2871
    %v3144 = vmul.f32 %v3134, %v2872
    %v3145 = vmul.f32 %v3136, %v2873
    %v3146 = vmul.f32 %v3138, %v2874
    %v3147 = vmul.f32 %v3140, %v2875
    %v3148 = vmul.f32 %v3142, %v2876
    %s3149 = scalar_lea.vmem %s8, 1
    %v3150 = vld [vmem:[%s3149] sm:$0x1]
    %v3152 = vlaneseq
    %v3153 = vshrl.u32 %v3152, 7
    %v3154 = vsub.s32 0, %v3153
    %v3155 = vrot.slane %v3150, %v3154
    %3157 = vmatprep.subr.mxu0 0.0
    %3158 = vmatpush1.msra.mxu0 %v3143
    %3159 = vmatprep.subr.mxu0 0.0
    %3160 = vmatpush1.msra.mxu0 %v3144
    %3161 = vmatprep.subr.mxu0 0.0
    %3162 = vmatpush1.msra.mxu0 %v3145
    %3163 = vmatprep.subr.mxu0 0.0
    %3164 = vmatpush1.msra.mxu0 %v3146
    %3165 = vmatprep.subr.mxu0 0.0
    %3166 = vmatpush1.msra.mxu0 %v3147
    %3167 = vmatprep.subr.mxu0 0.0
    %3168 = vmatpush1.msra.mxu0 %v3148
    %3169 = vmatprep.subr.mxu0 0.0
    %3170 = vmatpush1.msra.mxu0 0.0
    %3171 = vmatprep.subr.mxu0 0.0
    %3172 = vmatpush1.msra.mxu0 0.0
    %3173 = vmatprep.subr.mxu0 0.0
    %3174 = vmatpush1.msra.mxu0 0.0
    %3175 = vmatprep.subr.mxu0 0.0
    %3176 = vmatpush1.msra.mxu0 0.0
    %3177 = vmatprep.subr.mxu0 0.0
    %3178 = vmatpush1.msra.mxu0 0.0
    %3179 = vmatprep.subr.mxu0 0.0
    %3180 = vmatpush1.msra.mxu0 0.0
    %3181 = vmatprep.subr.mxu0 0.0
    %3182 = vmatpush1.msra.mxu0 0.0
    %3183 = vmatprep.subr.mxu0 0.0
    %3184 = vmatpush1.msra.mxu0 0.0
    %3185 = vmatprep.subr.mxu0 0.0
    %3186 = vmatpush1.msra.mxu0 0.0
    %3187 = vmatprep.subr.mxu0 0.0
    %3188 = vmatpush1.msra.mxu0 0.0
    %3189 = vmatprep.subr.mxu0 0.0
    %3190 = vmatpush1.msra.mxu0 0.0
    %3191 = vmatprep.subr.mxu0 0.0
    %3192 = vmatpush1.msra.mxu0 0.0
    %3193 = vmatprep.subr.mxu0 0.0
    %3194 = vmatpush1.msra.mxu0 0.0
    %3195 = vmatprep.subr.mxu0 0.0
    %3196 = vmatpush1.msra.mxu0 0.0
    %3197 = vmatprep.subr.mxu0 0.0
    %3198 = vmatpush1.msra.mxu0 0.0
    %3199 = vmatprep.subr.mxu0 0.0
    %3200 = vmatpush1.msra.mxu0 0.0
    %3201 = vmatprep.subr.mxu0 0.0
    %3202 = vmatpush1.msra.mxu0 0.0
    %3203 = vmatprep.subr.mxu0 0.0
    %3204 = vmatpush1.msra.mxu0 0.0
    %3205 = vmatprep.subr.mxu0 0.0
    %3206 = vmatpush1.msra.mxu0 0.0
    %3207 = vmatprep.subr.mxu0 0.0
    %3208 = vmatpush1.msra.mxu0 0.0
    %3209 = vmatprep.subr.mxu0 0.0
    %3210 = vmatpush1.msra.mxu0 0.0
    %3211 = vmatprep.subr.mxu0 0.0
    %3212 = vmatpush1.msra.mxu0 0.0
    %3213 = vmatprep.subr.mxu0 0.0
    %3214 = vmatpush1.msra.mxu0 0.0
    %3215 = vmatprep.subr.mxu0 0.0
    %3216 = vmatpush1.msra.mxu0 0.0
    %3217 = vmatprep.subr.mxu0 0.0
    %3218 = vmatpush1.msra.mxu0 0.0
    %3219 = vmatprep.subr.mxu0 0.0
    %3220 = vmatpush1.msra.mxu0 0.0
    %3221 = vmatprep.mubr.f32.mxu0 0.0
    %3222 = vmatmul.mubr.f32.gmra.mrb[0].mxu0 %v1803
    %v3223 = vpop.f32.mrb[0].mxu0
    %v3224 = vadd.f32 %v3155, %v3223
    %v3225 = vpop.f32.mrb[0].mxu0
    %3226 = vmatprep.mubr.f32.mxu0 0.0
    %3227 = vmatmul.mubr.f32.gmra.mrb[0].mxu0 %v1806
    %v3228 = vpop.f32.mrb[0].mxu0
    %v3229 = vadd.f32 %v3155, %v3228
    %v3230 = vpop.f32.mrb[0].mxu0
    %3231 = vmatprep.mubr.f32.mxu0 0.0
    %3232 = vmatmul.mubr.f32.gmra.mrb[0].mxu0 %v1809
    %v3233 = vpop.f32.mrb[0].mxu0
    %v3234 = vadd.f32 %v3155, %v3233
    %v3235 = vpop.f32.mrb[0].mxu0
    %3236 = vdwg.mxu0
    %s3237 = scalar_lea.vmem %s9, 4
    %v3238 = vld [vmem:[%s3237] sm:$0x7]
    %3239 = vmatprep.subr.mxu0 0.0
    %3240 = vmatpush1.msra.mxu0 %v3224
    %3241 = vmatprep.subr.mxu0 0.0
    %3242 = vmatpush1.msra.mxu0 %v3229
    %3243 = vmatprep.subr.mxu0 0.0
    %3244 = vmatpush1.msra.mxu0 %v3234
    %3245 = vmatprep.subr.mxu0 0.0
    %3246 = vmatpush1.msra.mxu0 0.0
    %3247 = vmatprep.subr.mxu0 0.0
    %3248 = vmatpush1.msra.mxu0 0.0
    %3249 = vmatprep.subr.mxu0 0.0
    %3250 = vmatpush1.msra.mxu0 0.0
    %3251 = vmatprep.subr.mxu0 0.0
    %3252 = vmatpush1.msra.mxu0 0.0
    %3253 = vmatprep.subr.mxu0 0.0
    %3254 = vmatpush1.msra.mxu0 0.0
    %3255 = vmatprep.subr.mxu0 0.0
    %3256 = vmatpush1.msra.mxu0 0.0
    %3257 = vmatprep.subr.mxu0 0.0
    %3258 = vmatpush1.msra.mxu0 0.0
    %3259 = vmatprep.subr.mxu0 0.0
    %3260 = vmatpush1.msra.mxu0 0.0
    %3261 = vmatprep.subr.mxu0 0.0
    %3262 = vmatpush1.msra.mxu0 0.0
    %3263 = vmatprep.subr.mxu0 0.0
    %3264 = vmatpush1.msra.mxu0 0.0
    %3265 = vmatprep.subr.mxu0 0.0
    %3266 = vmatpush1.msra.mxu0 0.0
    %3267 = vmatprep.subr.mxu0 0.0
    %3268 = vmatpush1.msra.mxu0 0.0
    %3269 = vmatprep.subr.mxu0 0.0
    %3270 = vmatpush1.msra.mxu0 0.0
    %3271 = vmatprep.subr.mxu0 0.0
    %3272 = vmatpush1.msra.mxu0 0.0
    %3273 = vmatprep.subr.mxu0 0.0
    %3274 = vmatpush1.msra.mxu0 0.0
    %3275 = vmatprep.subr.mxu0 0.0
    %3276 = vmatpush1.msra.mxu0 0.0
    %3277 = vmatprep.subr.mxu0 0.0
    %3278 = vmatpush1.msra.mxu0 0.0
    %3279 = vmatprep.subr.mxu0 0.0
    %3280 = vmatpush1.msra.mxu0 0.0
    %3281 = vmatprep.subr.mxu0 0.0
    %3282 = vmatpush1.msra.mxu0 0.0
    %3283 = vmatprep.subr.mxu0 0.0
    %3284 = vmatpush1.msra.mxu0 0.0
    %3285 = vmatprep.subr.mxu0 0.0
    %3286 = vmatpush1.msra.mxu0 0.0
    %3287 = vmatprep.subr.mxu0 0.0
    %3288 = vmatpush1.msra.mxu0 0.0
    %3289 = vmatprep.subr.mxu0 0.0
    %3290 = vmatpush1.msra.mxu0 0.0
    %3291 = vmatprep.subr.mxu0 0.0
    %3292 = vmatpush1.msra.mxu0 0.0
    %3293 = vmatprep.subr.mxu0 0.0
    %3294 = vmatpush1.msra.mxu0 0.0
    %3295 = vmatprep.subr.mxu0 0.0
    %3296 = vmatpush1.msra.mxu0 0.0
    %3297 = vmatprep.subr.mxu0 0.0
    %3298 = vmatpush1.msra.mxu0 0.0
    %3299 = vmatprep.subr.mxu0 0.0
    %3300 = vmatpush1.msra.mxu0 0.0
    %3301 = vmatprep.subr.mxu0 0.0
    %3302 = vmatpush1.msra.mxu0 0.0
    %3303 = vmatprep.mubr.f32.mxu0 0.0
    %3304 = vmatmul.mubr.f32.gmra.mrb[0].mxu0 %v353
    %v3305 = vpop.f32.mrb[0].mxu0
    %v3306 = vadd.f32 0.0, %v3305
    %v3307 = vpop.f32.mrb[0].mxu0
    %3308 = vdwg.mxu0
    %v3309 = vmul.f32 %v3306, %v172
    %v3311 = vsel %vm436, %v3309, 0
    %3313 = vmatprep.subr.mxu0 0.0
    %3314 = vmatpush1.msra.mxu0 %v3311
    %3315 = vmatprep.subr.mxu0 0.0
    %3316 = vmatpush1.msra.mxu0 0.0
    %3317 = vmatprep.subr.mxu0 0.0
    %3318 = vmatpush1.msra.mxu0 0.0
    %3319 = vmatprep.subr.mxu0 0.0
    %3320 = vmatpush1.msra.mxu0 0.0
    %3321 = vmatprep.subr.mxu0 0.0
    %3322 = vmatpush1.msra.mxu0 0.0
    %3323 = vmatprep.subr.mxu0 0.0
    %3324 = vmatpush1.msra.mxu0 0.0
    %3325 = vmatprep.subr.mxu0 0.0
    %3326 = vmatpush1.msra.mxu0 0.0
    %3327 = vmatprep.subr.mxu0 0.0
    %3328 = vmatpush1.msra.mxu0 0.0
    %3329 = vmatprep.subr.mxu0 0.0
    %3330 = vmatpush1.msra.mxu0 0.0
    %3331 = vmatprep.subr.mxu0 0.0
    %3332 = vmatpush1.msra.mxu0 0.0
    %3333 = vmatprep.subr.mxu0 0.0
    %3334 = vmatpush1.msra.mxu0 0.0
    %3335 = vmatprep.subr.mxu0 0.0
    %3336 = vmatpush1.msra.mxu0 0.0
    %3337 = vmatprep.subr.mxu0 0.0
    %3338 = vmatpush1.msra.mxu0 0.0
    %3339 = vmatprep.subr.mxu0 0.0
    %3340 = vmatpush1.msra.mxu0 0.0
    %3341 = vmatprep.subr.mxu0 0.0
    %3342 = vmatpush1.msra.mxu0 0.0
    %3343 = vmatprep.subr.mxu0 0.0
    %3344 = vmatpush1.msra.mxu0 0.0
    %3345 = vmatprep.subr.mxu0 0.0
    %3346 = vmatpush1.msra.mxu0 0.0
    %3347 = vmatprep.subr.mxu0 0.0
    %3348 = vmatpush1.msra.mxu0 0.0
    %3349 = vmatprep.subr.mxu0 0.0
    %3350 = vmatpush1.msra.mxu0 0.0
    %3351 = vmatprep.subr.mxu0 0.0
    %3352 = vmatpush1.msra.mxu0 0.0
    %3353 = vmatprep.subr.mxu0 0.0
    %3354 = vmatpush1.msra.mxu0 0.0
    %3355 = vmatprep.subr.mxu0 0.0
    %3356 = vmatpush1.msra.mxu0 0.0
    %3357 = vmatprep.subr.mxu0 0.0
    %3358 = vmatpush1.msra.mxu0 0.0
    %3359 = vmatprep.subr.mxu0 0.0
    %3360 = vmatpush1.msra.mxu0 0.0
    %3361 = vmatprep.subr.mxu0 0.0
    %3362 = vmatpush1.msra.mxu0 0.0
    %3363 = vmatprep.subr.mxu0 0.0
    %3364 = vmatpush1.msra.mxu0 0.0
    %3365 = vmatprep.subr.mxu0 0.0
    %3366 = vmatpush1.msra.mxu0 0.0
    %3367 = vmatprep.subr.mxu0 0.0
    %3368 = vmatpush1.msra.mxu0 0.0
    %3369 = vmatprep.subr.mxu0 0.0
    %3370 = vmatpush1.msra.mxu0 0.0
    %3371 = vmatprep.subr.mxu0 0.0
    %3372 = vmatpush1.msra.mxu0 0.0
    %3373 = vmatprep.subr.mxu0 0.0
    %3374 = vmatpush1.msra.mxu0 0.0
    %3375 = vmatprep.subr.mxu0 0.0
    %3376 = vmatpush1.msra.mxu0 0.0
    %3377 = vmatprep.mubr.f32.mxu0 0.0
    %3378 = vmatmul.mubr.f32.gmra.mrb[0].mxu0 %v428
    %v3379 = vpop.f32.mrb[0].mxu0
    %v3380 = vadd.f32 0.0, %v3379
    %v3381 = vpop.f32.mrb[0].mxu0
    %3382 = vmatprep.mubr.f32.mxu0 0.0
    %3383 = vmatmul.mubr.f32.gmra.mrb[0].mxu0 %v431
    %v3384 = vpop.f32.mrb[0].mxu0
    %v3385 = vadd.f32 0.0, %v3384
    %v3386 = vpop.f32.mrb[0].mxu0
    %3387 = vmatprep.mubr.f32.mxu0 0.0
    %3388 = vmatmul.mubr.f32.gmra.mrb[0].mxu0 %v434
    %v3389 = vpop.f32.mrb[0].mxu0
    %v3390 = vadd.f32 0.0, %v3389
    %v3391 = vpop.f32.mrb[0].mxu0
    %3392 = vdwg.mxu0
    %v3393 = vlaneseq
    %v3394 = vshrl.u32 %v3393, 7
    %v3395 = vsub.s32 2, %v3394
    %v3396 = vrot.slane %v3238, %v3395
    %v3397 = vmul.f32 %v3396, %v3380
    %v3398 = vmul.f32 %v3396, %v3385
    %v3399 = vmul.f32 %v3396, %v3390
    %v3400 = vsub.f32 %v3224, %v3397
    %v3401 = vsub.f32 %v3229, %v3398
    %v3402 = vsub.f32 %v3234, %v3399
    %v3403 = vmul.f32 %v3400, %v3400
    %v3404 = vmul.f32 %v3401, %v3401
    %v3405 = vmul.f32 %v3402, %v3402
    %3406 = vmatprep.subr.mxu0 0.0
    %3407 = vmatpush1.msra.mxu0 %v3403
    %3408 = vmatprep.subr.mxu0 0.0
    %3409 = vmatpush1.msra.mxu0 %v3404
    %3410 = vmatprep.subr.mxu0 0.0
    %3411 = vmatpush1.msra.mxu0 %v3405
    %3412 = vmatprep.subr.mxu0 0.0
    %3413 = vmatpush1.msra.mxu0 0.0
    %3414 = vmatprep.subr.mxu0 0.0
    %3415 = vmatpush1.msra.mxu0 0.0
    %3416 = vmatprep.subr.mxu0 0.0
    %3417 = vmatpush1.msra.mxu0 0.0
    %3418 = vmatprep.subr.mxu0 0.0
    %3419 = vmatpush1.msra.mxu0 0.0
    %3420 = vmatprep.subr.mxu0 0.0
    %3421 = vmatpush1.msra.mxu0 0.0
    %3422 = vmatprep.subr.mxu0 0.0
    %3423 = vmatpush1.msra.mxu0 0.0
    %3424 = vmatprep.subr.mxu0 0.0
    %3425 = vmatpush1.msra.mxu0 0.0
    %3426 = vmatprep.subr.mxu0 0.0
    %3427 = vmatpush1.msra.mxu0 0.0
    %3428 = vmatprep.subr.mxu0 0.0
    %3429 = vmatpush1.msra.mxu0 0.0
    %3430 = vmatprep.subr.mxu0 0.0
    %3431 = vmatpush1.msra.mxu0 0.0
    %3432 = vmatprep.subr.mxu0 0.0
    %3433 = vmatpush1.msra.mxu0 0.0
    %3434 = vmatprep.subr.mxu0 0.0
    %3435 = vmatpush1.msra.mxu0 0.0
    %3436 = vmatprep.subr.mxu0 0.0
    %3437 = vmatpush1.msra.mxu0 0.0
    %3438 = vmatprep.subr.mxu0 0.0
    %3439 = vmatpush1.msra.mxu0 0.0
    %3440 = vmatprep.subr.mxu0 0.0
    %3441 = vmatpush1.msra.mxu0 0.0
    %3442 = vmatprep.subr.mxu0 0.0
    %3443 = vmatpush1.msra.mxu0 0.0
    %3444 = vmatprep.subr.mxu0 0.0
    %3445 = vmatpush1.msra.mxu0 0.0
    %3446 = vmatprep.subr.mxu0 0.0
    %3447 = vmatpush1.msra.mxu0 0.0
    %3448 = vmatprep.subr.mxu0 0.0
    %3449 = vmatpush1.msra.mxu0 0.0
    %3450 = vmatprep.subr.mxu0 0.0
    %3451 = vmatpush1.msra.mxu0 0.0
    %3452 = vmatprep.subr.mxu0 0.0
    %3453 = vmatpush1.msra.mxu0 0.0
    %3454 = vmatprep.subr.mxu0 0.0
    %3455 = vmatpush1.msra.mxu0 0.0
    %3456 = vmatprep.subr.mxu0 0.0
    %3457 = vmatpush1.msra.mxu0 0.0
    %3458 = vmatprep.subr.mxu0 0.0
    %3459 = vmatpush1.msra.mxu0 0.0
    %3460 = vmatprep.subr.mxu0 0.0
    %3461 = vmatpush1.msra.mxu0 0.0
    %3462 = vmatprep.subr.mxu0 0.0
    %3463 = vmatpush1.msra.mxu0 0.0
    %3464 = vmatprep.subr.mxu0 0.0
    %3465 = vmatpush1.msra.mxu0 0.0
    %3466 = vmatprep.subr.mxu0 0.0
    %3467 = vmatpush1.msra.mxu0 0.0
    %3468 = vmatprep.subr.mxu0 0.0
    %3469 = vmatpush1.msra.mxu0 0.0
    %3470 = vmatprep.mubr.f32.mxu0 0.0
    %3471 = vmatmul.mubr.f32.gmra.mrb[0].mxu0 %v353
    %v3472 = vpop.f32.mrb[0].mxu0
    %v3473 = vadd.f32 0.0, %v3472
    %v3474 = vpop.f32.mrb[0].mxu0
    %3475 = vdwg.mxu0
    %v3476 = vmul.f32 %v3473, %v172
    %v3477 = vlaneseq
    %v3478 = vshrl.u32 %v3477, 7
    %v3479 = vsub.s32 0, %v3478
    %v3480 = vrot.slane %v3238, %v3479
    %v3481 = vmul.f32 %v3480, %v3400
    %v3482 = vmul.f32 %v3480, %v3401
    %v3483 = vmul.f32 %v3480, %v3402
    %v3485 = vsel %vm436, %v3476, 0
    %3487 = vmatprep.subr.mxu0 0.0
    %3488 = vmatpush1.msra.mxu0 %v3485
    %3489 = vmatprep.subr.mxu0 0.0
    %3490 = vmatpush1.msra.mxu0 0.0
    %3491 = vmatprep.subr.mxu0 0.0
    %3492 = vmatpush1.msra.mxu0 0.0
    %3493 = vmatprep.subr.mxu0 0.0
    %3494 = vmatpush1.msra.mxu0 0.0
    %3495 = vmatprep.subr.mxu0 0.0
    %3496 = vmatpush1.msra.mxu0 0.0
    %3497 = vmatprep.subr.mxu0 0.0
    %3498 = vmatpush1.msra.mxu0 0.0
    %3499 = vmatprep.subr.mxu0 0.0
    %3500 = vmatpush1.msra.mxu0 0.0
    %3501 = vmatprep.subr.mxu0 0.0
    %3502 = vmatpush1.msra.mxu0 0.0
    %3503 = vmatprep.subr.mxu0 0.0
    %3504 = vmatpush1.msra.mxu0 0.0
    %3505 = vmatprep.subr.mxu0 0.0
    %3506 = vmatpush1.msra.mxu0 0.0
    %3507 = vmatprep.subr.mxu0 0.0
    %3508 = vmatpush1.msra.mxu0 0.0
    %3509 = vmatprep.subr.mxu0 0.0
    %3510 = vmatpush1.msra.mxu0 0.0
    %3511 = vmatprep.subr.mxu0 0.0
    %3512 = vmatpush1.msra.mxu0 0.0
    %3513 = vmatprep.subr.mxu0 0.0
    %3514 = vmatpush1.msra.mxu0 0.0
    %3515 = vmatprep.subr.mxu0 0.0
    %3516 = vmatpush1.msra.mxu0 0.0
    %3517 = vmatprep.subr.mxu0 0.0
    %3518 = vmatpush1.msra.mxu0 0.0
    %3519 = vmatprep.subr.mxu0 0.0
    %3520 = vmatpush1.msra.mxu0 0.0
    %3521 = vmatprep.subr.mxu0 0.0
    %3522 = vmatpush1.msra.mxu0 0.0
    %3523 = vmatprep.subr.mxu0 0.0
    %3524 = vmatpush1.msra.mxu0 0.0
    %3525 = vmatprep.subr.mxu0 0.0
    %3526 = vmatpush1.msra.mxu0 0.0
    %3527 = vmatprep.subr.mxu0 0.0
    %3528 = vmatpush1.msra.mxu0 0.0
    %3529 = vmatprep.subr.mxu0 0.0
    %3530 = vmatpush1.msra.mxu0 0.0
    %3531 = vmatprep.subr.mxu0 0.0
    %3532 = vmatpush1.msra.mxu0 0.0
    %3533 = vmatprep.subr.mxu0 0.0
    %3534 = vmatpush1.msra.mxu0 0.0
    %3535 = vmatprep.subr.mxu0 0.0
    %3536 = vmatpush1.msra.mxu0 0.0
    %3537 = vmatprep.subr.mxu0 0.0
    %3538 = vmatpush1.msra.mxu0 0.0
    %3539 = vmatprep.subr.mxu0 0.0
    %3540 = vmatpush1.msra.mxu0 0.0
    %3541 = vmatprep.subr.mxu0 0.0
    %3542 = vmatpush1.msra.mxu0 0.0
    %3543 = vmatprep.subr.mxu0 0.0
    %3544 = vmatpush1.msra.mxu0 0.0
    %3545 = vmatprep.subr.mxu0 0.0
    %3546 = vmatpush1.msra.mxu0 0.0
    %3547 = vmatprep.subr.mxu0 0.0
    %3548 = vmatpush1.msra.mxu0 0.0
    %3549 = vmatprep.subr.mxu0 0.0
    %3550 = vmatpush1.msra.mxu0 0.0
    %3551 = vmatprep.mubr.f32.mxu0 0.0
    %3552 = vmatmul.mubr.f32.gmra.mrb[0].mxu0 %v428
    %v3553 = vpop.f32.mrb[0].mxu0
    %v3554 = vadd.f32 1e-05, %v3553
    %v3555 = vpop.f32.mrb[0].mxu0
    %3556 = vmatprep.mubr.f32.mxu0 0.0
    %3557 = vmatmul.mubr.f32.gmra.mrb[0].mxu0 %v431
    %v3558 = vpop.f32.mrb[0].mxu0
    %v3559 = vadd.f32 1e-05, %v3558
    %v3560 = vpop.f32.mrb[0].mxu0
    %3561 = vmatprep.mubr.f32.mxu0 0.0
    %3562 = vmatmul.mubr.f32.gmra.mrb[0].mxu0 %v434
    %v3563 = vpop.f32.mrb[0].mxu0
    %v3564 = vadd.f32 1e-05, %v3563
    %v3565 = vpop.f32.mrb[0].mxu0
    %3566 = vdwg.mxu0
    %v3567 = vrsqrt.pop %v3554
    %v3568 = vrsqrt.pop %v3559
    %v3569 = vrsqrt.pop %v3564
    %v3570 = vmul.f32 %v3481, %v3567
    %v3571 = vmul.f32 %v3482, %v3568
    %v3572 = vmul.f32 %v3483, %v3569
    %v3573 = vlaneseq
    %v3574 = vshrl.u32 %v3573, 7
    %v3575 = vsub.s32 1, %v3574
    %v3576 = vrot.slane %v3238, %v3575
    %v3577 = vadd.f32 %v3570, %v3576
    %v3578 = vadd.f32 %v3571, %v3576
    %v3579 = vadd.f32 %v3572, %v3576
    %v3580 = vadd.f32 %v3577, %v2242
    %v3581 = vadd.f32 %v3578, %v2243
    %v3582 = vadd.f32 %v3579, %v2244
    %vm3583 = vcmp.ge.f32.partialorder %v3580, 0.0
    %vm3584 = vcmp.ge.f32.partialorder %v3581, 0.0
    %vm3585 = vcmp.ge.f32.partialorder %v3582, 0.0
    %v3586 = vmul.f32 %v3580, 0.1
    %v3587 = vmul.f32 %v3581, 0.1
    %v3588 = vmul.f32 %v3582, 0.1
    %v3589 = vsel %vm3583, %v3580, %v3586
    %v3590 = vsel %vm3584, %v3581, %v3587
    %v3591 = vsel %vm3585, %v3582, %v3588
    %3592 = vst.msk [vmem:[%s19] sm:$0xff] %vm731, %v3589
    %3593 = vst.msk [vmem:[%s19 + $0x8] sm:$0xff] %vm731, %v3590
    %3594 = vst.msk [vmem:[%s19 + $0x10] sm:$0xff] %vm731, %v3591
    %v3595 = vpack.c.bf16 %v3590, %v3589
    %v3596 = vpack.c.bf16 %v3591, %v3591
    %v3598 = vsel %vm815, %v3596, 0
    %3600 = vmatprep.subr.bf16.mxu0 0
    %3601 = vmatpush1.bf16.msra.mxu0 %v3595
    %3602 = vmatprep.subr.bf16.mxu0 0
    %3603 = vmatpush1.bf16.msra.mxu0 %v3598
    %3604 = vmatprep.subr.bf16.mxu0 0
    %3605 = vmatpush1.bf16.msra.mxu0 0
    %3606 = vmatprep.subr.bf16.mxu0 0
    %3607 = vmatpush1.bf16.msra.mxu0 0
    %3608 = vmatprep.subr.bf16.mxu0 0
    %3609 = vmatpush1.bf16.msra.mxu0 0
    %3610 = vmatprep.subr.bf16.mxu0 0
    %3611 = vmatpush1.bf16.msra.mxu0 0
    %3612 = vmatprep.subr.bf16.mxu0 0
    %3613 = vmatpush1.bf16.msra.mxu0 0
    %3614 = vmatprep.subr.bf16.mxu0 0
    %3615 = vmatpush1.bf16.msra.mxu0 0
    %3616 = vmatprep.subr.bf16.mxu0 0
    %3617 = vmatpush1.bf16.msra.mxu0 0
    %3618 = vmatprep.subr.bf16.mxu0 0
    %3619 = vmatpush1.bf16.msra.mxu0 0
    %3620 = vmatprep.subr.bf16.mxu0 0
    %3621 = vmatpush1.bf16.msra.mxu0 0
    %3622 = vmatprep.subr.bf16.mxu0 0
    %3623 = vmatpush1.bf16.msra.mxu0 0
    %3624 = vmatprep.subr.bf16.mxu0 0
    %3625 = vmatpush1.bf16.msra.mxu0 0
    %3626 = vmatprep.subr.bf16.mxu0 0
    %3627 = vmatpush1.bf16.msra.mxu0 0
    %3628 = vmatprep.subr.bf16.mxu0 0
    %3629 = vmatpush1.bf16.msra.mxu0 0
    %3630 = vmatprep.subr.bf16.mxu0 0
    %3631 = vmatpush1.bf16.msra.mxu0 0
    %3632 = vmatprep.mubr.bf16.mxu0 0
    %3633 = vmatmul.mubr.bf16.gmra.mrb[0].mxu0 %v919
    %v3634 = vpop.f32.mrb[0].mxu0
    %v3635 = vadd.f32 0.0, %v3634
    %v3636 = vpop.f32.mrb[0].mxu0
    %v3637 = vpop.f32.mrb[0].mxu0
    %v3638 = vadd.f32 0.0, %v3637
    %v3639 = vpop.f32.mrb[0].mxu0
    %3640 = vmatprep.mubr.bf16.mxu0 0
    %3641 = vmatmul.mubr.bf16.gmra.mrb[0].mxu0 %v922
    %v3642 = vpop.f32.mrb[0].mxu0
    %v3643 = vadd.f32 0.0, %v3642
    %v3644 = vpop.f32.mrb[0].mxu0
    %v3645 = vpop.f32.mrb[0].mxu0
    %v3646 = vadd.f32 0.0, %v3645
    %v3647 = vpop.f32.mrb[0].mxu0
    %3648 = vmatprep.mubr.bf16.mxu0 0
    %3649 = vmatmul.mubr.bf16.gmra.mrb[0].mxu0 %v925
    %v3650 = vpop.f32.mrb[0].mxu0
    %v3651 = vadd.f32 0.0, %v3650
    %v3652 = vpop.f32.mrb[0].mxu0
    %v3653 = vpop.f32.mrb[0].mxu0
    %v3654 = vadd.f32 0.0, %v3653
    %v3655 = vpop.f32.mrb[0].mxu0
    %3656 = vdwg.mxu0
    %3657 = vmatprep.subr.mxu0 0.0
    %3658 = vmatpush1.msra.mxu0 %v3635
    %3659 = vmatprep.subr.mxu0 0.0
    %3660 = vmatpush1.msra.mxu0 %v3638
    %3661 = vmatprep.subr.mxu0 0.0
    %3662 = vmatpush1.msra.mxu0 %v3643
    %3663 = vmatprep.subr.mxu0 0.0
    %3664 = vmatpush1.msra.mxu0 %v3646
    %3665 = vmatprep.subr.mxu0 0.0
    %3666 = vmatpush1.msra.mxu0 %v3651
    %3667 = vmatprep.subr.mxu0 0.0
    %3668 = vmatpush1.msra.mxu0 %v3654
    %3669 = vmatprep.subr.mxu0 0.0
    %3670 = vmatpush1.msra.mxu0 0.0
    %3671 = vmatprep.subr.mxu0 0.0
    %3672 = vmatpush1.msra.mxu0 0.0
    %3673 = vmatprep.subr.mxu0 0.0
    %3674 = vmatpush1.msra.mxu0 0.0
    %3675 = vmatprep.subr.mxu0 0.0
    %3676 = vmatpush1.msra.mxu0 0.0
    %3677 = vmatprep.subr.mxu0 0.0
    %3678 = vmatpush1.msra.mxu0 0.0
    %3679 = vmatprep.subr.mxu0 0.0
    %3680 = vmatpush1.msra.mxu0 0.0
    %3681 = vmatprep.subr.mxu0 0.0
    %3682 = vmatpush1.msra.mxu0 0.0
    %3683 = vmatprep.subr.mxu0 0.0
    %3684 = vmatpush1.msra.mxu0 0.0
    %3685 = vmatprep.subr.mxu0 0.0
    %3686 = vmatpush1.msra.mxu0 0.0
    %3687 = vmatprep.subr.mxu0 0.0
    %3688 = vmatpush1.msra.mxu0 0.0
    %3689 = vmatprep.subr.mxu0 0.0
    %3690 = vmatpush1.msra.mxu0 0.0
    %3691 = vmatprep.subr.mxu0 0.0
    %3692 = vmatpush1.msra.mxu0 0.0
    %3693 = vmatprep.subr.mxu0 0.0
    %3694 = vmatpush1.msra.mxu0 0.0
    %3695 = vmatprep.subr.mxu0 0.0
    %3696 = vmatpush1.msra.mxu0 0.0
    %3697 = vmatprep.subr.mxu0 0.0
    %3698 = vmatpush1.msra.mxu0 0.0
    %3699 = vmatprep.subr.mxu0 0.0
    %3700 = vmatpush1.msra.mxu0 0.0
    %3701 = vmatprep.subr.mxu0 0.0
    %3702 = vmatpush1.msra.mxu0 0.0
    %3703 = vmatprep.subr.mxu0 0.0
    %3704 = vmatpush1.msra.mxu0 0.0
    %3705 = vmatprep.subr.mxu0 0.0
    %3706 = vmatpush1.msra.mxu0 0.0
    %3707 = vmatprep.subr.mxu0 0.0
    %3708 = vmatpush1.msra.mxu0 0.0
    %3709 = vmatprep.subr.mxu0 0.0
    %3710 = vmatpush1.msra.mxu0 0.0
    %3711 = vmatprep.subr.mxu0 0.0
    %3712 = vmatpush1.msra.mxu0 0.0
    %3713 = vmatprep.subr.mxu0 0.0
    %3714 = vmatpush1.msra.mxu0 0.0
    %3715 = vmatprep.subr.mxu0 0.0
    %3716 = vmatpush1.msra.mxu0 0.0
    %3717 = vmatprep.subr.mxu0 0.0
    %3718 = vmatpush1.msra.mxu0 0.0
    %3719 = vmatprep.subr.mxu0 0.0
    %3720 = vmatpush1.msra.mxu0 0.0
    %3721 = vmatprep.mubr.f32.mxu0 0.0
    %3722 = vmatmul.mubr.f32.gmra.mrb[0].mxu0 %v1803
    %v3723 = vpop.f32.mrb[0].mxu0
    %v3724 = vadd.f32 0.0, %v3723
    %v3725 = vpop.f32.mrb[0].mxu0
    %3726 = vmatprep.mubr.f32.mxu0 0.0
    %3727 = vmatmul.mubr.f32.gmra.mrb[0].mxu0 %v1806
    %v3728 = vpop.f32.mrb[0].mxu0
    %v3729 = vadd.f32 0.0, %v3728
    %v3730 = vpop.f32.mrb[0].mxu0
    %3731 = vmatprep.mubr.f32.mxu0 0.0
    %3732 = vmatmul.mubr.f32.gmra.mrb[0].mxu0 %v1809
    %v3733 = vpop.f32.mrb[0].mxu0
    %v3734 = vadd.f32 0.0, %v3733
    %v3735 = vpop.f32.mrb[0].mxu0
    %3736 = vdwg.mxu0
    %v3737 = vld [vmem:[#allocation7] sm:$0x1]
    %v3738 = vld [vmem:[#allocation8] sm:$0x1]
    %v3740 = vsel %vm731, %v3738, 0
    %v3743 = vsel %vm731, %v3589, 0
    %v3746 = vsel %vm731, %v3590, 0
    %v3749 = vsel %vm731, %v3591, 0
    %3751 = vmatprep.subr.mxu0 0.0
    %3752 = vmatpush1.xpose.msra.mxu0 %v3743
    %3753 = vmatprep.subr.mxu0 0.0
    %3754 = vmatpush1.xpose.msra.mxu0 %v3746
    %3755 = vmatprep.subr.mxu0 0.0
    %3756 = vmatpush1.xpose.msra.mxu0 %v3749
    %3757 = vmatprep.subr.mxu0 0.0
    %3758 = vmatpush1.xpose.msra.mxu0 0.0
    %3759 = vmatprep.subr.mxu0 0.0
    %3760 = vmatpush1.xpose.msra.mxu0 0.0
    %3761 = vmatprep.subr.mxu0 0.0
    %3762 = vmatpush1.xpose.msra.mxu0 0.0
    %3763 = vmatprep.subr.mxu0 0.0
    %3764 = vmatpush1.xpose.msra.mxu0 0.0
    %3765 = vmatprep.subr.mxu0 0.0
    %3766 = vmatpush1.xpose.msra.mxu0 0.0
    %3767 = vmatprep.subr.mxu0 0.0
    %3768 = vmatpush1.xpose.msra.mxu0 0.0
    %3769 = vmatprep.subr.mxu0 0.0
    %3770 = vmatpush1.xpose.msra.mxu0 0.0
    %3771 = vmatprep.subr.mxu0 0.0
    %3772 = vmatpush1.xpose.msra.mxu0 0.0
    %3773 = vmatprep.subr.mxu0 0.0
    %3774 = vmatpush1.xpose.msra.mxu0 0.0
    %3775 = vmatprep.subr.mxu0 0.0
    %3776 = vmatpush1.xpose.msra.mxu0 0.0
    %3777 = vmatprep.subr.mxu0 0.0
    %3778 = vmatpush1.xpose.msra.mxu0 0.0
    %3779 = vmatprep.subr.mxu0 0.0
    %3780 = vmatpush1.xpose.msra.mxu0 0.0
    %3781 = vmatprep.subr.mxu0 0.0
    %3782 = vmatpush1.xpose.msra.mxu0 0.0
    %3783 = vmatprep.subr.mxu0 0.0
    %3784 = vmatpush1.xpose.msra.mxu0 0.0
    %3785 = vmatprep.subr.mxu0 0.0
    %3786 = vmatpush1.xpose.msra.mxu0 0.0
    %3787 = vmatprep.subr.mxu0 0.0
    %3788 = vmatpush1.xpose.msra.mxu0 0.0
    %3789 = vmatprep.subr.mxu0 0.0
    %3790 = vmatpush1.xpose.msra.mxu0 0.0
    %3791 = vmatprep.subr.mxu0 0.0
    %3792 = vmatpush1.xpose.msra.mxu0 0.0
    %3793 = vmatprep.subr.mxu0 0.0
    %3794 = vmatpush1.xpose.msra.mxu0 0.0
    %3795 = vmatprep.subr.mxu0 0.0
    %3796 = vmatpush1.xpose.msra.mxu0 0.0
    %3797 = vmatprep.subr.mxu0 0.0
    %3798 = vmatpush1.xpose.msra.mxu0 0.0
    %3799 = vmatprep.subr.mxu0 0.0
    %3800 = vmatpush1.xpose.msra.mxu0 0.0
    %3801 = vmatprep.subr.mxu0 0.0
    %3802 = vmatpush1.xpose.msra.mxu0 0.0
    %3803 = vmatprep.subr.mxu0 0.0
    %3804 = vmatpush1.xpose.msra.mxu0 0.0
    %3805 = vmatprep.subr.mxu0 0.0
    %3806 = vmatpush1.xpose.msra.mxu0 0.0
    %3807 = vmatprep.subr.mxu0 0.0
    %3808 = vmatpush1.xpose.msra.mxu0 0.0
    %3809 = vmatprep.subr.mxu0 0.0
    %3810 = vmatpush1.xpose.msra.mxu0 0.0
    %3811 = vmatprep.subr.mxu0 0.0
    %3812 = vmatpush1.xpose.msra.mxu0 0.0
    %3813 = vmatprep.subr.mxu0 0.0
    %3814 = vmatpush1.xpose.msra.mxu0 0.0
    %3815 = vmatprep.mubr.f32.mxu0 0.0
    %3816 = vmatmul.mubr.f32.gmra.mrb[0].mxu0 %v3740
    %v3817 = vpop.f32.mrb[0].mxu0
    %v3818 = vadd.f32 0.0, %v3817
    %v3819 = vpop.f32.mrb[0].mxu0
    %3820 = vdwg.mxu0
    %v3822 = vsel %vm731, %v3737, 0
    %v3825 = vsel %vm731, %v3724, 0
    %v3828 = vsel %vm731, %v3729, 0
    %v3831 = vsel %vm731, %v3734, 0
    %3833 = vmatprep.subr.mxu0 0.0
    %3834 = vmatpush1.xpose.msra.mxu0 %v3825
    %3835 = vmatprep.subr.mxu0 0.0
    %3836 = vmatpush1.xpose.msra.mxu0 %v3828
    %3837 = vmatprep.subr.mxu0 0.0
    %3838 = vmatpush1.xpose.msra.mxu0 %v3831
    %3839 = vmatprep.subr.mxu0 0.0
    %3840 = vmatpush1.xpose.msra.mxu0 0.0
    %3841 = vmatprep.subr.mxu0 0.0
    %3842 = vmatpush1.xpose.msra.mxu0 0.0
    %3843 = vmatprep.subr.mxu0 0.0
    %3844 = vmatpush1.xpose.msra.mxu0 0.0
    %3845 = vmatprep.subr.mxu0 0.0
    %3846 = vmatpush1.xpose.msra.mxu0 0.0
    %3847 = vmatprep.subr.mxu0 0.0
    %3848 = vmatpush1.xpose.msra.mxu0 0.0
    %3849 = vmatprep.subr.mxu0 0.0
    %3850 = vmatpush1.xpose.msra.mxu0 0.0
    %3851 = vmatprep.subr.mxu0 0.0
    %3852 = vmatpush1.xpose.msra.mxu0 0.0
    %3853 = vmatprep.subr.mxu0 0.0
    %3854 = vmatpush1.xpose.msra.mxu0 0.0
    %3855 = vmatprep.subr.mxu0 0.0
    %3856 = vmatpush1.xpose.msra.mxu0 0.0
    %3857 = vmatprep.subr.mxu0 0.0
    %3858 = vmatpush1.xpose.msra.mxu0 0.0
    %3859 = vmatprep.subr.mxu0 0.0
    %3860 = vmatpush1.xpose.msra.mxu0 0.0
    %3861 = vmatprep.subr.mxu0 0.0
    %3862 = vmatpush1.xpose.msra.mxu0 0.0
    %3863 = vmatprep.subr.mxu0 0.0
    %3864 = vmatpush1.xpose.msra.mxu0 0.0
    %3865 = vmatprep.subr.mxu0 0.0
    %3866 = vmatpush1.xpose.msra.mxu0 0.0
    %3867 = vmatprep.subr.mxu0 0.0
    %3868 = vmatpush1.xpose.msra.mxu0 0.0
    %3869 = vmatprep.subr.mxu0 0.0
    %3870 = vmatpush1.xpose.msra.mxu0 0.0
    %3871 = vmatprep.subr.mxu0 0.0
    %3872 = vmatpush1.xpose.msra.mxu0 0.0
    %3873 = vmatprep.subr.mxu0 0.0
    %3874 = vmatpush1.xpose.msra.mxu0 0.0
    %3875 = vmatprep.subr.mxu0 0.0
    %3876 = vmatpush1.xpose.msra.mxu0 0.0
    %3877 = vmatprep.subr.mxu0 0.0
    %3878 = vmatpush1.xpose.msra.mxu0 0.0
    %3879 = vmatprep.subr.mxu0 0.0
    %3880 = vmatpush1.xpose.msra.mxu0 0.0
    %3881 = vmatprep.subr.mxu0 0.0
    %3882 = vmatpush1.xpose.msra.mxu0 0.0
    %3883 = vmatprep.subr.mxu0 0.0
    %3884 = vmatpush1.xpose.msra.mxu0 0.0
    %3885 = vmatprep.subr.mxu0 0.0
    %3886 = vmatpush1.xpose.msra.mxu0 0.0
    %3887 = vmatprep.subr.mxu0 0.0
    %3888 = vmatpush1.xpose.msra.mxu0 0.0
    %3889 = vmatprep.subr.mxu0 0.0
    %3890 = vmatpush1.xpose.msra.mxu0 0.0
    %3891 = vmatprep.subr.mxu0 0.0
    %3892 = vmatpush1.xpose.msra.mxu0 0.0
    %3893 = vmatprep.subr.mxu0 0.0
    %3894 = vmatpush1.xpose.msra.mxu0 0.0
    %3895 = vmatprep.subr.mxu0 0.0
    %3896 = vmatpush1.xpose.msra.mxu0 0.0
    %3897 = vmatprep.mubr.f32.mxu0 0.0
    %3898 = vmatmul.mubr.f32.gmra.mrb[0].mxu0 %v3822
    %v3899 = vpop.f32.mrb[0].mxu0
    %v3900 = vadd.f32 %v3818, %v3899
    %v3901 = vpop.f32.mrb[0].mxu0
    %3902 = vdwg.mxu0
    %v3903 = vld [vmem:[#allocation2] sm:$0x1]
    %3905 = vset.pattern.permute.xlu0 0
    %3906 = vperm.xlu0 %3905, %v3903
    %v3907 = vpop.permute.xlu0 %3906
    %v3909 = vlaneseq
    %v3910 = vshrl.u32 %v3909, 7
    %v3911 = vsub.s32 0, %v3910
    %v3912 = vrot.slane %v3907, %v3911
    %v3913 = vadd.f32 %v3900, %v3912
    %v3914 = vtanh.pop %v3913
    %vm3915 = vcmask 188416
    %3916 = vst.msk [vmem:[%s20] sm:$0x1] %vm3915, %v3914
    // Predicated region
    $region94: #{fwd.2} parent=1 // pred_check
      _
    $region95: #{fwd.2} parent=1 // pred_check_branch
      %3918 = sbr.rel (0) target = $region97
    $region96: #{fwd.2} parent=1 // pred_region
      _
    $region97: #{fwd.2} parent=1 // pred_fallthru
      _
    // Predicated region
    $region98: #{fwd.2} parent=1 // pred_check
      _
    $region99: #{fwd.2} parent=1 // pred_check_branch
      %3920 = sbr.rel (0) target = $region101
    $region100: #{fwd.2} parent=1 // pred_region
      _
    $region101: #{fwd.2} parent=1 // pred_fallthru
      _
    // Predicated region
    $region102: #{fwd.2} parent=1 // pred_check
      _
    $region103: #{fwd.2} parent=1 // pred_check_branch
      %3922 = sbr.rel (0) target = $region105
    $region104: #{fwd.2} parent=1 // pred_region
      _
    $region105: #{fwd.2} parent=1 // pred_fallthru
      _
    // Predicated region
    $region106: #{fwd.2} parent=1 // pred_check
      _
    $region107: #{fwd.2} parent=1 // pred_check_branch
      %3924 = sbr.rel (0) target = $region109
    $region108: #{fwd.2} parent=1 // pred_region
      _
    $region109: #{fwd.2} parent=1 // pred_fallthru
      _
    %3925 = vsyncpa [#allocation4], 1
    %3926 = vsyncpa [#allocation6], 1
    %3927 = vsyncpa [#allocation9], 1

// kernel: fwd.3
$region0: #{fwd.3}
  #allocation0 [shape = 'u32[]', space=smem, size = 0x4, offset = 0x4, fixed_abs, tag = 'smem constant byte address 0x4 - core index']
  #allocation1 [shape = 'u32[144,128]{1,0:T(1,128)}', space=vmem, size = 0x12000, scoped, tag = 'internal scratch']
  %s0 = inlined_call_operand.vmem [shape: f32[2,6,32], index: 0, kind: input, shape index: {}]
  %s1 = inlined_call_operand.vmem [shape: f32[2,6,1], index: 1, kind: input, shape index: {}]
  %s2 = inlined_call_operand.vmem [shape: f32[2,1,6], index: 2, kind: input, shape index: {}]
  %s3 = inlined_call_operand.vmem [shape: f32[2,32], index: 3, kind: input, shape index: {}]
  %s4 = inlined_call_operand.vmem [shape: bf16[32,32], index: 4, kind: input, shape index: {}]
  %s5 = inlined_call_operand.vmem [shape: f32[1,32], index: 5, kind: input, shape index: {}]
  %s6 = inlined_call_operand.vmem [shape: bf16[3,32,32], index: 6, kind: input, shape index: {}]
  %s7 = inlined_call_operand.vmem [shape: f32[3,1,32], index: 7, kind: input, shape index: {}]
  %s8 = inlined_call_operand.vmem [shape: bf16[3,32,32], index: 8, kind: input, shape index: {}]
  %s9 = inlined_call_operand.vmem [shape: f32[3,1,32], index: 9, kind: input, shape index: {}]
  %s10 = inlined_call_operand.vmem [shape: bf16[3,32,32], index: 10, kind: input, shape index: {}]
  %s11 = inlined_call_operand.vmem [shape: f32[3,1,32], index: 11, kind: input, shape index: {}]
  %s12 = inlined_call_operand.vmem [shape: bf16[3,32,32], index: 12, kind: input, shape index: {}]
  %s13 = inlined_call_operand.vmem [shape: f32[3,1,32], index: 13, kind: input, shape index: {}]
  %s14 = inlined_call_operand.vmem [shape: bf16[3,32,32], index: 14, kind: input, shape index: {}]
  %s15 = inlined_call_operand.vmem [shape: f32[3,1,32], index: 15, kind: input, shape index: {}]
  %s16 = inlined_call_operand.vmem [shape: f32[2,2,32], index: 16, kind: output, shape index: {}]
  %s17 = sld [smem:[#allocation0]]
  $region97: #{fwd.3} parent=0
    _
  %s19 = ssub.s32 1, %s17
  %s20 = scalar_select 0, %s19, %s17
  loop: start=0, step=1, limit=4
  $region2: #{fwd.3} parent=0 // loop_pre_header
    _
  $region3: #{fwd.3} parent=0 // loop_header
    %s22 = sphi 0, %s26
    %p23 = scmp.ge.s32.totalorder %s22, 4
    %s32 = sphi 0, %s34
    %s35 = sphi 0, %s32
    %s36 = sphi 0, %s35
    %s52 = sphi 0, %s36
    %s58 = sphi 0, %s60
    %s61 = sphi 0, %s58
    %s62 = sphi 0, %s61
    %s78 = sphi 0, %s62
    %s84 = sphi 0, %s86
    %s87 = sphi 0, %s84
    %s88 = sphi 0, %s87
    %s104 = sphi 0, %s88
    %s108 = sphi 0, %s108
    %s110 = sphi 0, %s108
    %s111 = sphi 0, %s110
    %s125 = sphi 0, %s111
    %s129 = sphi 0, %s129
    %s131 = sphi 0, %s129
    %s132 = sphi 0, %s131
    %s146 = sphi 0, %s132
    %s150 = sphi 0, %s150
    %s152 = sphi 0, %s150
    %s153 = sphi 0, %s152
    %s167 = sphi 0, %s153
    %s171 = sphi 0, %s171
    %s173 = sphi 0, %s171
    %s174 = sphi 0, %s173
    %s188 = sphi 0, %s174
    %s192 = sphi 0, %s192
    %s194 = sphi 0, %s192
    %s195 = sphi 0, %s194
    %s209 = sphi 0, %s195
    %s213 = sphi 0, %s213
    %s215 = sphi 0, %s213
    %s216 = sphi 0, %s215
    %s230 = sphi 0, %s216
    %s234 = sphi 0, %s234
    %s236 = sphi 0, %s234
    %s237 = sphi 0, %s236
    %s251 = sphi 0, %s237
    %s255 = sphi 0, %s255
    %s257 = sphi 0, %s255
    %s258 = sphi 0, %s257
    %s272 = sphi 0, %s258
    %s276 = sphi 0, %s276
    %s278 = sphi 0, %s276
    %s279 = sphi 0, %s278
    %s293 = sphi 0, %s279
    %s297 = sphi 0, %s297
    %s299 = sphi 0, %s297
    %s300 = sphi 0, %s299
    %s314 = sphi 0, %s300
    %s318 = sphi 0, %s318
    %s320 = sphi 0, %s318
    %s321 = sphi 0, %s320
    %s335 = sphi 0, %s321
    %s339 = sphi 0, %s339
    %s341 = sphi 0, %s339
    %s342 = sphi 0, %s341
    %s356 = sphi 0, %s342
    %s360 = sphi 0, %s360
    %s362 = sphi 0, %s360
    %s363 = sphi 0, %s362
    %s377 = sphi 0, %s363
    %s383 = sphi 0, %s385
    %s386 = sphi 0, %s383
    %s387 = sphi 0, %s386
    %s403 = sphi 0, %s387
  $region4: #{fwd.3} parent=0 // loop_header_branch
    %25 = sbr.rel (%p23) target = $region8
  $region5: #{fwd.3} parent=0 // loop_body
    %s27 = ssub.s32 %s22, 1
    %s28 = ssub.s32 %s22, 2
    %s29 = sadd.s32 %s22, 1
    %s30 = ssub.s32 %s22, %s29
    %p31 = scmp.eq.s32.totalorder %s30, 0
    %s33 = sadd.s32 %s32, 1
    %s34 = scalar_select %p31, %s32, %s33
    %p37 = pneg %p31
    %p38 = scmp.eq.s32.totalorder %s22, 1
    %p39 = por %p37, %p38
    %p40 = scmp.ne.s32.totalorder %s32, %s35
    %p41 = scmp.eq.s32.totalorder %s22, 0
    %p42 = por %p40, %p41
    %p43 = scmp.ne.s32.totalorder %s32, %s35
    %p44 = scmp.eq.s32.totalorder %s27, 1
    %p45 = por %p43, %p44
    %p46 = scmp.ne.s32.totalorder %s35, %s36
    %p47 = scmp.eq.s32.totalorder %s27, 0
    %p48 = por %p46, %p47
    %p49 = scmp.ne.s32.totalorder %s35, %s36
    %p50 = scmp.eq.s32.totalorder %s28, 1
    %p51 = por %p49, %p50
    %p53 = scmp.ne.s32.totalorder %s36, %s52
    %p54 = scmp.eq.s32.totalorder %s28, 0
    %p55 = por %p53, %p54
    %s56 = ssub.s32 %s22, %s29
    %p57 = scmp.eq.s32.totalorder %s56, 0
    %s59 = sadd.s32 %s58, 1
    %s60 = scalar_select %p57, %s58, %s59
    %p63 = pneg %p57
    %p64 = scmp.eq.s32.totalorder %s22, 1
    %p65 = por %p63, %p64
    %p66 = scmp.ne.s32.totalorder %s58, %s61
    %p67 = scmp.eq.s32.totalorder %s22, 0
    %p68 = por %p66, %p67
    %p69 = scmp.ne.s32.totalorder %s58, %s61
    %p70 = scmp.eq.s32.totalorder %s27, 1
    %p71 = por %p69, %p70
    %p72 = scmp.ne.s32.totalorder %s61, %s62
    %p73 = scmp.eq.s32.totalorder %s27, 0
    %p74 = por %p72, %p73
    %p75 = scmp.ne.s32.totalorder %s61, %s62
    %p76 = scmp.eq.s32.totalorder %s28, 1
    %p77 = por %p75, %p76
    %p79 = scmp.ne.s32.totalorder %s62, %s78
    %p80 = scmp.eq.s32.totalorder %s28, 0
    %p81 = por %p79, %p80
    %s82 = ssub.s32 %s22, %s29
    %p83 = scmp.eq.s32.totalorder %s82, 0
    %s85 = sadd.s32 %s84, 1
    %s86 = scalar_select %p83, %s84, %s85
    %p89 = pneg %p83
    %p90 = scmp.eq.s32.totalorder %s22, 1
    %p91 = por %p89, %p90
    %p92 = scmp.ne.s32.totalorder %s84, %s87
    %p93 = scmp.eq.s32.totalorder %s22, 0
    %p94 = por %p92, %p93
    %p95 = scmp.ne.s32.totalorder %s84, %s87
    %p96 = scmp.eq.s32.totalorder %s27, 1
    %p97 = por %p95, %p96
    %p98 = scmp.ne.s32.totalorder %s87, %s88
    %p99 = scmp.eq.s32.totalorder %s27, 0
    %p100 = por %p98, %p99
    %p101 = scmp.ne.s32.totalorder %s87, %s88
    %p102 = scmp.eq.s32.totalorder %s28, 1
    %p103 = por %p101, %p102
    %p105 = scmp.ne.s32.totalorder %s88, %s104
    %p106 = scmp.eq.s32.totalorder %s28, 0
    %p107 = por %p105, %p106
    %s109 = sadd.s32 %s108, 1
    %p112 = scmp.eq.s32.totalorder %s22, 1
    %p113 = scmp.ne.s32.totalorder %s108, %s110
    %p114 = scmp.eq.s32.totalorder %s22, 0
    %p115 = por %p113, %p114
    %p116 = scmp.ne.s32.totalorder %s108, %s110
    %p117 = scmp.eq.s32.totalorder %s27, 1
    %p118 = por %p116, %p117
    %p119 = scmp.ne.s32.totalorder %s110, %s111
    %p120 = scmp.eq.s32.totalorder %s27, 0
    %p121 = por %p119, %p120
    %p122 = scmp.ne.s32.totalorder %s110, %s111
    %p123 = scmp.eq.s32.totalorder %s28, 1
    %p124 = por %p122, %p123
    %p126 = scmp.ne.s32.totalorder %s111, %s125
    %p127 = scmp.eq.s32.totalorder %s28, 0
    %p128 = por %p126, %p127
    %s130 = sadd.s32 %s129, 1
    %p133 = scmp.eq.s32.totalorder %s22, 1
    %p134 = scmp.ne.s32.totalorder %s129, %s131
    %p135 = scmp.eq.s32.totalorder %s22, 0
    %p136 = por %p134, %p135
    %p137 = scmp.ne.s32.totalorder %s129, %s131
    %p138 = scmp.eq.s32.totalorder %s27, 1
    %p139 = por %p137, %p138
    %p140 = scmp.ne.s32.totalorder %s131, %s132
    %p141 = scmp.eq.s32.totalorder %s27, 0
    %p142 = por %p140, %p141
    %p143 = scmp.ne.s32.totalorder %s131, %s132
    %p144 = scmp.eq.s32.totalorder %s28, 1
    %p145 = por %p143, %p144
    %p147 = scmp.ne.s32.totalorder %s132, %s146
    %p148 = scmp.eq.s32.totalorder %s28, 0
    %p149 = por %p147, %p148
    %s151 = sadd.s32 %s150, 1
    %p154 = scmp.eq.s32.totalorder %s22, 1
    %p155 = scmp.ne.s32.totalorder %s150, %s152
    %p156 = scmp.eq.s32.totalorder %s22, 0
    %p157 = por %p155, %p156
    %p158 = scmp.ne.s32.totalorder %s150, %s152
    %p159 = scmp.eq.s32.totalorder %s27, 1
    %p160 = por %p158, %p159
    %p161 = scmp.ne.s32.totalorder %s152, %s153
    %p162 = scmp.eq.s32.totalorder %s27, 0
    %p163 = por %p161, %p162
    %p164 = scmp.ne.s32.totalorder %s152, %s153
    %p165 = scmp.eq.s32.totalorder %s28, 1
    %p166 = por %p164, %p165
    %p168 = scmp.ne.s32.totalorder %s153, %s167
    %p169 = scmp.eq.s32.totalorder %s28, 0
    %p170 = por %p168, %p169
    %s172 = sadd.s32 %s171, 1
    %p175 = scmp.eq.s32.totalorder %s22, 1
    %p176 = scmp.ne.s32.totalorder %s171, %s173
    %p177 = scmp.eq.s32.totalorder %s22, 0
    %p178 = por %p176, %p177
    %p179 = scmp.ne.s32.totalorder %s171, %s173
    %p180 = scmp.eq.s32.totalorder %s27, 1
    %p181 = por %p179, %p180
    %p182 = scmp.ne.s32.totalorder %s173, %s174
    %p183 = scmp.eq.s32.totalorder %s27, 0
    %p184 = por %p182, %p183
    %p185 = scmp.ne.s32.totalorder %s173, %s174
    %p186 = scmp.eq.s32.totalorder %s28, 1
    %p187 = por %p185, %p186
    %p189 = scmp.ne.s32.totalorder %s174, %s188
    %p190 = scmp.eq.s32.totalorder %s28, 0
    %p191 = por %p189, %p190
    %s193 = sadd.s32 %s192, 1
    %p196 = scmp.eq.s32.totalorder %s22, 1
    %p197 = scmp.ne.s32.totalorder %s192, %s194
    %p198 = scmp.eq.s32.totalorder %s22, 0
    %p199 = por %p197, %p198
    %p200 = scmp.ne.s32.totalorder %s192, %s194
    %p201 = scmp.eq.s32.totalorder %s27, 1
    %p202 = por %p200, %p201
    %p203 = scmp.ne.s32.totalorder %s194, %s195
    %p204 = scmp.eq.s32.totalorder %s27, 0
    %p205 = por %p203, %p204
    %p206 = scmp.ne.s32.totalorder %s194, %s195
    %p207 = scmp.eq.s32.totalorder %s28, 1
    %p208 = por %p206, %p207
    %p210 = scmp.ne.s32.totalorder %s195, %s209
    %p211 = scmp.eq.s32.totalorder %s28, 0
    %p212 = por %p210, %p211
    %s214 = sadd.s32 %s213, 1
    %p217 = scmp.eq.s32.totalorder %s22, 1
    %p218 = scmp.ne.s32.totalorder %s213, %s215
    %p219 = scmp.eq.s32.totalorder %s22, 0
    %p220 = por %p218, %p219
    %p221 = scmp.ne.s32.totalorder %s213, %s215
    %p222 = scmp.eq.s32.totalorder %s27, 1
    %p223 = por %p221, %p222
    %p224 = scmp.ne.s32.totalorder %s215, %s216
    %p225 = scmp.eq.s32.totalorder %s27, 0
    %p226 = por %p224, %p225
    %p227 = scmp.ne.s32.totalorder %s215, %s216
    %p228 = scmp.eq.s32.totalorder %s28, 1
    %p229 = por %p227, %p228
    %p231 = scmp.ne.s32.totalorder %s216, %s230
    %p232 = scmp.eq.s32.totalorder %s28, 0
    %p233 = por %p231, %p232
    %s235 = sadd.s32 %s234, 1
    %p238 = scmp.eq.s32.totalorder %s22, 1
    %p239 = scmp.ne.s32.totalorder %s234, %s236
    %p240 = scmp.eq.s32.totalorder %s22, 0
    %p241 = por %p239, %p240
    %p242 = scmp.ne.s32.totalorder %s234, %s236
    %p243 = scmp.eq.s32.totalorder %s27, 1
    %p244 = por %p242, %p243
    %p245 = scmp.ne.s32.totalorder %s236, %s237
    %p246 = scmp.eq.s32.totalorder %s27, 0
    %p247 = por %p245, %p246
    %p248 = scmp.ne.s32.totalorder %s236, %s237
    %p249 = scmp.eq.s32.totalorder %s28, 1
    %p250 = por %p248, %p249
    %p252 = scmp.ne.s32.totalorder %s237, %s251
    %p253 = scmp.eq.s32.totalorder %s28, 0
    %p254 = por %p252, %p253
    %s256 = sadd.s32 %s255, 1
    %p259 = scmp.eq.s32.totalorder %s22, 1
    %p260 = scmp.ne.s32.totalorder %s255, %s257
    %p261 = scmp.eq.s32.totalorder %s22, 0
    %p262 = por %p260, %p261
    %p263 = scmp.ne.s32.totalorder %s255, %s257
    %p264 = scmp.eq.s32.totalorder %s27, 1
    %p265 = por %p263, %p264
    %p266 = scmp.ne.s32.totalorder %s257, %s258
    %p267 = scmp.eq.s32.totalorder %s27, 0
    %p268 = por %p266, %p267
    %p269 = scmp.ne.s32.totalorder %s257, %s258
    %p270 = scmp.eq.s32.totalorder %s28, 1
    %p271 = por %p269, %p270
    %p273 = scmp.ne.s32.totalorder %s258, %s272
    %p274 = scmp.eq.s32.totalorder %s28, 0
    %p275 = por %p273, %p274
    %s277 = sadd.s32 %s276, 1
    %p280 = scmp.eq.s32.totalorder %s22, 1
    %p281 = scmp.ne.s32.totalorder %s276, %s278
    %p282 = scmp.eq.s32.totalorder %s22, 0
    %p283 = por %p281, %p282
    %p284 = scmp.ne.s32.totalorder %s276, %s278
    %p285 = scmp.eq.s32.totalorder %s27, 1
    %p286 = por %p284, %p285
    %p287 = scmp.ne.s32.totalorder %s278, %s279
    %p288 = scmp.eq.s32.totalorder %s27, 0
    %p289 = por %p287, %p288
    %p290 = scmp.ne.s32.totalorder %s278, %s279
    %p291 = scmp.eq.s32.totalorder %s28, 1
    %p292 = por %p290, %p291
    %p294 = scmp.ne.s32.totalorder %s279, %s293
    %p295 = scmp.eq.s32.totalorder %s28, 0
    %p296 = por %p294, %p295
    %s298 = sadd.s32 %s297, 1
    %p301 = scmp.eq.s32.totalorder %s22, 1
    %p302 = scmp.ne.s32.totalorder %s297, %s299
    %p303 = scmp.eq.s32.totalorder %s22, 0
    %p304 = por %p302, %p303
    %p305 = scmp.ne.s32.totalorder %s297, %s299
    %p306 = scmp.eq.s32.totalorder %s27, 1
    %p307 = por %p305, %p306
    %p308 = scmp.ne.s32.totalorder %s299, %s300
    %p309 = scmp.eq.s32.totalorder %s27, 0
    %p310 = por %p308, %p309
    %p311 = scmp.ne.s32.totalorder %s299, %s300
    %p312 = scmp.eq.s32.totalorder %s28, 1
    %p313 = por %p311, %p312
    %p315 = scmp.ne.s32.totalorder %s300, %s314
    %p316 = scmp.eq.s32.totalorder %s28, 0
    %p317 = por %p315, %p316
    %s319 = sadd.s32 %s318, 1
    %p322 = scmp.eq.s32.totalorder %s22, 1
    %p323 = scmp.ne.s32.totalorder %s318, %s320
    %p324 = scmp.eq.s32.totalorder %s22, 0
    %p325 = por %p323, %p324
    %p326 = scmp.ne.s32.totalorder %s318, %s320
    %p327 = scmp.eq.s32.totalorder %s27, 1
    %p328 = por %p326, %p327
    %p329 = scmp.ne.s32.totalorder %s320, %s321
    %p330 = scmp.eq.s32.totalorder %s27, 0
    %p331 = por %p329, %p330
    %p332 = scmp.ne.s32.totalorder %s320, %s321
    %p333 = scmp.eq.s32.totalorder %s28, 1
    %p334 = por %p332, %p333
    %p336 = scmp.ne.s32.totalorder %s321, %s335
    %p337 = scmp.eq.s32.totalorder %s28, 0
    %p338 = por %p336, %p337
    %s340 = sadd.s32 %s339, 1
    %p343 = scmp.eq.s32.totalorder %s22, 1
    %p344 = scmp.ne.s32.totalorder %s339, %s341
    %p345 = scmp.eq.s32.totalorder %s22, 0
    %p346 = por %p344, %p345
    %p347 = scmp.ne.s32.totalorder %s339, %s341
    %p348 = scmp.eq.s32.totalorder %s27, 1
    %p349 = por %p347, %p348
    %p350 = scmp.ne.s32.totalorder %s341, %s342
    %p351 = scmp.eq.s32.totalorder %s27, 0
    %p352 = por %p350, %p351
    %p353 = scmp.ne.s32.totalorder %s341, %s342
    %p354 = scmp.eq.s32.totalorder %s28, 1
    %p355 = por %p353, %p354
    %p357 = scmp.ne.s32.totalorder %s342, %s356
    %p358 = scmp.eq.s32.totalorder %s28, 0
    %p359 = por %p357, %p358
    %s361 = sadd.s32 %s360, 1
    %p364 = scmp.eq.s32.totalorder %s22, 1
    %p365 = scmp.ne.s32.totalorder %s360, %s362
    %p366 = scmp.eq.s32.totalorder %s22, 0
    %p367 = por %p365, %p366
    %p368 = scmp.ne.s32.totalorder %s360, %s362
    %p369 = scmp.eq.s32.totalorder %s27, 1
    %p370 = por %p368, %p369
    %p371 = scmp.ne.s32.totalorder %s362, %s363
    %p372 = scmp.eq.s32.totalorder %s27, 0
    %p373 = por %p371, %p372
    %p374 = scmp.ne.s32.totalorder %s362, %s363
    %p375 = scmp.eq.s32.totalorder %s28, 1
    %p376 = por %p374, %p375
    %p378 = scmp.ne.s32.totalorder %s363, %s377
    %p379 = scmp.eq.s32.totalorder %s28, 0
    %p380 = por %p378, %p379
    %s381 = ssub.s32 %s22, %s29
    %p382 = scmp.eq.s32.totalorder %s381, 0
    %s384 = sadd.s32 %s383, 1
    %s385 = scalar_select %p382, %s383, %s384
    %p388 = pneg %p382
    %p389 = scmp.eq.s32.totalorder %s22, 1
    %p390 = por %p388, %p389
    %p391 = scmp.ne.s32.totalorder %s383, %s386
    %p392 = scmp.eq.s32.totalorder %s22, 0
    %p393 = por %p391, %p392
    %p394 = scmp.ne.s32.totalorder %s383, %s386
    %p395 = scmp.eq.s32.totalorder %s27, 1
    %p396 = por %p394, %p395
    %p397 = scmp.ne.s32.totalorder %s386, %s387
    %p398 = scmp.eq.s32.totalorder %s27, 0
    %p399 = por %p397, %p398
    %p400 = scmp.ne.s32.totalorder %s386, %s387
    %p401 = scmp.eq.s32.totalorder %s28, 1
    %p402 = por %p400, %p401
    %p404 = scmp.ne.s32.totalorder %s387, %s403
    %p405 = scmp.eq.s32.totalorder %s28, 0
    %p406 = por %p404, %p405
    %p407 = scmp.le.s32.totalorder 1, %s22
    %p408 = scmp.lt.s32.totalorder %s22, 3
    %p409 = pnand %p407, %p408
    %p410 = pneg %p409
    // Predicated region
    $region9: #{fwd.3} parent=5 // pred_check
      _
    $region10: #{fwd.3} parent=5 // pred_check_branch
      %412 = sbr.rel (%p409) target = $region12
    $region11: #{fwd.3} parent=5 // pred_region
      %s413 = ssub.s32 %s22, 1
      // Predicated region
      $region13: #{fwd.3} parent=11 // pred_check
        %p414 = pneg %p121
      $region14: #{fwd.3} parent=11 // pred_check_branch
        %416 = sbr.rel (%p414) target = $region16
      $region15: #{fwd.3} parent=11 // pred_region
        _
      $region16: #{fwd.3} parent=11 // pred_fallthru
        _
      // Predicated region
      $region17: #{fwd.3} parent=11 // pred_check
        %p417 = pneg %p142
      $region18: #{fwd.3} parent=11 // pred_check_branch
        %419 = sbr.rel (%p417) target = $region20
      $region19: #{fwd.3} parent=11 // pred_region
        _
      $region20: #{fwd.3} parent=11 // pred_fallthru
        _
      // Predicated region
      $region21: #{fwd.3} parent=11 // pred_check
        %p420 = pneg %p163
      $region22: #{fwd.3} parent=11 // pred_check_branch
        %422 = sbr.rel (%p420) target = $region24
      $region23: #{fwd.3} parent=11 // pred_region
        _
      $region24: #{fwd.3} parent=11 // pred_fallthru
        _
      // Predicated region
      $region25: #{fwd.3} parent=11 // pred_check
        %p423 = pneg %p184
      $region26: #{fwd.3} parent=11 // pred_check_branch
        %425 = sbr.rel (%p423) target = $region28
      $region27: #{fwd.3} parent=11 // pred_region
        _
      $region28: #{fwd.3} parent=11 // pred_fallthru
        _
      // Predicated region
      $region29: #{fwd.3} parent=11 // pred_check
        %p426 = pneg %p205
      $region30: #{fwd.3} parent=11 // pred_check_branch
        %428 = sbr.rel (%p426) target = $region32
      $region31: #{fwd.3} parent=11 // pred_region
        _
      $region32: #{fwd.3} parent=11 // pred_fallthru
        _
      // Predicated region
      $region33: #{fwd.3} parent=11 // pred_check
        %p429 = pneg %p226
      $region34: #{fwd.3} parent=11 // pred_check_branch
        %431 = sbr.rel (%p429) target = $region36
      $region35: #{fwd.3} parent=11 // pred_region
        _
      $region36: #{fwd.3} parent=11 // pred_fallthru
        _
      // Predicated region
      $region37: #{fwd.3} parent=11 // pred_check
        %p432 = pneg %p247
      $region38: #{fwd.3} parent=11 // pred_check_branch
        %434 = sbr.rel (%p432) target = $region40
      $region39: #{fwd.3} parent=11 // pred_region
        _
      $region40: #{fwd.3} parent=11 // pred_fallthru
        _
      // Predicated region
      $region41: #{fwd.3} parent=11 // pred_check
        %p435 = pneg %p268
      $region42: #{fwd.3} parent=11 // pred_check_branch
        %437 = sbr.rel (%p435) target = $region44
      $region43: #{fwd.3} parent=11 // pred_region
        _
      $region44: #{fwd.3} parent=11 // pred_fallthru
        _
      // Predicated region
      $region45: #{fwd.3} parent=11 // pred_check
        %p438 = pneg %p289
      $region46: #{fwd.3} parent=11 // pred_check_branch
        %440 = sbr.rel (%p438) target = $region48
      $region47: #{fwd.3} parent=11 // pred_region
        _
      $region48: #{fwd.3} parent=11 // pred_fallthru
        _
      // Predicated region
      $region49: #{fwd.3} parent=11 // pred_check
        %p441 = pneg %p310
      $region50: #{fwd.3} parent=11 // pred_check_branch
        %443 = sbr.rel (%p441) target = $region52
      $region51: #{fwd.3} parent=11 // pred_region
        _
      $region52: #{fwd.3} parent=11 // pred_fallthru
        _
      // Predicated region
      $region53: #{fwd.3} parent=11 // pred_check
        %p444 = pneg %p331
      $region54: #{fwd.3} parent=11 // pred_check_branch
        %446 = sbr.rel (%p444) target = $region56
      $region55: #{fwd.3} parent=11 // pred_region
        _
      $region56: #{fwd.3} parent=11 // pred_fallthru
        _
      // Predicated region
      $region57: #{fwd.3} parent=11 // pred_check
        %p447 = pneg %p352
      $region58: #{fwd.3} parent=11 // pred_check_branch
        %449 = sbr.rel (%p447) target = $region60
      $region59: #{fwd.3} parent=11 // pred_region
        _
      $region60: #{fwd.3} parent=11 // pred_fallthru
        _
      // Predicated region
      $region61: #{fwd.3} parent=11 // pred_check
        %p450 = pneg %p373
      $region62: #{fwd.3} parent=11 // pred_check_branch
        %452 = sbr.rel (%p450) target = $region64
      $region63: #{fwd.3} parent=11 // pred_region
        _
      $region64: #{fwd.3} parent=11 // pred_fallthru
        _
    $region12: #{fwd.3} parent=5 // pred_fallthru
      _
    %p453 = scmp.lt.s32.totalorder %s22, 2
    // Predicated region
    $region65: #{fwd.3} parent=5 // pred_check
      %p454 = pneg %p453
    $region66: #{fwd.3} parent=5 // pred_check_branch
      %456 = sbr.rel (%p454) target = $region68
    $region67: #{fwd.3} parent=5 // pred_region
      // Predicated region
      $region69: #{fwd.3} parent=67 // pred_check
        %p457 = pneg %p42
      $region70: #{fwd.3} parent=67 // pred_check_branch
        %459 = sbr.rel (%p457) target = $region72
      $region71: #{fwd.3} parent=67 // pred_region
        %p460 = scmp.lt.s32.totalorder %s22, 1
        %s461 = scalar_select %p460, %s22, 1
        %s462 = smul.addr %s461, 8
        %s463 = scalar_lea.vmem %s0, %s462
      $region72: #{fwd.3} parent=67 // pred_fallthru
        _
      // Predicated region
      $region73: #{fwd.3} parent=67 // pred_check
        %p464 = pneg %p68
      $region74: #{fwd.3} parent=67 // pred_check_branch
        %466 = sbr.rel (%p464) target = $region76
      $region75: #{fwd.3} parent=67 // pred_region
        %p467 = scmp.lt.s32.totalorder %s22, 1
        %s468 = scalar_select %p467, %s22, 1
        %s469 = smul.addr %s468, 8
        %s470 = scalar_lea.vmem %s1, %s469
      $region76: #{fwd.3} parent=67 // pred_fallthru
        _
      // Predicated region
      $region77: #{fwd.3} parent=67 // pred_check
        %p471 = pneg %p94
      $region78: #{fwd.3} parent=67 // pred_check_branch
        %473 = sbr.rel (%p471) target = $region80
      $region79: #{fwd.3} parent=67 // pred_region
        %p474 = scmp.lt.s32.totalorder %s22, 1
        %s475 = scalar_select %p474, %s22, 1
        %s476 = scalar_lea.vmem %s2, %s475
      $region80: #{fwd.3} parent=67 // pred_fallthru
        _
    $region68: #{fwd.3} parent=5 // pred_fallthru
      _
    %p477 = scmp.le.s32.totalorder 1, %s22
    %p478 = scmp.lt.s32.totalorder %s22, 3
    %p479 = pnand %p477, %p478
    %p480 = pneg %p479
    // Predicated region
    $region81: #{fwd.3} parent=5 // pred_check
      _
    $region82: #{fwd.3} parent=5 // pred_check_branch
      %482 = sbr.rel (%p479) target = $region84
    $region83: #{fwd.3} parent=5 // pred_region
      %s483 = ssub.s32 %s22, 1
      %p484 = scmp.lt.s32.totalorder %s27, 1
      %s485 = scalar_select %p484, %s27, 1
      %s486 = smul.addr %s485, 8
      %s487 = scalar_lea.vmem %s0, %s486
      %p488 = pneg %p48
      %p489 = pneg %p45
      %p490 = scmp.lt.s32.totalorder %s27, 1
      %s491 = scalar_select %p490, %s27, 1
      %s492 = smul.addr %s491, 8
      %s493 = scalar_lea.vmem %s1, %s492
      %p494 = pneg %p74
      %p495 = pneg %p71
      %p496 = scmp.lt.s32.totalorder %s27, 1
      %s497 = scalar_select %p496, %s27, 1
      %s498 = scalar_lea.vmem %s2, %s497
      %p499 = pneg %p100
      %p500 = pneg %p97
      %p501 = pneg %p121
      %p502 = pneg %p118
      %p503 = pneg %p142
      %p504 = pneg %p139
      %p505 = pneg %p163
      %p506 = pneg %p160
      %p507 = pneg %p184
      %p508 = pneg %p181
      %p509 = pneg %p205
      %p510 = pneg %p202
      %p511 = pneg %p226
      %p512 = pneg %p223
      %p513 = pneg %p247
      %p514 = pneg %p244
      %p515 = pneg %p268
      %p516 = pneg %p265
      %p517 = pneg %p289
      %p518 = pneg %p286
      %p519 = pneg %p310
      %p520 = pneg %p307
      %p521 = pneg %p331
      %p522 = pneg %p328
      %p523 = pneg %p352
      %p524 = pneg %p349
      %p525 = pneg %p373
      %p526 = pneg %p370
      %p527 = pneg %p399
      %p528 = pneg %p396
      %p529 = scmp.lt.s32.totalorder %s27, 1
      %s530 = scalar_select %p529, %s27, 1
      %s531 = smul.addr %s530, 2
      %s532 = scalar_lea.vmem %s16, %s531
      %p533 = scmp.lt.s32.totalorder %s27, 1
      %s534 = scalar_select %p533, %s27, 1
      %s535 = smul.addr %s534, 8
      %s536 = scalar_lea.vmem %s0, %s535
      %p537 = scmp.lt.s32.totalorder %s27, 1
      %s538 = scalar_select %p537, %s27, 1
      %s539 = smul.addr %s538, 8
      %s540 = scalar_lea.vmem %s1, %s539
      %p541 = scmp.lt.s32.totalorder %s27, 1
      %s542 = scalar_select %p541, %s27, 1
      %s543 = scalar_lea.vmem %s2, %s542
      %p544 = scmp.lt.s32.totalorder %s27, 1
      %s545 = scalar_select %p544, %s27, 1
      %s546 = smul.addr %s545, 2
      %s547 = scalar_lea.vmem %s16, %s546
      %v549 = vlaneseq
      %v550 = vand.u32 %v549, 127
      %vm551 = vcmp.ge.s32.totalorder %v550, 0
      %vm552 = vcmp.lt.s32.totalorder %v550, 8
      %vm553 = vmand %vm551, %vm552
      %v554 = vsel %vm553, 1, 0
      %v555 = vcvt.s32.f32 %v554
      %vm556 = vcmp.ge.s32.totalorder %v550, 8
      %vm557 = vcmp.lt.s32.totalorder %v550, 16
      %vm558 = vmand %vm556, %vm557
      %v559 = vsel %vm558, 1, 0
      %v560 = vcvt.s32.f32 %v559
      %vm561 = vcmp.ge.s32.totalorder %v550, 16
      %vm562 = vcmp.lt.s32.totalorder %v550, 24
      %vm563 = vmand %vm561, %vm562
      %v564 = vsel %vm563, 1, 0
      %v565 = vcvt.s32.f32 %v564
      %vm566 = vcmp.ge.s32.totalorder %v550, 24
      %vm567 = vcmp.lt.s32.totalorder %v550, 32
      %vm568 = vmand %vm566, %vm567
      %v569 = vsel %vm568, 1, 0
      %v570 = vcvt.s32.f32 %v569
      %v571 = vld [vmem:[%s536] sm:$0x3f]
      %v572 = vld [vmem:[%s540] sm:$0x3f]
      %v573 = vld [vmem:[%s543] sm:$0x1]
      %v574 = vld [vmem:[%s6] sm:$0xf]
      %v575 = vld [vmem:[%s6 + $0x4] sm:$0xf]
      %v576 = vld [vmem:[%s6 + $0x8] sm:$0xf]
      %v577 = vld [vmem:[%s6 + $0xc] sm:$0xf]
      %v578 = vpack.c.bf16 %v571, %v571
      %v579 = vld [vmem:[%s7] sm:$0x1]
      %v581 = vlaneseq
      %v582 = vshrl.u32 %v581, 7
      %v583 = vsub.s32 0, %v582
      %v584 = vrot.slane %v579, %v583
      %v590 = vunpack.c.l.b16 %v574
      %v591 = vunpack.c.l.b16 %v575
      %v592 = vunpack.c.l.b16 %v576
      %v593 = vunpack.c.l.b16 %v577
      %v594 = vpack.c.b16 %v591, %v590
      %v595 = vpack.c.b16 %v593, %v592
      %vm598 = vcmask 261120
      %v600 = vsel %vm598, %v578, 0
      %602 = vmatprep.subr.bf16.mxu0 0
      %603 = vmatpush1.bf16.msra.mxu0 %v594
      %604 = vmatprep.subr.bf16.mxu0 0
      %605 = vmatpush1.bf16.msra.mxu0 %v595
      %606 = vmatprep.subr.bf16.mxu0 0
      %607 = vmatpush1.bf16.msra.mxu0 0
      %608 = vmatprep.subr.bf16.mxu0 0
      %609 = vmatpush1.bf16.msra.mxu0 0
      %610 = vmatprep.subr.bf16.mxu0 0
      %611 = vmatpush1.bf16.msra.mxu0 0
      %612 = vmatprep.subr.bf16.mxu0 0
      %613 = vmatpush1.bf16.msra.mxu0 0
      %614 = vmatprep.subr.bf16.mxu0 0
      %615 = vmatpush1.bf16.msra.mxu0 0
      %616 = vmatprep.subr.bf16.mxu0 0
      %617 = vmatpush1.bf16.msra.mxu0 0
      %618 = vmatprep.subr.bf16.mxu0 0
      %619 = vmatpush1.bf16.msra.mxu0 0
      %620 = vmatprep.subr.bf16.mxu0 0
      %621 = vmatpush1.bf16.msra.mxu0 0
      %622 = vmatprep.subr.bf16.mxu0 0
      %623 = vmatpush1.bf16.msra.mxu0 0
      %624 = vmatprep.subr.bf16.mxu0 0
      %625 = vmatpush1.bf16.msra.mxu0 0
      %626 = vmatprep.subr.bf16.mxu0 0
      %627 = vmatpush1.bf16.msra.mxu0 0
      %628 = vmatprep.subr.bf16.mxu0 0
      %629 = vmatpush1.bf16.msra.mxu0 0
      %630 = vmatprep.subr.bf16.mxu0 0
      %631 = vmatpush1.bf16.msra.mxu0 0
      %632 = vmatprep.subr.bf16.mxu0 0
      %633 = vmatpush1.bf16.msra.mxu0 0
      %634 = vmatprep.mubr.bf16.mxu0 0
      %635 = vmatmul.mubr.bf16.gmra.mrb[0].mxu0 %v600
      %v636 = vpop.f32.mrb[0].mxu0
      %v637 = vadd.f32 %v584, %v636
      %v638 = vpop.f32.mrb[0].mxu0
      %v639 = vpop.f32.mrb[0].mxu0
      %v640 = vpop.f32.mrb[0].mxu0
      %641 = vdwg.mxu0
      %v642 = vld [vmem:[%s8] sm:$0xf]
      %v643 = vld [vmem:[%s8 + $0x4] sm:$0xf]
      %v644 = vld [vmem:[%s8 + $0x8] sm:$0xf]
      %v645 = vld [vmem:[%s8 + $0xc] sm:$0xf]
      %v646 = vld [vmem:[%s9] sm:$0x1]
      %v648 = vlaneseq
      %v649 = vshrl.u32 %v648, 7
      %v650 = vsub.s32 0, %v649
      %v651 = vrot.slane %v646, %v650
      %v657 = vunpack.c.l.b16 %v642
      %v658 = vunpack.c.l.b16 %v643
      %v659 = vunpack.c.l.b16 %v644
      %v660 = vunpack.c.l.b16 %v645
      %v661 = vpack.c.b16 %v658, %v657
      %v662 = vpack.c.b16 %v660, %v659
      %665 = vmatprep.subr.bf16.mxu0 0
      %666 = vmatpush1.bf16.msra.mxu0 %v661
      %667 = vmatprep.subr.bf16.mxu0 0
      %668 = vmatpush1.bf16.msra.mxu0 %v662
      %669 = vmatprep.subr.bf16.mxu0 0
      %670 = vmatpush1.bf16.msra.mxu0 0
      %671 = vmatprep.subr.bf16.mxu0 0
      %672 = vmatpush1.bf16.msra.mxu0 0
      %673 = vmatprep.subr.bf16.mxu0 0
      %674 = vmatpush1.bf16.msra.mxu0 0
      %675 = vmatprep.subr.bf16.mxu0 0
      %676 = vmatpush1.bf16.msra.mxu0 0
      %677 = vmatprep.subr.bf16.mxu0 0
      %678 = vmatpush1.bf16.msra.mxu0 0
      %679 = vmatprep.subr.bf16.mxu0 0
      %680 = vmatpush1.bf16.msra.mxu0 0
      %681 = vmatprep.subr.bf16.mxu0 0
      %682 = vmatpush1.bf16.msra.mxu0 0
      %683 = vmatprep.subr.bf16.mxu0 0
      %684 = vmatpush1.bf16.msra.mxu0 0
      %685 = vmatprep.subr.bf16.mxu0 0
      %686 = vmatpush1.bf16.msra.mxu0 0
      %687 = vmatprep.subr.bf16.mxu0 0
      %688 = vmatpush1.bf16.msra.mxu0 0
      %689 = vmatprep.subr.bf16.mxu0 0
      %690 = vmatpush1.bf16.msra.mxu0 0
      %691 = vmatprep.subr.bf16.mxu0 0
      %692 = vmatpush1.bf16.msra.mxu0 0
      %693 = vmatprep.subr.bf16.mxu0 0
      %694 = vmatpush1.bf16.msra.mxu0 0
      %695 = vmatprep.subr.bf16.mxu0 0
      %696 = vmatpush1.bf16.msra.mxu0 0
      %697 = vmatprep.mubr.bf16.mxu0 0
      %698 = vmatmul.mubr.bf16.gmra.mrb[0].mxu0 %v600
      %v699 = vpop.f32.mrb[0].mxu0
      %v700 = vadd.f32 %v651, %v699
      %v701 = vpop.f32.mrb[0].mxu0
      %v702 = vpop.f32.mrb[0].mxu0
      %v703 = vpop.f32.mrb[0].mxu0
      %704 = vdwg.mxu0
      %v705 = vld [vmem:[%s10] sm:$0xf]
      %v706 = vld [vmem:[%s10 + $0x4] sm:$0xf]
      %v707 = vld [vmem:[%s10 + $0x8] sm:$0xf]
      %v708 = vld [vmem:[%s10 + $0xc] sm:$0xf]
      %v709 = vld [vmem:[%s11] sm:$0x1]
      %v711 = vlaneseq
      %v712 = vshrl.u32 %v711, 7
      %v713 = vsub.s32 0, %v712
      %v714 = vrot.slane %v709, %v713
      %v720 = vunpack.c.l.b16 %v705
      %v721 = vunpack.c.l.b16 %v706
      %v722 = vunpack.c.l.b16 %v707
      %v723 = vunpack.c.l.b16 %v708
      %v724 = vpack.c.b16 %v721, %v720
      %v725 = vpack.c.b16 %v723, %v722
      %728 = vmatprep.subr.bf16.mxu0 0
      %729 = vmatpush1.bf16.msra.mxu0 %v724
      %730 = vmatprep.subr.bf16.mxu0 0
      %731 = vmatpush1.bf16.msra.mxu0 %v725
      %732 = vmatprep.subr.bf16.mxu0 0
      %733 = vmatpush1.bf16.msra.mxu0 0
      %734 = vmatprep.subr.bf16.mxu0 0
      %735 = vmatpush1.bf16.msra.mxu0 0
      %736 = vmatprep.subr.bf16.mxu0 0
      %737 = vmatpush1.bf16.msra.mxu0 0
      %738 = vmatprep.subr.bf16.mxu0 0
      %739 = vmatpush1.bf16.msra.mxu0 0
      %740 = vmatprep.subr.bf16.mxu0 0
      %741 = vmatpush1.bf16.msra.mxu0 0
      %742 = vmatprep.subr.bf16.mxu0 0
      %743 = vmatpush1.bf16.msra.mxu0 0
      %744 = vmatprep.subr.bf16.mxu0 0
      %745 = vmatpush1.bf16.msra.mxu0 0
      %746 = vmatprep.subr.bf16.mxu0 0
      %747 = vmatpush1.bf16.msra.mxu0 0
      %748 = vmatprep.subr.bf16.mxu0 0
      %749 = vmatpush1.bf16.msra.mxu0 0
      %750 = vmatprep.subr.bf16.mxu0 0
      %751 = vmatpush1.bf16.msra.mxu0 0
      %752 = vmatprep.subr.bf16.mxu0 0
      %753 = vmatpush1.bf16.msra.mxu0 0
      %754 = vmatprep.subr.bf16.mxu0 0
      %755 = vmatpush1.bf16.msra.mxu0 0
      %756 = vmatprep.subr.bf16.mxu0 0
      %757 = vmatpush1.bf16.msra.mxu0 0
      %758 = vmatprep.subr.bf16.mxu0 0
      %759 = vmatpush1.bf16.msra.mxu0 0
      %760 = vmatprep.mubr.bf16.mxu0 0
      %761 = vmatmul.mubr.bf16.gmra.mrb[0].mxu0 %v600
      %v762 = vpop.f32.mrb[0].mxu0
      %v763 = vadd.f32 %v714, %v762
      %v764 = vpop.f32.mrb[0].mxu0
      %v765 = vpop.f32.mrb[0].mxu0
      %v766 = vpop.f32.mrb[0].mxu0
      %767 = vdwg.mxu0
      %v768 = vpack.c.bf16 %v700, %v700
      %v769 = vmul.f32 %v637, %v555
      %v770 = vpack.c.bf16 %v769, %v769
      %v772 = vsel %vm598, %v770, 0
      %v775 = vsel %vm598, %v768, 0
      %777 = vmatprep.subr.bf16.mxu0 0
      %778 = vmatpush1.bf16.xpose.msra.mxu0 %v775
      %779 = vmatprep.subr.bf16.mxu0 0
      %780 = vmatpush1.bf16.xpose.msra.mxu0 0
      %781 = vmatprep.subr.bf16.mxu0 0
      %782 = vmatpush1.bf16.xpose.msra.mxu0 0
      %783 = vmatprep.subr.bf16.mxu0 0
      %784 = vmatpush1.bf16.xpose.msra.mxu0 0
      %785 = vmatprep.subr.bf16.mxu0 0
      %786 = vmatpush1.bf16.xpose.msra.mxu0 0
      %787 = vmatprep.subr.bf16.mxu0 0
      %788 = vmatpush1.bf16.xpose.msra.mxu0 0
      %789 = vmatprep.subr.bf16.mxu0 0
      %790 = vmatpush1.bf16.xpose.msra.mxu0 0
      %791 = vmatprep.subr.bf16.mxu0 0
      %792 = vmatpush1.bf16.xpose.msra.mxu0 0
      %793 = vmatprep.subr.bf16.mxu0 0
      %794 = vmatpush1.bf16.xpose.msra.mxu0 0
      %795 = vmatprep.subr.bf16.mxu0 0
      %796 = vmatpush1.bf16.xpose.msra.mxu0 0
      %797 = vmatprep.subr.bf16.mxu0 0
      %798 = vmatpush1.bf16.xpose.msra.mxu0 0
      %799 = vmatprep.subr.bf16.mxu0 0
      %800 = vmatpush1.bf16.xpose.msra.mxu0 0
      %801 = vmatprep.subr.bf16.mxu0 0
      %802 = vmatpush1.bf16.xpose.msra.mxu0 0
      %803 = vmatprep.subr.bf16.mxu0 0
      %804 = vmatpush1.bf16.xpose.msra.mxu0 0
      %805 = vmatprep.subr.bf16.mxu0 0
      %806 = vmatpush1.bf16.xpose.msra.mxu0 0
      %807 = vmatprep.subr.bf16.mxu0 0
      %808 = vmatpush1.bf16.xpose.msra.mxu0 0
      %809 = vmatprep.mubr.bf16.mxu0 0
      %810 = vmatmul.mubr.bf16.gmra.mrb[0].mxu0 %v772
      %v811 = vpop.f32.mrb[0].mxu0
      %v812 = vadd.f32 0.0, %v811
      %v813 = vpop.f32.mrb[0].mxu0
      %v814 = vpop.f32.mrb[0].mxu0
      %v815 = vpop.f32.mrb[0].mxu0
      %816 = vdwg.mxu0
      %v817 = vmul.f32 %v812, 0.35355338
      %vm818 = vcmp.gt.f32.partialorder %v573, 0.0
      %v819 = vsel %vm818, 1, 0
      %v820 = vlaneseq
      %v821 = vshrl.u32 %v820, 7
      %v822 = vsub.s32 0, %v821
      %v823 = vrot.slane %v819, %v822
      %vm824 = vcmp.eq.s32.totalorder %v823, 1
      %v825 = vsel %vm824, %v817, -1e+30
      %vm826 = vcmask 46080
      %v827 = vsel %vm826, %v825, -inf
      %828 = vmax.xlane.f32.xlu0 %v827
      %v829 = vpop.xlane.xlu0 %828
      %v830 = vsub.f32 %v825, %v829
      %v831 = vmul.f32 %v830, 1.442695
      %v832 = vpow.pop %v831
      %v833 = vsel %vm826, %v832, 0.0
      %834 = vadd.xlane.f32.xlu0 %v833
      %v835 = vpop.xlane.xlu0 %834
      %v836 = vrcp.pop %v835
      %v837 = vmul.f32 %v832, %v836
      %v838 = vpack.c.bf16 %v837, %v837
      %v839 = vmul.f32 %v763, %v555
      %v840 = vpack.c.bf16 %v839, %v839
      %v841 = vmul.f32 %v637, %v560
      %v842 = vpack.c.bf16 %v841, %v841
      %v844 = vsel %vm598, %v842, 0
      %846 = vmatprep.subr.bf16.mxu0 0
      %847 = vmatpush1.bf16.xpose.msra.mxu0 %v775
      %848 = vmatprep.subr.bf16.mxu0 0
      %849 = vmatpush1.bf16.xpose.msra.mxu0 0
      %850 = vmatprep.subr.bf16.mxu0 0
      %851 = vmatpush1.bf16.xpose.msra.mxu0 0
      %852 = vmatprep.subr.bf16.mxu0 0
      %853 = vmatpush1.bf16.xpose.msra.mxu0 0
      %854 = vmatprep.subr.bf16.mxu0 0
      %855 = vmatpush1.bf16.xpose.msra.mxu0 0
      %856 = vmatprep.subr.bf16.mxu0 0
      %857 = vmatpush1.bf16.xpose.msra.mxu0 0
      %858 = vmatprep.subr.bf16.mxu0 0
      %859 = vmatpush1.bf16.xpose.msra.mxu0 0
      %860 = vmatprep.subr.bf16.mxu0 0
      %861 = vmatpush1.bf16.xpose.msra.mxu0 0
      %862 = vmatprep.subr.bf16.mxu0 0
      %863 = vmatpush1.bf16.xpose.msra.mxu0 0
      %864 = vmatprep.subr.bf16.mxu0 0
      %865 = vmatpush1.bf16.xpose.msra.mxu0 0
      %866 = vmatprep.subr.bf16.mxu0 0
      %867 = vmatpush1.bf16.xpose.msra.mxu0 0
      %868 = vmatprep.subr.bf16.mxu0 0
      %869 = vmatpush1.bf16.xpose.msra.mxu0 0
      %870 = vmatprep.subr.bf16.mxu0 0
      %871 = vmatpush1.bf16.xpose.msra.mxu0 0
      %872 = vmatprep.subr.bf16.mxu0 0
      %873 = vmatpush1.bf16.xpose.msra.mxu0 0
      %874 = vmatprep.subr.bf16.mxu0 0
      %875 = vmatpush1.bf16.xpose.msra.mxu0 0
      %876 = vmatprep.subr.bf16.mxu0 0
      %877 = vmatpush1.bf16.xpose.msra.mxu0 0
      %878 = vmatprep.mubr.bf16.mxu0 0
      %879 = vmatmul.mubr.bf16.gmra.mrb[0].mxu0 %v844
      %v880 = vpop.f32.mrb[0].mxu0
      %v881 = vadd.f32 0.0, %v880
      %v882 = vpop.f32.mrb[0].mxu0
      %v883 = vpop.f32.mrb[0].mxu0
      %v884 = vpop.f32.mrb[0].mxu0
      %885 = vdwg.mxu0
      %v886 = vmul.f32 %v881, 0.35355338
      %v887 = vsel %vm824, %v886, -1e+30
      %v888 = vsel %vm826, %v887, -inf
      %889 = vmax.xlane.f32.xlu0 %v888
      %v890 = vpop.xlane.xlu0 %889
      %v891 = vsub.f32 %v887, %v890
      %v892 = vmul.f32 %v891, 1.442695
      %v893 = vpow.pop %v892
      %v894 = vsel %vm826, %v893, 0.0
      %895 = vadd.xlane.f32.xlu0 %v894
      %v896 = vpop.xlane.xlu0 %895
      %v897 = vrcp.pop %v896
      %v898 = vmul.f32 %v893, %v897
      %v899 = vpack.c.bf16 %v898, %v898
      %v900 = vmul.f32 %v763, %v560
      %v901 = vpack.c.bf16 %v900, %v900
      %vm902 = vcmask 48128
      %v904 = vsel %vm902, %v899, 0
      %vm906 = vcmask 1042432
      %v908 = vsel %vm906, %v901, 0
      %910 = vmatprep.subr.bf16.mxu0 0
      %911 = vmatpush1.bf16.msra.mxu0 %v908
      %912 = vmatprep.subr.bf16.mxu0 0
      %913 = vmatpush1.bf16.msra.mxu0 0
      %914 = vmatprep.subr.bf16.mxu0 0
      %915 = vmatpush1.bf16.msra.mxu0 0
      %916 = vmatprep.subr.bf16.mxu0 0
      %917 = vmatpush1.bf16.msra.mxu0 0
      %918 = vmatprep.subr.bf16.mxu0 0
      %919 = vmatpush1.bf16.msra.mxu0 0
      %920 = vmatprep.subr.bf16.mxu0 0
      %921 = vmatpush1.bf16.msra.mxu0 0
      %922 = vmatprep.subr.bf16.mxu0 0
      %923 = vmatpush1.bf16.msra.mxu0 0
      %924 = vmatprep.subr.bf16.mxu0 0
      %925 = vmatpush1.bf16.msra.mxu0 0
      %926 = vmatprep.subr.bf16.mxu0 0
      %927 = vmatpush1.bf16.msra.mxu0 0
      %928 = vmatprep.subr.bf16.mxu0 0
      %929 = vmatpush1.bf16.msra.mxu0 0
      %930 = vmatprep.subr.bf16.mxu0 0
      %931 = vmatpush1.bf16.msra.mxu0 0
      %932 = vmatprep.subr.bf16.mxu0 0
      %933 = vmatpush1.bf16.msra.mxu0 0
      %934 = vmatprep.subr.bf16.mxu0 0
      %935 = vmatpush1.bf16.msra.mxu0 0
      %936 = vmatprep.subr.bf16.mxu0 0
      %937 = vmatpush1.bf16.msra.mxu0 0
      %938 = vmatprep.subr.bf16.mxu0 0
      %939 = vmatpush1.bf16.msra.mxu0 0
      %940 = vmatprep.subr.bf16.mxu0 0
      %941 = vmatpush1.bf16.msra.mxu0 0
      %942 = vmatprep.mubr.bf16.mxu0 0
      %943 = vmatmul.mubr.bf16.gmra.mrb[0].mxu0 %v904
      %v944 = vpop.f32.mrb[0].mxu0
      %v945 = vadd.f32 0.0, %v944
      %v946 = vpop.f32.mrb[0].mxu0
      %v947 = vpop.f32.mrb[0].mxu0
      %v948 = vpop.f32.mrb[0].mxu0
      %949 = vdwg.mxu0
      %v951 = vsel %vm902, %v838, 0
      %v954 = vsel %vm906, %v840, 0
      %956 = vmatprep.subr.bf16.mxu0 0
      %957 = vmatpush1.bf16.msra.mxu0 %v954
      %958 = vmatprep.subr.bf16.mxu0 0
      %959 = vmatpush1.bf16.msra.mxu0 0
      %960 = vmatprep.subr.bf16.mxu0 0
      %961 = vmatpush1.bf16.msra.mxu0 0
      %962 = vmatprep.subr.bf16.mxu0 0
      %963 = vmatpush1.bf16.msra.mxu0 0
      %964 = vmatprep.subr.bf16.mxu0 0
      %965 = vmatpush1.bf16.msra.mxu0 0
      %966 = vmatprep.subr.bf16.mxu0 0
      %967 = vmatpush1.bf16.msra.mxu0 0
      %968 = vmatprep.subr.bf16.mxu0 0
      %969 = vmatpush1.bf16.msra.mxu0 0
      %970 = vmatprep.subr.bf16.mxu0 0
      %971 = vmatpush1.bf16.msra.mxu0 0
      %972 = vmatprep.subr.bf16.mxu0 0
      %973 = vmatpush1.bf16.msra.mxu0 0
      %974 = vmatprep.subr.bf16.mxu0 0
      %975 = vmatpush1.bf16.msra.mxu0 0
      %976 = vmatprep.subr.bf16.mxu0 0
      %977 = vmatpush1.bf16.msra.mxu0 0
      %978 = vmatprep.subr.bf16.mxu0 0
      %979 = vmatpush1.bf16.msra.mxu0 0
      %980 = vmatprep.subr.bf16.mxu0 0
      %981 = vmatpush1.bf16.msra.mxu0 0
      %982 = vmatprep.subr.bf16.mxu0 0
      %983 = vmatpush1.bf16.msra.mxu0 0
      %984 = vmatprep.subr.bf16.mxu0 0
      %985 = vmatpush1.bf16.msra.mxu0 0
      %986 = vmatprep.subr.bf16.mxu0 0
      %987 = vmatpush1.bf16.msra.mxu0 0
      %988 = vmatprep.mubr.bf16.mxu0 0
      %989 = vmatmul.mubr.bf16.gmra.mrb[0].mxu0 %v951
      %v990 = vpop.f32.mrb[0].mxu0
      %v991 = vadd.f32 %v945, %v990
      %v992 = vpop.f32.mrb[0].mxu0
      %v993 = vpop.f32.mrb[0].mxu0
      %v994 = vpop.f32.mrb[0].mxu0
      %995 = vdwg.mxu0
      %v996 = vmul.f32 %v637, %v565
      %v997 = vpack.c.bf16 %v996, %v996
      %v999 = vsel %vm598, %v997, 0
      %1001 = vmatprep.subr.bf16.mxu0 0
      %1002 = vmatpush1.bf16.xpose.msra.mxu0 %v775
      %1003 = vmatprep.subr.bf16.mxu0 0
      %1004 = vmatpush1.bf16.xpose.msra.mxu0 0
      %1005 = vmatprep.subr.bf16.mxu0 0
      %1006 = vmatpush1.bf16.xpose.msra.mxu0 0
      %1007 = vmatprep.subr.bf16.mxu0 0
      %1008 = vmatpush1.bf16.xpose.msra.mxu0 0
      %1009 = vmatprep.subr.bf16.mxu0 0
      %1010 = vmatpush1.bf16.xpose.msra.mxu0 0
      %1011 = vmatprep.subr.bf16.mxu0 0
      %1012 = vmatpush1.bf16.xpose.msra.mxu0 0
      %1013 = vmatprep.subr.bf16.mxu0 0
      %1014 = vmatpush1.bf16.xpose.msra.mxu0 0
      %1015 = vmatprep.subr.bf16.mxu0 0
      %1016 = vmatpush1.bf16.xpose.msra.mxu0 0
      %1017 = vmatprep.subr.bf16.mxu0 0
      %1018 = vmatpush1.bf16.xpose.msra.mxu0 0
      %1019 = vmatprep.subr.bf16.mxu0 0
      %1020 = vmatpush1.bf16.xpose.msra.mxu0 0
      %1021 = vmatprep.subr.bf16.mxu0 0
      %1022 = vmatpush1.bf16.xpose.msra.mxu0 0
      %1023 = vmatprep.subr.bf16.mxu0 0
      %1024 = vmatpush1.bf16.xpose.msra.mxu0 0
      %1025 = vmatprep.subr.bf16.mxu0 0
      %1026 = vmatpush1.bf16.xpose.msra.mxu0 0
      %1027 = vmatprep.subr.bf16.mxu0 0
      %1028 = vmatpush1.bf16.xpose.msra.mxu0 0
      %1029 = vmatprep.subr.bf16.mxu0 0
      %1030 = vmatpush1.bf16.xpose.msra.mxu0 0
      %1031 = vmatprep.subr.bf16.mxu0 0
      %1032 = vmatpush1.bf16.xpose.msra.mxu0 0
      %1033 = vmatprep.mubr.bf16.mxu0 0
      %1034 = vmatmul.mubr.bf16.gmra.mrb[0].mxu0 %v999
      %v1035 = vpop.f32.mrb[0].mxu0
      %v1036 = vadd.f32 0.0, %v1035
      %v1037 = vpop.f32.mrb[0].mxu0
      %v1038 = vpop.f32.mrb[0].mxu0
      %v1039 = vpop.f32.mrb[0].mxu0
      %1040 = vdwg.mxu0
      %v1041 = vmul.f32 %v1036, 0.35355338
      %v1042 = vsel %vm824, %v1041, -1e+30
      %v1043 = vsel %vm826, %v1042, -inf
      %1044 = vmax.xlane.f32.xlu0 %v1043
      %v1045 = vpop.xlane.xlu0 %1044
      %v1046 = vsub.f32 %v1042, %v1045
      %v1047 = vmul.f32 %v1046, 1.442695
      %v1048 = vpow.pop %v1047
      %v1049 = vsel %vm826, %v1048, 0.0
      %1050 = vadd.xlane.f32.xlu0 %v1049
      %v1051 = vpop.xlane.xlu0 %1050
      %v1052 = vrcp.pop %v1051
      %v1053 = vmul.f32 %v1048, %v1052
      %v1054 = vpack.c.bf16 %v1053, %v1053
      %v1055 = vmul.f32 %v763, %v565
      %v1056 = vpack.c.bf16 %v1055, %v1055
      %v1058 = vsel %vm902, %v1054, 0
      %v1061 = vsel %vm906, %v1056, 0
      %1063 = vmatprep.subr.bf16.mxu0 0
      %1064 = vmatpush1.bf16.msra.mxu0 %v1061
      %1065 = vmatprep.subr.bf16.mxu0 0
      %1066 = vmatpush1.bf16.msra.mxu0 0
      %1067 = vmatprep.subr.bf16.mxu0 0
      %1068 = vmatpush1.bf16.msra.mxu0 0
      %1069 = vmatprep.subr.bf16.mxu0 0
      %1070 = vmatpush1.bf16.msra.mxu0 0
      %1071 = vmatprep.subr.bf16.mxu0 0
      %1072 = vmatpush1.bf16.msra.mxu0 0
      %1073 = vmatprep.subr.bf16.mxu0 0
      %1074 = vmatpush1.bf16.msra.mxu0 0
      %1075 = vmatprep.subr.bf16.mxu0 0
      %1076 = vmatpush1.bf16.msra.mxu0 0
      %1077 = vmatprep.subr.bf16.mxu0 0
      %1078 = vmatpush1.bf16.msra.mxu0 0
      %1079 = vmatprep.subr.bf16.mxu0 0
      %1080 = vmatpush1.bf16.msra.mxu0 0
      %1081 = vmatprep.subr.bf16.mxu0 0
      %1082 = vmatpush1.bf16.msra.mxu0 0
      %1083 = vmatprep.subr.bf16.mxu0 0
      %1084 = vmatpush1.bf16.msra.mxu0 0
      %1085 = vmatprep.subr.bf16.mxu0 0
      %1086 = vmatpush1.bf16.msra.mxu0 0
      %1087 = vmatprep.subr.bf16.mxu0 0
      %1088 = vmatpush1.bf16.msra.mxu0 0
      %1089 = vmatprep.subr.bf16.mxu0 0
      %1090 = vmatpush1.bf16.msra.mxu0 0
      %1091 = vmatprep.subr.bf16.mxu0 0
      %1092 = vmatpush1.bf16.msra.mxu0 0
      %1093 = vmatprep.subr.bf16.mxu0 0
      %1094 = vmatpush1.bf16.msra.mxu0 0
      %1095 = vmatprep.mubr.bf16.mxu0 0
      %1096 = vmatmul.mubr.bf16.gmra.mrb[0].mxu0 %v1058
      %v1097 = vpop.f32.mrb[0].mxu0
      %v1098 = vadd.f32 0.0, %v1097
      %v1099 = vpop.f32.mrb[0].mxu0
      %v1100 = vpop.f32.mrb[0].mxu0
      %v1101 = vpop.f32.mrb[0].mxu0
      %1102 = vdwg.mxu0
      %v1103 = vadd.f32 %v991, %v1098
      %v1104 = vmul.f32 %v637, %v570
      %v1105 = vpack.c.bf16 %v1104, %v1104
      %v1107 = vsel %vm598, %v1105, 0
      %1109 = vmatprep.subr.bf16.mxu0 0
      %1110 = vmatpush1.bf16.xpose.msra.mxu0 %v775
      %1111 = vmatprep.subr.bf16.mxu0 0
      %1112 = vmatpush1.bf16.xpose.msra.mxu0 0
      %1113 = vmatprep.subr.bf16.mxu0 0
      %1114 = vmatpush1.bf16.xpose.msra.mxu0 0
      %1115 = vmatprep.subr.bf16.mxu0 0
      %1116 = vmatpush1.bf16.xpose.msra.mxu0 0
      %1117 = vmatprep.subr.bf16.mxu0 0
      %1118 = vmatpush1.bf16.xpose.msra.mxu0 0
      %1119 = vmatprep.subr.bf16.mxu0 0
      %1120 = vmatpush1.bf16.xpose.msra.mxu0 0
      %1121 = vmatprep.subr.bf16.mxu0 0
      %1122 = vmatpush1.bf16.xpose.msra.mxu0 0
      %1123 = vmatprep.subr.bf16.mxu0 0
      %1124 = vmatpush1.bf16.xpose.msra.mxu0 0
      %1125 = vmatprep.subr.bf16.mxu0 0
      %1126 = vmatpush1.bf16.xpose.msra.mxu0 0
      %1127 = vmatprep.subr.bf16.mxu0 0
      %1128 = vmatpush1.bf16.xpose.msra.mxu0 0
      %1129 = vmatprep.subr.bf16.mxu0 0
      %1130 = vmatpush1.bf16.xpose.msra.mxu0 0
      %1131 = vmatprep.subr.bf16.mxu0 0
      %1132 = vmatpush1.bf16.xpose.msra.mxu0 0
      %1133 = vmatprep.subr.bf16.mxu0 0
      %1134 = vmatpush1.bf16.xpose.msra.mxu0 0
      %1135 = vmatprep.subr.bf16.mxu0 0
      %1136 = vmatpush1.bf16.xpose.msra.mxu0 0
      %1137 = vmatprep.subr.bf16.mxu0 0
      %1138 = vmatpush1.bf16.xpose.msra.mxu0 0
      %1139 = vmatprep.subr.bf16.mxu0 0
      %1140 = vmatpush1.bf16.xpose.msra.mxu0 0
      %1141 = vmatprep.mubr.bf16.mxu0 0
      %1142 = vmatmul.mubr.bf16.gmra.mrb[0].mxu0 %v1107
      %v1143 = vpop.f32.mrb[0].mxu0
      %v1144 = vadd.f32 0.0, %v1143
      %v1145 = vpop.f32.mrb[0].mxu0
      %v1146 = vpop.f32.mrb[0].mxu0
      %v1147 = vpop.f32.mrb[0].mxu0
      %1148 = vdwg.mxu0
      %v1149 = vmul.f32 %v1144, 0.35355338
      %v1150 = vsel %vm824, %v1149, -1e+30
      %v1151 = vsel %vm826, %v1150, -inf
      %1152 = vmax.xlane.f32.xlu0 %v1151
      %v1153 = vpop.xlane.xlu0 %1152
      %v1154 = vsub.f32 %v1150, %v1153
      %v1155 = vmul.f32 %v1154, 1.442695
      %v1156 = vpow.pop %v1155
      %v1157 = vsel %vm826, %v1156, 0.0
      %1158 = vadd.xlane.f32.xlu0 %v1157
      %v1159 = vpop.xlane.xlu0 %1158
      %v1160 = vrcp.pop %v1159
      %v1161 = vmul.f32 %v1156, %v1160
      %v1162 = vpack.c.bf16 %v1161, %v1161
      %v1163 = vmul.f32 %v763, %v570
      %v1164 = vpack.c.bf16 %v1163, %v1163
      %v1166 = vsel %vm902, %v1162, 0
      %v1169 = vsel %vm906, %v1164, 0
      %1171 = vmatprep.subr.bf16.mxu0 0
      %1172 = vmatpush1.bf16.msra.mxu0 %v1169
      %1173 = vmatprep.subr.bf16.mxu0 0
      %1174 = vmatpush1.bf16.msra.mxu0 0
      %1175 = vmatprep.subr.bf16.mxu0 0
      %1176 = vmatpush1.bf16.msra.mxu0 0
      %1177 = vmatprep.subr.bf16.mxu0 0
      %1178 = vmatpush1.bf16.msra.mxu0 0
      %1179 = vmatprep.subr.bf16.mxu0 0
      %1180 = vmatpush1.bf16.msra.mxu0 0
      %1181 = vmatprep.subr.bf16.mxu0 0
      %1182 = vmatpush1.bf16.msra.mxu0 0
      %1183 = vmatprep.subr.bf16.mxu0 0
      %1184 = vmatpush1.bf16.msra.mxu0 0
      %1185 = vmatprep.subr.bf16.mxu0 0
      %1186 = vmatpush1.bf16.msra.mxu0 0
      %1187 = vmatprep.subr.bf16.mxu0 0
      %1188 = vmatpush1.bf16.msra.mxu0 0
      %1189 = vmatprep.subr.bf16.mxu0 0
      %1190 = vmatpush1.bf16.msra.mxu0 0
      %1191 = vmatprep.subr.bf16.mxu0 0
      %1192 = vmatpush1.bf16.msra.mxu0 0
      %1193 = vmatprep.subr.bf16.mxu0 0
      %1194 = vmatpush1.bf16.msra.mxu0 0
      %1195 = vmatprep.subr.bf16.mxu0 0
      %1196 = vmatpush1.bf16.msra.mxu0 0
      %1197 = vmatprep.subr.bf16.mxu0 0
      %1198 = vmatpush1.bf16.msra.mxu0 0
      %1199 = vmatprep.subr.bf16.mxu0 0
      %1200 = vmatpush1.bf16.msra.mxu0 0
      %1201 = vmatprep.subr.bf16.mxu0 0
      %1202 = vmatpush1.bf16.msra.mxu0 0
      %1203 = vmatprep.mubr.bf16.mxu0 0
      %1204 = vmatmul.mubr.bf16.gmra.mrb[0].mxu0 %v1166
      %v1205 = vpop.f32.mrb[0].mxu0
      %v1206 = vadd.f32 0.0, %v1205
      %v1207 = vpop.f32.mrb[0].mxu0
      %v1208 = vpop.f32.mrb[0].mxu0
      %v1209 = vpop.f32.mrb[0].mxu0
      %1210 = vdwg.mxu0
      %v1211 = vadd.f32 %v1103, %v1206
      %v1212 = vld [vmem:[%s12] sm:$0xf]
      %v1213 = vld [vmem:[%s12 + $0x4] sm:$0xf]
      %v1214 = vld [vmem:[%s12 + $0x8] sm:$0xf]
      %v1215 = vld [vmem:[%s12 + $0xc] sm:$0xf]
      %v1216 = vpack.c.bf16 %v1211, %v1211
      %v1217 = vld [vmem:[%s13] sm:$0x1]
      %v1219 = vlaneseq
      %v1220 = vshrl.u32 %v1219, 7
      %v1221 = vsub.s32 0, %v1220
      %v1222 = vrot.slane %v1217, %v1221
      %v1228 = vunpack.c.l.b16 %v1212
      %v1229 = vunpack.c.l.b16 %v1213
      %v1230 = vunpack.c.l.b16 %v1214
      %v1231 = vunpack.c.l.b16 %v1215
      %v1232 = vpack.c.b16 %v1229, %v1228
      %v1233 = vpack.c.b16 %v1231, %v1230
      %v1237 = vsel %vm598, %v1216, 0
      %1239 = vmatprep.subr.bf16.mxu0 0
      %1240 = vmatpush1.bf16.msra.mxu0 %v1232
      %1241 = vmatprep.subr.bf16.mxu0 0
      %1242 = vmatpush1.bf16.msra.mxu0 %v1233
      %1243 = vmatprep.subr.bf16.mxu0 0
      %1244 = vmatpush1.bf16.msra.mxu0 0
      %1245 = vmatprep.subr.bf16.mxu0 0
      %1246 = vmatpush1.bf16.msra.mxu0 0
      %1247 = vmatprep.subr.bf16.mxu0 0
      %1248 = vmatpush1.bf16.msra.mxu0 0
      %1249 = vmatprep.subr.bf16.mxu0 0
      %1250 = vmatpush1.bf16.msra.mxu0 0
      %1251 = vmatprep.subr.bf16.mxu0 0
      %1252 = vmatpush1.bf16.msra.mxu0 0
      %1253 = vmatprep.subr.bf16.mxu0 0
      %1254 = vmatpush1.bf16.msra.mxu0 0
      %1255 = vmatprep.subr.bf16.mxu0 0
      %1256 = vmatpush1.bf16.msra.mxu0 0
      %1257 = vmatprep.subr.bf16.mxu0 0
      %1258 = vmatpush1.bf16.msra.mxu0 0
      %1259 = vmatprep.subr.bf16.mxu0 0
      %1260 = vmatpush1.bf16.msra.mxu0 0
      %1261 = vmatprep.subr.bf16.mxu0 0
      %1262 = vmatpush1.bf16.msra.mxu0 0
      %1263 = vmatprep.subr.bf16.mxu0 0
      %1264 = vmatpush1.bf16.msra.mxu0 0
      %1265 = vmatprep.subr.bf16.mxu0 0
      %1266 = vmatpush1.bf16.msra.mxu0 0
      %1267 = vmatprep.subr.bf16.mxu0 0
      %1268 = vmatpush1.bf16.msra.mxu0 0
      %1269 = vmatprep.subr.bf16.mxu0 0
      %1270 = vmatpush1.bf16.msra.mxu0 0
      %1271 = vmatprep.mubr.bf16.mxu0 0
      %1272 = vmatmul.mubr.bf16.gmra.mrb[0].mxu0 %v1237
      %v1273 = vpop.f32.mrb[0].mxu0
      %v1274 = vadd.f32 %v1222, %v1273
      %v1275 = vpop.f32.mrb[0].mxu0
      %v1276 = vpop.f32.mrb[0].mxu0
      %v1277 = vpop.f32.mrb[0].mxu0
      %1278 = vdwg.mxu0
      %1280 = vset.pattern.permute.xlu0 0
      %1281 = vperm.xlu0 %1280, %v572
      %v1282 = vpop.permute.xlu0 %1281
      %v1284 = vmul.f32 %v1274, %v1282
      %v1285 = vadd.f32 %v1284, %v571
      %v1286 = vld [vmem:[%s14] sm:$0xf]
      %v1287 = vld [vmem:[%s14 + $0x4] sm:$0xf]
      %v1288 = vld [vmem:[%s14 + $0x8] sm:$0xf]
      %v1289 = vld [vmem:[%s14 + $0xc] sm:$0xf]
      %v1290 = vpack.c.bf16 %v1285, %v1285
      %v1291 = vld [vmem:[%s15] sm:$0x1]
      %v1293 = vlaneseq
      %v1294 = vshrl.u32 %v1293, 7
      %v1295 = vsub.s32 0, %v1294
      %v1296 = vrot.slane %v1291, %v1295
      %v1302 = vunpack.c.l.b16 %v1286
      %v1303 = vunpack.c.l.b16 %v1287
      %v1304 = vunpack.c.l.b16 %v1288
      %v1305 = vunpack.c.l.b16 %v1289
      %v1306 = vpack.c.b16 %v1303, %v1302
      %v1307 = vpack.c.b16 %v1305, %v1304
      %v1311 = vsel %vm598, %v1290, 0
      %1313 = vmatprep.subr.bf16.mxu0 0
      %1314 = vmatpush1.bf16.msra.mxu0 %v1306
      %1315 = vmatprep.subr.bf16.mxu0 0
      %1316 = vmatpush1.bf16.msra.mxu0 %v1307
      %1317 = vmatprep.subr.bf16.mxu0 0
      %1318 = vmatpush1.bf16.msra.mxu0 0
      %1319 = vmatprep.subr.bf16.mxu0 0
      %1320 = vmatpush1.bf16.msra.mxu0 0
      %1321 = vmatprep.subr.bf16.mxu0 0
      %1322 = vmatpush1.bf16.msra.mxu0 0
      %1323 = vmatprep.subr.bf16.mxu0 0
      %1324 = vmatpush1.bf16.msra.mxu0 0
      %1325 = vmatprep.subr.bf16.mxu0 0
      %1326 = vmatpush1.bf16.msra.mxu0 0
      %1327 = vmatprep.subr.bf16.mxu0 0
      %1328 = vmatpush1.bf16.msra.mxu0 0
      %1329 = vmatprep.subr.bf16.mxu0 0
      %1330 = vmatpush1.bf16.msra.mxu0 0
      %1331 = vmatprep.subr.bf16.mxu0 0
      %1332 = vmatpush1.bf16.msra.mxu0 0
      %1333 = vmatprep.subr.bf16.mxu0 0
      %1334 = vmatpush1.bf16.msra.mxu0 0
      %1335 = vmatprep.subr.bf16.mxu0 0
      %1336 = vmatpush1.bf16.msra.mxu0 0
      %1337 = vmatprep.subr.bf16.mxu0 0
      %1338 = vmatpush1.bf16.msra.mxu0 0
      %1339 = vmatprep.subr.bf16.mxu0 0
      %1340 = vmatpush1.bf16.msra.mxu0 0
      %1341 = vmatprep.subr.bf16.mxu0 0
      %1342 = vmatpush1.bf16.msra.mxu0 0
      %1343 = vmatprep.subr.bf16.mxu0 0
      %1344 = vmatpush1.bf16.msra.mxu0 0
      %1345 = vmatprep.mubr.bf16.mxu0 0
      %1346 = vmatmul.mubr.bf16.gmra.mrb[0].mxu0 %v1311
      %v1347 = vpop.f32.mrb[0].mxu0
      %v1348 = vadd.f32 %v1296, %v1347
      %v1349 = vpop.f32.mrb[0].mxu0
      %v1350 = vpop.f32.mrb[0].mxu0
      %v1351 = vpop.f32.mrb[0].mxu0
      %1352 = vdwg.mxu0
      %v1353 = vmax.f32 %v1348, 0.0
      %v1354 = vadd.f32 %v1285, %v1353
      %v1355 = vld [vmem:[%s4] sm:$0xf]
      %v1356 = vld [vmem:[%s4 + $0x4] sm:$0xf]
      %v1357 = vld [vmem:[%s4 + $0x8] sm:$0xf]
      %v1358 = vld [vmem:[%s4 + $0xc] sm:$0xf]
      %v1359 = vpack.c.bf16 %v1354, %v1354
      %v1360 = vld [vmem:[%s5] sm:$0x1]
      %v1362 = vlaneseq
      %v1363 = vshrl.u32 %v1362, 7
      %v1364 = vsub.s32 0, %v1363
      %v1365 = vrot.slane %v1360, %v1364
      %v1371 = vunpack.c.l.b16 %v1355
      %v1372 = vunpack.c.l.b16 %v1356
      %v1373 = vunpack.c.l.b16 %v1357
      %v1374 = vunpack.c.l.b16 %v1358
      %v1375 = vpack.c.b16 %v1372, %v1371
      %v1376 = vpack.c.b16 %v1374, %v1373
      %v1380 = vsel %vm598, %v1359, 0
      %1382 = vmatprep.subr.bf16.mxu0 0
      %1383 = vmatpush1.bf16.msra.mxu0 %v1375
      %1384 = vmatprep.subr.bf16.mxu0 0
      %1385 = vmatpush1.bf16.msra.mxu0 %v1376
      %1386 = vmatprep.subr.bf16.mxu0 0
      %1387 = vmatpush1.bf16.msra.mxu0 0
      %1388 = vmatprep.subr.bf16.mxu0 0
      %1389 = vmatpush1.bf16.msra.mxu0 0
      %1390 = vmatprep.subr.bf16.mxu0 0
      %1391 = vmatpush1.bf16.msra.mxu0 0
      %1392 = vmatprep.subr.bf16.mxu0 0
      %1393 = vmatpush1.bf16.msra.mxu0 0
      %1394 = vmatprep.subr.bf16.mxu0 0
      %1395 = vmatpush1.bf16.msra.mxu0 0
      %1396 = vmatprep.subr.bf16.mxu0 0
      %1397 = vmatpush1.bf16.msra.mxu0 0
      %1398 = vmatprep.subr.bf16.mxu0 0
      %1399 = vmatpush1.bf16.msra.mxu0 0
      %1400 = vmatprep.subr.bf16.mxu0 0
      %1401 = vmatpush1.bf16.msra.mxu0 0
      %1402 = vmatprep.subr.bf16.mxu0 0
      %1403 = vmatpush1.bf16.msra.mxu0 0
      %1404 = vmatprep.subr.bf16.mxu0 0
      %1405 = vmatpush1.bf16.msra.mxu0 0
      %1406 = vmatprep.subr.bf16.mxu0 0
      %1407 = vmatpush1.bf16.msra.mxu0 0
      %1408 = vmatprep.subr.bf16.mxu0 0
      %1409 = vmatpush1.bf16.msra.mxu0 0
      %1410 = vmatprep.subr.bf16.mxu0 0
      %1411 = vmatpush1.bf16.msra.mxu0 0
      %1412 = vmatprep.subr.bf16.mxu0 0
      %1413 = vmatpush1.bf16.msra.mxu0 0
      %1414 = vmatprep.mubr.bf16.mxu0 0
      %1415 = vmatmul.mubr.bf16.gmra.mrb[0].mxu0 %v1380
      %v1416 = vpop.f32.mrb[0].mxu0
      %v1417 = vadd.f32 %v1365, %v1416
      %v1418 = vpop.f32.mrb[0].mxu0
      %v1419 = vpop.f32.mrb[0].mxu0
      %v1420 = vpop.f32.mrb[0].mxu0
      %1421 = vdwg.mxu0
      %v1422 = vmax.f32 %v1417, 0.0
      %v1423 = vld [vmem:[%s3] sm:$0x3]
      %s1424 = scalar_lea.vmem %s6, 16
      %v1425 = vld [vmem:[%s1424] sm:$0xf]
      %v1426 = vld [vmem:[%s1424 + $0x4] sm:$0xf]
      %v1427 = vld [vmem:[%s1424 + $0x8] sm:$0xf]
      %v1428 = vld [vmem:[%s1424 + $0xc] sm:$0xf]
      %v1429 = vpack.c.bf16 %v1423, %v1423
      %s1430 = scalar_lea.vmem %s7, 1
      %v1431 = vld [vmem:[%s1430] sm:$0x1]
      %v1433 = vlaneseq
      %v1434 = vshrl.u32 %v1433, 7
      %v1435 = vsub.s32 0, %v1434
      %v1436 = vrot.slane %v1431, %v1435
      %v1442 = vunpack.c.l.b16 %v1425
      %v1443 = vunpack.c.l.b16 %v1426
      %v1444 = vunpack.c.l.b16 %v1427
      %v1445 = vunpack.c.l.b16 %v1428
      %v1446 = vpack.c.b16 %v1443, %v1442
      %v1447 = vpack.c.b16 %v1445, %v1444
      %v1451 = vsel %vm598, %v1429, 0
      %1453 = vmatprep.subr.bf16.mxu0 0
      %1454 = vmatpush1.bf16.msra.mxu0 %v1446
      %1455 = vmatprep.subr.bf16.mxu0 0
      %1456 = vmatpush1.bf16.msra.mxu0 %v1447
      %1457 = vmatprep.subr.bf16.mxu0 0
      %1458 = vmatpush1.bf16.msra.mxu0 0
      %1459 = vmatprep.subr.bf16.mxu0 0
      %1460 = vmatpush1.bf16.msra.mxu0 0
      %1461 = vmatprep.subr.bf16.mxu0 0
      %1462 = vmatpush1.bf16.msra.mxu0 0
      %1463 = vmatprep.subr.bf16.mxu0 0
      %1464 = vmatpush1.bf16.msra.mxu0 0
      %1465 = vmatprep.subr.bf16.mxu0 0
      %1466 = vmatpush1.bf16.msra.mxu0 0
      %1467 = vmatprep.subr.bf16.mxu0 0
      %1468 = vmatpush1.bf16.msra.mxu0 0
      %1469 = vmatprep.subr.bf16.mxu0 0
      %1470 = vmatpush1.bf16.msra.mxu0 0
      %1471 = vmatprep.subr.bf16.mxu0 0
      %1472 = vmatpush1.bf16.msra.mxu0 0
      %1473 = vmatprep.subr.bf16.mxu0 0
      %1474 = vmatpush1.bf16.msra.mxu0 0
      %1475 = vmatprep.subr.bf16.mxu0 0
      %1476 = vmatpush1.bf16.msra.mxu0 0
      %1477 = vmatprep.subr.bf16.mxu0 0
      %1478 = vmatpush1.bf16.msra.mxu0 0
      %1479 = vmatprep.subr.bf16.mxu0 0
      %1480 = vmatpush1.bf16.msra.mxu0 0
      %1481 = vmatprep.subr.bf16.mxu0 0
      %1482 = vmatpush1.bf16.msra.mxu0 0
      %1483 = vmatprep.subr.bf16.mxu0 0
      %1484 = vmatpush1.bf16.msra.mxu0 0
      %1485 = vmatprep.mubr.bf16.mxu0 0
      %1486 = vmatmul.mubr.bf16.gmra.mrb[0].mxu0 %v1451
      %v1487 = vpop.f32.mrb[0].mxu0
      %v1488 = vadd.f32 %v1436, %v1487
      %v1489 = vpop.f32.mrb[0].mxu0
      %v1490 = vpop.f32.mrb[0].mxu0
      %v1491 = vpop.f32.mrb[0].mxu0
      %1492 = vdwg.mxu0
      %s1493 = scalar_lea.vmem %s8, 16
      %v1494 = vld [vmem:[%s1493] sm:$0xf]
      %v1495 = vld [vmem:[%s1493 + $0x4] sm:$0xf]
      %v1496 = vld [vmem:[%s1493 + $0x8] sm:$0xf]
      %v1497 = vld [vmem:[%s1493 + $0xc] sm:$0xf]
      %v1498 = vpack.c.bf16 %v1422, %v1422
      %s1499 = scalar_lea.vmem %s9, 1
      %v1500 = vld [vmem:[%s1499] sm:$0x1]
      %v1502 = vlaneseq
      %v1503 = vshrl.u32 %v1502, 7
      %v1504 = vsub.s32 0, %v1503
      %v1505 = vrot.slane %v1500, %v1504
      %v1511 = vunpack.c.l.b16 %v1494
      %v1512 = vunpack.c.l.b16 %v1495
      %v1513 = vunpack.c.l.b16 %v1496
      %v1514 = vunpack.c.l.b16 %v1497
      %v1515 = vpack.c.b16 %v1512, %v1511
      %v1516 = vpack.c.b16 %v1514, %v1513
      %v1520 = vsel %vm598, %v1498, 0
      %1522 = vmatprep.subr.bf16.mxu0 0
      %1523 = vmatpush1.bf16.msra.mxu0 %v1515
      %1524 = vmatprep.subr.bf16.mxu0 0
      %1525 = vmatpush1.bf16.msra.mxu0 %v1516
      %1526 = vmatprep.subr.bf16.mxu0 0
      %1527 = vmatpush1.bf16.msra.mxu0 0
      %1528 = vmatprep.subr.bf16.mxu0 0
      %1529 = vmatpush1.bf16.msra.mxu0 0
      %1530 = vmatprep.subr.bf16.mxu0 0
      %1531 = vmatpush1.bf16.msra.mxu0 0
      %1532 = vmatprep.subr.bf16.mxu0 0
      %1533 = vmatpush1.bf16.msra.mxu0 0
      %1534 = vmatprep.subr.bf16.mxu0 0
      %1535 = vmatpush1.bf16.msra.mxu0 0
      %1536 = vmatprep.subr.bf16.mxu0 0
      %1537 = vmatpush1.bf16.msra.mxu0 0
      %1538 = vmatprep.subr.bf16.mxu0 0
      %1539 = vmatpush1.bf16.msra.mxu0 0
      %1540 = vmatprep.subr.bf16.mxu0 0
      %1541 = vmatpush1.bf16.msra.mxu0 0
      %1542 = vmatprep.subr.bf16.mxu0 0
      %1543 = vmatpush1.bf16.msra.mxu0 0
      %1544 = vmatprep.subr.bf16.mxu0 0
      %1545 = vmatpush1.bf16.msra.mxu0 0
      %1546 = vmatprep.subr.bf16.mxu0 0
      %1547 = vmatpush1.bf16.msra.mxu0 0
      %1548 = vmatprep.subr.bf16.mxu0 0
      %1549 = vmatpush1.bf16.msra.mxu0 0
      %1550 = vmatprep.subr.bf16.mxu0 0
      %1551 = vmatpush1.bf16.msra.mxu0 0
      %1552 = vmatprep.subr.bf16.mxu0 0
      %1553 = vmatpush1.bf16.msra.mxu0 0
      %1554 = vmatprep.mubr.bf16.mxu0 0
      %1555 = vmatmul.mubr.bf16.gmra.mrb[0].mxu0 %v1520
      %v1556 = vpop.f32.mrb[0].mxu0
      %v1557 = vadd.f32 %v1505, %v1556
      %v1558 = vpop.f32.mrb[0].mxu0
      %v1559 = vpop.f32.mrb[0].mxu0
      %v1560 = vpop.f32.mrb[0].mxu0
      %1561 = vdwg.mxu0
      %s1562 = scalar_lea.vmem %s10, 16
      %v1563 = vld [vmem:[%s1562] sm:$0xf]
      %v1564 = vld [vmem:[%s1562 + $0x4] sm:$0xf]
      %v1565 = vld [vmem:[%s1562 + $0x8] sm:$0xf]
      %v1566 = vld [vmem:[%s1562 + $0xc] sm:$0xf]
      %s1567 = scalar_lea.vmem %s11, 1
      %v1568 = vld [vmem:[%s1567] sm:$0x1]
      %v1570 = vlaneseq
      %v1571 = vshrl.u32 %v1570, 7
      %v1572 = vsub.s32 0, %v1571
      %v1573 = vrot.slane %v1568, %v1572
      %v1579 = vunpack.c.l.b16 %v1563
      %v1580 = vunpack.c.l.b16 %v1564
      %v1581 = vunpack.c.l.b16 %v1565
      %v1582 = vunpack.c.l.b16 %v1566
      %v1583 = vpack.c.b16 %v1580, %v1579
      %v1584 = vpack.c.b16 %v1582, %v1581
      %1587 = vmatprep.subr.bf16.mxu0 0
      %1588 = vmatpush1.bf16.msra.mxu0 %v1583
      %1589 = vmatprep.subr.bf16.mxu0 0
      %1590 = vmatpush1.bf16.msra.mxu0 %v1584
      %1591 = vmatprep.subr.bf16.mxu0 0
      %1592 = vmatpush1.bf16.msra.mxu0 0
      %1593 = vmatprep.subr.bf16.mxu0 0
      %1594 = vmatpush1.bf16.msra.mxu0 0
      %1595 = vmatprep.subr.bf16.mxu0 0
      %1596 = vmatpush1.bf16.msra.mxu0 0
      %1597 = vmatprep.subr.bf16.mxu0 0
      %1598 = vmatpush1.bf16.msra.mxu0 0
      %1599 = vmatprep.subr.bf16.mxu0 0
      %1600 = vmatpush1.bf16.msra.mxu0 0
      %1601 = vmatprep.subr.bf16.mxu0 0
      %1602 = vmatpush1.bf16.msra.mxu0 0
      %1603 = vmatprep.subr.bf16.mxu0 0
      %1604 = vmatpush1.bf16.msra.mxu0 0
      %1605 = vmatprep.subr.bf16.mxu0 0
      %1606 = vmatpush1.bf16.msra.mxu0 0
      %1607 = vmatprep.subr.bf16.mxu0 0
      %1608 = vmatpush1.bf16.msra.mxu0 0
      %1609 = vmatprep.subr.bf16.mxu0 0
      %1610 = vmatpush1.bf16.msra.mxu0 0
      %1611 = vmatprep.subr.bf16.mxu0 0
      %1612 = vmatpush1.bf16.msra.mxu0 0
      %1613 = vmatprep.subr.bf16.mxu0 0
      %1614 = vmatpush1.bf16.msra.mxu0 0
      %1615 = vmatprep.subr.bf16.mxu0 0
      %1616 = vmatpush1.bf16.msra.mxu0 0
      %1617 = vmatprep.subr.bf16.mxu0 0
      %1618 = vmatpush1.bf16.msra.mxu0 0
      %1619 = vmatprep.mubr.bf16.mxu0 0
      %1620 = vmatmul.mubr.bf16.gmra.mrb[0].mxu0 %v1520
      %v1621 = vpop.f32.mrb[0].mxu0
      %v1622 = vadd.f32 %v1573, %v1621
      %v1623 = vpop.f32.mrb[0].mxu0
      %v1624 = vpop.f32.mrb[0].mxu0
      %v1625 = vpop.f32.mrb[0].mxu0
      %1626 = vdwg.mxu0
      %v1627 = vpack.c.bf16 %v1557, %v1557
      %v1628 = vmul.f32 %v1488, %v555
      %v1629 = vpack.c.bf16 %v1628, %v1628
      %v1631 = vsel %vm598, %v1629, 0
      %v1634 = vsel %vm598, %v1627, 0
      %1636 = vmatprep.subr.bf16.mxu0 0
      %1637 = vmatpush1.bf16.xpose.msra.mxu0 %v1634
      %1638 = vmatprep.subr.bf16.mxu0 0
      %1639 = vmatpush1.bf16.xpose.msra.mxu0 0
      %1640 = vmatprep.subr.bf16.mxu0 0
      %1641 = vmatpush1.bf16.xpose.msra.mxu0 0
      %1642 = vmatprep.subr.bf16.mxu0 0
      %1643 = vmatpush1.bf16.xpose.msra.mxu0 0
      %1644 = vmatprep.subr.bf16.mxu0 0
      %1645 = vmatpush1.bf16.xpose.msra.mxu0 0
      %1646 = vmatprep.subr.bf16.mxu0 0
      %1647 = vmatpush1.bf16.xpose.msra.mxu0 0
      %1648 = vmatprep.subr.bf16.mxu0 0
      %1649 = vmatpush1.bf16.xpose.msra.mxu0 0
      %1650 = vmatprep.subr.bf16.mxu0 0
      %1651 = vmatpush1.bf16.xpose.msra.mxu0 0
      %1652 = vmatprep.subr.bf16.mxu0 0
      %1653 = vmatpush1.bf16.xpose.msra.mxu0 0
      %1654 = vmatprep.subr.bf16.mxu0 0
      %1655 = vmatpush1.bf16.xpose.msra.mxu0 0
      %1656 = vmatprep.subr.bf16.mxu0 0
      %1657 = vmatpush1.bf16.xpose.msra.mxu0 0
      %1658 = vmatprep.subr.bf16.mxu0 0
      %1659 = vmatpush1.bf16.xpose.msra.mxu0 0
      %1660 = vmatprep.subr.bf16.mxu0 0
      %1661 = vmatpush1.bf16.xpose.msra.mxu0 0
      %1662 = vmatprep.subr.bf16.mxu0 0
      %1663 = vmatpush1.bf16.xpose.msra.mxu0 0
      %1664 = vmatprep.subr.bf16.mxu0 0
      %1665 = vmatpush1.bf16.xpose.msra.mxu0 0
      %1666 = vmatprep.subr.bf16.mxu0 0
      %1667 = vmatpush1.bf16.xpose.msra.mxu0 0
      %1668 = vmatprep.mubr.bf16.mxu0 0
      %1669 = vmatmul.mubr.bf16.gmra.mrb[0].mxu0 %v1631
      %v1670 = vpop.f32.mrb[0].mxu0
      %v1671 = vadd.f32 0.0, %v1670
      %v1672 = vpop.f32.mrb[0].mxu0
      %v1673 = vpop.f32.mrb[0].mxu0
      %v1674 = vpop.f32.mrb[0].mxu0
      %1675 = vdwg.mxu0
      %v1676 = vmul.f32 %v1671, 0.35355338
      %v1677 = vsel %vm824, %v1676, -1e+30
      %vm1678 = vcmask 41984
      %v1679 = vsel %vm1678, %v1677, -inf
      %1680 = vmax.xlane.f32.xlu0 %v1679
      %v1681 = vpop.xlane.xlu0 %1680
      %v1682 = vsub.f32 %v1677, %v1681
      %v1683 = vmul.f32 %v1682, 1.442695
      %v1684 = vpow.pop %v1683
      %v1685 = vsel %vm1678, %v1684, 0.0
      %1686 = vadd.xlane.f32.xlu0 %v1685
      %v1687 = vpop.xlane.xlu0 %1686
      %v1688 = vrcp.pop %v1687
      %v1689 = vmul.f32 %v1684, %v1688
      %v1690 = vpack.c.bf16 %v1689, %v1689
      %v1691 = vmul.f32 %v1622, %v555
      %v1692 = vpack.c.bf16 %v1691, %v1691
      %v1693 = vmul.f32 %v1488, %v560
      %v1694 = vpack.c.bf16 %v1693, %v1693
      %v1696 = vsel %vm598, %v1694, 0
      %1698 = vmatprep.subr.bf16.mxu0 0
      %1699 = vmatpush1.bf16.xpose.msra.mxu0 %v1634
      %1700 = vmatprep.subr.bf16.mxu0 0
      %1701 = vmatpush1.bf16.xpose.msra.mxu0 0
      %1702 = vmatprep.subr.bf16.mxu0 0
      %1703 = vmatpush1.bf16.xpose.msra.mxu0 0
      %1704 = vmatprep.subr.bf16.mxu0 0
      %1705 = vmatpush1.bf16.xpose.msra.mxu0 0
      %1706 = vmatprep.subr.bf16.mxu0 0
      %1707 = vmatpush1.bf16.xpose.msra.mxu0 0
      %1708 = vmatprep.subr.bf16.mxu0 0
      %1709 = vmatpush1.bf16.xpose.msra.mxu0 0
      %1710 = vmatprep.subr.bf16.mxu0 0
      %1711 = vmatpush1.bf16.xpose.msra.mxu0 0
      %1712 = vmatprep.subr.bf16.mxu0 0
      %1713 = vmatpush1.bf16.xpose.msra.mxu0 0
      %1714 = vmatprep.subr.bf16.mxu0 0
      %1715 = vmatpush1.bf16.xpose.msra.mxu0 0
      %1716 = vmatprep.subr.bf16.mxu0 0
      %1717 = vmatpush1.bf16.xpose.msra.mxu0 0
      %1718 = vmatprep.subr.bf16.mxu0 0
      %1719 = vmatpush1.bf16.xpose.msra.mxu0 0
      %1720 = vmatprep.subr.bf16.mxu0 0
      %1721 = vmatpush1.bf16.xpose.msra.mxu0 0
      %1722 = vmatprep.subr.bf16.mxu0 0
      %1723 = vmatpush1.bf16.xpose.msra.mxu0 0
      %1724 = vmatprep.subr.bf16.mxu0 0
      %1725 = vmatpush1.bf16.xpose.msra.mxu0 0
      %1726 = vmatprep.subr.bf16.mxu0 0
      %1727 = vmatpush1.bf16.xpose.msra.mxu0 0
      %1728 = vmatprep.subr.bf16.mxu0 0
      %1729 = vmatpush1.bf16.xpose.msra.mxu0 0
      %1730 = vmatprep.mubr.bf16.mxu0 0
      %1731 = vmatmul.mubr.bf16.gmra.mrb[0].mxu0 %v1696
      %v1732 = vpop.f32.mrb[0].mxu0
      %v1733 = vadd.f32 0.0, %v1732
      %v1734 = vpop.f32.mrb[0].mxu0
      %v1735 = vpop.f32.mrb[0].mxu0
      %v1736 = vpop.f32.mrb[0].mxu0
      %1737 = vdwg.mxu0
      %v1738 = vmul.f32 %v1733, 0.35355338
      %v1739 = vsel %vm824, %v1738, -1e+30
      %v1740 = vsel %vm1678, %v1739, -inf
      %1741 = vmax.xlane.f32.xlu0 %v1740
      %v1742 = vpop.xlane.xlu0 %1741
      %v1743 = vsub.f32 %v1739, %v1742
      %v1744 = vmul.f32 %v1743, 1.442695
      %v1745 = vpow.pop %v1744
      %v1746 = vsel %vm1678, %v1745, 0.0
      %1747 = vadd.xlane.f32.xlu0 %v1746
      %v1748 = vpop.xlane.xlu0 %1747
      %v1749 = vrcp.pop %v1748
      %v1750 = vmul.f32 %v1745, %v1749
      %v1751 = vpack.c.bf16 %v1750, %v1750
      %v1752 = vmul.f32 %v1622, %v560
      %v1753 = vpack.c.bf16 %v1752, %v1752
      %v1755 = vsel %vm902, %v1751, 0
      %v1758 = vsel %vm906, %v1753, 0
      %1760 = vmatprep.subr.bf16.mxu0 0
      %1761 = vmatpush1.bf16.msra.mxu0 %v1758
      %1762 = vmatprep.subr.bf16.mxu0 0
      %1763 = vmatpush1.bf16.msra.mxu0 0
      %1764 = vmatprep.subr.bf16.mxu0 0
      %1765 = vmatpush1.bf16.msra.mxu0 0
      %1766 = vmatprep.subr.bf16.mxu0 0
      %1767 = vmatpush1.bf16.msra.mxu0 0
      %1768 = vmatprep.subr.bf16.mxu0 0
      %1769 = vmatpush1.bf16.msra.mxu0 0
      %1770 = vmatprep.subr.bf16.mxu0 0
      %1771 = vmatpush1.bf16.msra.mxu0 0
      %1772 = vmatprep.subr.bf16.mxu0 0
      %1773 = vmatpush1.bf16.msra.mxu0 0
      %1774 = vmatprep.subr.bf16.mxu0 0
      %1775 = vmatpush1.bf16.msra.mxu0 0
      %1776 = vmatprep.subr.bf16.mxu0 0
      %1777 = vmatpush1.bf16.msra.mxu0 0
      %1778 = vmatprep.subr.bf16.mxu0 0
      %1779 = vmatpush1.bf16.msra.mxu0 0
      %1780 = vmatprep.subr.bf16.mxu0 0
      %1781 = vmatpush1.bf16.msra.mxu0 0
      %1782 = vmatprep.subr.bf16.mxu0 0
      %1783 = vmatpush1.bf16.msra.mxu0 0
      %1784 = vmatprep.subr.bf16.mxu0 0
      %1785 = vmatpush1.bf16.msra.mxu0 0
      %1786 = vmatprep.subr.bf16.mxu0 0
      %1787 = vmatpush1.bf16.msra.mxu0 0
      %1788 = vmatprep.subr.bf16.mxu0 0
      %1789 = vmatpush1.bf16.msra.mxu0 0
      %1790 = vmatprep.subr.bf16.mxu0 0
      %1791 = vmatpush1.bf16.msra.mxu0 0
      %1792 = vmatprep.mubr.bf16.mxu0 0
      %1793 = vmatmul.mubr.bf16.gmra.mrb[0].mxu0 %v1755
      %v1794 = vpop.f32.mrb[0].mxu0
      %v1795 = vadd.f32 0.0, %v1794
      %v1796 = vpop.f32.mrb[0].mxu0
      %v1797 = vpop.f32.mrb[0].mxu0
      %v1798 = vpop.f32.mrb[0].mxu0
      %1799 = vdwg.mxu0
      %v1801 = vsel %vm902, %v1690, 0
      %v1804 = vsel %vm906, %v1692, 0
      %1806 = vmatprep.subr.bf16.mxu0 0
      %1807 = vmatpush1.bf16.msra.mxu0 %v1804
      %1808 = vmatprep.subr.bf16.mxu0 0
      %1809 = vmatpush1.bf16.msra.mxu0 0
      %1810 = vmatprep.subr.bf16.mxu0 0
      %1811 = vmatpush1.bf16.msra.mxu0 0
      %1812 = vmatprep.subr.bf16.mxu0 0
      %1813 = vmatpush1.bf16.msra.mxu0 0
      %1814 = vmatprep.subr.bf16.mxu0 0
      %1815 = vmatpush1.bf16.msra.mxu0 0
      %1816 = vmatprep.subr.bf16.mxu0 0
      %1817 = vmatpush1.bf16.msra.mxu0 0
      %1818 = vmatprep.subr.bf16.mxu0 0
      %1819 = vmatpush1.bf16.msra.mxu0 0
      %1820 = vmatprep.subr.bf16.mxu0 0
      %1821 = vmatpush1.bf16.msra.mxu0 0
      %1822 = vmatprep.subr.bf16.mxu0 0
      %1823 = vmatpush1.bf16.msra.mxu0 0
      %1824 = vmatprep.subr.bf16.mxu0 0
      %1825 = vmatpush1.bf16.msra.mxu0 0
      %1826 = vmatprep.subr.bf16.mxu0 0
      %1827 = vmatpush1.bf16.msra.mxu0 0
      %1828 = vmatprep.subr.bf16.mxu0 0
      %1829 = vmatpush1.bf16.msra.mxu0 0
      %1830 = vmatprep.subr.bf16.mxu0 0
      %1831 = vmatpush1.bf16.msra.mxu0 0
      %1832 = vmatprep.subr.bf16.mxu0 0
      %1833 = vmatpush1.bf16.msra.mxu0 0
      %1834 = vmatprep.subr.bf16.mxu0 0
      %1835 = vmatpush1.bf16.msra.mxu0 0
      %1836 = vmatprep.subr.bf16.mxu0 0
      %1837 = vmatpush1.bf16.msra.mxu0 0
      %1838 = vmatprep.mubr.bf16.mxu0 0
      %1839 = vmatmul.mubr.bf16.gmra.mrb[0].mxu0 %v1801
      %v1840 = vpop.f32.mrb[0].mxu0
      %v1841 = vadd.f32 %v1795, %v1840
      %v1842 = vpop.f32.mrb[0].mxu0
      %v1843 = vpop.f32.mrb[0].mxu0
      %v1844 = vpop.f32.mrb[0].mxu0
      %1845 = vdwg.mxu0
      %v1846 = vmul.f32 %v1488, %v565
      %v1847 = vpack.c.bf16 %v1846, %v1846
      %v1849 = vsel %vm598, %v1847, 0
      %1851 = vmatprep.subr.bf16.mxu0 0
      %1852 = vmatpush1.bf16.xpose.msra.mxu0 %v1634
      %1853 = vmatprep.subr.bf16.mxu0 0
      %1854 = vmatpush1.bf16.xpose.msra.mxu0 0
      %1855 = vmatprep.subr.bf16.mxu0 0
      %1856 = vmatpush1.bf16.xpose.msra.mxu0 0
      %1857 = vmatprep.subr.bf16.mxu0 0
      %1858 = vmatpush1.bf16.xpose.msra.mxu0 0
      %1859 = vmatprep.subr.bf16.mxu0 0
      %1860 = vmatpush1.bf16.xpose.msra.mxu0 0
      %1861 = vmatprep.subr.bf16.mxu0 0
      %1862 = vmatpush1.bf16.xpose.msra.mxu0 0
      %1863 = vmatprep.subr.bf16.mxu0 0
      %1864 = vmatpush1.bf16.xpose.msra.mxu0 0
      %1865 = vmatprep.subr.bf16.mxu0 0
      %1866 = vmatpush1.bf16.xpose.msra.mxu0 0
      %1867 = vmatprep.subr.bf16.mxu0 0
      %1868 = vmatpush1.bf16.xpose.msra.mxu0 0
      %1869 = vmatprep.subr.bf16.mxu0 0
      %1870 = vmatpush1.bf16.xpose.msra.mxu0 0
      %1871 = vmatprep.subr.bf16.mxu0 0
      %1872 = vmatpush1.bf16.xpose.msra.mxu0 0
      %1873 = vmatprep.subr.bf16.mxu0 0
      %1874 = vmatpush1.bf16.xpose.msra.mxu0 0
      %1875 = vmatprep.subr.bf16.mxu0 0
      %1876 = vmatpush1.bf16.xpose.msra.mxu0 0
      %1877 = vmatprep.subr.bf16.mxu0 0
      %1878 = vmatpush1.bf16.xpose.msra.mxu0 0
      %1879 = vmatprep.subr.bf16.mxu0 0
      %1880 = vmatpush1.bf16.xpose.msra.mxu0 0
      %1881 = vmatprep.subr.bf16.mxu0 0
      %1882 = vmatpush1.bf16.xpose.msra.mxu0 0
      %1883 = vmatprep.mubr.bf16.mxu0 0
      %1884 = vmatmul.mubr.bf16.gmra.mrb[0].mxu0 %v1849
      %v1885 = vpop.f32.mrb[0].mxu0
      %v1886 = vadd.f32 0.0, %v1885
      %v1887 = vpop.f32.mrb[0].mxu0
      %v1888 = vpop.f32.mrb[0].mxu0
      %v1889 = vpop.f32.mrb[0].mxu0
      %1890 = vdwg.mxu0
      %v1891 = vmul.f32 %v1886, 0.35355338
      %v1892 = vsel %vm824, %v1891, -1e+30
      %v1893 = vsel %vm1678, %v1892, -inf
      %1894 = vmax.xlane.f32.xlu0 %v1893
      %v1895 = vpop.xlane.xlu0 %1894
      %v1896 = vsub.f32 %v1892, %v1895
      %v1897 = vmul.f32 %v1896, 1.442695
      %v1898 = vpow.pop %v1897
      %v1899 = vsel %vm1678, %v1898, 0.0
      %1900 = vadd.xlane.f32.xlu0 %v1899
      %v1901 = vpop.xlane.xlu0 %1900
      %v1902 = vrcp.pop %v1901
      %v1903 = vmul.f32 %v1898, %v1902
      %v1904 = vpack.c.bf16 %v1903, %v1903
      %v1905 = vmul.f32 %v1622, %v565
      %v1906 = vpack.c.bf16 %v1905, %v1905
      %v1908 = vsel %vm902, %v1904, 0
      %v1911 = vsel %vm906, %v1906, 0
      %1913 = vmatprep.subr.bf16.mxu0 0
      %1914 = vmatpush1.bf16.msra.mxu0 %v1911
      %1915 = vmatprep.subr.bf16.mxu0 0
      %1916 = vmatpush1.bf16.msra.mxu0 0
      %1917 = vmatprep.subr.bf16.mxu0 0
      %1918 = vmatpush1.bf16.msra.mxu0 0
      %1919 = vmatprep.subr.bf16.mxu0 0
      %1920 = vmatpush1.bf16.msra.mxu0 0
      %1921 = vmatprep.subr.bf16.mxu0 0
      %1922 = vmatpush1.bf16.msra.mxu0 0
      %1923 = vmatprep.subr.bf16.mxu0 0
      %1924 = vmatpush1.bf16.msra.mxu0 0
      %1925 = vmatprep.subr.bf16.mxu0 0
      %1926 = vmatpush1.bf16.msra.mxu0 0
      %1927 = vmatprep.subr.bf16.mxu0 0
      %1928 = vmatpush1.bf16.msra.mxu0 0
      %1929 = vmatprep.subr.bf16.mxu0 0
      %1930 = vmatpush1.bf16.msra.mxu0 0
      %1931 = vmatprep.subr.bf16.mxu0 0
      %1932 = vmatpush1.bf16.msra.mxu0 0
      %1933 = vmatprep.subr.bf16.mxu0 0
      %1934 = vmatpush1.bf16.msra.mxu0 0
      %1935 = vmatprep.subr.bf16.mxu0 0
      %1936 = vmatpush1.bf16.msra.mxu0 0
      %1937 = vmatprep.subr.bf16.mxu0 0
      %1938 = vmatpush1.bf16.msra.mxu0 0
      %1939 = vmatprep.subr.bf16.mxu0 0
      %1940 = vmatpush1.bf16.msra.mxu0 0
      %1941 = vmatprep.subr.bf16.mxu0 0
      %1942 = vmatpush1.bf16.msra.mxu0 0
      %1943 = vmatprep.subr.bf16.mxu0 0
      %1944 = vmatpush1.bf16.msra.mxu0 0
      %1945 = vmatprep.mubr.bf16.mxu0 0
      %1946 = vmatmul.mubr.bf16.gmra.mrb[0].mxu0 %v1908
      %v1947 = vpop.f32.mrb[0].mxu0
      %v1948 = vadd.f32 0.0, %v1947
      %v1949 = vpop.f32.mrb[0].mxu0
      %v1950 = vpop.f32.mrb[0].mxu0
      %v1951 = vpop.f32.mrb[0].mxu0
      %1952 = vdwg.mxu0
      %v1953 = vadd.f32 %v1841, %v1948
      %v1954 = vmul.f32 %v1488, %v570
      %v1955 = vpack.c.bf16 %v1954, %v1954
      %v1957 = vsel %vm598, %v1955, 0
      %1959 = vmatprep.subr.bf16.mxu0 0
      %1960 = vmatpush1.bf16.xpose.msra.mxu0 %v1634
      %1961 = vmatprep.subr.bf16.mxu0 0
      %1962 = vmatpush1.bf16.xpose.msra.mxu0 0
      %1963 = vmatprep.subr.bf16.mxu0 0
      %1964 = vmatpush1.bf16.xpose.msra.mxu0 0
      %1965 = vmatprep.subr.bf16.mxu0 0
      %1966 = vmatpush1.bf16.xpose.msra.mxu0 0
      %1967 = vmatprep.subr.bf16.mxu0 0
      %1968 = vmatpush1.bf16.xpose.msra.mxu0 0
      %1969 = vmatprep.subr.bf16.mxu0 0
      %1970 = vmatpush1.bf16.xpose.msra.mxu0 0
      %1971 = vmatprep.subr.bf16.mxu0 0
      %1972 = vmatpush1.bf16.xpose.msra.mxu0 0
      %1973 = vmatprep.subr.bf16.mxu0 0
      %1974 = vmatpush1.bf16.xpose.msra.mxu0 0
      %1975 = vmatprep.subr.bf16.mxu0 0
      %1976 = vmatpush1.bf16.xpose.msra.mxu0 0
      %1977 = vmatprep.subr.bf16.mxu0 0
      %1978 = vmatpush1.bf16.xpose.msra.mxu0 0
      %1979 = vmatprep.subr.bf16.mxu0 0
      %1980 = vmatpush1.bf16.xpose.msra.mxu0 0
      %1981 = vmatprep.subr.bf16.mxu0 0
      %1982 = vmatpush1.bf16.xpose.msra.mxu0 0
      %1983 = vmatprep.subr.bf16.mxu0 0
      %1984 = vmatpush1.bf16.xpose.msra.mxu0 0
      %1985 = vmatprep.subr.bf16.mxu0 0
      %1986 = vmatpush1.bf16.xpose.msra.mxu0 0
      %1987 = vmatprep.subr.bf16.mxu0 0
      %1988 = vmatpush1.bf16.xpose.msra.mxu0 0
      %1989 = vmatprep.subr.bf16.mxu0 0
      %1990 = vmatpush1.bf16.xpose.msra.mxu0 0
      %1991 = vmatprep.mubr.bf16.mxu0 0
      %1992 = vmatmul.mubr.bf16.gmra.mrb[0].mxu0 %v1957
      %v1993 = vpop.f32.mrb[0].mxu0
      %v1994 = vadd.f32 0.0, %v1993
      %v1995 = vpop.f32.mrb[0].mxu0
      %v1996 = vpop.f32.mrb[0].mxu0
      %v1997 = vpop.f32.mrb[0].mxu0
      %1998 = vdwg.mxu0
      %v1999 = vmul.f32 %v1994, 0.35355338
      %v2000 = vsel %vm824, %v1999, -1e+30
      %v2001 = vsel %vm1678, %v2000, -inf
      %2002 = vmax.xlane.f32.xlu0 %v2001
      %v2003 = vpop.xlane.xlu0 %2002
      %v2004 = vsub.f32 %v2000, %v2003
      %v2005 = vmul.f32 %v2004, 1.442695
      %v2006 = vpow.pop %v2005
      %v2007 = vsel %vm1678, %v2006, 0.0
      %2008 = vadd.xlane.f32.xlu0 %v2007
      %v2009 = vpop.xlane.xlu0 %2008
      %v2010 = vrcp.pop %v2009
      %v2011 = vmul.f32 %v2006, %v2010
      %v2012 = vpack.c.bf16 %v2011, %v2011
      %v2013 = vmul.f32 %v1622, %v570
      %v2014 = vpack.c.bf16 %v2013, %v2013
      %v2016 = vsel %vm902, %v2012, 0
      %v2019 = vsel %vm906, %v2014, 0
      %2021 = vmatprep.subr.bf16.mxu0 0
      %2022 = vmatpush1.bf16.msra.mxu0 %v2019
      %2023 = vmatprep.subr.bf16.mxu0 0
      %2024 = vmatpush1.bf16.msra.mxu0 0
      %2025 = vmatprep.subr.bf16.mxu0 0
      %2026 = vmatpush1.bf16.msra.mxu0 0
      %2027 = vmatprep.subr.bf16.mxu0 0
      %2028 = vmatpush1.bf16.msra.mxu0 0
      %2029 = vmatprep.subr.bf16.mxu0 0
      %2030 = vmatpush1.bf16.msra.mxu0 0
      %2031 = vmatprep.subr.bf16.mxu0 0
      %2032 = vmatpush1.bf16.msra.mxu0 0
      %2033 = vmatprep.subr.bf16.mxu0 0
      %2034 = vmatpush1.bf16.msra.mxu0 0
      %2035 = vmatprep.subr.bf16.mxu0 0
      %2036 = vmatpush1.bf16.msra.mxu0 0
      %2037 = vmatprep.subr.bf16.mxu0 0
      %2038 = vmatpush1.bf16.msra.mxu0 0
      %2039 = vmatprep.subr.bf16.mxu0 0
      %2040 = vmatpush1.bf16.msra.mxu0 0
      %2041 = vmatprep.subr.bf16.mxu0 0
      %2042 = vmatpush1.bf16.msra.mxu0 0
      %2043 = vmatprep.subr.bf16.mxu0 0
      %2044 = vmatpush1.bf16.msra.mxu0 0
      %2045 = vmatprep.subr.bf16.mxu0 0
      %2046 = vmatpush1.bf16.msra.mxu0 0
      %2047 = vmatprep.subr.bf16.mxu0 0
      %2048 = vmatpush1.bf16.msra.mxu0 0
      %2049 = vmatprep.subr.bf16.mxu0 0
      %2050 = vmatpush1.bf16.msra.mxu0 0
      %2051 = vmatprep.subr.bf16.mxu0 0
      %2052 = vmatpush1.bf16.msra.mxu0 0
      %2053 = vmatprep.mubr.bf16.mxu0 0
      %2054 = vmatmul.mubr.bf16.gmra.mrb[0].mxu0 %v2016
      %v2055 = vpop.f32.mrb[0].mxu0
      %v2056 = vadd.f32 0.0, %v2055
      %v2057 = vpop.f32.mrb[0].mxu0
      %v2058 = vpop.f32.mrb[0].mxu0
      %v2059 = vpop.f32.mrb[0].mxu0
      %2060 = vdwg.mxu0
      %v2061 = vadd.f32 %v1953, %v2056
      %s2062 = scalar_lea.vmem %s12, 16
      %v2063 = vld [vmem:[%s2062] sm:$0xf]
      %v2064 = vld [vmem:[%s2062 + $0x4] sm:$0xf]
      %v2065 = vld [vmem:[%s2062 + $0x8] sm:$0xf]
      %v2066 = vld [vmem:[%s2062 + $0xc] sm:$0xf]
      %v2067 = vpack.c.bf16 %v2061, %v2061
      %s2068 = scalar_lea.vmem %s13, 1
      %v2069 = vld [vmem:[%s2068] sm:$0x1]
      %v2071 = vlaneseq
      %v2072 = vshrl.u32 %v2071, 7
      %v2073 = vsub.s32 0, %v2072
      %v2074 = vrot.slane %v2069, %v2073
      %v2080 = vunpack.c.l.b16 %v2063
      %v2081 = vunpack.c.l.b16 %v2064
      %v2082 = vunpack.c.l.b16 %v2065
      %v2083 = vunpack.c.l.b16 %v2066
      %v2084 = vpack.c.b16 %v2081, %v2080
      %v2085 = vpack.c.b16 %v2083, %v2082
      %v2089 = vsel %vm598, %v2067, 0
      %2091 = vmatprep.subr.bf16.mxu0 0
      %2092 = vmatpush1.bf16.msra.mxu0 %v2084
      %2093 = vmatprep.subr.bf16.mxu0 0
      %2094 = vmatpush1.bf16.msra.mxu0 %v2085
      %2095 = vmatprep.subr.bf16.mxu0 0
      %2096 = vmatpush1.bf16.msra.mxu0 0
      %2097 = vmatprep.subr.bf16.mxu0 0
      %2098 = vmatpush1.bf16.msra.mxu0 0
      %2099 = vmatprep.subr.bf16.mxu0 0
      %2100 = vmatpush1.bf16.msra.mxu0 0
      %2101 = vmatprep.subr.bf16.mxu0 0
      %2102 = vmatpush1.bf16.msra.mxu0 0
      %2103 = vmatprep.subr.bf16.mxu0 0
      %2104 = vmatpush1.bf16.msra.mxu0 0
      %2105 = vmatprep.subr.bf16.mxu0 0
      %2106 = vmatpush1.bf16.msra.mxu0 0
      %2107 = vmatprep.subr.bf16.mxu0 0
      %2108 = vmatpush1.bf16.msra.mxu0 0
      %2109 = vmatprep.subr.bf16.mxu0 0
      %2110 = vmatpush1.bf16.msra.mxu0 0
      %2111 = vmatprep.subr.bf16.mxu0 0
      %2112 = vmatpush1.bf16.msra.mxu0 0
      %2113 = vmatprep.subr.bf16.mxu0 0
      %2114 = vmatpush1.bf16.msra.mxu0 0
      %2115 = vmatprep.subr.bf16.mxu0 0
      %2116 = vmatpush1.bf16.msra.mxu0 0
      %2117 = vmatprep.subr.bf16.mxu0 0
      %2118 = vmatpush1.bf16.msra.mxu0 0
      %2119 = vmatprep.subr.bf16.mxu0 0
      %2120 = vmatpush1.bf16.msra.mxu0 0
      %2121 = vmatprep.subr.bf16.mxu0 0
      %2122 = vmatpush1.bf16.msra.mxu0 0
      %2123 = vmatprep.mubr.bf16.mxu0 0
      %2124 = vmatmul.mubr.bf16.gmra.mrb[0].mxu0 %v2089
      %v2125 = vpop.f32.mrb[0].mxu0
      %v2126 = vadd.f32 %v2074, %v2125
      %v2127 = vpop.f32.mrb[0].mxu0
      %v2128 = vpop.f32.mrb[0].mxu0
      %v2129 = vpop.f32.mrb[0].mxu0
      %2130 = vdwg.mxu0
      %v2131 = vadd.f32 %v2126, %v1423
      %s2132 = scalar_lea.vmem %s14, 16
      %v2133 = vld [vmem:[%s2132] sm:$0xf]
      %v2134 = vld [vmem:[%s2132 + $0x4] sm:$0xf]
      %v2135 = vld [vmem:[%s2132 + $0x8] sm:$0xf]
      %v2136 = vld [vmem:[%s2132 + $0xc] sm:$0xf]
      %v2137 = vpack.c.bf16 %v2131, %v2131
      %s2138 = scalar_lea.vmem %s15, 1
      %v2139 = vld [vmem:[%s2138] sm:$0x1]
      %v2141 = vlaneseq
      %v2142 = vshrl.u32 %v2141, 7
      %v2143 = vsub.s32 0, %v2142
      %v2144 = vrot.slane %v2139, %v2143
      %v2150 = vunpack.c.l.b16 %v2133
      %v2151 = vunpack.c.l.b16 %v2134
      %v2152 = vunpack.c.l.b16 %v2135
      %v2153 = vunpack.c.l.b16 %v2136
      %v2154 = vpack.c.b16 %v2151, %v2150
      %v2155 = vpack.c.b16 %v2153, %v2152
      %v2159 = vsel %vm598, %v2137, 0
      %2161 = vmatprep.subr.bf16.mxu0 0
      %2162 = vmatpush1.bf16.msra.mxu0 %v2154
      %2163 = vmatprep.subr.bf16.mxu0 0
      %2164 = vmatpush1.bf16.msra.mxu0 %v2155
      %2165 = vmatprep.subr.bf16.mxu0 0
      %2166 = vmatpush1.bf16.msra.mxu0 0
      %2167 = vmatprep.subr.bf16.mxu0 0
      %2168 = vmatpush1.bf16.msra.mxu0 0
      %2169 = vmatprep.subr.bf16.mxu0 0
      %2170 = vmatpush1.bf16.msra.mxu0 0
      %2171 = vmatprep.subr.bf16.mxu0 0
      %2172 = vmatpush1.bf16.msra.mxu0 0
      %2173 = vmatprep.subr.bf16.mxu0 0
      %2174 = vmatpush1.bf16.msra.mxu0 0
      %2175 = vmatprep.subr.bf16.mxu0 0
      %2176 = vmatpush1.bf16.msra.mxu0 0
      %2177 = vmatprep.subr.bf16.mxu0 0
      %2178 = vmatpush1.bf16.msra.mxu0 0
      %2179 = vmatprep.subr.bf16.mxu0 0
      %2180 = vmatpush1.bf16.msra.mxu0 0
      %2181 = vmatprep.subr.bf16.mxu0 0
      %2182 = vmatpush1.bf16.msra.mxu0 0
      %2183 = vmatprep.subr.bf16.mxu0 0
      %2184 = vmatpush1.bf16.msra.mxu0 0
      %2185 = vmatprep.subr.bf16.mxu0 0
      %2186 = vmatpush1.bf16.msra.mxu0 0
      %2187 = vmatprep.subr.bf16.mxu0 0
      %2188 = vmatpush1.bf16.msra.mxu0 0
      %2189 = vmatprep.subr.bf16.mxu0 0
      %2190 = vmatpush1.bf16.msra.mxu0 0
      %2191 = vmatprep.subr.bf16.mxu0 0
      %2192 = vmatpush1.bf16.msra.mxu0 0
      %2193 = vmatprep.mubr.bf16.mxu0 0
      %2194 = vmatmul.mubr.bf16.gmra.mrb[0].mxu0 %v2159
      %v2195 = vpop.f32.mrb[0].mxu0
      %v2196 = vadd.f32 %v2144, %v2195
      %v2197 = vpop.f32.mrb[0].mxu0
      %v2198 = vpop.f32.mrb[0].mxu0
      %v2199 = vpop.f32.mrb[0].mxu0
      %2200 = vdwg.mxu0
      %v2201 = vmax.f32 %v2196, 0.0
      %v2202 = vadd.f32 %v2131, %v2201
      %s2203 = scalar_lea.vmem %s6, 32
      %v2204 = vld [vmem:[%s2203] sm:$0xf]
      %v2205 = vld [vmem:[%s2203 + $0x4] sm:$0xf]
      %v2206 = vld [vmem:[%s2203 + $0x8] sm:$0xf]
      %v2207 = vld [vmem:[%s2203 + $0xc] sm:$0xf]
      %v2208 = vpack.c.bf16 %v2202, %v2202
      %s2209 = scalar_lea.vmem %s7, 2
      %v2210 = vld [vmem:[%s2209] sm:$0x1]
      %v2212 = vlaneseq
      %v2213 = vshrl.u32 %v2212, 7
      %v2214 = vsub.s32 0, %v2213
      %v2215 = vrot.slane %v2210, %v2214
      %v2221 = vunpack.c.l.b16 %v2204
      %v2222 = vunpack.c.l.b16 %v2205
      %v2223 = vunpack.c.l.b16 %v2206
      %v2224 = vunpack.c.l.b16 %v2207
      %v2225 = vpack.c.b16 %v2222, %v2221
      %v2226 = vpack.c.b16 %v2224, %v2223
      %v2230 = vsel %vm598, %v2208, 0
      %2232 = vmatprep.subr.bf16.mxu0 0
      %2233 = vmatpush1.bf16.msra.mxu0 %v2225
      %2234 = vmatprep.subr.bf16.mxu0 0
      %2235 = vmatpush1.bf16.msra.mxu0 %v2226
      %2236 = vmatprep.subr.bf16.mxu0 0
      %2237 = vmatpush1.bf16.msra.mxu0 0
      %2238 = vmatprep.subr.bf16.mxu0 0
      %2239 = vmatpush1.bf16.msra.mxu0 0
      %2240 = vmatprep.subr.bf16.mxu0 0
      %2241 = vmatpush1.bf16.msra.mxu0 0
      %2242 = vmatprep.subr.bf16.mxu0 0
      %2243 = vmatpush1.bf16.msra.mxu0 0
      %2244 = vmatprep.subr.bf16.mxu0 0
      %2245 = vmatpush1.bf16.msra.mxu0 0
      %2246 = vmatprep.subr.bf16.mxu0 0
      %2247 = vmatpush1.bf16.msra.mxu0 0
      %2248 = vmatprep.subr.bf16.mxu0 0
      %2249 = vmatpush1.bf16.msra.mxu0 0
      %2250 = vmatprep.subr.bf16.mxu0 0
      %2251 = vmatpush1.bf16.msra.mxu0 0
      %2252 = vmatprep.subr.bf16.mxu0 0
      %2253 = vmatpush1.bf16.msra.mxu0 0
      %2254 = vmatprep.subr.bf16.mxu0 0
      %2255 = vmatpush1.bf16.msra.mxu0 0
      %2256 = vmatprep.subr.bf16.mxu0 0
      %2257 = vmatpush1.bf16.msra.mxu0 0
      %2258 = vmatprep.subr.bf16.mxu0 0
      %2259 = vmatpush1.bf16.msra.mxu0 0
      %2260 = vmatprep.subr.bf16.mxu0 0
      %2261 = vmatpush1.bf16.msra.mxu0 0
      %2262 = vmatprep.subr.bf16.mxu0 0
      %2263 = vmatpush1.bf16.msra.mxu0 0
      %2264 = vmatprep.mubr.bf16.mxu0 0
      %2265 = vmatmul.mubr.bf16.gmra.mrb[0].mxu0 %v2230
      %v2266 = vpop.f32.mrb[0].mxu0
      %v2267 = vadd.f32 %v2215, %v2266
      %v2268 = vpop.f32.mrb[0].mxu0
      %v2269 = vpop.f32.mrb[0].mxu0
      %v2270 = vpop.f32.mrb[0].mxu0
      %2271 = vdwg.mxu0
      %s2272 = scalar_lea.vmem %s8, 32
      %v2273 = vld [vmem:[%s2272] sm:$0xf]
      %v2274 = vld [vmem:[%s2272 + $0x4] sm:$0xf]
      %v2275 = vld [vmem:[%s2272 + $0x8] sm:$0xf]
      %v2276 = vld [vmem:[%s2272 + $0xc] sm:$0xf]
      %s2277 = scalar_lea.vmem %s9, 2
      %v2278 = vld [vmem:[%s2277] sm:$0x1]
      %v2280 = vlaneseq
      %v2281 = vshrl.u32 %v2280, 7
      %v2282 = vsub.s32 0, %v2281
      %v2283 = vrot.slane %v2278, %v2282
      %v2289 = vunpack.c.l.b16 %v2273
      %v2290 = vunpack.c.l.b16 %v2274
      %v2291 = vunpack.c.l.b16 %v2275
      %v2292 = vunpack.c.l.b16 %v2276
      %v2293 = vpack.c.b16 %v2290, %v2289
      %v2294 = vpack.c.b16 %v2292, %v2291
      %2297 = vmatprep.subr.bf16.mxu0 0
      %2298 = vmatpush1.bf16.msra.mxu0 %v2293
      %2299 = vmatprep.subr.bf16.mxu0 0
      %2300 = vmatpush1.bf16.msra.mxu0 %v2294
      %2301 = vmatprep.subr.bf16.mxu0 0
      %2302 = vmatpush1.bf16.msra.mxu0 0
      %2303 = vmatprep.subr.bf16.mxu0 0
      %2304 = vmatpush1.bf16.msra.mxu0 0
      %2305 = vmatprep.subr.bf16.mxu0 0
      %2306 = vmatpush1.bf16.msra.mxu0 0
      %2307 = vmatprep.subr.bf16.mxu0 0
      %2308 = vmatpush1.bf16.msra.mxu0 0
      %2309 = vmatprep.subr.bf16.mxu0 0
      %2310 = vmatpush1.bf16.msra.mxu0 0
      %2311 = vmatprep.subr.bf16.mxu0 0
      %2312 = vmatpush1.bf16.msra.mxu0 0
      %2313 = vmatprep.subr.bf16.mxu0 0
      %2314 = vmatpush1.bf16.msra.mxu0 0
      %2315 = vmatprep.subr.bf16.mxu0 0
      %2316 = vmatpush1.bf16.msra.mxu0 0
      %2317 = vmatprep.subr.bf16.mxu0 0
      %2318 = vmatpush1.bf16.msra.mxu0 0
      %2319 = vmatprep.subr.bf16.mxu0 0
      %2320 = vmatpush1.bf16.msra.mxu0 0
      %2321 = vmatprep.subr.bf16.mxu0 0
      %2322 = vmatpush1.bf16.msra.mxu0 0
      %2323 = vmatprep.subr.bf16.mxu0 0
      %2324 = vmatpush1.bf16.msra.mxu0 0
      %2325 = vmatprep.subr.bf16.mxu0 0
      %2326 = vmatpush1.bf16.msra.mxu0 0
      %2327 = vmatprep.subr.bf16.mxu0 0
      %2328 = vmatpush1.bf16.msra.mxu0 0
      %2329 = vmatprep.mubr.bf16.mxu0 0
      %2330 = vmatmul.mubr.bf16.gmra.mrb[0].mxu0 %v2230
      %v2331 = vpop.f32.mrb[0].mxu0
      %v2332 = vadd.f32 %v2283, %v2331
      %v2333 = vpop.f32.mrb[0].mxu0
      %v2334 = vpop.f32.mrb[0].mxu0
      %v2335 = vpop.f32.mrb[0].mxu0
      %2336 = vdwg.mxu0
      %s2337 = scalar_lea.vmem %s10, 32
      %v2338 = vld [vmem:[%s2337] sm:$0xf]
      %v2339 = vld [vmem:[%s2337 + $0x4] sm:$0xf]
      %v2340 = vld [vmem:[%s2337 + $0x8] sm:$0xf]
      %v2341 = vld [vmem:[%s2337 + $0xc] sm:$0xf]
      %s2342 = scalar_lea.vmem %s11, 2
      %v2343 = vld [vmem:[%s2342] sm:$0x1]
      %v2345 = vlaneseq
      %v2346 = vshrl.u32 %v2345, 7
      %v2347 = vsub.s32 0, %v2346
      %v2348 = vrot.slane %v2343, %v2347
      %v2354 = vunpack.c.l.b16 %v2338
      %v2355 = vunpack.c.l.b16 %v2339
      %v2356 = vunpack.c.l.b16 %v2340
      %v2357 = vunpack.c.l.b16 %v2341
      %v2358 = vpack.c.b16 %v2355, %v2354
      %v2359 = vpack.c.b16 %v2357, %v2356
      %2362 = vmatprep.subr.bf16.mxu0 0
      %2363 = vmatpush1.bf16.msra.mxu0 %v2358
      %2364 = vmatprep.subr.bf16.mxu0 0
      %2365 = vmatpush1.bf16.msra.mxu0 %v2359
      %2366 = vmatprep.subr.bf16.mxu0 0
      %2367 = vmatpush1.bf16.msra.mxu0 0
      %2368 = vmatprep.subr.bf16.mxu0 0
      %2369 = vmatpush1.bf16.msra.mxu0 0
      %2370 = vmatprep.subr.bf16.mxu0 0
      %2371 = vmatpush1.bf16.msra.mxu0 0
      %2372 = vmatprep.subr.bf16.mxu0 0
      %2373 = vmatpush1.bf16.msra.mxu0 0
      %2374 = vmatprep.subr.bf16.mxu0 0
      %2375 = vmatpush1.bf16.msra.mxu0 0
      %2376 = vmatprep.subr.bf16.mxu0 0
      %2377 = vmatpush1.bf16.msra.mxu0 0
      %2378 = vmatprep.subr.bf16.mxu0 0
      %2379 = vmatpush1.bf16.msra.mxu0 0
      %2380 = vmatprep.subr.bf16.mxu0 0
      %2381 = vmatpush1.bf16.msra.mxu0 0
      %2382 = vmatprep.subr.bf16.mxu0 0
      %2383 = vmatpush1.bf16.msra.mxu0 0
      %2384 = vmatprep.subr.bf16.mxu0 0
      %2385 = vmatpush1.bf16.msra.mxu0 0
      %2386 = vmatprep.subr.bf16.mxu0 0
      %2387 = vmatpush1.bf16.msra.mxu0 0
      %2388 = vmatprep.subr.bf16.mxu0 0
      %2389 = vmatpush1.bf16.msra.mxu0 0
      %2390 = vmatprep.subr.bf16.mxu0 0
      %2391 = vmatpush1.bf16.msra.mxu0 0
      %2392 = vmatprep.subr.bf16.mxu0 0
      %2393 = vmatpush1.bf16.msra.mxu0 0
      %2394 = vmatprep.mubr.bf16.mxu0 0
      %2395 = vmatmul.mubr.bf16.gmra.mrb[0].mxu0 %v2230
      %v2396 = vpop.f32.mrb[0].mxu0
      %v2397 = vadd.f32 %v2348, %v2396
      %v2398 = vpop.f32.mrb[0].mxu0
      %v2399 = vpop.f32.mrb[0].mxu0
      %v2400 = vpop.f32.mrb[0].mxu0
      %2401 = vdwg.mxu0
      %v2402 = vpack.c.bf16 %v2332, %v2332
      %v2403 = vmul.f32 %v2267, %v555
      %v2404 = vpack.c.bf16 %v2403, %v2403
      %v2406 = vsel %vm598, %v2404, 0
      %v2409 = vsel %vm598, %v2402, 0
      %2411 = vmatprep.subr.bf16.mxu0 0
      %2412 = vmatpush1.bf16.xpose.msra.mxu0 %v2409
      %2413 = vmatprep.subr.bf16.mxu0 0
      %2414 = vmatpush1.bf16.xpose.msra.mxu0 0
      %2415 = vmatprep.subr.bf16.mxu0 0
      %2416 = vmatpush1.bf16.xpose.msra.mxu0 0
      %2417 = vmatprep.subr.bf16.mxu0 0
      %2418 = vmatpush1.bf16.xpose.msra.mxu0 0
      %2419 = vmatprep.subr.bf16.mxu0 0
      %2420 = vmatpush1.bf16.xpose.msra.mxu0 0
      %2421 = vmatprep.subr.bf16.mxu0 0
      %2422 = vmatpush1.bf16.xpose.msra.mxu0 0
      %2423 = vmatprep.subr.bf16.mxu0 0
      %2424 = vmatpush1.bf16.xpose.msra.mxu0 0
      %2425 = vmatprep.subr.bf16.mxu0 0
      %2426 = vmatpush1.bf16.xpose.msra.mxu0 0
      %2427 = vmatprep.subr.bf16.mxu0 0
      %2428 = vmatpush1.bf16.xpose.msra.mxu0 0
      %2429 = vmatprep.subr.bf16.mxu0 0
      %2430 = vmatpush1.bf16.xpose.msra.mxu0 0
      %2431 = vmatprep.subr.bf16.mxu0 0
      %2432 = vmatpush1.bf16.xpose.msra.mxu0 0
      %2433 = vmatprep.subr.bf16.mxu0 0
      %2434 = vmatpush1.bf16.xpose.msra.mxu0 0
      %2435 = vmatprep.subr.bf16.mxu0 0
      %2436 = vmatpush1.bf16.xpose.msra.mxu0 0
      %2437 = vmatprep.subr.bf16.mxu0 0
      %2438 = vmatpush1.bf16.xpose.msra.mxu0 0
      %2439 = vmatprep.subr.bf16.mxu0 0
      %2440 = vmatpush1.bf16.xpose.msra.mxu0 0
      %2441 = vmatprep.subr.bf16.mxu0 0
      %2442 = vmatpush1.bf16.xpose.msra.mxu0 0
      %2443 = vmatprep.mubr.bf16.mxu0 0
      %2444 = vmatmul.mubr.bf16.gmra.mrb[0].mxu0 %v2406
      %v2445 = vpop.f32.mrb[0].mxu0
      %v2446 = vadd.f32 0.0, %v2445
      %v2447 = vpop.f32.mrb[0].mxu0
      %v2448 = vpop.f32.mrb[0].mxu0
      %v2449 = vpop.f32.mrb[0].mxu0
      %2450 = vdwg.mxu0
      %v2451 = vmul.f32 %v2446, 0.35355338
      %vm2452 = vcmask 9216
      %v2453 = vsel %vm2452, %v2451, -inf
      %2454 = vmax.xlane.f32.xlu0 %v2453
      %v2455 = vpop.xlane.xlu0 %2454
      %v2456 = vsub.f32 %v2451, %v2455
      %v2457 = vmul.f32 %v2456, 1.442695
      %v2458 = vpow.pop %v2457
      %v2459 = vsel %vm2452, %v2458, 0.0
      %2460 = vadd.xlane.f32.xlu0 %v2459
      %v2461 = vpop.xlane.xlu0 %2460
      %v2462 = vrcp.pop %v2461
      %v2463 = vmul.f32 %v2458, %v2462
      %v2464 = vpack.c.bf16 %v2463, %v2463
      %v2465 = vmul.f32 %v2397, %v555
      %v2466 = vpack.c.bf16 %v2465, %v2465
      %v2467 = vmul.f32 %v2267, %v560
      %v2468 = vpack.c.bf16 %v2467, %v2467
      %v2470 = vsel %vm598, %v2468, 0
      %2472 = vmatprep.subr.bf16.mxu0 0
      %2473 = vmatpush1.bf16.xpose.msra.mxu0 %v2409
      %2474 = vmatprep.subr.bf16.mxu0 0
      %2475 = vmatpush1.bf16.xpose.msra.mxu0 0
      %2476 = vmatprep.subr.bf16.mxu0 0
      %2477 = vmatpush1.bf16.xpose.msra.mxu0 0
      %2478 = vmatprep.subr.bf16.mxu0 0
      %2479 = vmatpush1.bf16.xpose.msra.mxu0 0
      %2480 = vmatprep.subr.bf16.mxu0 0
      %2481 = vmatpush1.bf16.xpose.msra.mxu0 0
      %2482 = vmatprep.subr.bf16.mxu0 0
      %2483 = vmatpush1.bf16.xpose.msra.mxu0 0
      %2484 = vmatprep.subr.bf16.mxu0 0
      %2485 = vmatpush1.bf16.xpose.msra.mxu0 0
      %2486 = vmatprep.subr.bf16.mxu0 0
      %2487 = vmatpush1.bf16.xpose.msra.mxu0 0
      %2488 = vmatprep.subr.bf16.mxu0 0
      %2489 = vmatpush1.bf16.xpose.msra.mxu0 0
      %2490 = vmatprep.subr.bf16.mxu0 0
      %2491 = vmatpush1.bf16.xpose.msra.mxu0 0
      %2492 = vmatprep.subr.bf16.mxu0 0
      %2493 = vmatpush1.bf16.xpose.msra.mxu0 0
      %2494 = vmatprep.subr.bf16.mxu0 0
      %2495 = vmatpush1.bf16.xpose.msra.mxu0 0
      %2496 = vmatprep.subr.bf16.mxu0 0
      %2497 = vmatpush1.bf16.xpose.msra.mxu0 0
      %2498 = vmatprep.subr.bf16.mxu0 0
      %2499 = vmatpush1.bf16.xpose.msra.mxu0 0
      %2500 = vmatprep.subr.bf16.mxu0 0
      %2501 = vmatpush1.bf16.xpose.msra.mxu0 0
      %2502 = vmatprep.subr.bf16.mxu0 0
      %2503 = vmatpush1.bf16.xpose.msra.mxu0 0
      %2504 = vmatprep.mubr.bf16.mxu0 0
      %2505 = vmatmul.mubr.bf16.gmra.mrb[0].mxu0 %v2470
      %v2506 = vpop.f32.mrb[0].mxu0
      %v2507 = vadd.f32 0.0, %v2506
      %v2508 = vpop.f32.mrb[0].mxu0
      %v2509 = vpop.f32.mrb[0].mxu0
      %v2510 = vpop.f32.mrb[0].mxu0
      %2511 = vdwg.mxu0
      %v2512 = vmul.f32 %v2507, 0.35355338
      %v2513 = vsel %vm2452, %v2512, -inf
      %2514 = vmax.xlane.f32.xlu0 %v2513
      %v2515 = vpop.xlane.xlu0 %2514
      %v2516 = vsub.f32 %v2512, %v2515
      %v2517 = vmul.f32 %v2516, 1.442695
      %v2518 = vpow.pop %v2517
      %v2519 = vsel %vm2452, %v2518, 0.0
      %2520 = vadd.xlane.f32.xlu0 %v2519
      %v2521 = vpop.xlane.xlu0 %2520
      %v2522 = vrcp.pop %v2521
      %v2523 = vmul.f32 %v2518, %v2522
      %v2524 = vpack.c.bf16 %v2523, %v2523
      %v2525 = vmul.f32 %v2397, %v560
      %v2526 = vpack.c.bf16 %v2525, %v2525
      %vm2527 = vcmask 15360
      %v2529 = vsel %vm2527, %v2524, 0
      %vm2531 = vcmask 1040384
      %v2533 = vsel %vm2531, %v2526, 0
      %2535 = vmatprep.subr.bf16.mxu0 0
      %2536 = vmatpush1.bf16.msra.mxu0 %v2533
      %2537 = vmatprep.subr.bf16.mxu0 0
      %2538 = vmatpush1.bf16.msra.mxu0 0
      %2539 = vmatprep.subr.bf16.mxu0 0
      %2540 = vmatpush1.bf16.msra.mxu0 0
      %2541 = vmatprep.subr.bf16.mxu0 0
      %2542 = vmatpush1.bf16.msra.mxu0 0
      %2543 = vmatprep.subr.bf16.mxu0 0
      %2544 = vmatpush1.bf16.msra.mxu0 0
      %2545 = vmatprep.subr.bf16.mxu0 0
      %2546 = vmatpush1.bf16.msra.mxu0 0
      %2547 = vmatprep.subr.bf16.mxu0 0
      %2548 = vmatpush1.bf16.msra.mxu0 0
      %2549 = vmatprep.subr.bf16.mxu0 0
      %2550 = vmatpush1.bf16.msra.mxu0 0
      %2551 = vmatprep.subr.bf16.mxu0 0
      %2552 = vmatpush1.bf16.msra.mxu0 0
      %2553 = vmatprep.subr.bf16.mxu0 0
      %2554 = vmatpush1.bf16.msra.mxu0 0
      %2555 = vmatprep.subr.bf16.mxu0 0
      %2556 = vmatpush1.bf16.msra.mxu0 0
      %2557 = vmatprep.subr.bf16.mxu0 0
      %2558 = vmatpush1.bf16.msra.mxu0 0
      %2559 = vmatprep.subr.bf16.mxu0 0
      %2560 = vmatpush1.bf16.msra.mxu0 0
      %2561 = vmatprep.subr.bf16.mxu0 0
      %2562 = vmatpush1.bf16.msra.mxu0 0
      %2563 = vmatprep.subr.bf16.mxu0 0
      %2564 = vmatpush1.bf16.msra.mxu0 0
      %2565 = vmatprep.subr.bf16.mxu0 0
      %2566 = vmatpush1.bf16.msra.mxu0 0
      %2567 = vmatprep.mubr.bf16.mxu0 0
      %2568 = vmatmul.mubr.bf16.gmra.mrb[0].mxu0 %v2529
      %v2569 = vpop.f32.mrb[0].mxu0
      %v2570 = vadd.f32 0.0, %v2569
      %v2571 = vpop.f32.mrb[0].mxu0
      %v2572 = vpop.f32.mrb[0].mxu0
      %v2573 = vpop.f32.mrb[0].mxu0
      %2574 = vdwg.mxu0
      %v2576 = vsel %vm2527, %v2464, 0
      %v2579 = vsel %vm2531, %v2466, 0
      %2581 = vmatprep.subr.bf16.mxu0 0
      %2582 = vmatpush1.bf16.msra.mxu0 %v2579
      %2583 = vmatprep.subr.bf16.mxu0 0
      %2584 = vmatpush1.bf16.msra.mxu0 0
      %2585 = vmatprep.subr.bf16.mxu0 0
      %2586 = vmatpush1.bf16.msra.mxu0 0
      %2587 = vmatprep.subr.bf16.mxu0 0
      %2588 = vmatpush1.bf16.msra.mxu0 0
      %2589 = vmatprep.subr.bf16.mxu0 0
      %2590 = vmatpush1.bf16.msra.mxu0 0
      %2591 = vmatprep.subr.bf16.mxu0 0
      %2592 = vmatpush1.bf16.msra.mxu0 0
      %2593 = vmatprep.subr.bf16.mxu0 0
      %2594 = vmatpush1.bf16.msra.mxu0 0
      %2595 = vmatprep.subr.bf16.mxu0 0
      %2596 = vmatpush1.bf16.msra.mxu0 0
      %2597 = vmatprep.subr.bf16.mxu0 0
      %2598 = vmatpush1.bf16.msra.mxu0 0
      %2599 = vmatprep.subr.bf16.mxu0 0
      %2600 = vmatpush1.bf16.msra.mxu0 0
      %2601 = vmatprep.subr.bf16.mxu0 0
      %2602 = vmatpush1.bf16.msra.mxu0 0
      %2603 = vmatprep.subr.bf16.mxu0 0
      %2604 = vmatpush1.bf16.msra.mxu0 0
      %2605 = vmatprep.subr.bf16.mxu0 0
      %2606 = vmatpush1.bf16.msra.mxu0 0
      %2607 = vmatprep.subr.bf16.mxu0 0
      %2608 = vmatpush1.bf16.msra.mxu0 0
      %2609 = vmatprep.subr.bf16.mxu0 0
      %2610 = vmatpush1.bf16.msra.mxu0 0
      %2611 = vmatprep.subr.bf16.mxu0 0
      %2612 = vmatpush1.bf16.msra.mxu0 0
      %2613 = vmatprep.mubr.bf16.mxu0 0
      %2614 = vmatmul.mubr.bf16.gmra.mrb[0].mxu0 %v2576
      %v2615 = vpop.f32.mrb[0].mxu0
      %v2616 = vadd.f32 %v2570, %v2615
      %v2617 = vpop.f32.mrb[0].mxu0
      %v2618 = vpop.f32.mrb[0].mxu0
      %v2619 = vpop.f32.mrb[0].mxu0
      %2620 = vdwg.mxu0
      %v2621 = vmul.f32 %v2267, %v565
      %v2622 = vpack.c.bf16 %v2621, %v2621
      %v2624 = vsel %vm598, %v2622, 0
      %2626 = vmatprep.subr.bf16.mxu0 0
      %2627 = vmatpush1.bf16.xpose.msra.mxu0 %v2409
      %2628 = vmatprep.subr.bf16.mxu0 0
      %2629 = vmatpush1.bf16.xpose.msra.mxu0 0
      %2630 = vmatprep.subr.bf16.mxu0 0
      %2631 = vmatpush1.bf16.xpose.msra.mxu0 0
      %2632 = vmatprep.subr.bf16.mxu0 0
      %2633 = vmatpush1.bf16.xpose.msra.mxu0 0
      %2634 = vmatprep.subr.bf16.mxu0 0
      %2635 = vmatpush1.bf16.xpose.msra.mxu0 0
      %2636 = vmatprep.subr.bf16.mxu0 0
      %2637 = vmatpush1.bf16.xpose.msra.mxu0 0
      %2638 = vmatprep.subr.bf16.mxu0 0
      %2639 = vmatpush1.bf16.xpose.msra.mxu0 0
      %2640 = vmatprep.subr.bf16.mxu0 0
      %2641 = vmatpush1.bf16.xpose.msra.mxu0 0
      %2642 = vmatprep.subr.bf16.mxu0 0
      %2643 = vmatpush1.bf16.xpose.msra.mxu0 0
      %2644 = vmatprep.subr.bf16.mxu0 0
      %2645 = vmatpush1.bf16.xpose.msra.mxu0 0
      %2646 = vmatprep.subr.bf16.mxu0 0
      %2647 = vmatpush1.bf16.xpose.msra.mxu0 0
      %2648 = vmatprep.subr.bf16.mxu0 0
      %2649 = vmatpush1.bf16.xpose.msra.mxu0 0
      %2650 = vmatprep.subr.bf16.mxu0 0
      %2651 = vmatpush1.bf16.xpose.msra.mxu0 0
      %2652 = vmatprep.subr.bf16.mxu0 0
      %2653 = vmatpush1.bf16.xpose.msra.mxu0 0
      %2654 = vmatprep.subr.bf16.mxu0 0
      %2655 = vmatpush1.bf16.xpose.msra.mxu0 0
      %2656 = vmatprep.subr.bf16.mxu0 0
      %2657 = vmatpush1.bf16.xpose.msra.mxu0 0
      %2658 = vmatprep.mubr.bf16.mxu0 0
      %2659 = vmatmul.mubr.bf16.gmra.mrb[0].mxu0 %v2624
      %v2660 = vpop.f32.mrb[0].mxu0
      %v2661 = vadd.f32 0.0, %v2660
      %v2662 = vpop.f32.mrb[0].mxu0
      %v2663 = vpop.f32.mrb[0].mxu0
      %v2664 = vpop.f32.mrb[0].mxu0
      %2665 = vdwg.mxu0
      %v2666 = vmul.f32 %v2661, 0.35355338
      %v2667 = vsel %vm2452, %v2666, -inf
      %2668 = vmax.xlane.f32.xlu0 %v2667
      %v2669 = vpop.xlane.xlu0 %2668
      %v2670 = vsub.f32 %v2666, %v2669
      %v2671 = vmul.f32 %v2670, 1.442695
      %v2672 = vpow.pop %v2671
      %v2673 = vsel %vm2452, %v2672, 0.0
      %2674 = vadd.xlane.f32.xlu0 %v2673
      %v2675 = vpop.xlane.xlu0 %2674
      %v2676 = vrcp.pop %v2675
      %v2677 = vmul.f32 %v2672, %v2676
      %v2678 = vpack.c.bf16 %v2677, %v2677
      %v2679 = vmul.f32 %v2397, %v565
      %v2680 = vpack.c.bf16 %v2679, %v2679
      %v2682 = vsel %vm2527, %v2678, 0
      %v2685 = vsel %vm2531, %v2680, 0
      %2687 = vmatprep.subr.bf16.mxu0 0
      %2688 = vmatpush1.bf16.msra.mxu0 %v2685
      %2689 = vmatprep.subr.bf16.mxu0 0
      %2690 = vmatpush1.bf16.msra.mxu0 0
      %2691 = vmatprep.subr.bf16.mxu0 0
      %2692 = vmatpush1.bf16.msra.mxu0 0
      %2693 = vmatprep.subr.bf16.mxu0 0
      %2694 = vmatpush1.bf16.msra.mxu0 0
      %2695 = vmatprep.subr.bf16.mxu0 0
      %2696 = vmatpush1.bf16.msra.mxu0 0
      %2697 = vmatprep.subr.bf16.mxu0 0
      %2698 = vmatpush1.bf16.msra.mxu0 0
      %2699 = vmatprep.subr.bf16.mxu0 0
      %2700 = vmatpush1.bf16.msra.mxu0 0
      %2701 = vmatprep.subr.bf16.mxu0 0
      %2702 = vmatpush1.bf16.msra.mxu0 0
      %2703 = vmatprep.subr.bf16.mxu0 0
      %2704 = vmatpush1.bf16.msra.mxu0 0
      %2705 = vmatprep.subr.bf16.mxu0 0
      %2706 = vmatpush1.bf16.msra.mxu0 0
      %2707 = vmatprep.subr.bf16.mxu0 0
      %2708 = vmatpush1.bf16.msra.mxu0 0
      %2709 = vmatprep.subr.bf16.mxu0 0
      %2710 = vmatpush1.bf16.msra.mxu0 0
      %2711 = vmatprep.subr.bf16.mxu0 0
      %2712 = vmatpush1.bf16.msra.mxu0 0
      %2713 = vmatprep.subr.bf16.mxu0 0
      %2714 = vmatpush1.bf16.msra.mxu0 0
      %2715 = vmatprep.subr.bf16.mxu0 0
      %2716 = vmatpush1.bf16.msra.mxu0 0
      %2717 = vmatprep.subr.bf16.mxu0 0
      %2718 = vmatpush1.bf16.msra.mxu0 0
      %2719 = vmatprep.mubr.bf16.mxu0 0
      %2720 = vmatmul.mubr.bf16.gmra.mrb[0].mxu0 %v2682
      %v2721 = vpop.f32.mrb[0].mxu0
      %v2722 = vadd.f32 0.0, %v2721
      %v2723 = vpop.f32.mrb[0].mxu0
      %v2724 = vpop.f32.mrb[0].mxu0
      %v2725 = vpop.f32.mrb[0].mxu0
      %2726 = vdwg.mxu0
      %v2727 = vadd.f32 %v2616, %v2722
      %v2728 = vmul.f32 %v2267, %v570
      %v2729 = vpack.c.bf16 %v2728, %v2728
      %v2731 = vsel %vm598, %v2729, 0
      %2733 = vmatprep.subr.bf16.mxu0 0
      %2734 = vmatpush1.bf16.xpose.msra.mxu0 %v2409
      %2735 = vmatprep.subr.bf16.mxu0 0
      %2736 = vmatpush1.bf16.xpose.msra.mxu0 0
      %2737 = vmatprep.subr.bf16.mxu0 0
      %2738 = vmatpush1.bf16.xpose.msra.mxu0 0
      %2739 = vmatprep.subr.bf16.mxu0 0
      %2740 = vmatpush1.bf16.xpose.msra.mxu0 0
      %2741 = vmatprep.subr.bf16.mxu0 0
      %2742 = vmatpush1.bf16.xpose.msra.mxu0 0
      %2743 = vmatprep.subr.bf16.mxu0 0
      %2744 = vmatpush1.bf16.xpose.msra.mxu0 0
      %2745 = vmatprep.subr.bf16.mxu0 0
      %2746 = vmatpush1.bf16.xpose.msra.mxu0 0
      %2747 = vmatprep.subr.bf16.mxu0 0
      %2748 = vmatpush1.bf16.xpose.msra.mxu0 0
      %2749 = vmatprep.subr.bf16.mxu0 0
      %2750 = vmatpush1.bf16.xpose.msra.mxu0 0
      %2751 = vmatprep.subr.bf16.mxu0 0
      %2752 = vmatpush1.bf16.xpose.msra.mxu0 0
      %2753 = vmatprep.subr.bf16.mxu0 0
      %2754 = vmatpush1.bf16.xpose.msra.mxu0 0
      %2755 = vmatprep.subr.bf16.mxu0 0
      %2756 = vmatpush1.bf16.xpose.msra.mxu0 0
      %2757 = vmatprep.subr.bf16.mxu0 0
      %2758 = vmatpush1.bf16.xpose.msra.mxu0 0
      %2759 = vmatprep.subr.bf16.mxu0 0
      %2760 = vmatpush1.bf16.xpose.msra.mxu0 0
      %2761 = vmatprep.subr.bf16.mxu0 0
      %2762 = vmatpush1.bf16.xpose.msra.mxu0 0
      %2763 = vmatprep.subr.bf16.mxu0 0
      %2764 = vmatpush1.bf16.xpose.msra.mxu0 0
      %2765 = vmatprep.mubr.bf16.mxu0 0
      %2766 = vmatmul.mubr.bf16.gmra.mrb[0].mxu0 %v2731
      %v2767 = vpop.f32.mrb[0].mxu0
      %v2768 = vadd.f32 0.0, %v2767
      %v2769 = vpop.f32.mrb[0].mxu0
      %v2770 = vpop.f32.mrb[0].mxu0
      %v2771 = vpop.f32.mrb[0].mxu0
      %2772 = vdwg.mxu0
      %v2773 = vmul.f32 %v2768, 0.35355338
      %v2774 = vsel %vm2452, %v2773, -inf
      %2775 = vmax.xlane.f32.xlu0 %v2774
      %v2776 = vpop.xlane.xlu0 %2775
      %v2777 = vsub.f32 %v2773, %v2776
      %v2778 = vmul.f32 %v2777, 1.442695
      %v2779 = vpow.pop %v2778
      %v2780 = vsel %vm2452, %v2779, 0.0
      %2781 = vadd.xlane.f32.xlu0 %v2780
      %v2782 = vpop.xlane.xlu0 %2781
      %v2783 = vrcp.pop %v2782
      %v2784 = vmul.f32 %v2779, %v2783
      %v2785 = vpack.c.bf16 %v2784, %v2784
      %v2786 = vmul.f32 %v2397, %v570
      %v2787 = vpack.c.bf16 %v2786, %v2786
      %v2789 = vsel %vm2527, %v2785, 0
      %v2792 = vsel %vm2531, %v2787, 0
      %2794 = vmatprep.subr.bf16.mxu0 0
      %2795 = vmatpush1.bf16.msra.mxu0 %v2792
      %2796 = vmatprep.subr.bf16.mxu0 0
      %2797 = vmatpush1.bf16.msra.mxu0 0
      %2798 = vmatprep.subr.bf16.mxu0 0
      %2799 = vmatpush1.bf16.msra.mxu0 0
      %2800 = vmatprep.subr.bf16.mxu0 0
      %2801 = vmatpush1.bf16.msra.mxu0 0
      %2802 = vmatprep.subr.bf16.mxu0 0
      %2803 = vmatpush1.bf16.msra.mxu0 0
      %2804 = vmatprep.subr.bf16.mxu0 0
      %2805 = vmatpush1.bf16.msra.mxu0 0
      %2806 = vmatprep.subr.bf16.mxu0 0
      %2807 = vmatpush1.bf16.msra.mxu0 0
      %2808 = vmatprep.subr.bf16.mxu0 0
      %2809 = vmatpush1.bf16.msra.mxu0 0
      %2810 = vmatprep.subr.bf16.mxu0 0
      %2811 = vmatpush1.bf16.msra.mxu0 0
      %2812 = vmatprep.subr.bf16.mxu0 0
      %2813 = vmatpush1.bf16.msra.mxu0 0
      %2814 = vmatprep.subr.bf16.mxu0 0
      %2815 = vmatpush1.bf16.msra.mxu0 0
      %2816 = vmatprep.subr.bf16.mxu0 0
      %2817 = vmatpush1.bf16.msra.mxu0 0
      %2818 = vmatprep.subr.bf16.mxu0 0
      %2819 = vmatpush1.bf16.msra.mxu0 0
      %2820 = vmatprep.subr.bf16.mxu0 0
      %2821 = vmatpush1.bf16.msra.mxu0 0
      %2822 = vmatprep.subr.bf16.mxu0 0
      %2823 = vmatpush1.bf16.msra.mxu0 0
      %2824 = vmatprep.subr.bf16.mxu0 0
      %2825 = vmatpush1.bf16.msra.mxu0 0
      %2826 = vmatprep.mubr.bf16.mxu0 0
      %2827 = vmatmul.mubr.bf16.gmra.mrb[0].mxu0 %v2789
      %v2828 = vpop.f32.mrb[0].mxu0
      %v2829 = vadd.f32 0.0, %v2828
      %v2830 = vpop.f32.mrb[0].mxu0
      %v2831 = vpop.f32.mrb[0].mxu0
      %v2832 = vpop.f32.mrb[0].mxu0
      %2833 = vdwg.mxu0
      %v2834 = vadd.f32 %v2727, %v2829
      %s2835 = scalar_lea.vmem %s12, 32
      %v2836 = vld [vmem:[%s2835] sm:$0xf]
      %v2837 = vld [vmem:[%s2835 + $0x4] sm:$0xf]
      %v2838 = vld [vmem:[%s2835 + $0x8] sm:$0xf]
      %v2839 = vld [vmem:[%s2835 + $0xc] sm:$0xf]
      %v2840 = vpack.c.bf16 %v2834, %v2834
      %s2841 = scalar_lea.vmem %s13, 2
      %v2842 = vld [vmem:[%s2841] sm:$0x1]
      %v2844 = vlaneseq
      %v2845 = vshrl.u32 %v2844, 7
      %v2846 = vsub.s32 0, %v2845
      %v2847 = vrot.slane %v2842, %v2846
      %v2853 = vunpack.c.l.b16 %v2836
      %v2854 = vunpack.c.l.b16 %v2837
      %v2855 = vunpack.c.l.b16 %v2838
      %v2856 = vunpack.c.l.b16 %v2839
      %v2857 = vpack.c.b16 %v2854, %v2853
      %v2858 = vpack.c.b16 %v2856, %v2855
      %v2862 = vsel %vm598, %v2840, 0
      %2864 = vmatprep.subr.bf16.mxu0 0
      %2865 = vmatpush1.bf16.msra.mxu0 %v2857
      %2866 = vmatprep.subr.bf16.mxu0 0
      %2867 = vmatpush1.bf16.msra.mxu0 %v2858
      %2868 = vmatprep.subr.bf16.mxu0 0
      %2869 = vmatpush1.bf16.msra.mxu0 0
      %2870 = vmatprep.subr.bf16.mxu0 0
      %2871 = vmatpush1.bf16.msra.mxu0 0
      %2872 = vmatprep.subr.bf16.mxu0 0
      %2873 = vmatpush1.bf16.msra.mxu0 0
      %2874 = vmatprep.subr.bf16.mxu0 0
      %2875 = vmatpush1.bf16.msra.mxu0 0
      %2876 = vmatprep.subr.bf16.mxu0 0
      %2877 = vmatpush1.bf16.msra.mxu0 0
      %2878 = vmatprep.subr.bf16.mxu0 0
      %2879 = vmatpush1.bf16.msra.mxu0 0
      %2880 = vmatprep.subr.bf16.mxu0 0
      %2881 = vmatpush1.bf16.msra.mxu0 0
      %2882 = vmatprep.subr.bf16.mxu0 0
      %2883 = vmatpush1.bf16.msra.mxu0 0
      %2884 = vmatprep.subr.bf16.mxu0 0
      %2885 = vmatpush1.bf16.msra.mxu0 0
      %2886 = vmatprep.subr.bf16.mxu0 0
      %2887 = vmatpush1.bf16.msra.mxu0 0
      %2888 = vmatprep.subr.bf16.mxu0 0
      %2889 = vmatpush1.bf16.msra.mxu0 0
      %2890 = vmatprep.subr.bf16.mxu0 0
      %2891 = vmatpush1.bf16.msra.mxu0 0
      %2892 = vmatprep.subr.bf16.mxu0 0
      %2893 = vmatpush1.bf16.msra.mxu0 0
      %2894 = vmatprep.subr.bf16.mxu0 0
      %2895 = vmatpush1.bf16.msra.mxu0 0
      %2896 = vmatprep.mubr.bf16.mxu0 0
      %2897 = vmatmul.mubr.bf16.gmra.mrb[0].mxu0 %v2862
      %v2898 = vpop.f32.mrb[0].mxu0
      %v2899 = vadd.f32 %v2847, %v2898
      %v2900 = vpop.f32.mrb[0].mxu0
      %v2901 = vpop.f32.mrb[0].mxu0
      %v2902 = vpop.f32.mrb[0].mxu0
      %2903 = vdwg.mxu0
      %v2904 = vadd.f32 %v2899, %v2202
      %s2905 = scalar_lea.vmem %s14, 32
      %v2906 = vld [vmem:[%s2905] sm:$0xf]
      %v2907 = vld [vmem:[%s2905 + $0x4] sm:$0xf]
      %v2908 = vld [vmem:[%s2905 + $0x8] sm:$0xf]
      %v2909 = vld [vmem:[%s2905 + $0xc] sm:$0xf]
      %v2910 = vpack.c.bf16 %v2904, %v2904
      %s2911 = scalar_lea.vmem %s15, 2
      %v2912 = vld [vmem:[%s2911] sm:$0x1]
      %v2914 = vlaneseq
      %v2915 = vshrl.u32 %v2914, 7
      %v2916 = vsub.s32 0, %v2915
      %v2917 = vrot.slane %v2912, %v2916
      %v2923 = vunpack.c.l.b16 %v2906
      %v2924 = vunpack.c.l.b16 %v2907
      %v2925 = vunpack.c.l.b16 %v2908
      %v2926 = vunpack.c.l.b16 %v2909
      %v2927 = vpack.c.b16 %v2924, %v2923
      %v2928 = vpack.c.b16 %v2926, %v2925
      %v2932 = vsel %vm598, %v2910, 0
      %2934 = vmatprep.subr.bf16.mxu0 0
      %2935 = vmatpush1.bf16.msra.mxu0 %v2927
      %2936 = vmatprep.subr.bf16.mxu0 0
      %2937 = vmatpush1.bf16.msra.mxu0 %v2928
      %2938 = vmatprep.subr.bf16.mxu0 0
      %2939 = vmatpush1.bf16.msra.mxu0 0
      %2940 = vmatprep.subr.bf16.mxu0 0
      %2941 = vmatpush1.bf16.msra.mxu0 0
      %2942 = vmatprep.subr.bf16.mxu0 0
      %2943 = vmatpush1.bf16.msra.mxu0 0
      %2944 = vmatprep.subr.bf16.mxu0 0
      %2945 = vmatpush1.bf16.msra.mxu0 0
      %2946 = vmatprep.subr.bf16.mxu0 0
      %2947 = vmatpush1.bf16.msra.mxu0 0
      %2948 = vmatprep.subr.bf16.mxu0 0
      %2949 = vmatpush1.bf16.msra.mxu0 0
      %2950 = vmatprep.subr.bf16.mxu0 0
      %2951 = vmatpush1.bf16.msra.mxu0 0
      %2952 = vmatprep.subr.bf16.mxu0 0
      %2953 = vmatpush1.bf16.msra.mxu0 0
      %2954 = vmatprep.subr.bf16.mxu0 0
      %2955 = vmatpush1.bf16.msra.mxu0 0
      %2956 = vmatprep.subr.bf16.mxu0 0
      %2957 = vmatpush1.bf16.msra.mxu0 0
      %2958 = vmatprep.subr.bf16.mxu0 0
      %2959 = vmatpush1.bf16.msra.mxu0 0
      %2960 = vmatprep.subr.bf16.mxu0 0
      %2961 = vmatpush1.bf16.msra.mxu0 0
      %2962 = vmatprep.subr.bf16.mxu0 0
      %2963 = vmatpush1.bf16.msra.mxu0 0
      %2964 = vmatprep.subr.bf16.mxu0 0
      %2965 = vmatpush1.bf16.msra.mxu0 0
      %2966 = vmatprep.mubr.bf16.mxu0 0
      %2967 = vmatmul.mubr.bf16.gmra.mrb[0].mxu0 %v2932
      %v2968 = vpop.f32.mrb[0].mxu0
      %v2969 = vadd.f32 %v2917, %v2968
      %v2970 = vpop.f32.mrb[0].mxu0
      %v2971 = vpop.f32.mrb[0].mxu0
      %v2972 = vpop.f32.mrb[0].mxu0
      %2973 = vdwg.mxu0
      %v2974 = vmax.f32 %v2969, 0.0
      %v2975 = vadd.f32 %v2904, %v2974
      %vm2976 = vcmask 254976
      %2977 = vst.msk [vmem:[%s547] sm:$0x3] %vm2976, %v2975
      %p2978 = scmp.lt.s32.totalorder %s27, 1
      %s2979 = scalar_select %p2978, %s27, 1
      %s2980 = smul.addr %s2979, 2
      %s2981 = scalar_lea.vmem %s16, %s2980
      // Predicated region
      $region85: #{fwd.3} parent=83 // pred_check
        %p2982 = pneg %p396
      $region86: #{fwd.3} parent=83 // pred_check_branch
        %2984 = sbr.rel (%p2982) target = $region88
      $region87: #{fwd.3} parent=83 // pred_region
        _
      $region88: #{fwd.3} parent=83 // pred_fallthru
        _
    $region84: #{fwd.3} parent=5 // pred_fallthru
      _
    %p2985 = scmp.le.s32.totalorder 2, %s22
    // Predicated region
    $region89: #{fwd.3} parent=5 // pred_check
      %p2986 = pneg %p2985
    $region90: #{fwd.3} parent=5 // pred_check_branch
      %2988 = sbr.rel (%p2986) target = $region92
    $region91: #{fwd.3} parent=5 // pred_region
      %s2989 = ssub.s32 %s22, 2
      // Predicated region
      $region93: #{fwd.3} parent=91 // pred_check
        %p2990 = pneg %p402
      $region94: #{fwd.3} parent=91 // pred_check_branch
        %2992 = sbr.rel (%p2990) target = $region96
      $region95: #{fwd.3} parent=91 // pred_region
        %p2993 = scmp.lt.s32.totalorder %s28, 1
        %s2994 = scalar_select %p2993, %s28, 1
        %s2995 = smul.addr %s2994, 2
        %s2996 = scalar_lea.vmem %s16, %s2995
      $region96: #{fwd.3} parent=91 // pred_fallthru
        _
    $region92: #{fwd.3} parent=5 // pred_fallthru
      _
  $region6: #{fwd.3} parent=0 // loop_footer
    %s26 = sadd.s32 1, %s22
  $region7: #{fwd.3} parent=0 // loop_footer_branch
    %21 = sbr.rel target = $region3
  $region8: #{fwd.3} parent=0 // loop_exit
    _

</llo_original>
